<compile_context>
chip_gen: v7x
topology: tpu7x:2x2x1
jax: 0.10.0
libtpu: 0.0.40
codegen_flags: <defaults>
</compile_context>

<pallas_src>
import jax
import jax.numpy as jnp
from jax import lax
from jax.experimental import pallas as pl
from jax.experimental.pallas import tpu as pltpu

F32 = jnp.float32
BF16 = jnp.bfloat16


def _round_up(x, m):
    return ((x + m - 1) // m) * m


def _geom(H, W):
    """Static geometry for the fused kernel (all Python ints)."""
    assert H % 8 == 0 and W % 8 == 0
    h2, w2 = H // 2, W // 2              # conv2 input spatial
    wp2 = w2 + 2                          # padded row stride
    R2 = _round_up((h2 + 2) * wp2, 16)    # conv2 matmul rows / image (junk incl.)
    PB2 = _round_up(R2 + 2 * wp2 + 2, 8)  # padded conv2-input rows / image
    h3, w3 = H // 4, W // 4
    wp3 = w3 + 2
    R3 = _round_up((h3 + 2) * wp3, 8)
    PB3 = _round_up(R3 + 2 * wp3 + 2, 8)
    R0, S0 = H // 8, W // 8               # latent spatial size
    return dict(H=H, W=W, h2=h2, w2=w2, wp2=wp2, R2=R2, PB2=PB2,
                h3=h3, w3=w3, wp3=wp3, R3=R3, PB3=PB3, R0=R0, S0=S0)


def _pick_fold(N):
    """Largest B dividing N with N/B >= 2 grid steps (megacore), capped at 8."""
    best = 1
    for b in range(1, min(8, N) + 1):
        if N % b == 0 and N // b >= 2:
            best = b
    return best


# ---------------------------------------------------------------------------
# Fused kernel
# ---------------------------------------------------------------------------
def make_kernel(B, g):
    H, W = g["H"], g["W"]
    h2, w2, wp2, R2 = g["h2"], g["w2"], g["wp2"], g["R2"]
    h3, w3, wp3, R3 = g["h3"], g["w3"], g["wp3"], g["R3"]
    R0, S0 = g["R0"], g["S0"]

    def kernel(x1_ref, w1_ref, b1_ref, w2_ref, b2_ref, w3_ref, b3_ref,
               wd1_ref, bd1_ref, wd2_ref, bd2_ref, wd3_ref, bd3_ref,
               o_ref, cb1, pb2, ic2, cb2, pb3, ic3):
        # Zero the padded input buffers: the pad ring / separator rows must read
        # as exact zeros.  NOTE: do NOT guard this with program_id()==0 (each
        # megacore core owns private scratch and only one core runs step 0).
        pb2[...] = jnp.zeros(pb2.shape, pb2.dtype)
        pb3[...] = jnp.zeros(pb3.shape, pb3.dtype)

        # ============================ encoder ============================
        # conv1: single bf16 matmul, K=32 (wrapper-side im2col, 27 real taps)
        x1 = x1_ref[...].reshape(B * H * W, 32)
        y1 = jnp.dot(x1, w1_ref[...], preferred_element_type=F32)
        y1 = jnp.maximum(y1 + b1_ref[...], 0.0)            # (B*H*W, 64) f32
        cb1[...] = y1

        # pool1 (2x2 max) -> interior of padded conv2-input buffer (bf16)
        half = B * H * W // 2
        ev = cb1[pl.ds(0, half, 2), :]                     # even x columns
        od = cb1[pl.ds(1, half, 2), :]                     # odd  x columns
        hm = jnp.maximum(ev, od).reshape(B, H * (W // 2), 64)
        hp = jnp.maximum(hm[:, :H * (W // 2) - W // 2, :], hm[:, W // 2:, :])
        for y0 in range(h2):
            src = (2 * y0) * (W // 2)
            dst = (y0 + 1) * wp2 + 1
            pb2[:, dst:dst + w2, :] = hp[:, src:src + w2, :].astype(BF16)

        # conv2: K-concatenated im2col (9 contiguous tap slabs), one matmul K=576
        for dy in range(3):
            for dx in range(3):
                t = dy * 3 + dx
                off = dy * wp2 + dx
                ic2[:, :, t * 64:(t + 1) * 64] = pb2[:, off:off + R2, :]
        y2 = jnp.dot(ic2[...].reshape(B * R2, 9 * 64), w2_ref[...],
                     preferred_element_type=F32)
        y2 = jnp.maximum(y2 + b2_ref[...], 0.0)            # (B*R2, 128) f32
        cb2[...] = y2

        # pool2 -> interior of padded conv3-input buffer
        half = B * R2 // 2
        ev = cb2[pl.ds(0, half, 2), :]
        od = cb2[pl.ds(1, half, 2), :]
        hm = jnp.maximum(ev, od).reshape(B, R2 // 2, 128)
        hp = jnp.maximum(hm[:, :R2 // 2 - wp2 // 2, :], hm[:, wp2 // 2:, :])
        for y0 in range(h3):
            src = (2 * y0) * (wp2 // 2)
            dst = (y0 + 1) * wp3 + 1
            pb3[:, dst:dst + w3, :] = hp[:, src:src + w3, :].astype(BF16)

        # conv3: one bf16 matmul, K=1152
        for dy in range(3):
            for dx in range(3):
                t = dy * 3 + dx
                off = dy * wp3 + dx
                ic3[:, :, t * 128:(t + 1) * 128] = pb3[:, off:off + R3, :]
        y3 = jnp.dot(ic3[...].reshape(B * R3, 9 * 128), w3_ref[...],
                     preferred_element_type=F32)
        y3 = jnp.maximum(y3 + b3_ref[...], 0.0)            # (B*R3, 256) f32
        y3 = y3.reshape(B, R3, 256)

        # pool3 -> latent, lane-dense: rows = (i0-major, b), lanes = (x0, c)
        lat_rows = []
        for i0 in range(R0):
            blocks = []
            for x0 in range(S0):
                r0 = (2 * i0) * wp3 + 2 * x0
                r1 = (2 * i0 + 1) * wp3 + 2 * x0
                p = jnp.maximum(
                    jnp.maximum(y3[:, r0:r0 + 1, :], y3[:, r0 + 1:r0 + 2, :]),
                    jnp.maximum(y3[:, r1:r1 + 1, :], y3[:, r1 + 1:r1 + 2, :]))
                blocks.append(p)                            # (B, 1, 256)
            lat_rows.append(jnp.concatenate(blocks, axis=2).reshape(B, S0 * 256))
        lat = jnp.concatenate(lat_rows, axis=0)             # (R0*B, S0*256) f32

        # ============================ decoder ============================
        # Each deconv(k=2, s=2) is ONE matmul (both ky parities concatenated
        # along N in the folded weight).  The lane->row split is a cheap lane
        # slice + sublane concat; row order is undone in the wrapper.
        d1 = jnp.dot(lat.astype(BF16), wd1_ref[...], preferred_element_type=F32)
        d1 = jnp.maximum(d1 + bd1_ref[...], 0.0)            # (R0*B, 2*2S0*128)
        nh = 2 * S0 * 128
        d1r = jnp.concatenate([d1[:, :nh], d1[:, nh:]], axis=0).astype(BF16)

        d2 = jnp.dot(d1r, wd2_ref[...], preferred_element_type=F32)
        d2 = jnp.maximum(d2 + bd2_ref[...], 0.0)            # (2*R0*B, 2*4S0*64)
        nh = 4 * S0 * 64
        d2r = jnp.concatenate([d2[:, :nh], d2[:, nh:]], axis=0).astype(BF16)

        y = jnp.dot(d2r, wd3_ref[...], preferred_element_type=F32) + bd3_ref[...]
        y = 0.5 * (jnp.tanh(0.5 * y) + 1.0)                 # sigmoid via EUP tanh
        o_ref[...] = y                                      # (B*H/2, 2W) f32

    return kernel


# ---------------------------------------------------------------------------
# Trace-time weight folding / layout prep
# ---------------------------------------------------------------------------
def _fold_conv1(w1):
    # (3,3,3,64) [ky,kx,ci,co] -> (32, 64): K ordered (ky,kx,ci), zero-padded.
    return jnp.pad(w1.reshape(27, 64), ((0, 5), (0, 0)))


def _fold_deconv(dw, S):
    # dw (2,2,Cin,Cout) [ky,kx,ci,co] -> (S*Cin, 2 * 2S*Cout); both ky halves
    # along N; within a half, output lanes are (x_out, c).
    # TODO(synk): these folded weights are O(S^2) with (1-1/S) structural zeros;
    # for H,W >= 64 tile them along N (or fall back to per-tap dots) to stay
    # inside v7x's 64 MiB VMEM.
    _, _, cin, cout = dw.shape
    half = 2 * S * cout
    w = jnp.zeros((S * cin, 2 * half), dw.dtype)
    for ky in range(2):
        for s in range(S):
            for kx in range(2):
                w = w.at[s * cin:(s + 1) * cin,
                         ky * half + (2 * s + kx) * cout:
                         ky * half + (2 * s + kx + 1) * cout].set(dw[ky, kx])
    return w


def _im2col_conv1(x_nhwc):
    N, H, W, C = x_nhwc.shape
    xp = jnp.pad(x_nhwc, ((0, 0), (1, 1), (1, 1), (0, 0)))
    pats = [xp[:, dy:dy + H, dx:dx + W, :] for dy in range(3) for dx in range(3)]
    col = jnp.stack(pats, axis=3).reshape(N, H * W, 9 * C)   # (N, H*W, 27)
    return jnp.pad(col, ((0, 0), (0, 0), (0, 32 - 9 * C)))   # (N, H*W, 32)


# ---------------------------------------------------------------------------
# Forward pass (NCHW in / NCHW out, matching the PyTorch module)
# ---------------------------------------------------------------------------
@jax.jit
def autoencoder_forward(x_nchw, params):
    N, C, H, W = x_nchw.shape
    assert C == 3
    g = _geom(H, W)
    B = _pick_fold(N)
    G = N // B
    R0, S0, R2, PB2, R3, PB3 = g["R0"], g["S0"], g["R2"], g["PB2"], g["R3"], g["PB3"]

    # ---- layout prep / weight folding (tiny, trace-time XLA) ----
    x = jnp.transpose(x_nchw, (0, 2, 3, 1)).astype(F32)       # NHWC
    x1 = _im2col_conv1(x).astype(BF16)                        # (N, H*W, 32)

    w1 = _fold_conv1(params["w1"]).astype(BF16)
    w2 = params["w2"].reshape(9 * 64, 128).astype(BF16)
    w3 = params["w3"].reshape(9 * 128, 256).astype(BF16)
    b1 = params["b1"].reshape(1, 64).astype(F32)
    b2 = params["b2"].reshape(1, 128).astype(F32)
    b3 = params["b3"].reshape(1, 256).astype(F32)
    wd1 = _fold_deconv(params["dw1"], S0).astype(BF16)        # (S0*256, 2*2S0*128)
    wd2 = _fold_deconv(params["dw2"], 2 * S0).astype(BF16)    # (2S0*128, 2*4S0*64)
    wd3 = _fold_deconv(params["dw3"], 4 * S0).astype(BF16)    # (4S0*64,  2*8S0*1)
    bd1 = jnp.tile(params["db1"], 2 * 2 * S0).reshape(1, -1).astype(F32)
    bd2 = jnp.tile(params["db2"], 2 * 4 * S0).reshape(1, -1).astype(F32)
    bd3 = jnp.tile(params["db3"], 2 * 8 * S0).reshape(1, -1).astype(F32)

    kernel = make_kernel(B, g)

    def const2d(a):
        return pl.BlockSpec(a.shape, lambda n: (0, 0))

    in_specs = ([pl.BlockSpec((B, H * W, 32), lambda n: (n, 0, 0))] +
                [const2d(a) for a in (w1, b1, w2, b2, w3, b3,
                                      wd1, bd1, wd2, bd2, wd3, bd3)])
    out_rows = B * H // 2
    out_specs = pl.BlockSpec((out_rows, 2 * W), lambda n: (n, 0))

    scratch = [
        pltpu.VMEM((B * H * W, 64), F32),      # cb1: conv1 output (pre-pool)
        pltpu.VMEM((B, PB2, 64), BF16),        # pb2: padded conv2 input
        pltpu.VMEM((B, R2, 9 * 64), BF16),     # ic2: conv2 im2col
        pltpu.VMEM((B * R2, 128), F32),        # cb2: conv2 output (pre-pool)
        pltpu.VMEM((B, PB3, 128), BF16),       # pb3: padded conv3 input
        pltpu.VMEM((B, R3, 9 * 128), BF16),    # ic3: conv3 im2col
    ]

    flops = 2 * N * (H * W * 32 * 64 + R2 * 576 * 128 + R3 * 1152 * 256
                     + R0 * (S0 * 256) * (2 * 2 * S0 * 128)
                     + 2 * R0 * (2 * S0 * 128) * (2 * 4 * S0 * 64)
                     + 4 * R0 * (4 * S0 * 64) * (2 * 8 * S0))
    weight_bytes = sum(int(a.size) * a.dtype.itemsize
                       for a in (w1, b1, w2, b2, w3, b3,
                                 wd1, bd1, wd2, bd2, wd3, bd3))
    cost = pl.CostEstimate(
        flops=int(flops),
        transcendentals=int(N * H * W),
        bytes_accessed=int(N * H * W * 32 * 2 + weight_bytes + N * H * W * 4))

    out = pl.pallas_call(
        kernel,
        out_shape=jax.ShapeDtypeStruct((N * H // 2, 2 * W), F32),
        grid_spec=pltpu.PrefetchScalarGridSpec(
            num_scalar_prefetch=0,
            grid=(G,),
            in_specs=in_specs,
            out_specs=out_specs,
            scratch_shapes=scratch),
        compiler_params=pltpu.CompilerParams(
            dimension_semantics=("parallel",)),
        cost_estimate=cost,
    )(x1, w1, b1, w2, b2, w3, b3, wd1, bd1, wd2, bd2, wd3, bd3)

    # Undo the kernel's natural row order (ky2, ky1, i0, b) / lane order (ky3, x):
    # image row y = 8*i0 + 4*ky1 + 2*ky2 + ky3.
    out = out.reshape(G, 2, 2, R0, B, 2, W)       # (g, ky2, ky1, i0, b, ky3, x)
    out = out.transpose(0, 4, 3, 2, 1, 5, 6)      # (g, b, i0, ky1, ky2, ky3, x)
    return out.reshape(N, 1, H, W)


# ---------------------------------------------------------------------------
# Deterministic parameter init (shapes from the PyTorch module __init__)
# ---------------------------------------------------------------------------
def init_params(keys):
    def rnd(k, shape, scale):
        return scale * jax.random.normal(k, shape, F32)

    return {
        "w1": rnd(keys[0], (3, 3, 3, 64), 0.10), "b1": rnd(keys[1], (64,), 0.05),
        "w2": rnd(keys[2], (3, 3, 64, 128), 0.05), "b2": rnd(keys[3], (128,), 0.05),
        "w3": rnd(keys[4], (3, 3, 128, 256), 0.03), "b3": rnd(keys[5], (256,), 0.05),
        "dw1": rnd(keys[6], (2, 2, 256, 128), 0.03), "db1": rnd(keys[7], (128,), 0.05),
        "dw2": rnd(keys[8], (2, 2, 128, 64), 0.05), "db2": rnd(keys[9], (64,), 0.05),
        "dw3": rnd(keys[10], (2, 2, 64, 1), 0.10), "db3": rnd(keys[11], (1,), 0.05),
    }


# ---------------------------------------------------------------------------
# Pure-JAX reference (mirrors the kernel's bf16-matmul / f32-accumulate policy)
# ---------------------------------------------------------------------------
@jax.jit
def reference_forward(x_nchw, params):
    x = jnp.transpose(x_nchw, (0, 2, 3, 1)).astype(F32)

    def conv_relu_pool(x, w, b):
        y = lax.conv_general_dilated(
            x.astype(BF16), w.astype(BF16), (1, 1), "SAME",
            dimension_numbers=("NHWC", "HWIO", "NHWC"),
            preferred_element_type=F32) + b
        y = jnp.maximum(y, 0.0)
        return lax.reduce_window(y, -jnp.inf, lax.max,
                                 (1, 2, 2, 1), (1, 2, 2, 1), "VALID")

    def deconv(x, w, b, act):
        n, h, ww, _ = x.shape
        cout = w.shape[-1]
        out = jnp.zeros((n, 2 * h, 2 * ww, cout), F32)
        for ky in range(2):
            for kx in range(2):
                y = jnp.einsum("nhwc,cd->nhwd", x.astype(BF16),
                               w[ky, kx].astype(BF16),
                               preferred_element_type=F32)
                out = out.at[:, ky::2, kx::2, :].set(y)
        out = out + b
        return jnp.maximum(out, 0.0) if act == "relu" else jax.nn.sigmoid(out)

    x = conv_relu_pool(x, params["w1"], params["b1"])
    x = conv_relu_pool(x, params["w2"], params["b2"])
    x = conv_relu_pool(x, params["w3"], params["b3"])
    x = deconv(x, params["dw1"], params["db1"], "relu")
    x = deconv(x, params["dw2"], params["db2"], "relu")
    x = deconv(x, params["dw3"], params["db3"], "sigmoid")
    return jnp.transpose(x, (0, 3, 1, 2))


if __name__ == "__main__":
    key = jax.random.PRNGKey(0)
    keys = jax.random.split(key, 13)

    N, H, W = 2, 16, 16
    x = jax.random.normal(keys[0], (N, 3, H, W), F32)      # NCHW like PyTorch
    params = init_params(keys[1:])

    y = autoencoder_forward(x, params)
    y = jax.block_until_ready(y)
    assert y.shape == (N, 1, H, W), y.shape

    y_ref = jax.block_until_ready(reference_forward(x, params))
    max_err = float(jnp.max(jnp.abs(y - y_ref)))
    assert max_err < 2e-2, f"max abs error {max_err}"

    print("KERNEL_OK")
</pallas_src>

<mosaic_0001>
module attributes {stable_mosaic.version = 11 : i64} {
  func.func @kernel(%arg0: i32, %arg1: memref<1x256x32xbf16, #tpu.memory_space<vmem>>, %arg2: memref<32x64xbf16, #tpu.memory_space<vmem>>, %arg3: memref<1x64xf32, #tpu.memory_space<vmem>>, %arg4: memref<576x128xbf16, #tpu.memory_space<vmem>>, %arg5: memref<1x128xf32, #tpu.memory_space<vmem>>, %arg6: memref<1152x256xbf16, #tpu.memory_space<vmem>>, %arg7: memref<1x256xf32, #tpu.memory_space<vmem>>, %arg8: memref<512x1024xbf16, #tpu.memory_space<vmem>>, %arg9: memref<1x1024xf32, #tpu.memory_space<vmem>>, %arg10: memref<512x1024xbf16, #tpu.memory_space<vmem>>, %arg11: memref<1x1024xf32, #tpu.memory_space<vmem>>, %arg12: memref<512x32xbf16, #tpu.memory_space<vmem>>, %arg13: memref<1x32xf32, #tpu.memory_space<vmem>>, %arg14: memref<8x32xf32, #tpu.memory_space<vmem>>, %arg15: memref<256x64xf32, #tpu.memory_space<vmem>>, %arg16: memref<1x136x64xbf16, #tpu.memory_space<vmem>>, %arg17: memref<1x112x576xbf16, #tpu.memory_space<vmem>>, %arg18: memref<112x128xf32, #tpu.memory_space<vmem>>, %arg19: memref<1x56x128xbf16, #tpu.memory_space<vmem>>, %arg20: memref<1x40x1152xbf16, #tpu.memory_space<vmem>>) attributes {dimension_semantics = [#tpu.dimension_semantics<parallel>], iteration_bounds = array<i64: 2>, scalar_prefetch = 0 : i64, scratch_operands = 6 : i64, tpu.core_type = #tpu.core_type<tc>, window_params = [{transform_indices = @transform_0, window_bounds = array<i64: 1, 256, 32>}, {pipeline_mode = #tpu.pipeline_mode<synchronous>, transform_indices = @transform_1, window_bounds = array<i64: 32, 64>}, {pipeline_mode = #tpu.pipeline_mode<synchronous>, transform_indices = @transform_2, window_bounds = array<i64: 1, 64>}, {pipeline_mode = #tpu.pipeline_mode<synchronous>, transform_indices = @transform_3, window_bounds = array<i64: 576, 128>}, {pipeline_mode = #tpu.pipeline_mode<synchronous>, transform_indices = @transform_4, window_bounds = array<i64: 1, 128>}, {pipeline_mode = #tpu.pipeline_mode<synchronous>, transform_indices = @transform_5, window_bounds = array<i64: 1152, 256>}, {pipeline_mode = #tpu.pipeline_mode<synchronous>, transform_indices = @transform_6, window_bounds = array<i64: 1, 256>}, {pipeline_mode = #tpu.pipeline_mode<synchronous>, transform_indices = @transform_7, window_bounds = array<i64: 512, 1024>}, {pipeline_mode = #tpu.pipeline_mode<synchronous>, transform_indices = @transform_8, window_bounds = array<i64: 1, 1024>}, {pipeline_mode = #tpu.pipeline_mode<synchronous>, transform_indices = @transform_9, window_bounds = array<i64: 512, 1024>}, {pipeline_mode = #tpu.pipeline_mode<synchronous>, transform_indices = @transform_10, window_bounds = array<i64: 1, 1024>}, {pipeline_mode = #tpu.pipeline_mode<synchronous>, transform_indices = @transform_11, window_bounds = array<i64: 512, 32>}, {pipeline_mode = #tpu.pipeline_mode<synchronous>, transform_indices = @transform_12, window_bounds = array<i64: 1, 32>}, {transform_indices = @transform_13, window_bounds = array<i64: 8, 32>}]} {
    %cst = arith.constant 0.000000e+00 : bf16
    %0 = vector.broadcast %cst : bf16 to vector<1x136x64xbf16>
    %c0 = arith.constant 0 : index
    %c0_0 = arith.constant 0 : index
    %c0_1 = arith.constant 0 : index
    %1 = vector.load %arg16[%c0, %c0_0, %c0_1] : memref<1x136x64xbf16, #tpu.memory_space<vmem>>, vector<1x136x64xbf16>
    tpu.vector_store %arg16[%c0, %c0_0, %c0_1], %0 {strides = array<i32>} : memref<1x136x64xbf16, #tpu.memory_space<vmem>>, vector<1x136x64xbf16>,
    %cst_2 = arith.constant 0.000000e+00 : bf16
    %2 = vector.broadcast %cst_2 : bf16 to vector<1x56x128xbf16>
    %c0_3 = arith.constant 0 : index
    %c0_4 = arith.constant 0 : index
    %c0_5 = arith.constant 0 : index
    %3 = vector.load %arg19[%c0_3, %c0_4, %c0_5] : memref<1x56x128xbf16, #tpu.memory_space<vmem>>, vector<1x56x128xbf16>
    tpu.vector_store %arg19[%c0_3, %c0_4, %c0_5], %2 {strides = array<i32>} : memref<1x56x128xbf16, #tpu.memory_space<vmem>>, vector<1x56x128xbf16>,
    %c0_6 = arith.constant 0 : index
    %c0_7 = arith.constant 0 : index
    %c0_8 = arith.constant 0 : index
    %4 = vector.load %arg1[%c0_6, %c0_7, %c0_8] : memref<1x256x32xbf16, #tpu.memory_space<vmem>>, vector<1x256x32xbf16>
    %5 = vector.shape_cast %4 : vector<1x256x32xbf16> to vector<256x32xbf16>
    %c0_9 = arith.constant 0 : index
    %c0_10 = arith.constant 0 : index
    %6 = vector.load %arg2[%c0_9, %c0_10] : memref<32x64xbf16, #tpu.memory_space<vmem>>, vector<32x64xbf16>
    %cst_11 = arith.constant dense<0.000000e+00> : vector<256x64xf32>
    %7 = tpu.matmul %5, %6, %cst_11 {dimension_numbers = #tpu.dot_dimension_numbers<[1], [0], [0], [1], [0, 0, 1, 1], [], []>} : vector<256x32xbf16>, vector<32x64xbf16>, vector<256x64xf32> -> vector<256x64xf32>
    %c0_12 = arith.constant 0 : index
    %c0_13 = arith.constant 0 : index
    %8 = vector.load %arg3[%c0_12, %c0_13] : memref<1x64xf32, #tpu.memory_space<vmem>>, vector<1x64xf32>
    %9 = vector.broadcast %8 : vector<1x64xf32> to vector<256x64xf32>
    %10 = arith.addf %7, %9 : vector<256x64xf32>
    %cst_14 = arith.constant 0.000000e+00 : f32
    %11 = vector.broadcast %cst_14 : f32 to vector<256x64xf32>
    %12 = arith.maximumf %10, %11 : vector<256x64xf32>
    %c0_15 = arith.constant 0 : index
    %c0_16 = arith.constant 0 : index
    %13 = vector.load %arg15[%c0_15, %c0_16] : memref<256x64xf32, #tpu.memory_space<vmem>>, vector<256x64xf32>
    tpu.vector_store %arg15[%c0_15, %c0_16], %12 {strides = array<i32>} : memref<256x64xf32, #tpu.memory_space<vmem>>, vector<256x64xf32>,
    %c0_17 = arith.constant 0 : index
    %c0_18 = arith.constant 0 : index
    %14 = tpu.strided_load %arg15[%c0_17, %c0_18] {strides = array<i32: 2, 1>} : memref<256x64xf32, #tpu.memory_space<vmem>>, vector<128x64xf32>
    %c1 = arith.constant 1 : index
    %c0_19 = arith.constant 0 : index
    %15 = tpu.strided_load %arg15[%c1, %c0_19] {strides = array<i32: 2, 1>} : memref<256x64xf32, #tpu.memory_space<vmem>>, vector<128x64xf32>
    %16 = arith.maximumf %14, %15 : vector<128x64xf32>
    %17 = vector.shape_cast %16 : vector<128x64xf32> to vector<1x128x64xf32>
    %18 = vector.extract_strided_slice %17 {offsets = [0, 0, 0], sizes = [1, 120, 64], strides = [1, 1, 1]} : vector<1x128x64xf32> to vector<1x120x64xf32>
    %19 = vector.extract_strided_slice %17 {offsets = [0, 8, 0], sizes = [1, 120, 64], strides = [1, 1, 1]} : vector<1x128x64xf32> to vector<1x120x64xf32>
    %20 = arith.maximumf %18, %19 : vector<1x120x64xf32>
    %21 = vector.extract_strided_slice %20 {offsets = [0, 0, 0], sizes = [1, 8, 64], strides = [1, 1, 1]} : vector<1x120x64xf32> to vector<1x8x64xf32>
    %22 = arith.truncf %21 : vector<1x8x64xf32> to vector<1x8x64xbf16>
    %c0_20 = arith.constant 0 : index
    %c11 = arith.constant 11 : index
    %c0_21 = arith.constant 0 : index
    %23 = vector.load %arg16[%c0_20, %c11, %c0_21] : memref<1x136x64xbf16, #tpu.memory_space<vmem>>, vector<1x8x64xbf16>
    tpu.vector_store %arg16[%c0_20, %c11, %c0_21], %22 {strides = array<i32>} : memref<1x136x64xbf16, #tpu.memory_space<vmem>>, vector<1x8x64xbf16>,
    %24 = vector.extract_strided_slice %20 {offsets = [0, 16, 0], sizes = [1, 8, 64], strides = [1, 1, 1]} : vector<1x120x64xf32> to vector<1x8x64xf32>
    %25 = arith.truncf %24 : vector<1x8x64xf32> to vector<1x8x64xbf16>
    %c0_22 = arith.constant 0 : index
    %c21 = arith.constant 21 : index
    %c0_23 = arith.constant 0 : index
    %26 = vector.load %arg16[%c0_22, %c21, %c0_23] : memref<1x136x64xbf16, #tpu.memory_space<vmem>>, vector<1x8x64xbf16>
    tpu.vector_store %arg16[%c0_22, %c21, %c0_23], %25 {strides = array<i32>} : memref<1x136x64xbf16, #tpu.memory_space<vmem>>, vector<1x8x64xbf16>,
    %27 = vector.extract_strided_slice %20 {offsets = [0, 32, 0], sizes = [1, 8, 64], strides = [1, 1, 1]} : vector<1x120x64xf32> to vector<1x8x64xf32>
    %28 = arith.truncf %27 : vector<1x8x64xf32> to vector<1x8x64xbf16>
    %c0_24 = arith.constant 0 : index
    %c31 = arith.constant 31 : index
    %c0_25 = arith.constant 0 : index
    %29 = vector.load %arg16[%c0_24, %c31, %c0_25] : memref<1x136x64xbf16, #tpu.memory_space<vmem>>, vector<1x8x64xbf16>
    tpu.vector_store %arg16[%c0_24, %c31, %c0_25], %28 {strides = array<i32>} : memref<1x136x64xbf16, #tpu.memory_space<vmem>>, vector<1x8x64xbf16>,
    %30 = vector.extract_strided_slice %20 {offsets = [0, 48, 0], sizes = [1, 8, 64], strides = [1, 1, 1]} : vector<1x120x64xf32> to vector<1x8x64xf32>
    %31 = arith.truncf %30 : vector<1x8x64xf32> to vector<1x8x64xbf16>
    %c0_26 = arith.constant 0 : index
    %c41 = arith.constant 41 : index
    %c0_27 = arith.constant 0 : index
    %32 = vector.load %arg16[%c0_26, %c41, %c0_27] : memref<1x136x64xbf16, #tpu.memory_space<vmem>>, vector<1x8x64xbf16>
    tpu.vector_store %arg16[%c0_26, %c41, %c0_27], %31 {strides = array<i32>} : memref<1x136x64xbf16, #tpu.memory_space<vmem>>, vector<1x8x64xbf16>,
    %33 = vector.extract_strided_slice %20 {offsets = [0, 64, 0], sizes = [1, 8, 64], strides = [1, 1, 1]} : vector<1x120x64xf32> to vector<1x8x64xf32>
    %34 = arith.truncf %33 : vector<1x8x64xf32> to vector<1x8x64xbf16>
    %c0_28 = arith.constant 0 : index
    %c51 = arith.constant 51 : index
    %c0_29 = arith.constant 0 : index
    %35 = vector.load %arg16[%c0_28, %c51, %c0_29] : memref<1x136x64xbf16, #tpu.memory_space<vmem>>, vector<1x8x64xbf16>
    tpu.vector_store %arg16[%c0_28, %c51, %c0_29], %34 {strides = array<i32>} : memref<1x136x64xbf16, #tpu.memory_space<vmem>>, vector<1x8x64xbf16>,
    %36 = vector.extract_strided_slice %20 {offsets = [0, 80, 0], sizes = [1, 8, 64], strides = [1, 1, 1]} : vector<1x120x64xf32> to vector<1x8x64xf32>
    %37 = arith.truncf %36 : vector<1x8x64xf32> to vector<1x8x64xbf16>
    %c0_30 = arith.constant 0 : index
    %c61 = arith.constant 61 : index
    %c0_31 = arith.constant 0 : index
    %38 = vector.load %arg16[%c0_30, %c61, %c0_31] : memref<1x136x64xbf16, #tpu.memory_space<vmem>>, vector<1x8x64xbf16>
    tpu.vector_store %arg16[%c0_30, %c61, %c0_31], %37 {strides = array<i32>} : memref<1x136x64xbf16, #tpu.memory_space<vmem>>, vector<1x8x64xbf16>,
    %39 = vector.extract_strided_slice %20 {offsets = [0, 96, 0], sizes = [1, 8, 64], strides = [1, 1, 1]} : vector<1x120x64xf32> to vector<1x8x64xf32>
    %40 = arith.truncf %39 : vector<1x8x64xf32> to vector<1x8x64xbf16>
    %c0_32 = arith.constant 0 : index
    %c71 = arith.constant 71 : index
    %c0_33 = arith.constant 0 : index
    %41 = vector.load %arg16[%c0_32, %c71, %c0_33] : memref<1x136x64xbf16, #tpu.memory_space<vmem>>, vector<1x8x64xbf16>
    tpu.vector_store %arg16[%c0_32, %c71, %c0_33], %40 {strides = array<i32>} : memref<1x136x64xbf16, #tpu.memory_space<vmem>>, vector<1x8x64xbf16>,
    %42 = vector.extract_strided_slice %20 {offsets = [0, 112, 0], sizes = [1, 8, 64], strides = [1, 1, 1]} : vector<1x120x64xf32> to vector<1x8x64xf32>
    %43 = arith.truncf %42 : vector<1x8x64xf32> to vector<1x8x64xbf16>
    %c0_34 = arith.constant 0 : index
    %c81 = arith.constant 81 : index
    %c0_35 = arith.constant 0 : index
    %44 = vector.load %arg16[%c0_34, %c81, %c0_35] : memref<1x136x64xbf16, #tpu.memory_space<vmem>>, vector<1x8x64xbf16>
    tpu.vector_store %arg16[%c0_34, %c81, %c0_35], %43 {strides = array<i32>} : memref<1x136x64xbf16, #tpu.memory_space<vmem>>, vector<1x8x64xbf16>,
    %c0_36 = arith.constant 0 : index
    %c0_37 = arith.constant 0 : index
    %c0_38 = arith.constant 0 : index
    %45 = vector.load %arg16[%c0_36, %c0_37, %c0_38] : memref<1x136x64xbf16, #tpu.memory_space<vmem>>, vector<1x112x64xbf16>
    %c0_39 = arith.constant 0 : index
    %c0_40 = arith.constant 0 : index
    %c0_41 = arith.constant 0 : index
    %46 = vector.load %arg17[%c0_39, %c0_40, %c0_41] : memref<1x112x576xbf16, #tpu.memory_space<vmem>>, vector<1x112x64xbf16>
    tpu.vector_store %arg17[%c0_39, %c0_40, %c0_41], %45 {strides = array<i32>} : memref<1x112x576xbf16, #tpu.memory_space<vmem>>, vector<1x112x64xbf16>,
    %c0_42 = arith.constant 0 : index
    %c1_43 = arith.constant 1 : index
    %c0_44 = arith.constant 0 : index
    %47 = vector.load %arg16[%c0_42, %c1_43, %c0_44] : memref<1x136x64xbf16, #tpu.memory_space<vmem>>, vector<1x112x64xbf16>
    %c0_45 = arith.constant 0 : index
    %c0_46 = arith.constant 0 : index
    %c64 = arith.constant 64 : index
    %48 = vector.load %arg17[%c0_45, %c0_46, %c64] : memref<1x112x576xbf16, #tpu.memory_space<vmem>>, vector<1x112x64xbf16>
    tpu.vector_store %arg17[%c0_45, %c0_46, %c64], %47 {strides = array<i32>} : memref<1x112x576xbf16, #tpu.memory_space<vmem>>, vector<1x112x64xbf16>,
    %c0_47 = arith.constant 0 : index
    %c2 = arith.constant 2 : index
    %c0_48 = arith.constant 0 : index
    %49 = vector.load %arg16[%c0_47, %c2, %c0_48] : memref<1x136x64xbf16, #tpu.memory_space<vmem>>, vector<1x112x64xbf16>
    %c0_49 = arith.constant 0 : index
    %c0_50 = arith.constant 0 : index
    %c128 = arith.constant 128 : index
    %50 = vector.load %arg17[%c0_49, %c0_50, %c128] : memref<1x112x576xbf16, #tpu.memory_space<vmem>>, vector<1x112x64xbf16>
    tpu.vector_store %arg17[%c0_49, %c0_50, %c128], %49 {strides = array<i32>} : memref<1x112x576xbf16, #tpu.memory_space<vmem>>, vector<1x112x64xbf16>,
    %c0_51 = arith.constant 0 : index
    %c10 = arith.constant 10 : index
    %c0_52 = arith.constant 0 : index
    %51 = vector.load %arg16[%c0_51, %c10, %c0_52] : memref<1x136x64xbf16, #tpu.memory_space<vmem>>, vector<1x112x64xbf16>
    %c0_53 = arith.constant 0 : index
    %c0_54 = arith.constant 0 : index
    %c192 = arith.constant 192 : index
    %52 = vector.load %arg17[%c0_53, %c0_54, %c192] : memref<1x112x576xbf16, #tpu.memory_space<vmem>>, vector<1x112x64xbf16>
    tpu.vector_store %arg17[%c0_53, %c0_54, %c192], %51 {strides = array<i32>} : memref<1x112x576xbf16, #tpu.memory_space<vmem>>, vector<1x112x64xbf16>,
    %c0_55 = arith.constant 0 : index
    %c11_56 = arith.constant 11 : index
    %c0_57 = arith.constant 0 : index
    %53 = vector.load %arg16[%c0_55, %c11_56, %c0_57] : memref<1x136x64xbf16, #tpu.memory_space<vmem>>, vector<1x112x64xbf16>
    %c0_58 = arith.constant 0 : index
    %c0_59 = arith.constant 0 : index
    %c256 = arith.constant 256 : index
    %54 = vector.load %arg17[%c0_58, %c0_59, %c256] : memref<1x112x576xbf16, #tpu.memory_space<vmem>>, vector<1x112x64xbf16>
    tpu.vector_store %arg17[%c0_58, %c0_59, %c256], %53 {strides = array<i32>} : memref<1x112x576xbf16, #tpu.memory_space<vmem>>, vector<1x112x64xbf16>,
    %c0_60 = arith.constant 0 : index
    %c12 = arith.constant 12 : index
    %c0_61 = arith.constant 0 : index
    %55 = vector.load %arg16[%c0_60, %c12, %c0_61] : memref<1x136x64xbf16, #tpu.memory_space<vmem>>, vector<1x112x64xbf16>
    %c0_62 = arith.constant 0 : index
    %c0_63 = arith.constant 0 : index
    %c320 = arith.constant 320 : index
    %56 = vector.load %arg17[%c0_62, %c0_63, %c320] : memref<1x112x576xbf16, #tpu.memory_space<vmem>>, vector<1x112x64xbf16>
    tpu.vector_store %arg17[%c0_62, %c0_63, %c320], %55 {strides = array<i32>} : memref<1x112x576xbf16, #tpu.memory_space<vmem>>, vector<1x112x64xbf16>,
    %c0_64 = arith.constant 0 : index
    %c20 = arith.constant 20 : index
    %c0_65 = arith.constant 0 : index
    %57 = vector.load %arg16[%c0_64, %c20, %c0_65] : memref<1x136x64xbf16, #tpu.memory_space<vmem>>, vector<1x112x64xbf16>
    %c0_66 = arith.constant 0 : index
    %c0_67 = arith.constant 0 : index
    %c384 = arith.constant 384 : index
    %58 = vector.load %arg17[%c0_66, %c0_67, %c384] : memref<1x112x576xbf16, #tpu.memory_space<vmem>>, vector<1x112x64xbf16>
    tpu.vector_store %arg17[%c0_66, %c0_67, %c384], %57 {strides = array<i32>} : memref<1x112x576xbf16, #tpu.memory_space<vmem>>, vector<1x112x64xbf16>,
    %c0_68 = arith.constant 0 : index
    %c21_69 = arith.constant 21 : index
    %c0_70 = arith.constant 0 : index
    %59 = vector.load %arg16[%c0_68, %c21_69, %c0_70] : memref<1x136x64xbf16, #tpu.memory_space<vmem>>, vector<1x112x64xbf16>
    %c0_71 = arith.constant 0 : index
    %c0_72 = arith.constant 0 : index
    %c448 = arith.constant 448 : index
    %60 = vector.load %arg17[%c0_71, %c0_72, %c448] : memref<1x112x576xbf16, #tpu.memory_space<vmem>>, vector<1x112x64xbf16>
    tpu.vector_store %arg17[%c0_71, %c0_72, %c448], %59 {strides = array<i32>} : memref<1x112x576xbf16, #tpu.memory_space<vmem>>, vector<1x112x64xbf16>,
    %c0_73 = arith.constant 0 : index
    %c22 = arith.constant 22 : index
    %c0_74 = arith.constant 0 : index
    %61 = vector.load %arg16[%c0_73, %c22, %c0_74] : memref<1x136x64xbf16, #tpu.memory_space<vmem>>, vector<1x112x64xbf16>
    %c0_75 = arith.constant 0 : index
    %c0_76 = arith.constant 0 : index
    %c512 = arith.constant 512 : index
    %62 = vector.load %arg17[%c0_75, %c0_76, %c512] : memref<1x112x576xbf16, #tpu.memory_space<vmem>>, vector<1x112x64xbf16>
    tpu.vector_store %arg17[%c0_75, %c0_76, %c512], %61 {strides = array<i32>} : memref<1x112x576xbf16, #tpu.memory_space<vmem>>, vector<1x112x64xbf16>,
    %c0_77 = arith.constant 0 : index
    %c0_78 = arith.constant 0 : index
    %c0_79 = arith.constant 0 : index
    %63 = vector.load %arg17[%c0_77, %c0_78, %c0_79] : memref<1x112x576xbf16, #tpu.memory_space<vmem>>, vector<1x112x576xbf16>
    %64 = vector.shape_cast %63 : vector<1x112x576xbf16> to vector<112x576xbf16>
    %c0_80 = arith.constant 0 : index
    %c0_81 = arith.constant 0 : index
    %65 = vector.load %arg4[%c0_80, %c0_81] : memref<576x128xbf16, #tpu.memory_space<vmem>>, vector<576x128xbf16>
    %cst_82 = arith.constant dense<0.000000e+00> : vector<112x128xf32>
    %66 = tpu.matmul %64, %65, %cst_82 {dimension_numbers = #tpu.dot_dimension_numbers<[1], [0], [0], [1], [0, 0, 1, 1], [], []>} : vector<112x576xbf16>, vector<576x128xbf16>, vector<112x128xf32> -> vector<112x128xf32>
    %c0_83 = arith.constant 0 : index
    %c0_84 = arith.constant 0 : index
    %67 = vector.load %arg5[%c0_83, %c0_84] : memref<1x128xf32, #tpu.memory_space<vmem>>, vector<1x128xf32>
    %68 = vector.broadcast %67 : vector<1x128xf32> to vector<112x128xf32>
    %69 = arith.addf %66, %68 : vector<112x128xf32>
    %cst_85 = arith.constant 0.000000e+00 : f32
    %70 = vector.broadcast %cst_85 : f32 to vector<112x128xf32>
    %71 = arith.maximumf %69, %70 : vector<112x128xf32>
    %c0_86 = arith.constant 0 : index
    %c0_87 = arith.constant 0 : index
    %72 = vector.load %arg18[%c0_86, %c0_87] : memref<112x128xf32, #tpu.memory_space<vmem>>, vector<112x128xf32>
    tpu.vector_store %arg18[%c0_86, %c0_87], %71 {strides = array<i32>} : memref<112x128xf32, #tpu.memory_space<vmem>>, vector<112x128xf32>,
    %c0_88 = arith.constant 0 : index
    %c0_89 = arith.constant 0 : index
    %73 = tpu.strided_load %arg18[%c0_88, %c0_89] {strides = array<i32: 2, 1>} : memref<112x128xf32, #tpu.memory_space<vmem>>, vector<56x128xf32>
    %c1_90 = arith.constant 1 : index
    %c0_91 = arith.constant 0 : index
    %74 = tpu.strided_load %arg18[%c1_90, %c0_91] {strides = array<i32: 2, 1>} : memref<112x128xf32, #tpu.memory_space<vmem>>, vector<56x128xf32>
    %75 = arith.maximumf %73, %74 : vector<56x128xf32>
    %76 = vector.shape_cast %75 : vector<56x128xf32> to vector<1x56x128xf32>
    %77 = vector.extract_strided_slice %76 {offsets = [0, 0, 0], sizes = [1, 51, 128], strides = [1, 1, 1]} : vector<1x56x128xf32> to vector<1x51x128xf32>
    %78 = vector.extract_strided_slice %76 {offsets = [0, 5, 0], sizes = [1, 51, 128], strides = [1, 1, 1]} : vector<1x56x128xf32> to vector<1x51x128xf32>
    %79 = arith.maximumf %77, %78 : vector<1x51x128xf32>
    %80 = vector.extract_strided_slice %79 {offsets = [0, 0, 0], sizes = [1, 4, 128], strides = [1, 1, 1]} : vector<1x51x128xf32> to vector<1x4x128xf32>
    %81 = arith.truncf %80 : vector<1x4x128xf32> to vector<1x4x128xbf16>
    %c0_92 = arith.constant 0 : index
    %c7 = arith.constant 7 : index
    %c0_93 = arith.constant 0 : index
    %82 = vector.load %arg19[%c0_92, %c7, %c0_93] : memref<1x56x128xbf16, #tpu.memory_space<vmem>>, vector<1x4x128xbf16>
    tpu.vector_store %arg19[%c0_92, %c7, %c0_93], %81 {strides = array<i32>} : memref<1x56x128xbf16, #tpu.memory_space<vmem>>, vector<1x4x128xbf16>,
    %83 = vector.extract_strided_slice %79 {offsets = [0, 10, 0], sizes = [1, 4, 128], strides = [1, 1, 1]} : vector<1x51x128xf32> to vector<1x4x128xf32>
    %84 = arith.truncf %83 : vector<1x4x128xf32> to vector<1x4x128xbf16>
    %c0_94 = arith.constant 0 : index
    %c13 = arith.constant 13 : index
    %c0_95 = arith.constant 0 : index
    %85 = vector.load %arg19[%c0_94, %c13, %c0_95] : memref<1x56x128xbf16, #tpu.memory_space<vmem>>, vector<1x4x128xbf16>
    tpu.vector_store %arg19[%c0_94, %c13, %c0_95], %84 {strides = array<i32>} : memref<1x56x128xbf16, #tpu.memory_space<vmem>>, vector<1x4x128xbf16>,
    %86 = vector.extract_strided_slice %79 {offsets = [0, 20, 0], sizes = [1, 4, 128], strides = [1, 1, 1]} : vector<1x51x128xf32> to vector<1x4x128xf32>
    %87 = arith.truncf %86 : vector<1x4x128xf32> to vector<1x4x128xbf16>
    %c0_96 = arith.constant 0 : index
    %c19 = arith.constant 19 : index
    %c0_97 = arith.constant 0 : index
    %88 = vector.load %arg19[%c0_96, %c19, %c0_97] : memref<1x56x128xbf16, #tpu.memory_space<vmem>>, vector<1x4x128xbf16>
    tpu.vector_store %arg19[%c0_96, %c19, %c0_97], %87 {strides = array<i32>} : memref<1x56x128xbf16, #tpu.memory_space<vmem>>, vector<1x4x128xbf16>,
    %89 = vector.extract_strided_slice %79 {offsets = [0, 30, 0], sizes = [1, 4, 128], strides = [1, 1, 1]} : vector<1x51x128xf32> to vector<1x4x128xf32>
    %90 = arith.truncf %89 : vector<1x4x128xf32> to vector<1x4x128xbf16>
    %c0_98 = arith.constant 0 : index
    %c25 = arith.constant 25 : index
    %c0_99 = arith.constant 0 : index
    %91 = vector.load %arg19[%c0_98, %c25, %c0_99] : memref<1x56x128xbf16, #tpu.memory_space<vmem>>, vector<1x4x128xbf16>
    tpu.vector_store %arg19[%c0_98, %c25, %c0_99], %90 {strides = array<i32>} : memref<1x56x128xbf16, #tpu.memory_space<vmem>>, vector<1x4x128xbf16>,
    %c0_100 = arith.constant 0 : index
    %c0_101 = arith.constant 0 : index
    %c0_102 = arith.constant 0 : index
    %92 = vector.load %arg19[%c0_100, %c0_101, %c0_102] : memref<1x56x128xbf16, #tpu.memory_space<vmem>>, vector<1x40x128xbf16>
    %c0_103 = arith.constant 0 : index
    %c0_104 = arith.constant 0 : index
    %c0_105 = arith.constant 0 : index
    %93 = vector.load %arg20[%c0_103, %c0_104, %c0_105] : memref<1x40x1152xbf16, #tpu.memory_space<vmem>>, vector<1x40x128xbf16>
    tpu.vector_store %arg20[%c0_103, %c0_104, %c0_105], %92 {strides = array<i32>} : memref<1x40x1152xbf16, #tpu.memory_space<vmem>>, vector<1x40x128xbf16>,
    %c0_106 = arith.constant 0 : index
    %c1_107 = arith.constant 1 : index
    %c0_108 = arith.constant 0 : index
    %94 = vector.load %arg19[%c0_106, %c1_107, %c0_108] : memref<1x56x128xbf16, #tpu.memory_space<vmem>>, vector<1x40x128xbf16>
    %c0_109 = arith.constant 0 : index
    %c0_110 = arith.constant 0 : index
    %c128_111 = arith.constant 128 : index
    %95 = vector.load %arg20[%c0_109, %c0_110, %c128_111] : memref<1x40x1152xbf16, #tpu.memory_space<vmem>>, vector<1x40x128xbf16>
    tpu.vector_store %arg20[%c0_109, %c0_110, %c128_111], %94 {strides = array<i32>} : memref<1x40x1152xbf16, #tpu.memory_space<vmem>>, vector<1x40x128xbf16>,
    %c0_112 = arith.constant 0 : index
    %c2_113 = arith.constant 2 : index
    %c0_114 = arith.constant 0 : index
    %96 = vector.load %arg19[%c0_112, %c2_113, %c0_114] : memref<1x56x128xbf16, #tpu.memory_space<vmem>>, vector<1x40x128xbf16>
    %c0_115 = arith.constant 0 : index
    %c0_116 = arith.constant 0 : index
    %c256_117 = arith.constant 256 : index
    %97 = vector.load %arg20[%c0_115, %c0_116, %c256_117] : memref<1x40x1152xbf16, #tpu.memory_space<vmem>>, vector<1x40x128xbf16>
    tpu.vector_store %arg20[%c0_115, %c0_116, %c256_117], %96 {strides = array<i32>} : memref<1x40x1152xbf16, #tpu.memory_space<vmem>>, vector<1x40x128xbf16>,
    %c0_118 = arith.constant 0 : index
    %c6 = arith.constant 6 : index
    %c0_119 = arith.constant 0 : index
    %98 = vector.load %arg19[%c0_118, %c6, %c0_119] : memref<1x56x128xbf16, #tpu.memory_space<vmem>>, vector<1x40x128xbf16>
    %c0_120 = arith.constant 0 : index
    %c0_121 = arith.constant 0 : index
    %c384_122 = arith.constant 384 : index
    %99 = vector.load %arg20[%c0_120, %c0_121, %c384_122] : memref<1x40x1152xbf16, #tpu.memory_space<vmem>>, vector<1x40x128xbf16>
    tpu.vector_store %arg20[%c0_120, %c0_121, %c384_122], %98 {strides = array<i32>} : memref<1x40x1152xbf16, #tpu.memory_space<vmem>>, vector<1x40x128xbf16>,
    %c0_123 = arith.constant 0 : index
    %c7_124 = arith.constant 7 : index
    %c0_125 = arith.constant 0 : index
    %100 = vector.load %arg19[%c0_123, %c7_124, %c0_125] : memref<1x56x128xbf16, #tpu.memory_space<vmem>>, vector<1x40x128xbf16>
    %c0_126 = arith.constant 0 : index
    %c0_127 = arith.constant 0 : index
    %c512_128 = arith.constant 512 : index
    %101 = vector.load %arg20[%c0_126, %c0_127, %c512_128] : memref<1x40x1152xbf16, #tpu.memory_space<vmem>>, vector<1x40x128xbf16>
    tpu.vector_store %arg20[%c0_126, %c0_127, %c512_128], %100 {strides = array<i32>} : memref<1x40x1152xbf16, #tpu.memory_space<vmem>>, vector<1x40x128xbf16>,
    %c0_129 = arith.constant 0 : index
    %c8 = arith.constant 8 : index
    %c0_130 = arith.constant 0 : index
    %102 = vector.load %arg19[%c0_129, %c8, %c0_130] : memref<1x56x128xbf16, #tpu.memory_space<vmem>>, vector<1x40x128xbf16>
    %c0_131 = arith.constant 0 : index
    %c0_132 = arith.constant 0 : index
    %c640 = arith.constant 640 : index
    %103 = vector.load %arg20[%c0_131, %c0_132, %c640] : memref<1x40x1152xbf16, #tpu.memory_space<vmem>>, vector<1x40x128xbf16>
    tpu.vector_store %arg20[%c0_131, %c0_132, %c640], %102 {strides = array<i32>} : memref<1x40x1152xbf16, #tpu.memory_space<vmem>>, vector<1x40x128xbf16>,
    %c0_133 = arith.constant 0 : index
    %c12_134 = arith.constant 12 : index
    %c0_135 = arith.constant 0 : index
    %104 = vector.load %arg19[%c0_133, %c12_134, %c0_135] : memref<1x56x128xbf16, #tpu.memory_space<vmem>>, vector<1x40x128xbf16>
    %c0_136 = arith.constant 0 : index
    %c0_137 = arith.constant 0 : index
    %c768 = arith.constant 768 : index
    %105 = vector.load %arg20[%c0_136, %c0_137, %c768] : memref<1x40x1152xbf16, #tpu.memory_space<vmem>>, vector<1x40x128xbf16>
    tpu.vector_store %arg20[%c0_136, %c0_137, %c768], %104 {strides = array<i32>} : memref<1x40x1152xbf16, #tpu.memory_space<vmem>>, vector<1x40x128xbf16>,
    %c0_138 = arith.constant 0 : index
    %c13_139 = arith.constant 13 : index
    %c0_140 = arith.constant 0 : index
    %106 = vector.load %arg19[%c0_138, %c13_139, %c0_140] : memref<1x56x128xbf16, #tpu.memory_space<vmem>>, vector<1x40x128xbf16>
    %c0_141 = arith.constant 0 : index
    %c0_142 = arith.constant 0 : index
    %c896 = arith.constant 896 : index
    %107 = vector.load %arg20[%c0_141, %c0_142, %c896] : memref<1x40x1152xbf16, #tpu.memory_space<vmem>>, vector<1x40x128xbf16>
    tpu.vector_store %arg20[%c0_141, %c0_142, %c896], %106 {strides = array<i32>} : memref<1x40x1152xbf16, #tpu.memory_space<vmem>>, vector<1x40x128xbf16>,
    %c0_143 = arith.constant 0 : index
    %c14 = arith.constant 14 : index
    %c0_144 = arith.constant 0 : index
    %108 = vector.load %arg19[%c0_143, %c14, %c0_144] : memref<1x56x128xbf16, #tpu.memory_space<vmem>>, vector<1x40x128xbf16>
    %c0_145 = arith.constant 0 : index
    %c0_146 = arith.constant 0 : index
    %c1024 = arith.constant 1024 : index
    %109 = vector.load %arg20[%c0_145, %c0_146, %c1024] : memref<1x40x1152xbf16, #tpu.memory_space<vmem>>, vector<1x40x128xbf16>
    tpu.vector_store %arg20[%c0_145, %c0_146, %c1024], %108 {strides = array<i32>} : memref<1x40x1152xbf16, #tpu.memory_space<vmem>>, vector<1x40x128xbf16>,
    %c0_147 = arith.constant 0 : index
    %c0_148 = arith.constant 0 : index
    %c0_149 = arith.constant 0 : index
    %110 = vector.load %arg20[%c0_147, %c0_148, %c0_149] : memref<1x40x1152xbf16, #tpu.memory_space<vmem>>, vector<1x40x1152xbf16>
    %111 = vector.shape_cast %110 : vector<1x40x1152xbf16> to vector<40x1152xbf16>
    %c0_150 = arith.constant 0 : index
    %c0_151 = arith.constant 0 : index
    %112 = vector.load %arg6[%c0_150, %c0_151] : memref<1152x256xbf16, #tpu.memory_space<vmem>>, vector<1152x256xbf16>
    %cst_152 = arith.constant dense<0.000000e+00> : vector<40x256xf32>
    %113 = tpu.matmul %111, %112, %cst_152 {dimension_numbers = #tpu.dot_dimension_numbers<[1], [0], [0], [1], [0, 0, 1, 1], [], []>} : vector<40x1152xbf16>, vector<1152x256xbf16>, vector<40x256xf32> -> vector<40x256xf32>
    %c0_153 = arith.constant 0 : index
    %c0_154 = arith.constant 0 : index
    %114 = vector.load %arg7[%c0_153, %c0_154] : memref<1x256xf32, #tpu.memory_space<vmem>>, vector<1x256xf32>
    %115 = vector.broadcast %114 : vector<1x256xf32> to vector<40x256xf32>
    %116 = arith.addf %113, %115 : vector<40x256xf32>
    %cst_155 = arith.constant 0.000000e+00 : f32
    %117 = vector.broadcast %cst_155 : f32 to vector<40x256xf32>
    %118 = arith.maximumf %116, %117 : vector<40x256xf32>
    %119 = vector.shape_cast %118 : vector<40x256xf32> to vector<1x40x256xf32>
    %120 = vector.extract_strided_slice %119 {offsets = [0, 0, 0], sizes = [1, 1, 256], strides = [1, 1, 1]} : vector<1x40x256xf32> to vector<1x1x256xf32>
    %121 = vector.extract_strided_slice %119 {offsets = [0, 1, 0], sizes = [1, 1, 256], strides = [1, 1, 1]} : vector<1x40x256xf32> to vector<1x1x256xf32>
    %122 = arith.maximumf %120, %121 : vector<1x1x256xf32>
    %123 = vector.extract_strided_slice %119 {offsets = [0, 6, 0], sizes = [1, 1, 256], strides = [1, 1, 1]} : vector<1x40x256xf32> to vector<1x1x256xf32>
    %124 = vector.extract_strided_slice %119 {offsets = [0, 7, 0], sizes = [1, 1, 256], strides = [1, 1, 1]} : vector<1x40x256xf32> to vector<1x1x256xf32>
    %125 = arith.maximumf %123, %124 : vector<1x1x256xf32>
    %126 = arith.maximumf %122, %125 : vector<1x1x256xf32>
    %127 = vector.extract_strided_slice %119 {offsets = [0, 2, 0], sizes = [1, 1, 256], strides = [1, 1, 1]} : vector<1x40x256xf32> to vector<1x1x256xf32>
    %128 = vector.extract_strided_slice %119 {offsets = [0, 3, 0], sizes = [1, 1, 256], strides = [1, 1, 1]} : vector<1x40x256xf32> to vector<1x1x256xf32>
    %129 = arith.maximumf %127, %128 : vector<1x1x256xf32>
    %130 = vector.extract_strided_slice %119 {offsets = [0, 8, 0], sizes = [1, 1, 256], strides = [1, 1, 1]} : vector<1x40x256xf32> to vector<1x1x256xf32>
    %131 = vector.extract_strided_slice %119 {offsets = [0, 9, 0], sizes = [1, 1, 256], strides = [1, 1, 1]} : vector<1x40x256xf32> to vector<1x1x256xf32>
    %132 = arith.maximumf %130, %131 : vector<1x1x256xf32>
    %133 = arith.maximumf %129, %132 : vector<1x1x256xf32>
    %134 = tpu.concatenate %126, %133 in 2 : vector<1x1x256xf32>, vector<1x1x256xf32> -> vector<1x1x512xf32>
    %135 = vector.shape_cast %134 : vector<1x1x512xf32> to vector<1x512xf32>
    %136 = vector.extract_strided_slice %119 {offsets = [0, 12, 0], sizes = [1, 1, 256], strides = [1, 1, 1]} : vector<1x40x256xf32> to vector<1x1x256xf32>
    %137 = vector.extract_strided_slice %119 {offsets = [0, 13, 0], sizes = [1, 1, 256], strides = [1, 1, 1]} : vector<1x40x256xf32> to vector<1x1x256xf32>
    %138 = arith.maximumf %136, %137 : vector<1x1x256xf32>
    %139 = vector.extract_strided_slice %119 {offsets = [0, 18, 0], sizes = [1, 1, 256], strides = [1, 1, 1]} : vector<1x40x256xf32> to vector<1x1x256xf32>
    %140 = vector.extract_strided_slice %119 {offsets = [0, 19, 0], sizes = [1, 1, 256], strides = [1, 1, 1]} : vector<1x40x256xf32> to vector<1x1x256xf32>
    %141 = arith.maximumf %139, %140 : vector<1x1x256xf32>
    %142 = arith.maximumf %138, %141 : vector<1x1x256xf32>
    %143 = vector.extract_strided_slice %119 {offsets = [0, 14, 0], sizes = [1, 1, 256], strides = [1, 1, 1]} : vector<1x40x256xf32> to vector<1x1x256xf32>
    %144 = vector.extract_strided_slice %119 {offsets = [0, 15, 0], sizes = [1, 1, 256], strides = [1, 1, 1]} : vector<1x40x256xf32> to vector<1x1x256xf32>
    %145 = arith.maximumf %143, %144 : vector<1x1x256xf32>
    %146 = vector.extract_strided_slice %119 {offsets = [0, 20, 0], sizes = [1, 1, 256], strides = [1, 1, 1]} : vector<1x40x256xf32> to vector<1x1x256xf32>
    %147 = vector.extract_strided_slice %119 {offsets = [0, 21, 0], sizes = [1, 1, 256], strides = [1, 1, 1]} : vector<1x40x256xf32> to vector<1x1x256xf32>
    %148 = arith.maximumf %146, %147 : vector<1x1x256xf32>
    %149 = arith.maximumf %145, %148 : vector<1x1x256xf32>
    %150 = tpu.concatenate %142, %149 in 2 : vector<1x1x256xf32>, vector<1x1x256xf32> -> vector<1x1x512xf32>
    %151 = vector.shape_cast %150 : vector<1x1x512xf32> to vector<1x512xf32>
    %152 = tpu.concatenate %135, %151 in 0 : vector<1x512xf32>, vector<1x512xf32> -> vector<2x512xf32>
    %153 = arith.truncf %152 : vector<2x512xf32> to vector<2x512xbf16>
    %c0_156 = arith.constant 0 : index
    %c0_157 = arith.constant 0 : index
    %154 = vector.load %arg8[%c0_156, %c0_157] : memref<512x1024xbf16, #tpu.memory_space<vmem>>, vector<512x1024xbf16>
    %cst_158 = arith.constant dense<0.000000e+00> : vector<2x1024xf32>
    %155 = tpu.matmul %153, %154, %cst_158 {dimension_numbers = #tpu.dot_dimension_numbers<[1], [0], [0], [1], [0, 0, 1, 1], [], []>} : vector<2x512xbf16>, vector<512x1024xbf16>, vector<2x1024xf32> -> vector<2x1024xf32>
    %c0_159 = arith.constant 0 : index
    %c0_160 = arith.constant 0 : index
    %156 = vector.load %arg9[%c0_159, %c0_160] : memref<1x1024xf32, #tpu.memory_space<vmem>>, vector<1x1024xf32>
    %157 = vector.broadcast %156 : vector<1x1024xf32> to vector<2x1024xf32>
    %158 = arith.addf %155, %157 : vector<2x1024xf32>
    %cst_161 = arith.constant 0.000000e+00 : f32
    %159 = vector.broadcast %cst_161 : f32 to vector<2x1024xf32>
    %160 = arith.maximumf %158, %159 : vector<2x1024xf32>
    %161 = vector.extract_strided_slice %160 {offsets = [0, 0], sizes = [2, 512], strides = [1, 1]} : vector<2x1024xf32> to vector<2x512xf32>
    %162 = vector.extract_strided_slice %160 {offsets = [0, 512], sizes = [2, 512], strides = [1, 1]} : vector<2x1024xf32> to vector<2x512xf32>
    %163 = tpu.concatenate %161, %162 in 0 : vector<2x512xf32>, vector<2x512xf32> -> vector<4x512xf32>
    %164 = arith.truncf %163 : vector<4x512xf32> to vector<4x512xbf16>
    %c0_162 = arith.constant 0 : index
    %c0_163 = arith.constant 0 : index
    %165 = vector.load %arg10[%c0_162, %c0_163] : memref<512x1024xbf16, #tpu.memory_space<vmem>>, vector<512x1024xbf16>
    %cst_164 = arith.constant dense<0.000000e+00> : vector<4x1024xf32>
    %166 = tpu.matmul %164, %165, %cst_164 {dimension_numbers = #tpu.dot_dimension_numbers<[1], [0], [0], [1], [0, 0, 1, 1], [], []>} : vector<4x512xbf16>, vector<512x1024xbf16>, vector<4x1024xf32> -> vector<4x1024xf32>
    %c0_165 = arith.constant 0 : index
    %c0_166 = arith.constant 0 : index
    %167 = vector.load %arg11[%c0_165, %c0_166] : memref<1x1024xf32, #tpu.memory_space<vmem>>, vector<1x1024xf32>
    %168 = vector.broadcast %167 : vector<1x1024xf32> to vector<4x1024xf32>
    %169 = arith.addf %166, %168 : vector<4x1024xf32>
    %cst_167 = arith.constant 0.000000e+00 : f32
    %170 = vector.broadcast %cst_167 : f32 to vector<4x1024xf32>
    %171 = arith.maximumf %169, %170 : vector<4x1024xf32>
    %172 = vector.extract_strided_slice %171 {offsets = [0, 0], sizes = [4, 512], strides = [1, 1]} : vector<4x1024xf32> to vector<4x512xf32>
    %173 = vector.extract_strided_slice %171 {offsets = [0, 512], sizes = [4, 512], strides = [1, 1]} : vector<4x1024xf32> to vector<4x512xf32>
    %174 = tpu.concatenate %172, %173 in 0 : vector<4x512xf32>, vector<4x512xf32> -> vector<8x512xf32>
    %175 = arith.truncf %174 : vector<8x512xf32> to vector<8x512xbf16>
    %c0_168 = arith.constant 0 : index
    %c0_169 = arith.constant 0 : index
    %176 = vector.load %arg12[%c0_168, %c0_169] : memref<512x32xbf16, #tpu.memory_space<vmem>>, vector<512x32xbf16>
    %cst_170 = arith.constant dense<0.000000e+00> : vector<8x32xf32>
    %177 = tpu.matmul %175, %176, %cst_170 {dimension_numbers = #tpu.dot_dimension_numbers<[1], [0], [0], [1], [0, 0, 1, 1], [], []>} : vector<8x512xbf16>, vector<512x32xbf16>, vector<8x32xf32> -> vector<8x32xf32>
    %c0_171 = arith.constant 0 : index
    %c0_172 = arith.constant 0 : index
    %178 = vector.load %arg13[%c0_171, %c0_172] : memref<1x32xf32, #tpu.memory_space<vmem>>, vector<1x32xf32>
    %179 = vector.broadcast %178 : vector<1x32xf32> to vector<8x32xf32>
    %180 = arith.addf %177, %179 : vector<8x32xf32>
    %cst_173 = arith.constant 5.000000e-01 : f32
    %181 = vector.broadcast %cst_173 : f32 to vector<8x32xf32>
    %182 = arith.mulf %181, %180 : vector<8x32xf32>
    %183 = math.tanh %182 : vector<8x32xf32>
    %cst_174 = arith.constant 1.000000e+00 : f32
    %184 = vector.broadcast %cst_174 : f32 to vector<8x32xf32>
    %185 = arith.addf %183, %184 : vector<8x32xf32>
    %cst_175 = arith.constant 5.000000e-01 : f32
    %186 = vector.broadcast %cst_175 : f32 to vector<8x32xf32>
    %187 = arith.mulf %186, %185 : vector<8x32xf32>
    %c0_176 = arith.constant 0 : index
    %c0_177 = arith.constant 0 : index
    %188 = vector.load %arg14[%c0_176, %c0_177] : memref<8x32xf32, #tpu.memory_space<vmem>>, vector<8x32xf32>
    tpu.vector_store %arg14[%c0_176, %c0_177], %187 {strides = array<i32>} : memref<8x32xf32, #tpu.memory_space<vmem>>, vector<8x32xf32>,
    return
  }
  func.func @transform_0(%arg0: i32) -> (i32, i32, i32) {
    %c0_i32 = arith.constant 0 : i32
    %c0_i32_0 = arith.constant 0 : i32
    %c0_i32_1 = arith.constant 0 : i32
    return %arg0, %c0_i32, %c0_i32_0 : i32, i32, i32
  }
  func.func @transform_1(%arg0: i32) -> (i32, i32) {
    %c0_i32 = arith.constant 0 : i32
    %c0_i32_0 = arith.constant 0 : i32
    %c0_i32_1 = arith.constant 0 : i32
    return %c0_i32, %c0_i32_0 : i32, i32
  }
  func.func @transform_2(%arg0: i32) -> (i32, i32) {
    %c0_i32 = arith.constant 0 : i32
    %c0_i32_0 = arith.constant 0 : i32
    %c0_i32_1 = arith.constant 0 : i32
    return %c0_i32, %c0_i32_0 : i32, i32
  }
  func.func @transform_3(%arg0: i32) -> (i32, i32) {
    %c0_i32 = arith.constant 0 : i32
    %c0_i32_0 = arith.constant 0 : i32
    %c0_i32_1 = arith.constant 0 : i32
    return %c0_i32, %c0_i32_0 : i32, i32
  }
  func.func @transform_4(%arg0: i32) -> (i32, i32) {
    %c0_i32 = arith.constant 0 : i32
    %c0_i32_0 = arith.constant 0 : i32
    %c0_i32_1 = arith.constant 0 : i32
    return %c0_i32, %c0_i32_0 : i32, i32
  }
  func.func @transform_5(%arg0: i32) -> (i32, i32) {
    %c0_i32 = arith.constant 0 : i32
    %c0_i32_0 = arith.constant 0 : i32
    %c0_i32_1 = arith.constant 0 : i32
    return %c0_i32, %c0_i32_0 : i32, i32
  }
  func.func @transform_6(%arg0: i32) -> (i32, i32) {
    %c0_i32 = arith.constant 0 : i32
    %c0_i32_0 = arith.constant 0 : i32
    %c0_i32_1 = arith.constant 0 : i32
    return %c0_i32, %c0_i32_0 : i32, i32
  }
  func.func @transform_7(%arg0: i32) -> (i32, i32) {
    %c0_i32 = arith.constant 0 : i32
    %c0_i32_0 = arith.constant 0 : i32
    %c0_i32_1 = arith.constant 0 : i32
    return %c0_i32, %c0_i32_0 : i32, i32
  }
  func.func @transform_8(%arg0: i32) -> (i32, i32) {
    %c0_i32 = arith.constant 0 : i32
    %c0_i32_0 = arith.constant 0 : i32
    %c0_i32_1 = arith.constant 0 : i32
    return %c0_i32, %c0_i32_0 : i32, i32
  }
  func.func @transform_9(%arg0: i32) -> (i32, i32) {
    %c0_i32 = arith.constant 0 : i32
    %c0_i32_0 = arith.constant 0 : i32
    %c0_i32_1 = arith.constant 0 : i32
    return %c0_i32, %c0_i32_0 : i32, i32
  }
  func.func @transform_10(%arg0: i32) -> (i32, i32) {
    %c0_i32 = arith.constant 0 : i32
    %c0_i32_0 = arith.constant 0 : i32
    %c0_i32_1 = arith.constant 0 : i32
    return %c0_i32, %c0_i32_0 : i32, i32
  }
  func.func @transform_11(%arg0: i32) -> (i32, i32) {
    %c0_i32 = arith.constant 0 : i32
    %c0_i32_0 = arith.constant 0 : i32
    %c0_i32_1 = arith.constant 0 : i32
    return %c0_i32, %c0_i32_0 : i32, i32
  }
  func.func @transform_12(%arg0: i32) -> (i32, i32) {
    %c0_i32 = arith.constant 0 : i32
    %c0_i32_0 = arith.constant 0 : i32
    %c0_i32_1 = arith.constant 0 : i32
    return %c0_i32, %c0_i32_0 : i32, i32
  }
  func.func @transform_13(%arg0: i32) -> (i32, i32) {
    %c0_i32 = arith.constant 0 : i32
    %c0_i32_0 = arith.constant 0 : i32
    return %arg0, %c0_i32 : i32, i32
  }
}

</mosaic_0001>

<llo_original>
// kernel: tile.23
$region0: #{tile.23}
  #allocation0 [shape = 's32[1]{0}', space=sflag, size = 0x4, scoped, tag = 'scoped memory for tile.23']
  %s0 = inlined_call_operand.vmem [shape: f32[64], index: 0, kind: input, shape index: {}]
  %s1 = inlined_call_operand.vmem [shape: f32[16,64], index: 1, kind: output, shape index: {}]
  // Predicated region
  $region2: #{tile.23} parent=0 // pred_check
    _
  $region3: #{tile.23} parent=0 // pred_check_branch
    %3 = sbr.rel (0) target = $region5
  $region4: #{tile.23} parent=0 // pred_region
    _
  $region5: #{tile.23} parent=0 // pred_fallthru
    _
  %v4 = vld [vmem:[%s0] ss:$0 sm:$0xff]
  %5 = vst [vmem:[%s1] sm:$0xff] %v4
  %s6 = scalar_lea.vmem %s1, 8
  %7 = vst [vmem:[%s6] sm:$0xff] %v4

// kernel: tile.24
$region0: #{tile.24}
  %s0 = inlined_call_operand.vmem [shape: f32[16,64], index: 0, kind: input, shape index: {}]
  %s1 = inlined_call_operand.vmem [shape: f32[1,1024], index: 1, kind: output, shape index: {}]
  $region1: #{tile.24} parent=0
    #allocation0 [shape = 'u8[32768]{0}', space=vmem, size = 0x8000, scoped, tag = 'scoped mem for output reshape']
    %v2 = vld [vmem:[%s0] ss:$2 sm:$0xff]
    %vm3 = vcmask 523264
    %4 = vst.msk [vmem:[#allocation0] ss:$8 sm:$0xf] %vm3, %v2
    %5 = vst.msk [vmem:[#allocation0] ss:$8 sm:$0xf0] %vm3, %v2
    %s6 = scalar_lea.vmem %s0, 1
    %v7 = vld [vmem:[%s6] ss:$2 sm:$0xff]
    %8 = vrot.lane.b32.xlu0 %v7, 64
    %v9 = vpop.permute.xlu0 %8
    %vm10 = vcmask 1048064
    %11 = vst.msk [vmem:[#allocation0] ss:$8 sm:$0xf] %vm10, %v9
    %12 = vst.msk [vmem:[#allocation0] ss:$8 sm:$0xf0] %vm10, %v9
    %s14 = sshllo.u32 0, 1
    %v16 = vld [vmem:[#allocation0] sm:%s14]
    %s17 = sshllo.u32 0, 1
    %18 = vst [vmem:[%s1] sm:%s17] %v16
    %s19 = scalar_lea.vmem [#allocation0], 8
    %v20 = vld [vmem:[%s19] sm:%s14]
    %s21 = sshllo.u32 0, 1
    %s22 = scalar_lea.vmem %s1, 1
    %23 = vst [vmem:[%s22] sm:%s21] %v20
    %s24 = scalar_lea.vmem [#allocation0], 16
    %v25 = vld [vmem:[%s24] sm:%s14]
    %s26 = sshllo.u32 0, 1
    %s27 = smul.addr 1, 2
    %s28 = scalar_lea.vmem %s1, %s27
    %29 = vst [vmem:[%s28] sm:%s26] %v25
    %s30 = scalar_lea.vmem [#allocation0], 24
    %v31 = vld [vmem:[%s30] sm:%s14]
    %s32 = sshllo.u32 0, 1
    %s33 = smul.addr 1, 3
    %s34 = scalar_lea.vmem %s1, %s33
    %35 = vst [vmem:[%s34] sm:%s32] %v31
    %s36 = scalar_lea.vmem [#allocation0], 32
    %v37 = vld [vmem:[%s36] sm:%s14]
    %s38 = sshllo.u32 0, 1
    %s39 = smul.addr 1, 4
    %s40 = scalar_lea.vmem %s1, %s39
    %41 = vst [vmem:[%s40] sm:%s38] %v37
    %s42 = scalar_lea.vmem [#allocation0], 40
    %v43 = vld [vmem:[%s42] sm:%s14]
    %s44 = sshllo.u32 0, 1
    %s45 = smul.addr 1, 5
    %s46 = scalar_lea.vmem %s1, %s45
    %47 = vst [vmem:[%s46] sm:%s44] %v43
    %s48 = scalar_lea.vmem [#allocation0], 48
    %v49 = vld [vmem:[%s48] sm:%s14]
    %s50 = sshllo.u32 0, 1
    %s51 = smul.addr 1, 6
    %s52 = scalar_lea.vmem %s1, %s51
    %53 = vst [vmem:[%s52] sm:%s50] %v49
    %s54 = scalar_lea.vmem [#allocation0], 56
    %v55 = vld [vmem:[%s54] sm:%s14]
    %s56 = sshllo.u32 0, 1
    %s57 = smul.addr 1, 7
    %s58 = scalar_lea.vmem %s1, %s57
    %59 = vst [vmem:[%s58] sm:%s56] %v55

// kernel: tile.18
$region0: #{tile.18}
  #allocation0 [shape = 's32[1]{0}', space=sflag, size = 0x4, scoped, tag = 'scoped memory for tile.18']
  %s0 = inlined_call_operand.vmem [shape: f32[128], index: 0, kind: input, shape index: {}]
  %s1 = inlined_call_operand.vmem [shape: f32[8,128], index: 1, kind: output, shape index: {}]
  // Predicated region
  $region2: #{tile.18} parent=0 // pred_check
    _
  $region3: #{tile.18} parent=0 // pred_check_branch
    %3 = sbr.rel (0) target = $region5
  $region4: #{tile.18} parent=0 // pred_region
    _
  $region5: #{tile.18} parent=0 // pred_fallthru
    _
  %v4 = vld [vmem:[%s0] ss:$0 sm:$0xff]
  %5 = vst [vmem:[%s1] sm:$0xff] %v4

// kernel: autoencoder_forward.1
$region0: #{autoencoder_forward.1}
  #allocation0 [shape = 'u32[]', space=smem, size = 0x4, offset = 0x4, fixed_abs, tag = 'smem constant byte address 0x4 - core index']
  #allocation1 [shape = 'u32[144,128]{1,0:T(1,128)}', space=vmem, size = 0x12000, scoped, tag = 'internal scratch']
  #allocation2 [shape = 'f32[256,64]{1,0:T(8,128)}', space=vmem, size = 0x20000, scoped, tag = 'scratch operand']
  #allocation3 [shape = 'bf16[1,136,64]{2,1,0:T(8,128)(2,1)}', space=vmem, size = 0x8800, scoped, tag = 'scratch operand']
  #allocation4 [shape = 'bf16[1,112,576]{2,1,0:T(16,128)(2,1)}', space=vmem, size = 0x23000, scoped, tag = 'scratch operand']
  #allocation5 [shape = 'f32[112,128]{1,0:T(8,128)}', space=vmem, size = 0xe000, scoped, tag = 'scratch operand']
  #allocation6 [shape = 'bf16[1,56,128]{2,1,0:T(8,128)(2,1)}', space=vmem, size = 0x3800, scoped, tag = 'scratch operand']
  #allocation7 [shape = 'bf16[1,40,1152]{2,1,0:T(8,128)(2,1)}', space=vmem, size = 0x16800, scoped, tag = 'scratch operand']
  %s0 = inlined_call_operand.vmem [shape: bf16[2,256,32], index: 0, kind: input, shape index: {}]
  %s1 = inlined_call_operand.vmem [shape: bf16[32,64], index: 1, kind: input, shape index: {}]
  %s2 = inlined_call_operand.vmem [shape: f32[1,64], index: 2, kind: input, shape index: {}]
  %s3 = inlined_call_operand.vmem [shape: bf16[576,128], index: 3, kind: input, shape index: {}]
  %s4 = inlined_call_operand.vmem [shape: f32[1,128], index: 4, kind: input, shape index: {}]
  %s5 = inlined_call_operand.vmem [shape: bf16[1152,256], index: 5, kind: input, shape index: {}]
  %s6 = inlined_call_operand.vmem [shape: f32[1,256], index: 6, kind: input, shape index: {}]
  %s7 = inlined_call_operand.vmem [shape: bf16[512,1024], index: 7, kind: input, shape index: {}]
  %s8 = inlined_call_operand.vmem [shape: f32[1,1024], index: 8, kind: input, shape index: {}]
  %s9 = inlined_call_operand.vmem [shape: bf16[512,1024], index: 9, kind: input, shape index: {}]
  %s10 = inlined_call_operand.vmem [shape: f32[1,1024], index: 10, kind: input, shape index: {}]
  %s11 = inlined_call_operand.vmem [shape: bf16[512,32], index: 11, kind: input, shape index: {}]
  %s12 = inlined_call_operand.vmem [shape: f32[1,32], index: 12, kind: input, shape index: {}]
  %s13 = inlined_call_operand.vmem [shape: f32[16,32], index: 13, kind: output, shape index: {}]
  %s14 = sld [smem:[#allocation0]]
  $region85: #{autoencoder_forward.1} parent=0
    _
  %s16 = ssub.s32 1, %s14
  %s17 = scalar_select 0, %s16, %s14
  loop: start=0, step=1, limit=4
  $region2: #{autoencoder_forward.1} parent=0 // loop_pre_header
    _
  $region3: #{autoencoder_forward.1} parent=0 // loop_header
    %s19 = sphi 0, %s23
    %p20 = scmp.ge.s32.totalorder %s19, 4
    %s29 = sphi 0, %s31
    %s32 = sphi 0, %s29
    %s33 = sphi 0, %s32
    %s49 = sphi 0, %s33
    %s53 = sphi 0, %s53
    %s55 = sphi 0, %s53
    %s56 = sphi 0, %s55
    %s70 = sphi 0, %s56
    %s74 = sphi 0, %s74
    %s76 = sphi 0, %s74
    %s77 = sphi 0, %s76
    %s91 = sphi 0, %s77
    %s95 = sphi 0, %s95
    %s97 = sphi 0, %s95
    %s98 = sphi 0, %s97
    %s112 = sphi 0, %s98
    %s116 = sphi 0, %s116
    %s118 = sphi 0, %s116
    %s119 = sphi 0, %s118
    %s133 = sphi 0, %s119
    %s137 = sphi 0, %s137
    %s139 = sphi 0, %s137
    %s140 = sphi 0, %s139
    %s154 = sphi 0, %s140
    %s158 = sphi 0, %s158
    %s160 = sphi 0, %s158
    %s161 = sphi 0, %s160
    %s175 = sphi 0, %s161
    %s179 = sphi 0, %s179
    %s181 = sphi 0, %s179
    %s182 = sphi 0, %s181
    %s196 = sphi 0, %s182
    %s200 = sphi 0, %s200
    %s202 = sphi 0, %s200
    %s203 = sphi 0, %s202
    %s217 = sphi 0, %s203
    %s221 = sphi 0, %s221
    %s223 = sphi 0, %s221
    %s224 = sphi 0, %s223
    %s238 = sphi 0, %s224
    %s242 = sphi 0, %s242
    %s244 = sphi 0, %s242
    %s245 = sphi 0, %s244
    %s259 = sphi 0, %s245
    %s263 = sphi 0, %s263
    %s265 = sphi 0, %s263
    %s266 = sphi 0, %s265
    %s280 = sphi 0, %s266
    %s284 = sphi 0, %s284
    %s286 = sphi 0, %s284
    %s287 = sphi 0, %s286
    %s301 = sphi 0, %s287
    %s307 = sphi 0, %s309
    %s310 = sphi 0, %s307
    %s311 = sphi 0, %s310
    %s327 = sphi 0, %s311
  $region4: #{autoencoder_forward.1} parent=0 // loop_header_branch
    %22 = sbr.rel (%p20) target = $region8
  $region5: #{autoencoder_forward.1} parent=0 // loop_body
    %s24 = ssub.s32 %s19, 1
    %s25 = ssub.s32 %s19, 2
    %s26 = sadd.s32 %s19, 1
    %s27 = ssub.s32 %s19, %s26
    %p28 = scmp.eq.s32.totalorder %s27, 0
    %s30 = sadd.s32 %s29, 1
    %s31 = scalar_select %p28, %s29, %s30
    %p34 = pneg %p28
    %p35 = scmp.eq.s32.totalorder %s19, 1
    %p36 = por %p34, %p35
    %p37 = scmp.ne.s32.totalorder %s29, %s32
    %p38 = scmp.eq.s32.totalorder %s19, 0
    %p39 = por %p37, %p38
    %p40 = scmp.ne.s32.totalorder %s29, %s32
    %p41 = scmp.eq.s32.totalorder %s24, 1
    %p42 = por %p40, %p41
    %p43 = scmp.ne.s32.totalorder %s32, %s33
    %p44 = scmp.eq.s32.totalorder %s24, 0
    %p45 = por %p43, %p44
    %p46 = scmp.ne.s32.totalorder %s32, %s33
    %p47 = scmp.eq.s32.totalorder %s25, 1
    %p48 = por %p46, %p47
    %p50 = scmp.ne.s32.totalorder %s33, %s49
    %p51 = scmp.eq.s32.totalorder %s25, 0
    %p52 = por %p50, %p51
    %s54 = sadd.s32 %s53, 1
    %p57 = scmp.eq.s32.totalorder %s19, 1
    %p58 = scmp.ne.s32.totalorder %s53, %s55
    %p59 = scmp.eq.s32.totalorder %s19, 0
    %p60 = por %p58, %p59
    %p61 = scmp.ne.s32.totalorder %s53, %s55
    %p62 = scmp.eq.s32.totalorder %s24, 1
    %p63 = por %p61, %p62
    %p64 = scmp.ne.s32.totalorder %s55, %s56
    %p65 = scmp.eq.s32.totalorder %s24, 0
    %p66 = por %p64, %p65
    %p67 = scmp.ne.s32.totalorder %s55, %s56
    %p68 = scmp.eq.s32.totalorder %s25, 1
    %p69 = por %p67, %p68
    %p71 = scmp.ne.s32.totalorder %s56, %s70
    %p72 = scmp.eq.s32.totalorder %s25, 0
    %p73 = por %p71, %p72
    %s75 = sadd.s32 %s74, 1
    %p78 = scmp.eq.s32.totalorder %s19, 1
    %p79 = scmp.ne.s32.totalorder %s74, %s76
    %p80 = scmp.eq.s32.totalorder %s19, 0
    %p81 = por %p79, %p80
    %p82 = scmp.ne.s32.totalorder %s74, %s76
    %p83 = scmp.eq.s32.totalorder %s24, 1
    %p84 = por %p82, %p83
    %p85 = scmp.ne.s32.totalorder %s76, %s77
    %p86 = scmp.eq.s32.totalorder %s24, 0
    %p87 = por %p85, %p86
    %p88 = scmp.ne.s32.totalorder %s76, %s77
    %p89 = scmp.eq.s32.totalorder %s25, 1
    %p90 = por %p88, %p89
    %p92 = scmp.ne.s32.totalorder %s77, %s91
    %p93 = scmp.eq.s32.totalorder %s25, 0
    %p94 = por %p92, %p93
    %s96 = sadd.s32 %s95, 1
    %p99 = scmp.eq.s32.totalorder %s19, 1
    %p100 = scmp.ne.s32.totalorder %s95, %s97
    %p101 = scmp.eq.s32.totalorder %s19, 0
    %p102 = por %p100, %p101
    %p103 = scmp.ne.s32.totalorder %s95, %s97
    %p104 = scmp.eq.s32.totalorder %s24, 1
    %p105 = por %p103, %p104
    %p106 = scmp.ne.s32.totalorder %s97, %s98
    %p107 = scmp.eq.s32.totalorder %s24, 0
    %p108 = por %p106, %p107
    %p109 = scmp.ne.s32.totalorder %s97, %s98
    %p110 = scmp.eq.s32.totalorder %s25, 1
    %p111 = por %p109, %p110
    %p113 = scmp.ne.s32.totalorder %s98, %s112
    %p114 = scmp.eq.s32.totalorder %s25, 0
    %p115 = por %p113, %p114
    %s117 = sadd.s32 %s116, 1
    %p120 = scmp.eq.s32.totalorder %s19, 1
    %p121 = scmp.ne.s32.totalorder %s116, %s118
    %p122 = scmp.eq.s32.totalorder %s19, 0
    %p123 = por %p121, %p122
    %p124 = scmp.ne.s32.totalorder %s116, %s118
    %p125 = scmp.eq.s32.totalorder %s24, 1
    %p126 = por %p124, %p125
    %p127 = scmp.ne.s32.totalorder %s118, %s119
    %p128 = scmp.eq.s32.totalorder %s24, 0
    %p129 = por %p127, %p128
    %p130 = scmp.ne.s32.totalorder %s118, %s119
    %p131 = scmp.eq.s32.totalorder %s25, 1
    %p132 = por %p130, %p131
    %p134 = scmp.ne.s32.totalorder %s119, %s133
    %p135 = scmp.eq.s32.totalorder %s25, 0
    %p136 = por %p134, %p135
    %s138 = sadd.s32 %s137, 1
    %p141 = scmp.eq.s32.totalorder %s19, 1
    %p142 = scmp.ne.s32.totalorder %s137, %s139
    %p143 = scmp.eq.s32.totalorder %s19, 0
    %p144 = por %p142, %p143
    %p145 = scmp.ne.s32.totalorder %s137, %s139
    %p146 = scmp.eq.s32.totalorder %s24, 1
    %p147 = por %p145, %p146
    %p148 = scmp.ne.s32.totalorder %s139, %s140
    %p149 = scmp.eq.s32.totalorder %s24, 0
    %p150 = por %p148, %p149
    %p151 = scmp.ne.s32.totalorder %s139, %s140
    %p152 = scmp.eq.s32.totalorder %s25, 1
    %p153 = por %p151, %p152
    %p155 = scmp.ne.s32.totalorder %s140, %s154
    %p156 = scmp.eq.s32.totalorder %s25, 0
    %p157 = por %p155, %p156
    %s159 = sadd.s32 %s158, 1
    %p162 = scmp.eq.s32.totalorder %s19, 1
    %p163 = scmp.ne.s32.totalorder %s158, %s160
    %p164 = scmp.eq.s32.totalorder %s19, 0
    %p165 = por %p163, %p164
    %p166 = scmp.ne.s32.totalorder %s158, %s160
    %p167 = scmp.eq.s32.totalorder %s24, 1
    %p168 = por %p166, %p167
    %p169 = scmp.ne.s32.totalorder %s160, %s161
    %p170 = scmp.eq.s32.totalorder %s24, 0
    %p171 = por %p169, %p170
    %p172 = scmp.ne.s32.totalorder %s160, %s161
    %p173 = scmp.eq.s32.totalorder %s25, 1
    %p174 = por %p172, %p173
    %p176 = scmp.ne.s32.totalorder %s161, %s175
    %p177 = scmp.eq.s32.totalorder %s25, 0
    %p178 = por %p176, %p177
    %s180 = sadd.s32 %s179, 1
    %p183 = scmp.eq.s32.totalorder %s19, 1
    %p184 = scmp.ne.s32.totalorder %s179, %s181
    %p185 = scmp.eq.s32.totalorder %s19, 0
    %p186 = por %p184, %p185
    %p187 = scmp.ne.s32.totalorder %s179, %s181
    %p188 = scmp.eq.s32.totalorder %s24, 1
    %p189 = por %p187, %p188
    %p190 = scmp.ne.s32.totalorder %s181, %s182
    %p191 = scmp.eq.s32.totalorder %s24, 0
    %p192 = por %p190, %p191
    %p193 = scmp.ne.s32.totalorder %s181, %s182
    %p194 = scmp.eq.s32.totalorder %s25, 1
    %p195 = por %p193, %p194
    %p197 = scmp.ne.s32.totalorder %s182, %s196
    %p198 = scmp.eq.s32.totalorder %s25, 0
    %p199 = por %p197, %p198
    %s201 = sadd.s32 %s200, 1
    %p204 = scmp.eq.s32.totalorder %s19, 1
    %p205 = scmp.ne.s32.totalorder %s200, %s202
    %p206 = scmp.eq.s32.totalorder %s19, 0
    %p207 = por %p205, %p206
    %p208 = scmp.ne.s32.totalorder %s200, %s202
    %p209 = scmp.eq.s32.totalorder %s24, 1
    %p210 = por %p208, %p209
    %p211 = scmp.ne.s32.totalorder %s202, %s203
    %p212 = scmp.eq.s32.totalorder %s24, 0
    %p213 = por %p211, %p212
    %p214 = scmp.ne.s32.totalorder %s202, %s203
    %p215 = scmp.eq.s32.totalorder %s25, 1
    %p216 = por %p214, %p215
    %p218 = scmp.ne.s32.totalorder %s203, %s217
    %p219 = scmp.eq.s32.totalorder %s25, 0
    %p220 = por %p218, %p219
    %s222 = sadd.s32 %s221, 1
    %p225 = scmp.eq.s32.totalorder %s19, 1
    %p226 = scmp.ne.s32.totalorder %s221, %s223
    %p227 = scmp.eq.s32.totalorder %s19, 0
    %p228 = por %p226, %p227
    %p229 = scmp.ne.s32.totalorder %s221, %s223
    %p230 = scmp.eq.s32.totalorder %s24, 1
    %p231 = por %p229, %p230
    %p232 = scmp.ne.s32.totalorder %s223, %s224
    %p233 = scmp.eq.s32.totalorder %s24, 0
    %p234 = por %p232, %p233
    %p235 = scmp.ne.s32.totalorder %s223, %s224
    %p236 = scmp.eq.s32.totalorder %s25, 1
    %p237 = por %p235, %p236
    %p239 = scmp.ne.s32.totalorder %s224, %s238
    %p240 = scmp.eq.s32.totalorder %s25, 0
    %p241 = por %p239, %p240
    %s243 = sadd.s32 %s242, 1
    %p246 = scmp.eq.s32.totalorder %s19, 1
    %p247 = scmp.ne.s32.totalorder %s242, %s244
    %p248 = scmp.eq.s32.totalorder %s19, 0
    %p249 = por %p247, %p248
    %p250 = scmp.ne.s32.totalorder %s242, %s244
    %p251 = scmp.eq.s32.totalorder %s24, 1
    %p252 = por %p250, %p251
    %p253 = scmp.ne.s32.totalorder %s244, %s245
    %p254 = scmp.eq.s32.totalorder %s24, 0
    %p255 = por %p253, %p254
    %p256 = scmp.ne.s32.totalorder %s244, %s245
    %p257 = scmp.eq.s32.totalorder %s25, 1
    %p258 = por %p256, %p257
    %p260 = scmp.ne.s32.totalorder %s245, %s259
    %p261 = scmp.eq.s32.totalorder %s25, 0
    %p262 = por %p260, %p261
    %s264 = sadd.s32 %s263, 1
    %p267 = scmp.eq.s32.totalorder %s19, 1
    %p268 = scmp.ne.s32.totalorder %s263, %s265
    %p269 = scmp.eq.s32.totalorder %s19, 0
    %p270 = por %p268, %p269
    %p271 = scmp.ne.s32.totalorder %s263, %s265
    %p272 = scmp.eq.s32.totalorder %s24, 1
    %p273 = por %p271, %p272
    %p274 = scmp.ne.s32.totalorder %s265, %s266
    %p275 = scmp.eq.s32.totalorder %s24, 0
    %p276 = por %p274, %p275
    %p277 = scmp.ne.s32.totalorder %s265, %s266
    %p278 = scmp.eq.s32.totalorder %s25, 1
    %p279 = por %p277, %p278
    %p281 = scmp.ne.s32.totalorder %s266, %s280
    %p282 = scmp.eq.s32.totalorder %s25, 0
    %p283 = por %p281, %p282
    %s285 = sadd.s32 %s284, 1
    %p288 = scmp.eq.s32.totalorder %s19, 1
    %p289 = scmp.ne.s32.totalorder %s284, %s286
    %p290 = scmp.eq.s32.totalorder %s19, 0
    %p291 = por %p289, %p290
    %p292 = scmp.ne.s32.totalorder %s284, %s286
    %p293 = scmp.eq.s32.totalorder %s24, 1
    %p294 = por %p292, %p293
    %p295 = scmp.ne.s32.totalorder %s286, %s287
    %p296 = scmp.eq.s32.totalorder %s24, 0
    %p297 = por %p295, %p296
    %p298 = scmp.ne.s32.totalorder %s286, %s287
    %p299 = scmp.eq.s32.totalorder %s25, 1
    %p300 = por %p298, %p299
    %p302 = scmp.ne.s32.totalorder %s287, %s301
    %p303 = scmp.eq.s32.totalorder %s25, 0
    %p304 = por %p302, %p303
    %s305 = ssub.s32 %s19, %s26
    %p306 = scmp.eq.s32.totalorder %s305, 0
    %s308 = sadd.s32 %s307, 1
    %s309 = scalar_select %p306, %s307, %s308
    %p312 = pneg %p306
    %p313 = scmp.eq.s32.totalorder %s19, 1
    %p314 = por %p312, %p313
    %p315 = scmp.ne.s32.totalorder %s307, %s310
    %p316 = scmp.eq.s32.totalorder %s19, 0
    %p317 = por %p315, %p316
    %p318 = scmp.ne.s32.totalorder %s307, %s310
    %p319 = scmp.eq.s32.totalorder %s24, 1
    %p320 = por %p318, %p319
    %p321 = scmp.ne.s32.totalorder %s310, %s311
    %p322 = scmp.eq.s32.totalorder %s24, 0
    %p323 = por %p321, %p322
    %p324 = scmp.ne.s32.totalorder %s310, %s311
    %p325 = scmp.eq.s32.totalorder %s25, 1
    %p326 = por %p324, %p325
    %p328 = scmp.ne.s32.totalorder %s311, %s327
    %p329 = scmp.eq.s32.totalorder %s25, 0
    %p330 = por %p328, %p329
    %p331 = scmp.le.s32.totalorder 1, %s19
    %p332 = scmp.lt.s32.totalorder %s19, 3
    %p333 = pnand %p331, %p332
    %p334 = pneg %p333
    // Predicated region
    $region9: #{autoencoder_forward.1} parent=5 // pred_check
      _
    $region10: #{autoencoder_forward.1} parent=5 // pred_check_branch
      %336 = sbr.rel (%p333) target = $region12
    $region11: #{autoencoder_forward.1} parent=5 // pred_region
      %s337 = ssub.s32 %s19, 1
      // Predicated region
      $region13: #{autoencoder_forward.1} parent=11 // pred_check
        %p338 = pneg %p66
      $region14: #{autoencoder_forward.1} parent=11 // pred_check_branch
        %340 = sbr.rel (%p338) target = $region16
      $region15: #{autoencoder_forward.1} parent=11 // pred_region
        _
      $region16: #{autoencoder_forward.1} parent=11 // pred_fallthru
        _
      // Predicated region
      $region17: #{autoencoder_forward.1} parent=11 // pred_check
        %p341 = pneg %p87
      $region18: #{autoencoder_forward.1} parent=11 // pred_check_branch
        %343 = sbr.rel (%p341) target = $region20
      $region19: #{autoencoder_forward.1} parent=11 // pred_region
        _
      $region20: #{autoencoder_forward.1} parent=11 // pred_fallthru
        _
      // Predicated region
      $region21: #{autoencoder_forward.1} parent=11 // pred_check
        %p344 = pneg %p108
      $region22: #{autoencoder_forward.1} parent=11 // pred_check_branch
        %346 = sbr.rel (%p344) target = $region24
      $region23: #{autoencoder_forward.1} parent=11 // pred_region
        _
      $region24: #{autoencoder_forward.1} parent=11 // pred_fallthru
        _
      // Predicated region
      $region25: #{autoencoder_forward.1} parent=11 // pred_check
        %p347 = pneg %p129
      $region26: #{autoencoder_forward.1} parent=11 // pred_check_branch
        %349 = sbr.rel (%p347) target = $region28
      $region27: #{autoencoder_forward.1} parent=11 // pred_region
        _
      $region28: #{autoencoder_forward.1} parent=11 // pred_fallthru
        _
      // Predicated region
      $region29: #{autoencoder_forward.1} parent=11 // pred_check
        %p350 = pneg %p150
      $region30: #{autoencoder_forward.1} parent=11 // pred_check_branch
        %352 = sbr.rel (%p350) target = $region32
      $region31: #{autoencoder_forward.1} parent=11 // pred_region
        _
      $region32: #{autoencoder_forward.1} parent=11 // pred_fallthru
        _
      // Predicated region
      $region33: #{autoencoder_forward.1} parent=11 // pred_check
        %p353 = pneg %p171
      $region34: #{autoencoder_forward.1} parent=11 // pred_check_branch
        %355 = sbr.rel (%p353) target = $region36
      $region35: #{autoencoder_forward.1} parent=11 // pred_region
        _
      $region36: #{autoencoder_forward.1} parent=11 // pred_fallthru
        _
      // Predicated region
      $region37: #{autoencoder_forward.1} parent=11 // pred_check
        %p356 = pneg %p192
      $region38: #{autoencoder_forward.1} parent=11 // pred_check_branch
        %358 = sbr.rel (%p356) target = $region40
      $region39: #{autoencoder_forward.1} parent=11 // pred_region
        _
      $region40: #{autoencoder_forward.1} parent=11 // pred_fallthru
        _
      // Predicated region
      $region41: #{autoencoder_forward.1} parent=11 // pred_check
        %p359 = pneg %p213
      $region42: #{autoencoder_forward.1} parent=11 // pred_check_branch
        %361 = sbr.rel (%p359) target = $region44
      $region43: #{autoencoder_forward.1} parent=11 // pred_region
        _
      $region44: #{autoencoder_forward.1} parent=11 // pred_fallthru
        _
      // Predicated region
      $region45: #{autoencoder_forward.1} parent=11 // pred_check
        %p362 = pneg %p234
      $region46: #{autoencoder_forward.1} parent=11 // pred_check_branch
        %364 = sbr.rel (%p362) target = $region48
      $region47: #{autoencoder_forward.1} parent=11 // pred_region
        _
      $region48: #{autoencoder_forward.1} parent=11 // pred_fallthru
        _
      // Predicated region
      $region49: #{autoencoder_forward.1} parent=11 // pred_check
        %p365 = pneg %p255
      $region50: #{autoencoder_forward.1} parent=11 // pred_check_branch
        %367 = sbr.rel (%p365) target = $region52
      $region51: #{autoencoder_forward.1} parent=11 // pred_region
        _
      $region52: #{autoencoder_forward.1} parent=11 // pred_fallthru
        _
      // Predicated region
      $region53: #{autoencoder_forward.1} parent=11 // pred_check
        %p368 = pneg %p276
      $region54: #{autoencoder_forward.1} parent=11 // pred_check_branch
        %370 = sbr.rel (%p368) target = $region56
      $region55: #{autoencoder_forward.1} parent=11 // pred_region
        _
      $region56: #{autoencoder_forward.1} parent=11 // pred_fallthru
        _
      // Predicated region
      $region57: #{autoencoder_forward.1} parent=11 // pred_check
        %p371 = pneg %p297
      $region58: #{autoencoder_forward.1} parent=11 // pred_check_branch
        %373 = sbr.rel (%p371) target = $region60
      $region59: #{autoencoder_forward.1} parent=11 // pred_region
        _
      $region60: #{autoencoder_forward.1} parent=11 // pred_fallthru
        _
    $region12: #{autoencoder_forward.1} parent=5 // pred_fallthru
      _
    %p374 = scmp.lt.s32.totalorder %s19, 2
    // Predicated region
    $region61: #{autoencoder_forward.1} parent=5 // pred_check
      %p375 = pneg %p374
    $region62: #{autoencoder_forward.1} parent=5 // pred_check_branch
      %377 = sbr.rel (%p375) target = $region64
    $region63: #{autoencoder_forward.1} parent=5 // pred_region
      // Predicated region
      $region65: #{autoencoder_forward.1} parent=63 // pred_check
        %p378 = pneg %p39
      $region66: #{autoencoder_forward.1} parent=63 // pred_check_branch
        %380 = sbr.rel (%p378) target = $region68
      $region67: #{autoencoder_forward.1} parent=63 // pred_region
        %p381 = scmp.lt.s32.totalorder %s19, 1
        %s382 = scalar_select %p381, %s19, 1
        %s383 = smul.addr %s382, 32
        %s384 = smul.addr %s383, 4
        %s385 = scalar_lea.vmem %s0, %s384
      $region68: #{autoencoder_forward.1} parent=63 // pred_fallthru
        _
    $region64: #{autoencoder_forward.1} parent=5 // pred_fallthru
      _
    %p386 = scmp.le.s32.totalorder 1, %s19
    %p387 = scmp.lt.s32.totalorder %s19, 3
    %p388 = pnand %p386, %p387
    %p389 = pneg %p388
    // Predicated region
    $region69: #{autoencoder_forward.1} parent=5 // pred_check
      _
    $region70: #{autoencoder_forward.1} parent=5 // pred_check_branch
      %391 = sbr.rel (%p388) target = $region72
    $region71: #{autoencoder_forward.1} parent=5 // pred_region
      %s392 = ssub.s32 %s19, 1
      %p393 = scmp.lt.s32.totalorder %s24, 1
      %s394 = scalar_select %p393, %s24, 1
      %s395 = smul.addr %s394, 32
      %s396 = smul.addr %s395, 4
      %s397 = scalar_lea.vmem %s0, %s396
      %p398 = pneg %p45
      %p399 = pneg %p42
      %p400 = pneg %p66
      %p401 = pneg %p63
      %p402 = pneg %p87
      %p403 = pneg %p84
      %p404 = pneg %p108
      %p405 = pneg %p105
      %p406 = pneg %p129
      %p407 = pneg %p126
      %p408 = pneg %p150
      %p409 = pneg %p147
      %p410 = pneg %p171
      %p411 = pneg %p168
      %p412 = pneg %p192
      %p413 = pneg %p189
      %p414 = pneg %p213
      %p415 = pneg %p210
      %p416 = pneg %p234
      %p417 = pneg %p231
      %p418 = pneg %p255
      %p419 = pneg %p252
      %p420 = pneg %p276
      %p421 = pneg %p273
      %p422 = pneg %p297
      %p423 = pneg %p294
      %p424 = pneg %p323
      %p425 = pneg %p320
      %p426 = scmp.lt.s32.totalorder %s24, 1
      %s427 = scalar_select %p426, %s24, 1
      %s428 = smul.addr %s427, 8
      %s429 = scalar_lea.vmem %s13, %s428
      %p430 = scmp.lt.s32.totalorder %s24, 1
      %s431 = scalar_select %p430, %s24, 1
      %s432 = smul.addr %s431, 32
      %s433 = smul.addr %s432, 4
      %s434 = scalar_lea.vmem %s0, %s433
      %p435 = scmp.lt.s32.totalorder %s24, 1
      %s436 = scalar_select %p435, %s24, 1
      %s437 = smul.addr %s436, 8
      %s438 = scalar_lea.vmem %s13, %s437
      %vm440 = vcmask 519168
      %441 = vst.msk [vmem:[#allocation3] sm:$0xf] %vm440, 0
      %442 = vst.msk [vmem:[#allocation3 + $0x4] sm:$0xf] %vm440, 0
      %443 = vst.msk [vmem:[#allocation3 + $0x8] sm:$0xf] %vm440, 0
      %444 = vst.msk [vmem:[#allocation3 + $0xc] sm:$0xf] %vm440, 0
      %445 = vst.msk [vmem:[#allocation3 + $0x10] sm:$0xf] %vm440, 0
      %446 = vst.msk [vmem:[#allocation3 + $0x14] sm:$0xf] %vm440, 0
      %447 = vst.msk [vmem:[#allocation3 + $0x18] sm:$0xf] %vm440, 0
      %448 = vst.msk [vmem:[#allocation3 + $0x1c] sm:$0xf] %vm440, 0
      %449 = vst.msk [vmem:[#allocation3 + $0x20] sm:$0xf] %vm440, 0
      %450 = vst.msk [vmem:[#allocation3 + $0x24] sm:$0xf] %vm440, 0
      %451 = vst.msk [vmem:[#allocation3 + $0x28] sm:$0xf] %vm440, 0
      %452 = vst.msk [vmem:[#allocation3 + $0x2c] sm:$0xf] %vm440, 0
      %453 = vst.msk [vmem:[#allocation3 + $0x30] sm:$0xf] %vm440, 0
      %454 = vst.msk [vmem:[#allocation3 + $0x34] sm:$0xf] %vm440, 0
      %455 = vst.msk [vmem:[#allocation3 + $0x38] sm:$0xf] %vm440, 0
      %456 = vst.msk [vmem:[#allocation3 + $0x3c] sm:$0xf] %vm440, 0
      %457 = vst.msk [vmem:[#allocation3 + $0x40] sm:$0xf] %vm440, 0
      %458 = vst [vmem:[#allocation6] sm:$0xf] 0
      %459 = vst [vmem:[#allocation6 + $0x4] sm:$0xf] 0
      %460 = vst [vmem:[#allocation6 + $0x8] sm:$0xf] 0
      %461 = vst [vmem:[#allocation6 + $0xc] sm:$0xf] 0
      %462 = vst [vmem:[#allocation6 + $0x10] sm:$0xf] 0
      %463 = vst [vmem:[#allocation6 + $0x14] sm:$0xf] 0
      %464 = vst [vmem:[#allocation6 + $0x18] sm:$0xf] 0
      %v465 = vld [vmem:[%s434] sm:$0xf]
      %v466 = vld [vmem:[%s434 + $0x4] sm:$0xf]
      %v467 = vld [vmem:[%s434 + $0x8] sm:$0xf]
      %v468 = vld [vmem:[%s434 + $0xc] sm:$0xf]
      %v469 = vld [vmem:[%s434 + $0x10] sm:$0xf]
      %v470 = vld [vmem:[%s434 + $0x14] sm:$0xf]
      %v471 = vld [vmem:[%s434 + $0x18] sm:$0xf]
      %v472 = vld [vmem:[%s434 + $0x1c] sm:$0xf]
      %v473 = vld [vmem:[%s434 + $0x20] sm:$0xf]
      %v474 = vld [vmem:[%s434 + $0x24] sm:$0xf]
      %v475 = vld [vmem:[%s434 + $0x28] sm:$0xf]
      %v476 = vld [vmem:[%s434 + $0x2c] sm:$0xf]
      %v477 = vld [vmem:[%s434 + $0x30] sm:$0xf]
      %v478 = vld [vmem:[%s434 + $0x34] sm:$0xf]
      %v479 = vld [vmem:[%s434 + $0x38] sm:$0xf]
      %v480 = vld [vmem:[%s434 + $0x3c] sm:$0xf]
      %v481 = vld [vmem:[%s434 + $0x40] sm:$0xf]
      %v482 = vld [vmem:[%s434 + $0x44] sm:$0xf]
      %v483 = vld [vmem:[%s434 + $0x48] sm:$0xf]
      %v484 = vld [vmem:[%s434 + $0x4c] sm:$0xf]
      %v485 = vld [vmem:[%s434 + $0x50] sm:$0xf]
      %v486 = vld [vmem:[%s434 + $0x54] sm:$0xf]
      %v487 = vld [vmem:[%s434 + $0x58] sm:$0xf]
      %v488 = vld [vmem:[%s434 + $0x5c] sm:$0xf]
      %v489 = vld [vmem:[%s434 + $0x60] sm:$0xf]
      %v490 = vld [vmem:[%s434 + $0x64] sm:$0xf]
      %v491 = vld [vmem:[%s434 + $0x68] sm:$0xf]
      %v492 = vld [vmem:[%s434 + $0x6c] sm:$0xf]
      %v493 = vld [vmem:[%s434 + $0x70] sm:$0xf]
      %v494 = vld [vmem:[%s434 + $0x74] sm:$0xf]
      %v495 = vld [vmem:[%s434 + $0x78] sm:$0xf]
      %v496 = vld [vmem:[%s434 + $0x7c] sm:$0xf]
      %v497 = vld [vmem:[%s1] sm:$0xf]
      %v498 = vld [vmem:[%s1 + $0x4] sm:$0xf]
      %v499 = vld [vmem:[%s1 + $0x8] sm:$0xf]
      %v500 = vld [vmem:[%s1 + $0xc] sm:$0xf]
      %v501 = vld [vmem:[%s2] sm:$0x1]
      %v503 = vlaneseq
      %v504 = vshrl.u32 %v503, 7
      %v505 = vsub.s32 0, %v504
      %v506 = vrot.slane %v501, %v505
      %v540 = vunpack.c.l.b16 %v465
      %v541 = vunpack.c.l.b16 %v466
      %v542 = vunpack.c.l.b16 %v467
      %v543 = vunpack.c.l.b16 %v468
      %v544 = vunpack.c.l.b16 %v469
      %v545 = vunpack.c.l.b16 %v470
      %v546 = vunpack.c.l.b16 %v471
      %v547 = vunpack.c.l.b16 %v472
      %v548 = vunpack.c.l.b16 %v473
      %v549 = vunpack.c.l.b16 %v474
      %v550 = vunpack.c.l.b16 %v475
      %v551 = vunpack.c.l.b16 %v476
      %v552 = vunpack.c.l.b16 %v477
      %v553 = vunpack.c.l.b16 %v478
      %v554 = vunpack.c.l.b16 %v479
      %v555 = vunpack.c.l.b16 %v480
      %v556 = vunpack.c.l.b16 %v481
      %v557 = vunpack.c.l.b16 %v482
      %v558 = vunpack.c.l.b16 %v483
      %v559 = vunpack.c.l.b16 %v484
      %v560 = vunpack.c.l.b16 %v485
      %v561 = vunpack.c.l.b16 %v486
      %v562 = vunpack.c.l.b16 %v487
      %v563 = vunpack.c.l.b16 %v488
      %v564 = vunpack.c.l.b16 %v489
      %v565 = vunpack.c.l.b16 %v490
      %v566 = vunpack.c.l.b16 %v491
      %v567 = vunpack.c.l.b16 %v492
      %v568 = vunpack.c.l.b16 %v493
      %v569 = vunpack.c.l.b16 %v494
      %v570 = vunpack.c.l.b16 %v495
      %v571 = vunpack.c.l.b16 %v496
      %v572 = vpack.c.b16 %v541, %v540
      %v573 = vpack.c.b16 %v543, %v542
      %v574 = vpack.c.b16 %v545, %v544
      %v575 = vpack.c.b16 %v547, %v546
      %v576 = vpack.c.b16 %v549, %v548
      %v577 = vpack.c.b16 %v551, %v550
      %v578 = vpack.c.b16 %v553, %v552
      %v579 = vpack.c.b16 %v555, %v554
      %v580 = vpack.c.b16 %v557, %v556
      %v581 = vpack.c.b16 %v559, %v558
      %v582 = vpack.c.b16 %v561, %v560
      %v583 = vpack.c.b16 %v563, %v562
      %v584 = vpack.c.b16 %v565, %v564
      %v585 = vpack.c.b16 %v567, %v566
      %v586 = vpack.c.b16 %v569, %v568
      %v587 = vpack.c.b16 %v571, %v570
      %v592 = vunpack.c.l.b16 %v497
      %v593 = vunpack.c.l.b16 %v498
      %v594 = vunpack.c.l.b16 %v499
      %v595 = vunpack.c.l.b16 %v500
      %v596 = vpack.c.b16 %v593, %v592
      %v597 = vpack.c.b16 %v595, %v594
      %vm600 = vcmask 261120
      %v602 = vsel %vm600, %v572, 0
      %v605 = vsel %vm600, %v573, 0
      %v608 = vsel %vm600, %v574, 0
      %v611 = vsel %vm600, %v575, 0
      %v614 = vsel %vm600, %v576, 0
      %v617 = vsel %vm600, %v577, 0
      %v620 = vsel %vm600, %v578, 0
      %v623 = vsel %vm600, %v579, 0
      %v626 = vsel %vm600, %v580, 0
      %v629 = vsel %vm600, %v581, 0
      %v632 = vsel %vm600, %v582, 0
      %v635 = vsel %vm600, %v583, 0
      %v638 = vsel %vm600, %v584, 0
      %v641 = vsel %vm600, %v585, 0
      %v644 = vsel %vm600, %v586, 0
      %v647 = vsel %vm600, %v587, 0
      %649 = vmatprep.subr.bf16.mxu0 0
      %650 = vmatpush1.bf16.msra.mxu0 %v596
      %651 = vmatprep.subr.bf16.mxu0 0
      %652 = vmatpush1.bf16.msra.mxu0 %v597
      %653 = vmatprep.subr.bf16.mxu0 0
      %654 = vmatpush1.bf16.msra.mxu0 0
      %655 = vmatprep.subr.bf16.mxu0 0
      %656 = vmatpush1.bf16.msra.mxu0 0
      %657 = vmatprep.subr.bf16.mxu0 0
      %658 = vmatpush1.bf16.msra.mxu0 0
      %659 = vmatprep.subr.bf16.mxu0 0
      %660 = vmatpush1.bf16.msra.mxu0 0
      %661 = vmatprep.subr.bf16.mxu0 0
      %662 = vmatpush1.bf16.msra.mxu0 0
      %663 = vmatprep.subr.bf16.mxu0 0
      %664 = vmatpush1.bf16.msra.mxu0 0
      %665 = vmatprep.subr.bf16.mxu0 0
      %666 = vmatpush1.bf16.msra.mxu0 0
      %667 = vmatprep.subr.bf16.mxu0 0
      %668 = vmatpush1.bf16.msra.mxu0 0
      %669 = vmatprep.subr.bf16.mxu0 0
      %670 = vmatpush1.bf16.msra.mxu0 0
      %671 = vmatprep.subr.bf16.mxu0 0
      %672 = vmatpush1.bf16.msra.mxu0 0
      %673 = vmatprep.subr.bf16.mxu0 0
      %674 = vmatpush1.bf16.msra.mxu0 0
      %675 = vmatprep.subr.bf16.mxu0 0
      %676 = vmatpush1.bf16.msra.mxu0 0
      %677 = vmatprep.subr.bf16.mxu0 0
      %678 = vmatpush1.bf16.msra.mxu0 0
      %679 = vmatprep.subr.bf16.mxu0 0
      %680 = vmatpush1.bf16.msra.mxu0 0
      %681 = vmatprep.mubr.bf16.mxu0 0
      %682 = vmatmul.mubr.bf16.gmra.mrb[0].mxu0 %v602
      %v683 = vpop.f32.mrb[0].mxu0
      %v684 = vadd.f32 %v506, %v683
      %v685 = vpop.f32.mrb[0].mxu0
      %v686 = vpop.f32.mrb[0].mxu0
      %v687 = vadd.f32 %v506, %v686
      %v688 = vpop.f32.mrb[0].mxu0
      %689 = vmatprep.mubr.bf16.mxu0 0
      %690 = vmatmul.mubr.bf16.gmra.mrb[0].mxu0 %v605
      %v691 = vpop.f32.mrb[0].mxu0
      %v692 = vadd.f32 %v506, %v691
      %v693 = vpop.f32.mrb[0].mxu0
      %v694 = vpop.f32.mrb[0].mxu0
      %v695 = vadd.f32 %v506, %v694
      %v696 = vpop.f32.mrb[0].mxu0
      %697 = vmatprep.mubr.bf16.mxu0 0
      %698 = vmatmul.mubr.bf16.gmra.mrb[0].mxu0 %v608
      %v699 = vpop.f32.mrb[0].mxu0
      %v700 = vadd.f32 %v506, %v699
      %v701 = vpop.f32.mrb[0].mxu0
      %v702 = vpop.f32.mrb[0].mxu0
      %v703 = vadd.f32 %v506, %v702
      %v704 = vpop.f32.mrb[0].mxu0
      %705 = vmatprep.mubr.bf16.mxu0 0
      %706 = vmatmul.mubr.bf16.gmra.mrb[0].mxu0 %v611
      %v707 = vpop.f32.mrb[0].mxu0
      %v708 = vadd.f32 %v506, %v707
      %v709 = vpop.f32.mrb[0].mxu0
      %v710 = vpop.f32.mrb[0].mxu0
      %v711 = vadd.f32 %v506, %v710
      %v712 = vpop.f32.mrb[0].mxu0
      %713 = vmatprep.mubr.bf16.mxu0 0
      %714 = vmatmul.mubr.bf16.gmra.mrb[0].mxu0 %v614
      %v715 = vpop.f32.mrb[0].mxu0
      %v716 = vadd.f32 %v506, %v715
      %v717 = vpop.f32.mrb[0].mxu0
      %v718 = vpop.f32.mrb[0].mxu0
      %v719 = vadd.f32 %v506, %v718
      %v720 = vpop.f32.mrb[0].mxu0
      %721 = vmatprep.mubr.bf16.mxu0 0
      %722 = vmatmul.mubr.bf16.gmra.mrb[0].mxu0 %v617
      %v723 = vpop.f32.mrb[0].mxu0
      %v724 = vadd.f32 %v506, %v723
      %v725 = vpop.f32.mrb[0].mxu0
      %v726 = vpop.f32.mrb[0].mxu0
      %v727 = vadd.f32 %v506, %v726
      %v728 = vpop.f32.mrb[0].mxu0
      %729 = vmatprep.mubr.bf16.mxu0 0
      %730 = vmatmul.mubr.bf16.gmra.mrb[0].mxu0 %v620
      %v731 = vpop.f32.mrb[0].mxu0
      %v732 = vadd.f32 %v506, %v731
      %v733 = vpop.f32.mrb[0].mxu0
      %v734 = vpop.f32.mrb[0].mxu0
      %v735 = vadd.f32 %v506, %v734
      %v736 = vpop.f32.mrb[0].mxu0
      %737 = vmatprep.mubr.bf16.mxu0 0
      %738 = vmatmul.mubr.bf16.gmra.mrb[0].mxu0 %v623
      %v739 = vpop.f32.mrb[0].mxu0
      %v740 = vadd.f32 %v506, %v739
      %v741 = vpop.f32.mrb[0].mxu0
      %v742 = vpop.f32.mrb[0].mxu0
      %v743 = vadd.f32 %v506, %v742
      %v744 = vpop.f32.mrb[0].mxu0
      %745 = vmatprep.mubr.bf16.mxu0 0
      %746 = vmatmul.mubr.bf16.gmra.mrb[0].mxu0 %v626
      %v747 = vpop.f32.mrb[0].mxu0
      %v748 = vadd.f32 %v506, %v747
      %v749 = vpop.f32.mrb[0].mxu0
      %v750 = vpop.f32.mrb[0].mxu0
      %v751 = vadd.f32 %v506, %v750
      %v752 = vpop.f32.mrb[0].mxu0
      %753 = vmatprep.mubr.bf16.mxu0 0
      %754 = vmatmul.mubr.bf16.gmra.mrb[0].mxu0 %v629
      %v755 = vpop.f32.mrb[0].mxu0
      %v756 = vadd.f32 %v506, %v755
      %v757 = vpop.f32.mrb[0].mxu0
      %v758 = vpop.f32.mrb[0].mxu0
      %v759 = vadd.f32 %v506, %v758
      %v760 = vpop.f32.mrb[0].mxu0
      %761 = vmatprep.mubr.bf16.mxu0 0
      %762 = vmatmul.mubr.bf16.gmra.mrb[0].mxu0 %v632
      %v763 = vpop.f32.mrb[0].mxu0
      %v764 = vadd.f32 %v506, %v763
      %v765 = vpop.f32.mrb[0].mxu0
      %v766 = vpop.f32.mrb[0].mxu0
      %v767 = vadd.f32 %v506, %v766
      %v768 = vpop.f32.mrb[0].mxu0
      %769 = vmatprep.mubr.bf16.mxu0 0
      %770 = vmatmul.mubr.bf16.gmra.mrb[0].mxu0 %v635
      %v771 = vpop.f32.mrb[0].mxu0
      %v772 = vadd.f32 %v506, %v771
      %v773 = vpop.f32.mrb[0].mxu0
      %v774 = vpop.f32.mrb[0].mxu0
      %v775 = vadd.f32 %v506, %v774
      %v776 = vpop.f32.mrb[0].mxu0
      %777 = vmatprep.mubr.bf16.mxu0 0
      %778 = vmatmul.mubr.bf16.gmra.mrb[0].mxu0 %v638
      %v779 = vpop.f32.mrb[0].mxu0
      %v780 = vadd.f32 %v506, %v779
      %v781 = vpop.f32.mrb[0].mxu0
      %v782 = vpop.f32.mrb[0].mxu0
      %v783 = vadd.f32 %v506, %v782
      %v784 = vpop.f32.mrb[0].mxu0
      %785 = vmatprep.mubr.bf16.mxu0 0
      %786 = vmatmul.mubr.bf16.gmra.mrb[0].mxu0 %v641
      %v787 = vpop.f32.mrb[0].mxu0
      %v788 = vadd.f32 %v506, %v787
      %v789 = vpop.f32.mrb[0].mxu0
      %v790 = vpop.f32.mrb[0].mxu0
      %v791 = vadd.f32 %v506, %v790
      %v792 = vpop.f32.mrb[0].mxu0
      %793 = vmatprep.mubr.bf16.mxu0 0
      %794 = vmatmul.mubr.bf16.gmra.mrb[0].mxu0 %v644
      %v795 = vpop.f32.mrb[0].mxu0
      %v796 = vadd.f32 %v506, %v795
      %v797 = vpop.f32.mrb[0].mxu0
      %v798 = vpop.f32.mrb[0].mxu0
      %v799 = vadd.f32 %v506, %v798
      %v800 = vpop.f32.mrb[0].mxu0
      %801 = vmatprep.mubr.bf16.mxu0 0
      %802 = vmatmul.mubr.bf16.gmra.mrb[0].mxu0 %v647
      %v803 = vpop.f32.mrb[0].mxu0
      %v804 = vadd.f32 %v506, %v803
      %v805 = vpop.f32.mrb[0].mxu0
      %v806 = vpop.f32.mrb[0].mxu0
      %v807 = vadd.f32 %v506, %v806
      %v808 = vpop.f32.mrb[0].mxu0
      %809 = vdwg.mxu0
      %v810 = vmax.f32 %v684, 0.0
      %v811 = vmax.f32 %v687, 0.0
      %v812 = vmax.f32 %v692, 0.0
      %v813 = vmax.f32 %v695, 0.0
      %v814 = vmax.f32 %v700, 0.0
      %v815 = vmax.f32 %v703, 0.0
      %v816 = vmax.f32 %v708, 0.0
      %v817 = vmax.f32 %v711, 0.0
      %v818 = vmax.f32 %v716, 0.0
      %v819 = vmax.f32 %v719, 0.0
      %v820 = vmax.f32 %v724, 0.0
      %v821 = vmax.f32 %v727, 0.0
      %v822 = vmax.f32 %v732, 0.0
      %v823 = vmax.f32 %v735, 0.0
      %v824 = vmax.f32 %v740, 0.0
      %v825 = vmax.f32 %v743, 0.0
      %v826 = vmax.f32 %v748, 0.0
      %v827 = vmax.f32 %v751, 0.0
      %v828 = vmax.f32 %v756, 0.0
      %v829 = vmax.f32 %v759, 0.0
      %v830 = vmax.f32 %v764, 0.0
      %v831 = vmax.f32 %v767, 0.0
      %v832 = vmax.f32 %v772, 0.0
      %v833 = vmax.f32 %v775, 0.0
      %v834 = vmax.f32 %v780, 0.0
      %v835 = vmax.f32 %v783, 0.0
      %v836 = vmax.f32 %v788, 0.0
      %v837 = vmax.f32 %v791, 0.0
      %v838 = vmax.f32 %v796, 0.0
      %v839 = vmax.f32 %v799, 0.0
      %v840 = vmax.f32 %v804, 0.0
      %v841 = vmax.f32 %v807, 0.0
      %vm842 = vcmask 523264
      %843 = vst.msk [vmem:[#allocation2] sm:$0xff] %vm842, %v810
      %844 = vst.msk [vmem:[#allocation2 + $0x8] sm:$0xff] %vm842, %v811
      %845 = vst.msk [vmem:[#allocation2 + $0x10] sm:$0xff] %vm842, %v812
      %846 = vst.msk [vmem:[#allocation2 + $0x18] sm:$0xff] %vm842, %v813
      %847 = vst.msk [vmem:[#allocation2 + $0x20] sm:$0xff] %vm842, %v814
      %848 = vst.msk [vmem:[#allocation2 + $0x28] sm:$0xff] %vm842, %v815
      %849 = vst.msk [vmem:[#allocation2 + $0x30] sm:$0xff] %vm842, %v816
      %850 = vst.msk [vmem:[#allocation2 + $0x38] sm:$0xff] %vm842, %v817
      %851 = vst.msk [vmem:[#allocation2 + $0x40] sm:$0xff] %vm842, %v818
      %852 = vst.msk [vmem:[#allocation2 + $0x48] sm:$0xff] %vm842, %v819
      %853 = vst.msk [vmem:[#allocation2 + $0x50] sm:$0xff] %vm842, %v820
      %854 = vst.msk [vmem:[#allocation2 + $0x58] sm:$0xff] %vm842, %v821
      %855 = vst.msk [vmem:[#allocation2 + $0x60] sm:$0xff] %vm842, %v822
      %856 = vst.msk [vmem:[#allocation2 + $0x68] sm:$0xff] %vm842, %v823
      %857 = vst.msk [vmem:[#allocation2 + $0x70] sm:$0xff] %vm842, %v824
      %858 = vst.msk [vmem:[#allocation2 + $0x78] sm:$0xff] %vm842, %v825
      %859 = vst.msk [vmem:[#allocation2 + $0x80] sm:$0xff] %vm842, %v826
      %860 = vst.msk [vmem:[#allocation2 + $0x88] sm:$0xff] %vm842, %v827
      %861 = vst.msk [vmem:[#allocation2 + $0x90] sm:$0xff] %vm842, %v828
      %862 = vst.msk [vmem:[#allocation2 + $0x98] sm:$0xff] %vm842, %v829
      %863 = vst.msk [vmem:[#allocation2 + $0xa0] sm:$0xff] %vm842, %v830
      %864 = vst.msk [vmem:[#allocation2 + $0xa8] sm:$0xff] %vm842, %v831
      %865 = vst.msk [vmem:[#allocation2 + $0xb0] sm:$0xff] %vm842, %v832
      %866 = vst.msk [vmem:[#allocation2 + $0xb8] sm:$0xff] %vm842, %v833
      %867 = vst.msk [vmem:[#allocation2 + $0xc0] sm:$0xff] %vm842, %v834
      %868 = vst.msk [vmem:[#allocation2 + $0xc8] sm:$0xff] %vm842, %v835
      %869 = vst.msk [vmem:[#allocation2 + $0xd0] sm:$0xff] %vm842, %v836
      %870 = vst.msk [vmem:[#allocation2 + $0xd8] sm:$0xff] %vm842, %v837
      %871 = vst.msk [vmem:[#allocation2 + $0xe0] sm:$0xff] %vm842, %v838
      %872 = vst.msk [vmem:[#allocation2 + $0xe8] sm:$0xff] %vm842, %v839
      %873 = vst.msk [vmem:[#allocation2 + $0xf0] sm:$0xff] %vm842, %v840
      %874 = vst.msk [vmem:[#allocation2 + $0xf8] sm:$0xff] %vm842, %v841
      %v875 = vld [vmem:[#allocation2] ss:$2 sm:$0xff]
      %s876 = scalar_lea.vmem [#allocation2], 16
      %v877 = vld [vmem:[%s876] ss:$2 sm:$0xff]
      %s878 = scalar_lea.vmem [#allocation2], 32
      %v879 = vld [vmem:[%s878] ss:$2 sm:$0xff]
      %s880 = scalar_lea.vmem [#allocation2], 48
      %v881 = vld [vmem:[%s880] ss:$2 sm:$0xff]
      %s882 = scalar_lea.vmem [#allocation2], 64
      %v883 = vld [vmem:[%s882] ss:$2 sm:$0xff]
      %s884 = scalar_lea.vmem [#allocation2], 80
      %v885 = vld [vmem:[%s884] ss:$2 sm:$0xff]
      %s886 = scalar_lea.vmem [#allocation2], 96
      %v887 = vld [vmem:[%s886] ss:$2 sm:$0xff]
      %s888 = scalar_lea.vmem [#allocation2], 112
      %v889 = vld [vmem:[%s888] ss:$2 sm:$0xff]
      %s890 = scalar_lea.vmem [#allocation2], 128
      %v891 = vld [vmem:[%s890] ss:$2 sm:$0xff]
      %s892 = scalar_lea.vmem [#allocation2], 144
      %v893 = vld [vmem:[%s892] ss:$2 sm:$0xff]
      %s894 = scalar_lea.vmem [#allocation2], 160
      %v895 = vld [vmem:[%s894] ss:$2 sm:$0xff]
      %s896 = scalar_lea.vmem [#allocation2], 176
      %v897 = vld [vmem:[%s896] ss:$2 sm:$0xff]
      %s898 = scalar_lea.vmem [#allocation2], 192
      %v899 = vld [vmem:[%s898] ss:$2 sm:$0xff]
      %s900 = scalar_lea.vmem [#allocation2], 208
      %v901 = vld [vmem:[%s900] ss:$2 sm:$0xff]
      %s902 = scalar_lea.vmem [#allocation2], 224
      %v903 = vld [vmem:[%s902] ss:$2 sm:$0xff]
      %s904 = scalar_lea.vmem [#allocation2], 240
      %v905 = vld [vmem:[%s904] ss:$2 sm:$0xff]
      %s906 = scalar_lea.vmem [#allocation2], 1
      %v907 = vld [vmem:[%s906] ss:$2 sm:$0xff]
      %s908 = scalar_lea.vmem [#allocation2], 17
      %v909 = vld [vmem:[%s908] ss:$2 sm:$0xff]
      %s910 = scalar_lea.vmem [#allocation2], 33
      %v911 = vld [vmem:[%s910] ss:$2 sm:$0xff]
      %s912 = scalar_lea.vmem [#allocation2], 49
      %v913 = vld [vmem:[%s912] ss:$2 sm:$0xff]
      %s914 = scalar_lea.vmem [#allocation2], 65
      %v915 = vld [vmem:[%s914] ss:$2 sm:$0xff]
      %s916 = scalar_lea.vmem [#allocation2], 81
      %v917 = vld [vmem:[%s916] ss:$2 sm:$0xff]
      %s918 = scalar_lea.vmem [#allocation2], 97
      %v919 = vld [vmem:[%s918] ss:$2 sm:$0xff]
      %s920 = scalar_lea.vmem [#allocation2], 113
      %v921 = vld [vmem:[%s920] ss:$2 sm:$0xff]
      %s922 = scalar_lea.vmem [#allocation2], 129
      %v923 = vld [vmem:[%s922] ss:$2 sm:$0xff]
      %s924 = scalar_lea.vmem [#allocation2], 145
      %v925 = vld [vmem:[%s924] ss:$2 sm:$0xff]
      %s926 = scalar_lea.vmem [#allocation2], 161
      %v927 = vld [vmem:[%s926] ss:$2 sm:$0xff]
      %s928 = scalar_lea.vmem [#allocation2], 177
      %v929 = vld [vmem:[%s928] ss:$2 sm:$0xff]
      %s930 = scalar_lea.vmem [#allocation2], 193
      %v931 = vld [vmem:[%s930] ss:$2 sm:$0xff]
      %s932 = scalar_lea.vmem [#allocation2], 209
      %v933 = vld [vmem:[%s932] ss:$2 sm:$0xff]
      %s934 = scalar_lea.vmem [#allocation2], 225
      %v935 = vld [vmem:[%s934] ss:$2 sm:$0xff]
      %s936 = scalar_lea.vmem [#allocation2], 241
      %v937 = vld [vmem:[%s936] ss:$2 sm:$0xff]
      %v938 = vmax.f32 %v875, %v907
      %v939 = vmax.f32 %v877, %v909
      %v940 = vmax.f32 %v879, %v911
      %v941 = vmax.f32 %v881, %v913
      %v942 = vmax.f32 %v883, %v915
      %v943 = vmax.f32 %v885, %v917
      %v944 = vmax.f32 %v887, %v919
      %v945 = vmax.f32 %v889, %v921
      %v946 = vmax.f32 %v891, %v923
      %v947 = vmax.f32 %v893, %v925
      %v948 = vmax.f32 %v895, %v927
      %v949 = vmax.f32 %v897, %v929
      %v950 = vmax.f32 %v899, %v931
      %v951 = vmax.f32 %v901, %v933
      %v952 = vmax.f32 %v903, %v935
      %v953 = vmax.f32 %v905, %v937
      %v954 = vmax.f32 %v938, %v939
      %v955 = vmax.f32 %v940, %v941
      %v956 = vmax.f32 %v942, %v943
      %v957 = vmax.f32 %v944, %v945
      %v958 = vmax.f32 %v946, %v947
      %v959 = vmax.f32 %v948, %v949
      %v960 = vmax.f32 %v950, %v951
      %v961 = vmax.f32 %v952, %v953
      %v962 = vpack.c.bf16 %v954, %v954
      %v964 = vunpack.c.l.b16 %v962
      %v965 = vpack.c.b16 %v964, %v964
      %v967 = vshrl.u32 %v965, 16
      %v969 = vrot.slane %v967, 6
      %v970 = vshll.u32 %v965, 16
      %v972 = vrot.slane %v970, 7
      %v973 = vor.u32 %v969, %v972
      %v974 = vrot.slane %v973, 4
      %vm977 = vcmask 519169
      %vm978 = vsmask.f32 7942
      %vm979 = vmand %vm977, %vm978
      %v980 = vld [vmem:[#allocation3 + $0x4] sm:$0xe]
      %v981 = vsel %vm979, %v973, %v980
      %982 = vst [vmem:[#allocation3 + $0x4] sm:$0xe] %v981
      %vm983 = vcmask 517120
      %vm984 = vsmask.f32 1280
      %vm985 = vmand %vm983, %vm984
      %v986 = vld [vmem:[#allocation3 + $0x8] sm:$0x3]
      %v987 = vsel %vm985, %v974, %v986
      %988 = vst [vmem:[#allocation3 + $0x8] sm:$0x3] %v987
      %v989 = vpack.c.bf16 %v955, %v955
      %v991 = vunpack.c.l.b16 %v989
      %v992 = vpack.c.b16 %v991, %v991
      %v994 = vshrl.u32 %v992, 16
      %v996 = vrot.slane %v994, 5
      %v997 = vshll.u32 %v992, 16
      %v999 = vrot.slane %v997, 6
      %v1000 = vor.u32 %v996, %v999
      %v1001 = vrot.slane %v1000, 4
      %vm1004 = vcmask 519170
      %vm1005 = vsmask.f32 7946
      %vm1006 = vmand %vm1004, %vm1005
      %v1007 = vld [vmem:[#allocation3 + $0x8] sm:$0xc]
      %v1008 = vsel %vm1006, %v1000, %v1007
      %1009 = vst [vmem:[#allocation3 + $0x8] sm:$0xc] %v1008
      %vm1010 = vcmask 518144
      %vm1011 = vsmask.f32 2304
      %vm1012 = vmand %vm1010, %vm1011
      %v1013 = vld [vmem:[#allocation3 + $0xc] sm:$0x7]
      %v1014 = vsel %vm1012, %v1001, %v1013
      %1015 = vst [vmem:[#allocation3 + $0xc] sm:$0x7] %v1014
      %v1016 = vpack.c.bf16 %v956, %v956
      %v1018 = vunpack.c.l.b16 %v1016
      %v1019 = vpack.c.b16 %v1018, %v1018
      %v1021 = vshll.u32 %v1019, 16
      %v1023 = vrot.slane %v1021, 5
      %v1024 = vshrl.u32 %v1019, 16
      %v1026 = vrot.slane %v1024, 4
      %v1027 = vor.u32 %v1026, %v1023
      %v1028 = vrot.slane %v1027, 4
      %vm1031 = vcmask 519171
      %vm1032 = vsmask.f32 7950
      %vm1033 = vmand %vm1031, %vm1032
      %v1034 = vld [vmem:[#allocation3 + $0xc] sm:$0x8]
      %v1035 = vsel %vm1033, %v1023, %v1034
      %1036 = vst [vmem:[#allocation3 + $0xc] sm:$0x8] %v1035
      %vm1037 = vcmask 519168
      %vm1038 = vsmask.f32 3328
      %vm1039 = vmand %vm1037, %vm1038
      %v1040 = vld [vmem:[#allocation3 + $0x10] sm:$0xf]
      %v1041 = vsel %vm1039, %v1028, %v1040
      %1042 = vst [vmem:[#allocation3 + $0x10] sm:$0xf] %v1041
      %v1043 = vpack.c.bf16 %v957, %v957
      %v1045 = vunpack.c.l.b16 %v1043
      %v1046 = vpack.c.b16 %v1045, %v1045
      %v1048 = vshrl.u32 %v1046, 16
      %v1050 = vrot.slane %v1048, 7
      %v1051 = vshll.u32 %v1046, 16
      %v1053 = vor.u32 %v1050, %v1051
      %v1054 = vrot.slane %v1050, 4
      %vm1057 = vsmask.f32 7938
      %vm1058 = vmand %vm1037, %vm1057
      %v1059 = vld [vmem:[#allocation3 + $0x14] sm:$0xf]
      %v1060 = vsel %vm1058, %v1053, %v1059
      %1061 = vst [vmem:[#allocation3 + $0x14] sm:$0xf] %v1060
      %vm1062 = vcmask 516096
      %vm1063 = vsmask.f32 256
      %vm1064 = vmand %vm1062, %vm1063
      %v1065 = vld [vmem:[#allocation3 + $0x18] sm:$0x1]
      %v1066 = vsel %vm1064, %v1054, %v1065
      %1067 = vst [vmem:[#allocation3 + $0x18] sm:$0x1] %v1066
      %v1068 = vpack.c.bf16 %v958, %v958
      %v1070 = vunpack.c.l.b16 %v1068
      %v1071 = vpack.c.b16 %v1070, %v1070
      %v1073 = vshrl.u32 %v1071, 16
      %v1075 = vrot.slane %v1073, 6
      %v1076 = vshll.u32 %v1071, 16
      %v1078 = vrot.slane %v1076, 7
      %v1079 = vor.u32 %v1075, %v1078
      %v1080 = vrot.slane %v1079, 4
      %v1083 = vld [vmem:[#allocation3 + $0x18] sm:$0xe]
      %v1084 = vsel %vm979, %v1079, %v1083
      %1085 = vst [vmem:[#allocation3 + $0x18] sm:$0xe] %v1084
      %v1086 = vld [vmem:[#allocation3 + $0x1c] sm:$0x3]
      %v1087 = vsel %vm985, %v1080, %v1086
      %1088 = vst [vmem:[#allocation3 + $0x1c] sm:$0x3] %v1087
      %v1089 = vpack.c.bf16 %v959, %v959
      %v1091 = vunpack.c.l.b16 %v1089
      %v1092 = vpack.c.b16 %v1091, %v1091
      %v1094 = vshrl.u32 %v1092, 16
      %v1096 = vrot.slane %v1094, 5
      %v1097 = vshll.u32 %v1092, 16
      %v1099 = vrot.slane %v1097, 6
      %v1100 = vor.u32 %v1096, %v1099
      %v1101 = vrot.slane %v1100, 4
      %v1104 = vld [vmem:[#allocation3 + $0x1c] sm:$0xc]
      %v1105 = vsel %vm1006, %v1100, %v1104
      %1106 = vst [vmem:[#allocation3 + $0x1c] sm:$0xc] %v1105
      %v1107 = vld [vmem:[#allocation3 + $0x20] sm:$0x7]
      %v1108 = vsel %vm1012, %v1101, %v1107
      %1109 = vst [vmem:[#allocation3 + $0x20] sm:$0x7] %v1108
      %v1110 = vpack.c.bf16 %v960, %v960
      %v1112 = vunpack.c.l.b16 %v1110
      %v1113 = vpack.c.b16 %v1112, %v1112
      %v1115 = vshll.u32 %v1113, 16
      %v1117 = vrot.slane %v1115, 5
      %v1118 = vshrl.u32 %v1113, 16
      %v1120 = vrot.slane %v1118, 4
      %v1121 = vor.u32 %v1120, %v1117
      %v1122 = vrot.slane %v1121, 4
      %v1125 = vld [vmem:[#allocation3 + $0x20] sm:$0x8]
      %v1126 = vsel %vm1033, %v1117, %v1125
      %1127 = vst [vmem:[#allocation3 + $0x20] sm:$0x8] %v1126
      %v1128 = vld [vmem:[#allocation3 + $0x24] sm:$0xf]
      %v1129 = vsel %vm1039, %v1122, %v1128
      %1130 = vst [vmem:[#allocation3 + $0x24] sm:$0xf] %v1129
      %v1131 = vpack.c.bf16 %v961, %v961
      %v1133 = vunpack.c.l.b16 %v1131
      %v1134 = vpack.c.b16 %v1133, %v1133
      %v1136 = vshrl.u32 %v1134, 16
      %v1138 = vrot.slane %v1136, 7
      %v1139 = vshll.u32 %v1134, 16
      %v1141 = vor.u32 %v1138, %v1139
      %v1142 = vrot.slane %v1138, 4
      %v1145 = vld [vmem:[#allocation3 + $0x28] sm:$0xf]
      %v1146 = vsel %vm1058, %v1141, %v1145
      %1147 = vst [vmem:[#allocation3 + $0x28] sm:$0xf] %v1146
      %v1148 = vld [vmem:[#allocation3 + $0x2c] sm:$0x1]
      %v1149 = vsel %vm1064, %v1142, %v1148
      %1150 = vst [vmem:[#allocation3 + $0x2c] sm:$0x1] %v1149
      %v1151 = vld [vmem:[#allocation3] sm:$0xf]
      %v1152 = vld [vmem:[#allocation3 + $0x4] sm:$0xf]
      %v1153 = vld [vmem:[#allocation3 + $0x8] sm:$0xf]
      %v1154 = vld [vmem:[#allocation3 + $0xc] sm:$0xf]
      %v1155 = vld [vmem:[#allocation3 + $0x10] sm:$0xf]
      %v1156 = vld [vmem:[#allocation3 + $0x14] sm:$0xf]
      %v1157 = vld [vmem:[#allocation3 + $0x18] sm:$0xf]
      %v1158 = vld [vmem:[#allocation3 + $0x1c] sm:$0xf]
      %v1159 = vld [vmem:[#allocation3 + $0x20] sm:$0xf]
      %v1160 = vld [vmem:[#allocation3 + $0x24] sm:$0xf]
      %v1161 = vld [vmem:[#allocation3 + $0x28] sm:$0xf]
      %v1162 = vld [vmem:[#allocation3 + $0x2c] sm:$0xf]
      %v1163 = vld [vmem:[#allocation3 + $0x30] sm:$0xf]
      %v1164 = vld [vmem:[#allocation3 + $0x34] sm:$0xf]
      %v1179 = vunpack.c.l.b16 %v1151
      %v1180 = vunpack.c.l.b16 %v1152
      %v1181 = vunpack.c.l.b16 %v1153
      %v1182 = vunpack.c.l.b16 %v1154
      %v1183 = vunpack.c.l.b16 %v1155
      %v1184 = vunpack.c.l.b16 %v1156
      %v1185 = vunpack.c.l.b16 %v1157
      %v1186 = vunpack.c.l.b16 %v1158
      %v1187 = vunpack.c.l.b16 %v1159
      %v1188 = vunpack.c.l.b16 %v1160
      %v1189 = vunpack.c.l.b16 %v1161
      %v1190 = vunpack.c.l.b16 %v1162
      %v1191 = vunpack.c.l.b16 %v1163
      %v1192 = vunpack.c.l.b16 %v1164
      %v1193 = vpack.c.b16 %v1180, %v1179
      %v1194 = vpack.c.b16 %v1182, %v1181
      %v1195 = vpack.c.b16 %v1184, %v1183
      %v1196 = vpack.c.b16 %v1186, %v1185
      %v1197 = vpack.c.b16 %v1188, %v1187
      %v1198 = vpack.c.b16 %v1190, %v1189
      %v1199 = vpack.c.b16 %v1192, %v1191
      %1207 = vst.msk [vmem:[#allocation4] sm:$0xff] %vm842, %v1193
      %1208 = vst.msk [vmem:[#allocation4 + $0x28] sm:$0xff] %vm842, %v1194
      %1209 = vst.msk [vmem:[#allocation4 + $0x50] sm:$0xff] %vm842, %v1195
      %1210 = vst.msk [vmem:[#allocation4 + $0x78] sm:$0xff] %vm842, %v1196
      %1211 = vst.msk [vmem:[#allocation4 + $0xa0] sm:$0xff] %vm842, %v1197
      %1212 = vst.msk [vmem:[#allocation4 + $0xc8] sm:$0xff] %vm842, %v1198
      %1213 = vst.msk [vmem:[#allocation4 + $0xf0] sm:$0xff] %vm842, %v1199
      %v1214 = vld [vmem:[#allocation3] sm:$0xf]
      %v1215 = vld [vmem:[#allocation3 + $0x4] sm:$0xf]
      %v1216 = vld [vmem:[#allocation3 + $0x8] sm:$0xf]
      %v1217 = vld [vmem:[#allocation3 + $0xc] sm:$0xf]
      %v1218 = vld [vmem:[#allocation3 + $0x10] sm:$0xf]
      %v1219 = vld [vmem:[#allocation3 + $0x14] sm:$0xf]
      %v1220 = vld [vmem:[#allocation3 + $0x18] sm:$0xf]
      %v1221 = vld [vmem:[#allocation3 + $0x1c] sm:$0xf]
      %v1222 = vld [vmem:[#allocation3 + $0x20] sm:$0xf]
      %v1223 = vld [vmem:[#allocation3 + $0x24] sm:$0xf]
      %v1224 = vld [vmem:[#allocation3 + $0x28] sm:$0xf]
      %v1225 = vld [vmem:[#allocation3 + $0x2c] sm:$0xf]
      %v1226 = vld [vmem:[#allocation3 + $0x30] sm:$0xf]
      %v1227 = vld [vmem:[#allocation3 + $0x34] sm:$0xf]
      %v1228 = vld [vmem:[#allocation3 + $0x38] sm:$0x1]
      %v1244 = vunpack.c.l.b16 %v1214
      %v1245 = vunpack.c.l.b16 %v1215
      %v1246 = vunpack.c.l.b16 %v1216
      %v1247 = vunpack.c.l.b16 %v1217
      %v1248 = vunpack.c.l.b16 %v1218
      %v1249 = vunpack.c.l.b16 %v1219
      %v1250 = vunpack.c.l.b16 %v1220
      %v1251 = vunpack.c.l.b16 %v1221
      %v1252 = vunpack.c.l.b16 %v1222
      %v1253 = vunpack.c.l.b16 %v1223
      %v1254 = vunpack.c.l.b16 %v1224
      %v1255 = vunpack.c.l.b16 %v1225
      %v1256 = vunpack.c.l.b16 %v1226
      %v1257 = vunpack.c.l.b16 %v1227
      %v1258 = vunpack.c.l.b16 %v1228
      %v1259 = vpack.c.b16 %v1245, %v1244
      %v1260 = vpack.c.b16 %v1247, %v1246
      %v1261 = vpack.c.b16 %v1249, %v1248
      %v1262 = vpack.c.b16 %v1251, %v1250
      %v1263 = vpack.c.b16 %v1253, %v1252
      %v1264 = vpack.c.b16 %v1255, %v1254
      %v1265 = vpack.c.b16 %v1257, %v1256
      %v1266 = vpack.c.b16 %v1258, %v1258
      %vm1267 = vsmask.f32 7424
      %v1269 = vshrl.u32 %v1259, 16
      %v1271 = vshll.u32 %v1259, 16
      %v1273 = vrot.slane %v1271, 1
      %v1274 = vor.u32 %v1269, %v1273
      %v1276 = vshll.u32 %v1260, 16
      %v1278 = vrot.slane %v1276, 1
      %v1279 = vsel %vm1267, %v1274, %v1278
      %v1280 = vshrl.u32 %v1260, 16
      %v1282 = vor.u32 %v1280, %v1278
      %v1284 = vshll.u32 %v1261, 16
      %v1286 = vrot.slane %v1284, 1
      %v1287 = vsel %vm1267, %v1282, %v1286
      %v1288 = vshrl.u32 %v1261, 16
      %v1290 = vor.u32 %v1288, %v1286
      %v1292 = vshll.u32 %v1262, 16
      %v1294 = vrot.slane %v1292, 1
      %v1295 = vsel %vm1267, %v1290, %v1294
      %v1296 = vshrl.u32 %v1262, 16
      %v1298 = vor.u32 %v1296, %v1294
      %v1300 = vshll.u32 %v1263, 16
      %v1302 = vrot.slane %v1300, 1
      %v1303 = vsel %vm1267, %v1298, %v1302
      %v1304 = vshrl.u32 %v1263, 16
      %v1306 = vor.u32 %v1304, %v1302
      %v1308 = vshll.u32 %v1264, 16
      %v1310 = vrot.slane %v1308, 1
      %v1311 = vsel %vm1267, %v1306, %v1310
      %v1312 = vshrl.u32 %v1264, 16
      %v1314 = vor.u32 %v1312, %v1310
      %v1316 = vshll.u32 %v1265, 16
      %v1318 = vrot.slane %v1316, 1
      %v1319 = vsel %vm1267, %v1314, %v1318
      %v1320 = vshrl.u32 %v1265, 16
      %v1322 = vor.u32 %v1320, %v1318
      %v1324 = vshll.u32 %v1266, 16
      %v1326 = vrot.slane %v1324, 1
      %v1327 = vsel %vm1267, %v1322, %v1326
      %1328 = vrot.lane.b32.xlu0 %v1279, 64
      %v1329 = vpop.permute.xlu0 %1328
      %1330 = vrot.lane.b32.xlu0 %v1287, 64
      %v1331 = vpop.permute.xlu0 %1330
      %1332 = vrot.lane.b32.xlu0 %v1295, 64
      %v1333 = vpop.permute.xlu0 %1332
      %1334 = vrot.lane.b32.xlu0 %v1303, 64
      %v1335 = vpop.permute.xlu0 %1334
      %1336 = vrot.lane.b32.xlu0 %v1311, 64
      %v1337 = vpop.permute.xlu0 %1336
      %1338 = vrot.lane.b32.xlu0 %v1319, 64
      %v1339 = vpop.permute.xlu0 %1338
      %1340 = vrot.lane.b32.xlu0 %v1327, 64
      %v1341 = vpop.permute.xlu0 %1340
      %vm1349 = vcmask 1048064
      %1350 = vst.msk [vmem:[#allocation4] sm:$0xff] %vm1349, %v1329
      %1351 = vst.msk [vmem:[#allocation4 + $0x28] sm:$0xff] %vm1349, %v1331
      %1352 = vst.msk [vmem:[#allocation4 + $0x50] sm:$0xff] %vm1349, %v1333
      %1353 = vst.msk [vmem:[#allocation4 + $0x78] sm:$0xff] %vm1349, %v1335
      %1354 = vst.msk [vmem:[#allocation4 + $0xa0] sm:$0xff] %vm1349, %v1337
      %1355 = vst.msk [vmem:[#allocation4 + $0xc8] sm:$0xff] %vm1349, %v1339
      %1356 = vst.msk [vmem:[#allocation4 + $0xf0] sm:$0xff] %vm1349, %v1341
      %v1357 = vld [vmem:[#allocation3] sm:$0xe]
      %v1358 = vld [vmem:[#allocation3 + $0x4] sm:$0xf]
      %v1359 = vld [vmem:[#allocation3 + $0x8] sm:$0xf]
      %v1360 = vld [vmem:[#allocation3 + $0xc] sm:$0xf]
      %v1361 = vld [vmem:[#allocation3 + $0x10] sm:$0xf]
      %v1362 = vld [vmem:[#allocation3 + $0x14] sm:$0xf]
      %v1363 = vld [vmem:[#allocation3 + $0x18] sm:$0xf]
      %v1364 = vld [vmem:[#allocation3 + $0x1c] sm:$0xf]
      %v1365 = vld [vmem:[#allocation3 + $0x20] sm:$0xf]
      %v1366 = vld [vmem:[#allocation3 + $0x24] sm:$0xf]
      %v1367 = vld [vmem:[#allocation3 + $0x28] sm:$0xf]
      %v1368 = vld [vmem:[#allocation3 + $0x2c] sm:$0xf]
      %v1369 = vld [vmem:[#allocation3 + $0x30] sm:$0xf]
      %v1370 = vld [vmem:[#allocation3 + $0x34] sm:$0xf]
      %v1371 = vld [vmem:[#allocation3 + $0x38] sm:$0x1]
      %v1387 = vunpack.c.l.b16 %v1357
      %v1388 = vunpack.c.l.b16 %v1358
      %v1389 = vunpack.c.l.b16 %v1359
      %v1390 = vunpack.c.l.b16 %v1360
      %v1391 = vunpack.c.l.b16 %v1361
      %v1392 = vunpack.c.l.b16 %v1362
      %v1393 = vunpack.c.l.b16 %v1363
      %v1394 = vunpack.c.l.b16 %v1364
      %v1395 = vunpack.c.l.b16 %v1365
      %v1396 = vunpack.c.l.b16 %v1366
      %v1397 = vunpack.c.l.b16 %v1367
      %v1398 = vunpack.c.l.b16 %v1368
      %v1399 = vunpack.c.l.b16 %v1369
      %v1400 = vunpack.c.l.b16 %v1370
      %v1401 = vunpack.c.l.b16 %v1371
      %v1402 = vpack.c.b16 %v1388, %v1387
      %v1403 = vpack.c.b16 %v1390, %v1389
      %v1404 = vpack.c.b16 %v1392, %v1391
      %v1405 = vpack.c.b16 %v1394, %v1393
      %v1406 = vpack.c.b16 %v1396, %v1395
      %v1407 = vpack.c.b16 %v1398, %v1397
      %v1408 = vpack.c.b16 %v1400, %v1399
      %v1409 = vpack.c.b16 %v1401, %v1401
      %vm1410 = vcmask 1046528
      %v1411 = vrot.slane %v1402, 1
      %v1412 = vrot.slane %v1403, 1
      %v1413 = vsel %vm1410, %v1411, %v1412
      %v1414 = vrot.slane %v1404, 1
      %v1415 = vsel %vm1410, %v1412, %v1414
      %v1416 = vrot.slane %v1405, 1
      %v1417 = vsel %vm1410, %v1414, %v1416
      %v1418 = vrot.slane %v1406, 1
      %v1419 = vsel %vm1410, %v1416, %v1418
      %v1420 = vrot.slane %v1407, 1
      %v1421 = vsel %vm1410, %v1418, %v1420
      %v1422 = vrot.slane %v1408, 1
      %v1423 = vsel %vm1410, %v1420, %v1422
      %v1424 = vrot.slane %v1409, 1
      %v1425 = vsel %vm1410, %v1422, %v1424
      %1433 = vst.msk [vmem:[#allocation4 + $0x8] sm:$0xff] %vm842, %v1413
      %1434 = vst.msk [vmem:[#allocation4 + $0x30] sm:$0xff] %vm842, %v1415
      %1435 = vst.msk [vmem:[#allocation4 + $0x58] sm:$0xff] %vm842, %v1417
      %1436 = vst.msk [vmem:[#allocation4 + $0x80] sm:$0xff] %vm842, %v1419
      %1437 = vst.msk [vmem:[#allocation4 + $0xa8] sm:$0xff] %vm842, %v1421
      %1438 = vst.msk [vmem:[#allocation4 + $0xd0] sm:$0xff] %vm842, %v1423
      %1439 = vst.msk [vmem:[#allocation4 + $0xf8] sm:$0xff] %vm842, %v1425
      %v1440 = vld [vmem:[#allocation3 + $0x4] sm:$0xe]
      %v1441 = vld [vmem:[#allocation3 + $0x8] sm:$0xf]
      %v1442 = vld [vmem:[#allocation3 + $0xc] sm:$0xf]
      %v1443 = vld [vmem:[#allocation3 + $0x10] sm:$0xf]
      %v1444 = vld [vmem:[#allocation3 + $0x14] sm:$0xf]
      %v1445 = vld [vmem:[#allocation3 + $0x18] sm:$0xf]
      %v1446 = vld [vmem:[#allocation3 + $0x1c] sm:$0xf]
      %v1447 = vld [vmem:[#allocation3 + $0x20] sm:$0xf]
      %v1448 = vld [vmem:[#allocation3 + $0x24] sm:$0xf]
      %v1449 = vld [vmem:[#allocation3 + $0x28] sm:$0xf]
      %v1450 = vld [vmem:[#allocation3 + $0x2c] sm:$0xf]
      %v1451 = vld [vmem:[#allocation3 + $0x30] sm:$0xf]
      %v1452 = vld [vmem:[#allocation3 + $0x34] sm:$0xf]
      %v1453 = vld [vmem:[#allocation3 + $0x38] sm:$0xf]
      %v1454 = vld [vmem:[#allocation3 + $0x3c] sm:$0x1]
      %v1470 = vunpack.c.l.b16 %v1440
      %v1471 = vunpack.c.l.b16 %v1441
      %v1472 = vunpack.c.l.b16 %v1442
      %v1473 = vunpack.c.l.b16 %v1443
      %v1474 = vunpack.c.l.b16 %v1444
      %v1475 = vunpack.c.l.b16 %v1445
      %v1476 = vunpack.c.l.b16 %v1446
      %v1477 = vunpack.c.l.b16 %v1447
      %v1478 = vunpack.c.l.b16 %v1448
      %v1479 = vunpack.c.l.b16 %v1449
      %v1480 = vunpack.c.l.b16 %v1450
      %v1481 = vunpack.c.l.b16 %v1451
      %v1482 = vunpack.c.l.b16 %v1452
      %v1483 = vunpack.c.l.b16 %v1453
      %v1484 = vunpack.c.l.b16 %v1454
      %v1485 = vpack.c.b16 %v1471, %v1470
      %v1486 = vpack.c.b16 %v1473, %v1472
      %v1487 = vpack.c.b16 %v1475, %v1474
      %v1488 = vpack.c.b16 %v1477, %v1476
      %v1489 = vpack.c.b16 %v1479, %v1478
      %v1490 = vpack.c.b16 %v1481, %v1480
      %v1491 = vpack.c.b16 %v1483, %v1482
      %v1492 = vpack.c.b16 %v1484, %v1484
      %v1493 = vrot.slane %v1485, 1
      %v1494 = vrot.slane %v1486, 1
      %v1495 = vsel %vm1410, %v1493, %v1494
      %v1496 = vrot.slane %v1487, 1
      %v1497 = vsel %vm1410, %v1494, %v1496
      %v1498 = vrot.slane %v1488, 1
      %v1499 = vsel %vm1410, %v1496, %v1498
      %v1500 = vrot.slane %v1489, 1
      %v1501 = vsel %vm1410, %v1498, %v1500
      %v1502 = vrot.slane %v1490, 1
      %v1503 = vsel %vm1410, %v1500, %v1502
      %v1504 = vrot.slane %v1491, 1
      %v1505 = vsel %vm1410, %v1502, %v1504
      %v1506 = vrot.slane %v1492, 1
      %v1507 = vsel %vm1410, %v1504, %v1506
      %1508 = vrot.lane.b32.xlu0 %v1495, 64
      %v1509 = vpop.permute.xlu0 %1508
      %1510 = vrot.lane.b32.xlu0 %v1497, 64
      %v1511 = vpop.permute.xlu0 %1510
      %1512 = vrot.lane.b32.xlu0 %v1499, 64
      %v1513 = vpop.permute.xlu0 %1512
      %1514 = vrot.lane.b32.xlu0 %v1501, 64
      %v1515 = vpop.permute.xlu0 %1514
      %1516 = vrot.lane.b32.xlu0 %v1503, 64
      %v1517 = vpop.permute.xlu0 %1516
      %1518 = vrot.lane.b32.xlu0 %v1505, 64
      %v1519 = vpop.permute.xlu0 %1518
      %1520 = vrot.lane.b32.xlu0 %v1507, 64
      %v1521 = vpop.permute.xlu0 %1520
      %1529 = vst.msk [vmem:[#allocation4 + $0x8] sm:$0xff] %vm1349, %v1509
      %1530 = vst.msk [vmem:[#allocation4 + $0x30] sm:$0xff] %vm1349, %v1511
      %1531 = vst.msk [vmem:[#allocation4 + $0x58] sm:$0xff] %vm1349, %v1513
      %1532 = vst.msk [vmem:[#allocation4 + $0x80] sm:$0xff] %vm1349, %v1515
      %1533 = vst.msk [vmem:[#allocation4 + $0xa8] sm:$0xff] %vm1349, %v1517
      %1534 = vst.msk [vmem:[#allocation4 + $0xd0] sm:$0xff] %vm1349, %v1519
      %1535 = vst.msk [vmem:[#allocation4 + $0xf8] sm:$0xff] %vm1349, %v1521
      %v1536 = vld [vmem:[#allocation3 + $0x4] sm:$0xe]
      %v1537 = vld [vmem:[#allocation3 + $0x8] sm:$0xf]
      %v1538 = vld [vmem:[#allocation3 + $0xc] sm:$0xf]
      %v1539 = vld [vmem:[#allocation3 + $0x10] sm:$0xf]
      %v1540 = vld [vmem:[#allocation3 + $0x14] sm:$0xf]
      %v1541 = vld [vmem:[#allocation3 + $0x18] sm:$0xf]
      %v1542 = vld [vmem:[#allocation3 + $0x1c] sm:$0xf]
      %v1543 = vld [vmem:[#allocation3 + $0x20] sm:$0xf]
      %v1544 = vld [vmem:[#allocation3 + $0x24] sm:$0xf]
      %v1545 = vld [vmem:[#allocation3 + $0x28] sm:$0xf]
      %v1546 = vld [vmem:[#allocation3 + $0x2c] sm:$0xf]
      %v1547 = vld [vmem:[#allocation3 + $0x30] sm:$0xf]
      %v1548 = vld [vmem:[#allocation3 + $0x34] sm:$0xf]
      %v1549 = vld [vmem:[#allocation3 + $0x38] sm:$0xf]
      %v1550 = vld [vmem:[#allocation3 + $0x3c] sm:$0x3]
      %v1566 = vunpack.c.l.b16 %v1536
      %v1567 = vunpack.c.l.b16 %v1537
      %v1568 = vunpack.c.l.b16 %v1538
      %v1569 = vunpack.c.l.b16 %v1539
      %v1570 = vunpack.c.l.b16 %v1540
      %v1571 = vunpack.c.l.b16 %v1541
      %v1572 = vunpack.c.l.b16 %v1542
      %v1573 = vunpack.c.l.b16 %v1543
      %v1574 = vunpack.c.l.b16 %v1544
      %v1575 = vunpack.c.l.b16 %v1545
      %v1576 = vunpack.c.l.b16 %v1546
      %v1577 = vunpack.c.l.b16 %v1547
      %v1578 = vunpack.c.l.b16 %v1548
      %v1579 = vunpack.c.l.b16 %v1549
      %v1580 = vunpack.c.l.b16 %v1550
      %v1581 = vpack.c.b16 %v1567, %v1566
      %v1582 = vpack.c.b16 %v1569, %v1568
      %v1583 = vpack.c.b16 %v1571, %v1570
      %v1584 = vpack.c.b16 %v1573, %v1572
      %v1585 = vpack.c.b16 %v1575, %v1574
      %v1586 = vpack.c.b16 %v1577, %v1576
      %v1587 = vpack.c.b16 %v1579, %v1578
      %v1588 = vpack.c.b16 %v1580, %v1580
      %vm1589 = vsmask.f32 6400
      %v1591 = vshrl.u32 %v1581, 16
      %v1593 = vrot.slane %v1591, 1
      %v1594 = vshll.u32 %v1581, 16
      %v1596 = vrot.slane %v1594, 2
      %v1597 = vor.u32 %v1593, %v1596
      %v1599 = vshrl.u32 %v1582, 16
      %v1601 = vrot.slane %v1599, 1
      %v1602 = vshll.u32 %v1582, 16
      %v1604 = vrot.slane %v1602, 2
      %v1605 = vor.u32 %v1601, %v1604
      %v1606 = vsel %vm1589, %v1597, %v1605
      %v1608 = vshrl.u32 %v1583, 16
      %v1610 = vrot.slane %v1608, 1
      %v1611 = vshll.u32 %v1583, 16
      %v1613 = vrot.slane %v1611, 2
      %v1614 = vor.u32 %v1610, %v1613
      %v1615 = vsel %vm1589, %v1605, %v1614
      %v1617 = vshrl.u32 %v1584, 16
      %v1619 = vrot.slane %v1617, 1
      %v1620 = vshll.u32 %v1584, 16
      %v1622 = vrot.slane %v1620, 2
      %v1623 = vor.u32 %v1619, %v1622
      %v1624 = vsel %vm1589, %v1614, %v1623
      %v1626 = vshrl.u32 %v1585, 16
      %v1628 = vrot.slane %v1626, 1
      %v1629 = vshll.u32 %v1585, 16
      %v1631 = vrot.slane %v1629, 2
      %v1632 = vor.u32 %v1628, %v1631
      %v1633 = vsel %vm1589, %v1623, %v1632
      %v1635 = vshrl.u32 %v1586, 16
      %v1637 = vrot.slane %v1635, 1
      %v1638 = vshll.u32 %v1586, 16
      %v1640 = vrot.slane %v1638, 2
      %v1641 = vor.u32 %v1637, %v1640
      %v1642 = vsel %vm1589, %v1632, %v1641
      %v1644 = vshrl.u32 %v1587, 16
      %v1646 = vrot.slane %v1644, 1
      %v1647 = vshll.u32 %v1587, 16
      %v1649 = vrot.slane %v1647, 2
      %v1650 = vor.u32 %v1646, %v1649
      %v1651 = vsel %vm1589, %v1641, %v1650
      %v1653 = vshrl.u32 %v1588, 16
      %v1655 = vrot.slane %v1653, 1
      %v1656 = vshll.u32 %v1588, 16
      %v1658 = vrot.slane %v1656, 2
      %v1659 = vor.u32 %v1655, %v1658
      %v1660 = vsel %vm1589, %v1650, %v1659
      %1668 = vst.msk [vmem:[#allocation4 + $0x10] sm:$0xff] %vm842, %v1606
      %1669 = vst.msk [vmem:[#allocation4 + $0x38] sm:$0xff] %vm842, %v1615
      %1670 = vst.msk [vmem:[#allocation4 + $0x60] sm:$0xff] %vm842, %v1624
      %1671 = vst.msk [vmem:[#allocation4 + $0x88] sm:$0xff] %vm842, %v1633
      %1672 = vst.msk [vmem:[#allocation4 + $0xb0] sm:$0xff] %vm842, %v1642
      %1673 = vst.msk [vmem:[#allocation4 + $0xd8] sm:$0xff] %vm842, %v1651
      %1674 = vst.msk [vmem:[#allocation4 + $0x100] sm:$0xff] %vm842, %v1660
      %v1675 = vld [vmem:[#allocation3 + $0x4] sm:$0xc]
      %v1676 = vld [vmem:[#allocation3 + $0x8] sm:$0xf]
      %v1677 = vld [vmem:[#allocation3 + $0xc] sm:$0xf]
      %v1678 = vld [vmem:[#allocation3 + $0x10] sm:$0xf]
      %v1679 = vld [vmem:[#allocation3 + $0x14] sm:$0xf]
      %v1680 = vld [vmem:[#allocation3 + $0x18] sm:$0xf]
      %v1681 = vld [vmem:[#allocation3 + $0x1c] sm:$0xf]
      %v1682 = vld [vmem:[#allocation3 + $0x20] sm:$0xf]
      %v1683 = vld [vmem:[#allocation3 + $0x24] sm:$0xf]
      %v1684 = vld [vmem:[#allocation3 + $0x28] sm:$0xf]
      %v1685 = vld [vmem:[#allocation3 + $0x2c] sm:$0xf]
      %v1686 = vld [vmem:[#allocation3 + $0x30] sm:$0xf]
      %v1687 = vld [vmem:[#allocation3 + $0x34] sm:$0xf]
      %v1688 = vld [vmem:[#allocation3 + $0x38] sm:$0xf]
      %v1689 = vld [vmem:[#allocation3 + $0x3c] sm:$0x3]
      %v1705 = vunpack.c.l.b16 %v1675
      %v1706 = vunpack.c.l.b16 %v1676
      %v1707 = vunpack.c.l.b16 %v1677
      %v1708 = vunpack.c.l.b16 %v1678
      %v1709 = vunpack.c.l.b16 %v1679
      %v1710 = vunpack.c.l.b16 %v1680
      %v1711 = vunpack.c.l.b16 %v1681
      %v1712 = vunpack.c.l.b16 %v1682
      %v1713 = vunpack.c.l.b16 %v1683
      %v1714 = vunpack.c.l.b16 %v1684
      %v1715 = vunpack.c.l.b16 %v1685
      %v1716 = vunpack.c.l.b16 %v1686
      %v1717 = vunpack.c.l.b16 %v1687
      %v1718 = vunpack.c.l.b16 %v1688
      %v1719 = vunpack.c.l.b16 %v1689
      %v1720 = vpack.c.b16 %v1706, %v1705
      %v1721 = vpack.c.b16 %v1708, %v1707
      %v1722 = vpack.c.b16 %v1710, %v1709
      %v1723 = vpack.c.b16 %v1712, %v1711
      %v1724 = vpack.c.b16 %v1714, %v1713
      %v1725 = vpack.c.b16 %v1716, %v1715
      %v1726 = vpack.c.b16 %v1718, %v1717
      %v1727 = vpack.c.b16 %v1719, %v1719
      %vm1728 = vcmask 1045504
      %v1729 = vrot.slane %v1720, 2
      %v1730 = vrot.slane %v1721, 2
      %v1731 = vsel %vm1728, %v1729, %v1730
      %v1732 = vrot.slane %v1722, 2
      %v1733 = vsel %vm1728, %v1730, %v1732
      %v1734 = vrot.slane %v1723, 2
      %v1735 = vsel %vm1728, %v1732, %v1734
      %v1736 = vrot.slane %v1724, 2
      %v1737 = vsel %vm1728, %v1734, %v1736
      %v1738 = vrot.slane %v1725, 2
      %v1739 = vsel %vm1728, %v1736, %v1738
      %v1740 = vrot.slane %v1726, 2
      %v1741 = vsel %vm1728, %v1738, %v1740
      %v1742 = vrot.slane %v1727, 2
      %v1743 = vsel %vm1728, %v1740, %v1742
      %1744 = vrot.lane.b32.xlu0 %v1731, 64
      %v1745 = vpop.permute.xlu0 %1744
      %1746 = vrot.lane.b32.xlu0 %v1733, 64
      %v1747 = vpop.permute.xlu0 %1746
      %1748 = vrot.lane.b32.xlu0 %v1735, 64
      %v1749 = vpop.permute.xlu0 %1748
      %1750 = vrot.lane.b32.xlu0 %v1737, 64
      %v1751 = vpop.permute.xlu0 %1750
      %1752 = vrot.lane.b32.xlu0 %v1739, 64
      %v1753 = vpop.permute.xlu0 %1752
      %1754 = vrot.lane.b32.xlu0 %v1741, 64
      %v1755 = vpop.permute.xlu0 %1754
      %1756 = vrot.lane.b32.xlu0 %v1743, 64
      %v1757 = vpop.permute.xlu0 %1756
      %1765 = vst.msk [vmem:[#allocation4 + $0x10] sm:$0xff] %vm1349, %v1745
      %1766 = vst.msk [vmem:[#allocation4 + $0x38] sm:$0xff] %vm1349, %v1747
      %1767 = vst.msk [vmem:[#allocation4 + $0x60] sm:$0xff] %vm1349, %v1749
      %1768 = vst.msk [vmem:[#allocation4 + $0x88] sm:$0xff] %vm1349, %v1751
      %1769 = vst.msk [vmem:[#allocation4 + $0xb0] sm:$0xff] %vm1349, %v1753
      %1770 = vst.msk [vmem:[#allocation4 + $0xd8] sm:$0xff] %vm1349, %v1755
      %1771 = vst.msk [vmem:[#allocation4 + $0x100] sm:$0xff] %vm1349, %v1757
      %v1772 = vld [vmem:[#allocation3 + $0x8] sm:$0xc]
      %v1773 = vld [vmem:[#allocation3 + $0xc] sm:$0xf]
      %v1774 = vld [vmem:[#allocation3 + $0x10] sm:$0xf]
      %v1775 = vld [vmem:[#allocation3 + $0x14] sm:$0xf]
      %v1776 = vld [vmem:[#allocation3 + $0x18] sm:$0xf]
      %v1777 = vld [vmem:[#allocation3 + $0x1c] sm:$0xf]
      %v1778 = vld [vmem:[#allocation3 + $0x20] sm:$0xf]
      %v1779 = vld [vmem:[#allocation3 + $0x24] sm:$0xf]
      %v1780 = vld [vmem:[#allocation3 + $0x28] sm:$0xf]
      %v1781 = vld [vmem:[#allocation3 + $0x2c] sm:$0xf]
      %v1782 = vld [vmem:[#allocation3 + $0x30] sm:$0xf]
      %v1783 = vld [vmem:[#allocation3 + $0x34] sm:$0xf]
      %v1784 = vld [vmem:[#allocation3 + $0x38] sm:$0xf]
      %v1785 = vld [vmem:[#allocation3 + $0x3c] sm:$0xf]
      %v1786 = vld [vmem:[#allocation3 + $0x40] sm:$0x3]
      %v1802 = vunpack.c.l.b16 %v1772
      %v1803 = vunpack.c.l.b16 %v1773
      %v1804 = vunpack.c.l.b16 %v1774
      %v1805 = vunpack.c.l.b16 %v1775
      %v1806 = vunpack.c.l.b16 %v1776
      %v1807 = vunpack.c.l.b16 %v1777
      %v1808 = vunpack.c.l.b16 %v1778
      %v1809 = vunpack.c.l.b16 %v1779
      %v1810 = vunpack.c.l.b16 %v1780
      %v1811 = vunpack.c.l.b16 %v1781
      %v1812 = vunpack.c.l.b16 %v1782
      %v1813 = vunpack.c.l.b16 %v1783
      %v1814 = vunpack.c.l.b16 %v1784
      %v1815 = vunpack.c.l.b16 %v1785
      %v1816 = vunpack.c.l.b16 %v1786
      %v1817 = vpack.c.b16 %v1803, %v1802
      %v1818 = vpack.c.b16 %v1805, %v1804
      %v1819 = vpack.c.b16 %v1807, %v1806
      %v1820 = vpack.c.b16 %v1809, %v1808
      %v1821 = vpack.c.b16 %v1811, %v1810
      %v1822 = vpack.c.b16 %v1813, %v1812
      %v1823 = vpack.c.b16 %v1815, %v1814
      %v1824 = vpack.c.b16 %v1816, %v1816
      %v1825 = vrot.slane %v1817, 2
      %v1826 = vrot.slane %v1818, 2
      %v1827 = vsel %vm1728, %v1825, %v1826
      %v1828 = vrot.slane %v1819, 2
      %v1829 = vsel %vm1728, %v1826, %v1828
      %v1830 = vrot.slane %v1820, 2
      %v1831 = vsel %vm1728, %v1828, %v1830
      %v1832 = vrot.slane %v1821, 2
      %v1833 = vsel %vm1728, %v1830, %v1832
      %v1834 = vrot.slane %v1822, 2
      %v1835 = vsel %vm1728, %v1832, %v1834
      %v1836 = vrot.slane %v1823, 2
      %v1837 = vsel %vm1728, %v1834, %v1836
      %v1838 = vrot.slane %v1824, 2
      %v1839 = vsel %vm1728, %v1836, %v1838
      %1847 = vst.msk [vmem:[#allocation4 + $0x18] sm:$0xff] %vm842, %v1827
      %1848 = vst.msk [vmem:[#allocation4 + $0x40] sm:$0xff] %vm842, %v1829
      %1849 = vst.msk [vmem:[#allocation4 + $0x68] sm:$0xff] %vm842, %v1831
      %1850 = vst.msk [vmem:[#allocation4 + $0x90] sm:$0xff] %vm842, %v1833
      %1851 = vst.msk [vmem:[#allocation4 + $0xb8] sm:$0xff] %vm842, %v1835
      %1852 = vst.msk [vmem:[#allocation4 + $0xe0] sm:$0xff] %vm842, %v1837
      %1853 = vst.msk [vmem:[#allocation4 + $0x108] sm:$0xff] %vm842, %v1839
      %v1854 = vld [vmem:[#allocation3 + $0x8] sm:$0xc]
      %v1855 = vld [vmem:[#allocation3 + $0xc] sm:$0xf]
      %v1856 = vld [vmem:[#allocation3 + $0x10] sm:$0xf]
      %v1857 = vld [vmem:[#allocation3 + $0x14] sm:$0xf]
      %v1858 = vld [vmem:[#allocation3 + $0x18] sm:$0xf]
      %v1859 = vld [vmem:[#allocation3 + $0x1c] sm:$0xf]
      %v1860 = vld [vmem:[#allocation3 + $0x20] sm:$0xf]
      %v1861 = vld [vmem:[#allocation3 + $0x24] sm:$0xf]
      %v1862 = vld [vmem:[#allocation3 + $0x28] sm:$0xf]
      %v1863 = vld [vmem:[#allocation3 + $0x2c] sm:$0xf]
      %v1864 = vld [vmem:[#allocation3 + $0x30] sm:$0xf]
      %v1865 = vld [vmem:[#allocation3 + $0x34] sm:$0xf]
      %v1866 = vld [vmem:[#allocation3 + $0x38] sm:$0xf]
      %v1867 = vld [vmem:[#allocation3 + $0x3c] sm:$0xf]
      %v1868 = vld [vmem:[#allocation3 + $0x40] sm:$0x7]
      %v1884 = vunpack.c.l.b16 %v1854
      %v1885 = vunpack.c.l.b16 %v1855
      %v1886 = vunpack.c.l.b16 %v1856
      %v1887 = vunpack.c.l.b16 %v1857
      %v1888 = vunpack.c.l.b16 %v1858
      %v1889 = vunpack.c.l.b16 %v1859
      %v1890 = vunpack.c.l.b16 %v1860
      %v1891 = vunpack.c.l.b16 %v1861
      %v1892 = vunpack.c.l.b16 %v1862
      %v1893 = vunpack.c.l.b16 %v1863
      %v1894 = vunpack.c.l.b16 %v1864
      %v1895 = vunpack.c.l.b16 %v1865
      %v1896 = vunpack.c.l.b16 %v1866
      %v1897 = vunpack.c.l.b16 %v1867
      %v1898 = vunpack.c.l.b16 %v1868
      %v1899 = vpack.c.b16 %v1885, %v1884
      %v1900 = vpack.c.b16 %v1887, %v1886
      %v1901 = vpack.c.b16 %v1889, %v1888
      %v1902 = vpack.c.b16 %v1891, %v1890
      %v1903 = vpack.c.b16 %v1893, %v1892
      %v1904 = vpack.c.b16 %v1895, %v1894
      %v1905 = vpack.c.b16 %v1897, %v1896
      %v1906 = vpack.c.b16 %v1898, %v1898
      %vm1907 = vsmask.f32 5376
      %v1909 = vshrl.u32 %v1899, 16
      %v1911 = vrot.slane %v1909, 2
      %v1912 = vshll.u32 %v1899, 16
      %v1914 = vrot.slane %v1912, 3
      %v1915 = vor.u32 %v1911, %v1914
      %v1917 = vshrl.u32 %v1900, 16
      %v1919 = vrot.slane %v1917, 2
      %v1920 = vshll.u32 %v1900, 16
      %v1922 = vrot.slane %v1920, 3
      %v1923 = vor.u32 %v1919, %v1922
      %v1924 = vsel %vm1907, %v1915, %v1923
      %v1926 = vshrl.u32 %v1901, 16
      %v1928 = vrot.slane %v1926, 2
      %v1929 = vshll.u32 %v1901, 16
      %v1931 = vrot.slane %v1929, 3
      %v1932 = vor.u32 %v1928, %v1931
      %v1933 = vsel %vm1907, %v1923, %v1932
      %v1935 = vshrl.u32 %v1902, 16
      %v1937 = vrot.slane %v1935, 2
      %v1938 = vshll.u32 %v1902, 16
      %v1940 = vrot.slane %v1938, 3
      %v1941 = vor.u32 %v1937, %v1940
      %v1942 = vsel %vm1907, %v1932, %v1941
      %v1944 = vshrl.u32 %v1903, 16
      %v1946 = vrot.slane %v1944, 2
      %v1947 = vshll.u32 %v1903, 16
      %v1949 = vrot.slane %v1947, 3
      %v1950 = vor.u32 %v1946, %v1949
      %v1951 = vsel %vm1907, %v1941, %v1950
      %v1953 = vshrl.u32 %v1904, 16
      %v1955 = vrot.slane %v1953, 2
      %v1956 = vshll.u32 %v1904, 16
      %v1958 = vrot.slane %v1956, 3
      %v1959 = vor.u32 %v1955, %v1958
      %v1960 = vsel %vm1907, %v1950, %v1959
      %v1962 = vshrl.u32 %v1905, 16
      %v1964 = vrot.slane %v1962, 2
      %v1965 = vshll.u32 %v1905, 16
      %v1967 = vrot.slane %v1965, 3
      %v1968 = vor.u32 %v1964, %v1967
      %v1969 = vsel %vm1907, %v1959, %v1968
      %v1971 = vshrl.u32 %v1906, 16
      %v1973 = vrot.slane %v1971, 2
      %v1974 = vshll.u32 %v1906, 16
      %v1976 = vrot.slane %v1974, 3
      %v1977 = vor.u32 %v1973, %v1976
      %v1978 = vsel %vm1907, %v1968, %v1977
      %1979 = vrot.lane.b32.xlu0 %v1924, 64
      %v1980 = vpop.permute.xlu0 %1979
      %1981 = vrot.lane.b32.xlu0 %v1933, 64
      %v1982 = vpop.permute.xlu0 %1981
      %1983 = vrot.lane.b32.xlu0 %v1942, 64
      %v1984 = vpop.permute.xlu0 %1983
      %1985 = vrot.lane.b32.xlu0 %v1951, 64
      %v1986 = vpop.permute.xlu0 %1985
      %1987 = vrot.lane.b32.xlu0 %v1960, 64
      %v1988 = vpop.permute.xlu0 %1987
      %1989 = vrot.lane.b32.xlu0 %v1969, 64
      %v1990 = vpop.permute.xlu0 %1989
      %1991 = vrot.lane.b32.xlu0 %v1978, 64
      %v1992 = vpop.permute.xlu0 %1991
      %2000 = vst.msk [vmem:[#allocation4 + $0x18] sm:$0xff] %vm1349, %v1980
      %2001 = vst.msk [vmem:[#allocation4 + $0x40] sm:$0xff] %vm1349, %v1982
      %2002 = vst.msk [vmem:[#allocation4 + $0x68] sm:$0xff] %vm1349, %v1984
      %2003 = vst.msk [vmem:[#allocation4 + $0x90] sm:$0xff] %vm1349, %v1986
      %2004 = vst.msk [vmem:[#allocation4 + $0xb8] sm:$0xff] %vm1349, %v1988
      %2005 = vst.msk [vmem:[#allocation4 + $0xe0] sm:$0xff] %vm1349, %v1990
      %2006 = vst.msk [vmem:[#allocation4 + $0x108] sm:$0xff] %vm1349, %v1992
      %v2007 = vld [vmem:[#allocation3 + $0x8] sm:$0x8]
      %v2008 = vld [vmem:[#allocation3 + $0xc] sm:$0xf]
      %v2009 = vld [vmem:[#allocation3 + $0x10] sm:$0xf]
      %v2010 = vld [vmem:[#allocation3 + $0x14] sm:$0xf]
      %v2011 = vld [vmem:[#allocation3 + $0x18] sm:$0xf]
      %v2012 = vld [vmem:[#allocation3 + $0x1c] sm:$0xf]
      %v2013 = vld [vmem:[#allocation3 + $0x20] sm:$0xf]
      %v2014 = vld [vmem:[#allocation3 + $0x24] sm:$0xf]
      %v2015 = vld [vmem:[#allocation3 + $0x28] sm:$0xf]
      %v2016 = vld [vmem:[#allocation3 + $0x2c] sm:$0xf]
      %v2017 = vld [vmem:[#allocation3 + $0x30] sm:$0xf]
      %v2018 = vld [vmem:[#allocation3 + $0x34] sm:$0xf]
      %v2019 = vld [vmem:[#allocation3 + $0x38] sm:$0xf]
      %v2020 = vld [vmem:[#allocation3 + $0x3c] sm:$0xf]
      %v2021 = vld [vmem:[#allocation3 + $0x40] sm:$0x7]
      %v2037 = vunpack.c.l.b16 %v2007
      %v2038 = vunpack.c.l.b16 %v2008
      %v2039 = vunpack.c.l.b16 %v2009
      %v2040 = vunpack.c.l.b16 %v2010
      %v2041 = vunpack.c.l.b16 %v2011
      %v2042 = vunpack.c.l.b16 %v2012
      %v2043 = vunpack.c.l.b16 %v2013
      %v2044 = vunpack.c.l.b16 %v2014
      %v2045 = vunpack.c.l.b16 %v2015
      %v2046 = vunpack.c.l.b16 %v2016
      %v2047 = vunpack.c.l.b16 %v2017
      %v2048 = vunpack.c.l.b16 %v2018
      %v2049 = vunpack.c.l.b16 %v2019
      %v2050 = vunpack.c.l.b16 %v2020
      %v2051 = vunpack.c.l.b16 %v2021
      %v2052 = vpack.c.b16 %v2038, %v2037
      %v2053 = vpack.c.b16 %v2040, %v2039
      %v2054 = vpack.c.b16 %v2042, %v2041
      %v2055 = vpack.c.b16 %v2044, %v2043
      %v2056 = vpack.c.b16 %v2046, %v2045
      %v2057 = vpack.c.b16 %v2048, %v2047
      %v2058 = vpack.c.b16 %v2050, %v2049
      %v2059 = vpack.c.b16 %v2051, %v2051
      %vm2060 = vcmask 1044480
      %v2061 = vrot.slane %v2052, 3
      %v2062 = vrot.slane %v2053, 3
      %v2063 = vsel %vm2060, %v2061, %v2062
      %v2064 = vrot.slane %v2054, 3
      %v2065 = vsel %vm2060, %v2062, %v2064
      %v2066 = vrot.slane %v2055, 3
      %v2067 = vsel %vm2060, %v2064, %v2066
      %v2068 = vrot.slane %v2056, 3
      %v2069 = vsel %vm2060, %v2066, %v2068
      %v2070 = vrot.slane %v2057, 3
      %v2071 = vsel %vm2060, %v2068, %v2070
      %v2072 = vrot.slane %v2058, 3
      %v2073 = vsel %vm2060, %v2070, %v2072
      %v2074 = vrot.slane %v2059, 3
      %v2075 = vsel %vm2060, %v2072, %v2074
      %2083 = vst.msk [vmem:[#allocation4 + $0x20] sm:$0xff] %vm842, %v2063
      %2084 = vst.msk [vmem:[#allocation4 + $0x48] sm:$0xff] %vm842, %v2065
      %2085 = vst.msk [vmem:[#allocation4 + $0x70] sm:$0xff] %vm842, %v2067
      %2086 = vst.msk [vmem:[#allocation4 + $0x98] sm:$0xff] %vm842, %v2069
      %2087 = vst.msk [vmem:[#allocation4 + $0xc0] sm:$0xff] %vm842, %v2071
      %2088 = vst.msk [vmem:[#allocation4 + $0xe8] sm:$0xff] %vm842, %v2073
      %2089 = vst.msk [vmem:[#allocation4 + $0x110] sm:$0xff] %vm842, %v2075
      %v2090 = vld [vmem:[#allocation4] sm:$0xff]
      %v2091 = vld [vmem:[#allocation4 + $0x8] sm:$0xff]
      %v2092 = vld [vmem:[#allocation4 + $0x10] sm:$0xff]
      %v2093 = vld [vmem:[#allocation4 + $0x18] sm:$0xff]
      %v2094 = vld [vmem:[#allocation4 + $0x20] sm:$0xff]
      %v2095 = vld [vmem:[#allocation4 + $0x28] sm:$0xff]
      %v2096 = vld [vmem:[#allocation4 + $0x30] sm:$0xff]
      %v2097 = vld [vmem:[#allocation4 + $0x38] sm:$0xff]
      %v2098 = vld [vmem:[#allocation4 + $0x40] sm:$0xff]
      %v2099 = vld [vmem:[#allocation4 + $0x48] sm:$0xff]
      %v2100 = vld [vmem:[#allocation4 + $0x50] sm:$0xff]
      %v2101 = vld [vmem:[#allocation4 + $0x58] sm:$0xff]
      %v2102 = vld [vmem:[#allocation4 + $0x60] sm:$0xff]
      %v2103 = vld [vmem:[#allocation4 + $0x68] sm:$0xff]
      %v2104 = vld [vmem:[#allocation4 + $0x70] sm:$0xff]
      %v2105 = vld [vmem:[#allocation4 + $0x78] sm:$0xff]
      %v2106 = vld [vmem:[#allocation4 + $0x80] sm:$0xff]
      %v2107 = vld [vmem:[#allocation4 + $0x88] sm:$0xff]
      %v2108 = vld [vmem:[#allocation4 + $0x90] sm:$0xff]
      %v2109 = vld [vmem:[#allocation4 + $0x98] sm:$0xff]
      %v2110 = vld [vmem:[#allocation4 + $0xa0] sm:$0xff]
      %v2111 = vld [vmem:[#allocation4 + $0xa8] sm:$0xff]
      %v2112 = vld [vmem:[#allocation4 + $0xb0] sm:$0xff]
      %v2113 = vld [vmem:[#allocation4 + $0xb8] sm:$0xff]
      %v2114 = vld [vmem:[#allocation4 + $0xc0] sm:$0xff]
      %v2115 = vld [vmem:[#allocation4 + $0xc8] sm:$0xff]
      %v2116 = vld [vmem:[#allocation4 + $0xd0] sm:$0xff]
      %v2117 = vld [vmem:[#allocation4 + $0xd8] sm:$0xff]
      %v2118 = vld [vmem:[#allocation4 + $0xe0] sm:$0xff]
      %v2119 = vld [vmem:[#allocation4 + $0xe8] sm:$0xff]
      %v2120 = vld [vmem:[#allocation4 + $0xf0] sm:$0xff]
      %v2121 = vld [vmem:[#allocation4 + $0xf8] sm:$0xff]
      %v2122 = vld [vmem:[#allocation4 + $0x100] sm:$0xff]
      %v2123 = vld [vmem:[#allocation4 + $0x108] sm:$0xff]
      %v2124 = vld [vmem:[#allocation4 + $0x110] sm:$0xff]
      %v2125 = vld [vmem:[%s3] sm:$0xf]
      %v2126 = vld [vmem:[%s3 + $0x4] sm:$0xf]
      %v2127 = vld [vmem:[%s3 + $0x8] sm:$0xf]
      %v2128 = vld [vmem:[%s3 + $0xc] sm:$0xf]
      %v2129 = vld [vmem:[%s3 + $0x10] sm:$0xf]
      %v2130 = vld [vmem:[%s3 + $0x14] sm:$0xf]
      %v2131 = vld [vmem:[%s3 + $0x18] sm:$0xf]
      %v2132 = vld [vmem:[%s3 + $0x1c] sm:$0xf]
      %v2133 = vld [vmem:[%s3 + $0x20] sm:$0xf]
      %v2134 = vld [vmem:[%s3 + $0x24] sm:$0xf]
      %v2135 = vld [vmem:[%s3 + $0x28] sm:$0xf]
      %v2136 = vld [vmem:[%s3 + $0x2c] sm:$0xf]
      %v2137 = vld [vmem:[%s3 + $0x30] sm:$0xf]
      %v2138 = vld [vmem:[%s3 + $0x34] sm:$0xf]
      %v2139 = vld [vmem:[%s3 + $0x38] sm:$0xf]
      %v2140 = vld [vmem:[%s3 + $0x3c] sm:$0xf]
      %v2141 = vld [vmem:[%s3 + $0x40] sm:$0xf]
      %v2142 = vld [vmem:[%s3 + $0x44] sm:$0xf]
      %v2143 = vld [vmem:[%s3 + $0x48] sm:$0xf]
      %v2144 = vld [vmem:[%s3 + $0x4c] sm:$0xf]
      %v2145 = vld [vmem:[%s3 + $0x50] sm:$0xf]
      %v2146 = vld [vmem:[%s3 + $0x54] sm:$0xf]
      %v2147 = vld [vmem:[%s3 + $0x58] sm:$0xf]
      %v2148 = vld [vmem:[%s3 + $0x5c] sm:$0xf]
      %v2149 = vld [vmem:[%s3 + $0x60] sm:$0xf]
      %v2150 = vld [vmem:[%s3 + $0x64] sm:$0xf]
      %v2151 = vld [vmem:[%s3 + $0x68] sm:$0xf]
      %v2152 = vld [vmem:[%s3 + $0x6c] sm:$0xf]
      %v2153 = vld [vmem:[%s3 + $0x70] sm:$0xf]
      %v2154 = vld [vmem:[%s3 + $0x74] sm:$0xf]
      %v2155 = vld [vmem:[%s3 + $0x78] sm:$0xf]
      %v2156 = vld [vmem:[%s3 + $0x7c] sm:$0xf]
      %v2157 = vld [vmem:[%s3 + $0x80] sm:$0xf]
      %v2158 = vld [vmem:[%s3 + $0x84] sm:$0xf]
      %v2159 = vld [vmem:[%s3 + $0x88] sm:$0xf]
      %v2160 = vld [vmem:[%s3 + $0x8c] sm:$0xf]
      %v2161 = vld [vmem:[%s3 + $0x90] sm:$0xf]
      %v2162 = vld [vmem:[%s3 + $0x94] sm:$0xf]
      %v2163 = vld [vmem:[%s3 + $0x98] sm:$0xf]
      %v2164 = vld [vmem:[%s3 + $0x9c] sm:$0xf]
      %v2165 = vld [vmem:[%s3 + $0xa0] sm:$0xf]
      %v2166 = vld [vmem:[%s3 + $0xa4] sm:$0xf]
      %v2167 = vld [vmem:[%s3 + $0xa8] sm:$0xf]
      %v2168 = vld [vmem:[%s3 + $0xac] sm:$0xf]
      %v2169 = vld [vmem:[%s3 + $0xb0] sm:$0xf]
      %v2170 = vld [vmem:[%s3 + $0xb4] sm:$0xf]
      %v2171 = vld [vmem:[%s3 + $0xb8] sm:$0xf]
      %v2172 = vld [vmem:[%s3 + $0xbc] sm:$0xf]
      %v2173 = vld [vmem:[%s3 + $0xc0] sm:$0xf]
      %v2174 = vld [vmem:[%s3 + $0xc4] sm:$0xf]
      %v2175 = vld [vmem:[%s3 + $0xc8] sm:$0xf]
      %v2176 = vld [vmem:[%s3 + $0xcc] sm:$0xf]
      %v2177 = vld [vmem:[%s3 + $0xd0] sm:$0xf]
      %v2178 = vld [vmem:[%s3 + $0xd4] sm:$0xf]
      %v2179 = vld [vmem:[%s3 + $0xd8] sm:$0xf]
      %v2180 = vld [vmem:[%s3 + $0xdc] sm:$0xf]
      %v2181 = vld [vmem:[%s3 + $0xe0] sm:$0xf]
      %v2182 = vld [vmem:[%s3 + $0xe4] sm:$0xf]
      %v2183 = vld [vmem:[%s3 + $0xe8] sm:$0xf]
      %v2184 = vld [vmem:[%s3 + $0xec] sm:$0xf]
      %v2185 = vld [vmem:[%s3 + $0xf0] sm:$0xf]
      %v2186 = vld [vmem:[%s3 + $0xf4] sm:$0xf]
      %v2187 = vld [vmem:[%s3 + $0xf8] sm:$0xf]
      %v2188 = vld [vmem:[%s3 + $0xfc] sm:$0xf]
      %v2189 = vld [vmem:[%s3 + $0x100] sm:$0xf]
      %v2190 = vld [vmem:[%s3 + $0x104] sm:$0xf]
      %v2191 = vld [vmem:[%s3 + $0x108] sm:$0xf]
      %v2192 = vld [vmem:[%s3 + $0x10c] sm:$0xf]
      %v2193 = vld [vmem:[%s3 + $0x110] sm:$0xf]
      %v2194 = vld [vmem:[%s3 + $0x114] sm:$0xf]
      %v2195 = vld [vmem:[%s3 + $0x118] sm:$0xf]
      %v2196 = vld [vmem:[%s3 + $0x11c] sm:$0xf]
      %v2197 = vld [vmem:[%s4] sm:$0x1]
      %v2199 = vlaneseq
      %v2200 = vshrl.u32 %v2199, 7
      %v2201 = vsub.s32 0, %v2200
      %v2202 = vrot.slane %v2197, %v2201
      %v2276 = vunpack.c.l.b16 %v2125
      %v2277 = vunpack.c.l.b16 %v2126
      %v2278 = vunpack.c.l.b16 %v2127
      %v2279 = vunpack.c.l.b16 %v2128
      %v2280 = vunpack.c.l.b16 %v2129
      %v2281 = vunpack.c.l.b16 %v2130
      %v2282 = vunpack.c.l.b16 %v2131
      %v2283 = vunpack.c.l.b16 %v2132
      %v2284 = vunpack.c.l.b16 %v2133
      %v2285 = vunpack.c.l.b16 %v2134
      %v2286 = vunpack.c.l.b16 %v2135
      %v2287 = vunpack.c.l.b16 %v2136
      %v2288 = vunpack.c.l.b16 %v2137
      %v2289 = vunpack.c.l.b16 %v2138
      %v2290 = vunpack.c.l.b16 %v2139
      %v2291 = vunpack.c.l.b16 %v2140
      %v2292 = vunpack.c.l.b16 %v2141
      %v2293 = vunpack.c.l.b16 %v2142
      %v2294 = vunpack.c.l.b16 %v2143
      %v2295 = vunpack.c.l.b16 %v2144
      %v2296 = vunpack.c.l.b16 %v2145
      %v2297 = vunpack.c.l.b16 %v2146
      %v2298 = vunpack.c.l.b16 %v2147
      %v2299 = vunpack.c.l.b16 %v2148
      %v2300 = vunpack.c.l.b16 %v2149
      %v2301 = vunpack.c.l.b16 %v2150
      %v2302 = vunpack.c.l.b16 %v2151
      %v2303 = vunpack.c.l.b16 %v2152
      %v2304 = vunpack.c.l.b16 %v2153
      %v2305 = vunpack.c.l.b16 %v2154
      %v2306 = vunpack.c.l.b16 %v2155
      %v2307 = vunpack.c.l.b16 %v2156
      %v2308 = vunpack.c.l.b16 %v2157
      %v2309 = vunpack.c.l.b16 %v2158
      %v2310 = vunpack.c.l.b16 %v2159
      %v2311 = vunpack.c.l.b16 %v2160
      %v2312 = vunpack.c.l.b16 %v2161
      %v2313 = vunpack.c.l.b16 %v2162
      %v2314 = vunpack.c.l.b16 %v2163
      %v2315 = vunpack.c.l.b16 %v2164
      %v2316 = vunpack.c.l.b16 %v2165
      %v2317 = vunpack.c.l.b16 %v2166
      %v2318 = vunpack.c.l.b16 %v2167
      %v2319 = vunpack.c.l.b16 %v2168
      %v2320 = vunpack.c.l.b16 %v2169
      %v2321 = vunpack.c.l.b16 %v2170
      %v2322 = vunpack.c.l.b16 %v2171
      %v2323 = vunpack.c.l.b16 %v2172
      %v2324 = vunpack.c.l.b16 %v2173
      %v2325 = vunpack.c.l.b16 %v2174
      %v2326 = vunpack.c.l.b16 %v2175
      %v2327 = vunpack.c.l.b16 %v2176
      %v2328 = vunpack.c.l.b16 %v2177
      %v2329 = vunpack.c.l.b16 %v2178
      %v2330 = vunpack.c.l.b16 %v2179
      %v2331 = vunpack.c.l.b16 %v2180
      %v2332 = vunpack.c.l.b16 %v2181
      %v2333 = vunpack.c.l.b16 %v2182
      %v2334 = vunpack.c.l.b16 %v2183
      %v2335 = vunpack.c.l.b16 %v2184
      %v2336 = vunpack.c.l.b16 %v2185
      %v2337 = vunpack.c.l.b16 %v2186
      %v2338 = vunpack.c.l.b16 %v2187
      %v2339 = vunpack.c.l.b16 %v2188
      %v2340 = vunpack.c.l.b16 %v2189
      %v2341 = vunpack.c.l.b16 %v2190
      %v2342 = vunpack.c.l.b16 %v2191
      %v2343 = vunpack.c.l.b16 %v2192
      %v2344 = vunpack.c.l.b16 %v2193
      %v2345 = vunpack.c.l.b16 %v2194
      %v2346 = vunpack.c.l.b16 %v2195
      %v2347 = vunpack.c.l.b16 %v2196
      %v2348 = vpack.c.b16 %v2277, %v2276
      %v2349 = vpack.c.b16 %v2279, %v2278
      %v2350 = vpack.c.b16 %v2281, %v2280
      %v2351 = vpack.c.b16 %v2283, %v2282
      %v2352 = vpack.c.b16 %v2285, %v2284
      %v2353 = vpack.c.b16 %v2287, %v2286
      %v2354 = vpack.c.b16 %v2289, %v2288
      %v2355 = vpack.c.b16 %v2291, %v2290
      %v2356 = vpack.c.b16 %v2293, %v2292
      %v2357 = vpack.c.b16 %v2295, %v2294
      %v2358 = vpack.c.b16 %v2297, %v2296
      %v2359 = vpack.c.b16 %v2299, %v2298
      %v2360 = vpack.c.b16 %v2301, %v2300
      %v2361 = vpack.c.b16 %v2303, %v2302
      %v2362 = vpack.c.b16 %v2305, %v2304
      %v2363 = vpack.c.b16 %v2307, %v2306
      %v2364 = vpack.c.b16 %v2309, %v2308
      %v2365 = vpack.c.b16 %v2311, %v2310
      %v2366 = vpack.c.b16 %v2313, %v2312
      %v2367 = vpack.c.b16 %v2315, %v2314
      %v2368 = vpack.c.b16 %v2317, %v2316
      %v2369 = vpack.c.b16 %v2319, %v2318
      %v2370 = vpack.c.b16 %v2321, %v2320
      %v2371 = vpack.c.b16 %v2323, %v2322
      %v2372 = vpack.c.b16 %v2325, %v2324
      %v2373 = vpack.c.b16 %v2327, %v2326
      %v2374 = vpack.c.b16 %v2329, %v2328
      %v2375 = vpack.c.b16 %v2331, %v2330
      %v2376 = vpack.c.b16 %v2333, %v2332
      %v2377 = vpack.c.b16 %v2335, %v2334
      %v2378 = vpack.c.b16 %v2337, %v2336
      %v2379 = vpack.c.b16 %v2339, %v2338
      %v2380 = vpack.c.b16 %v2341, %v2340
      %v2381 = vpack.c.b16 %v2343, %v2342
      %v2382 = vpack.c.b16 %v2345, %v2344
      %v2383 = vpack.c.b16 %v2347, %v2346
      %v2421 = vsel %vm842, %v2094, 0
      %v2424 = vsel %vm842, %v2099, 0
      %v2427 = vsel %vm842, %v2104, 0
      %v2430 = vsel %vm842, %v2109, 0
      %v2433 = vsel %vm842, %v2114, 0
      %v2436 = vsel %vm842, %v2119, 0
      %v2439 = vsel %vm842, %v2124, 0
      %2441 = vmatprep.subr.bf16.mxu0 0
      %2442 = vmatpush1.bf16.msra.mxu0 %v2348
      %2443 = vmatprep.subr.bf16.mxu0 0
      %2444 = vmatpush1.bf16.msra.mxu0 %v2349
      %2445 = vmatprep.subr.bf16.mxu0 0
      %2446 = vmatpush1.bf16.msra.mxu0 %v2350
      %2447 = vmatprep.subr.bf16.mxu0 0
      %2448 = vmatpush1.bf16.msra.mxu0 %v2351
      %2449 = vmatprep.subr.bf16.mxu0 0
      %2450 = vmatpush1.bf16.msra.mxu0 %v2352
      %2451 = vmatprep.subr.bf16.mxu0 0
      %2452 = vmatpush1.bf16.msra.mxu0 %v2353
      %2453 = vmatprep.subr.bf16.mxu0 0
      %2454 = vmatpush1.bf16.msra.mxu0 %v2354
      %2455 = vmatprep.subr.bf16.mxu0 0
      %2456 = vmatpush1.bf16.msra.mxu0 %v2355
      %2457 = vmatprep.subr.bf16.mxu0 0
      %2458 = vmatpush1.bf16.msra.mxu0 %v2356
      %2459 = vmatprep.subr.bf16.mxu0 0
      %2460 = vmatpush1.bf16.msra.mxu0 %v2357
      %2461 = vmatprep.subr.bf16.mxu0 0
      %2462 = vmatpush1.bf16.msra.mxu0 %v2358
      %2463 = vmatprep.subr.bf16.mxu0 0
      %2464 = vmatpush1.bf16.msra.mxu0 %v2359
      %2465 = vmatprep.subr.bf16.mxu0 0
      %2466 = vmatpush1.bf16.msra.mxu0 %v2360
      %2467 = vmatprep.subr.bf16.mxu0 0
      %2468 = vmatpush1.bf16.msra.mxu0 %v2361
      %2469 = vmatprep.subr.bf16.mxu0 0
      %2470 = vmatpush1.bf16.msra.mxu0 %v2362
      %2471 = vmatprep.subr.bf16.mxu0 0
      %2472 = vmatpush1.bf16.msra.mxu0 %v2363
      %2473 = vmatprep.mubr.bf16.mxu0 %v2091
      %2474 = vmatmul.mubr.bf16.gmra.mrb[0].mxu0 %v2090
      %v2475 = vpop.f32.mrb[0].mxu0
      %v2476 = vadd.f32 %v2202, %v2475
      %v2477 = vpop.f32.mrb[0].mxu0
      %v2478 = vpop.f32.mrb[0].mxu0
      %v2479 = vadd.f32 %v2202, %v2478
      %v2480 = vpop.f32.mrb[0].mxu0
      %2481 = vmatprep.mubr.bf16.mxu0 %v2096
      %2482 = vmatmul.mubr.bf16.gmra.mrb[0].mxu0 %v2095
      %v2483 = vpop.f32.mrb[0].mxu0
      %v2484 = vadd.f32 %v2202, %v2483
      %v2485 = vpop.f32.mrb[0].mxu0
      %v2486 = vpop.f32.mrb[0].mxu0
      %v2487 = vadd.f32 %v2202, %v2486
      %v2488 = vpop.f32.mrb[0].mxu0
      %2489 = vmatprep.mubr.bf16.mxu0 %v2101
      %2490 = vmatmul.mubr.bf16.gmra.mrb[0].mxu0 %v2100
      %v2491 = vpop.f32.mrb[0].mxu0
      %v2492 = vadd.f32 %v2202, %v2491
      %v2493 = vpop.f32.mrb[0].mxu0
      %v2494 = vpop.f32.mrb[0].mxu0
      %v2495 = vadd.f32 %v2202, %v2494
      %v2496 = vpop.f32.mrb[0].mxu0
      %2497 = vmatprep.mubr.bf16.mxu0 %v2106
      %2498 = vmatmul.mubr.bf16.gmra.mrb[0].mxu0 %v2105
      %v2499 = vpop.f32.mrb[0].mxu0
      %v2500 = vadd.f32 %v2202, %v2499
      %v2501 = vpop.f32.mrb[0].mxu0
      %v2502 = vpop.f32.mrb[0].mxu0
      %v2503 = vadd.f32 %v2202, %v2502
      %v2504 = vpop.f32.mrb[0].mxu0
      %2505 = vmatprep.mubr.bf16.mxu0 %v2111
      %2506 = vmatmul.mubr.bf16.gmra.mrb[0].mxu0 %v2110
      %v2507 = vpop.f32.mrb[0].mxu0
      %v2508 = vadd.f32 %v2202, %v2507
      %v2509 = vpop.f32.mrb[0].mxu0
      %v2510 = vpop.f32.mrb[0].mxu0
      %v2511 = vadd.f32 %v2202, %v2510
      %v2512 = vpop.f32.mrb[0].mxu0
      %2513 = vmatprep.mubr.bf16.mxu0 %v2116
      %2514 = vmatmul.mubr.bf16.gmra.mrb[0].mxu0 %v2115
      %v2515 = vpop.f32.mrb[0].mxu0
      %v2516 = vadd.f32 %v2202, %v2515
      %v2517 = vpop.f32.mrb[0].mxu0
      %v2518 = vpop.f32.mrb[0].mxu0
      %v2519 = vadd.f32 %v2202, %v2518
      %v2520 = vpop.f32.mrb[0].mxu0
      %2521 = vmatprep.mubr.bf16.mxu0 %v2121
      %2522 = vmatmul.mubr.bf16.gmra.mrb[0].mxu0 %v2120
      %v2523 = vpop.f32.mrb[0].mxu0
      %v2524 = vadd.f32 %v2202, %v2523
      %v2525 = vpop.f32.mrb[0].mxu0
      %v2526 = vpop.f32.mrb[0].mxu0
      %v2527 = vadd.f32 %v2202, %v2526
      %v2528 = vpop.f32.mrb[0].mxu0
      %2529 = vdwg.mxu0
      %2530 = vmatprep.subr.bf16.mxu0 0
      %2531 = vmatpush1.bf16.msra.mxu0 %v2364
      %2532 = vmatprep.subr.bf16.mxu0 0
      %2533 = vmatpush1.bf16.msra.mxu0 %v2365
      %2534 = vmatprep.subr.bf16.mxu0 0
      %2535 = vmatpush1.bf16.msra.mxu0 %v2366
      %2536 = vmatprep.subr.bf16.mxu0 0
      %2537 = vmatpush1.bf16.msra.mxu0 %v2367
      %2538 = vmatprep.subr.bf16.mxu0 0
      %2539 = vmatpush1.bf16.msra.mxu0 %v2368
      %2540 = vmatprep.subr.bf16.mxu0 0
      %2541 = vmatpush1.bf16.msra.mxu0 %v2369
      %2542 = vmatprep.subr.bf16.mxu0 0
      %2543 = vmatpush1.bf16.msra.mxu0 %v2370
      %2544 = vmatprep.subr.bf16.mxu0 0
      %2545 = vmatpush1.bf16.msra.mxu0 %v2371
      %2546 = vmatprep.subr.bf16.mxu0 0
      %2547 = vmatpush1.bf16.msra.mxu0 %v2372
      %2548 = vmatprep.subr.bf16.mxu0 0
      %2549 = vmatpush1.bf16.msra.mxu0 %v2373
      %2550 = vmatprep.subr.bf16.mxu0 0
      %2551 = vmatpush1.bf16.msra.mxu0 %v2374
      %2552 = vmatprep.subr.bf16.mxu0 0
      %2553 = vmatpush1.bf16.msra.mxu0 %v2375
      %2554 = vmatprep.subr.bf16.mxu0 0
      %2555 = vmatpush1.bf16.msra.mxu0 %v2376
      %2556 = vmatprep.subr.bf16.mxu0 0
      %2557 = vmatpush1.bf16.msra.mxu0 %v2377
      %2558 = vmatprep.subr.bf16.mxu0 0
      %2559 = vmatpush1.bf16.msra.mxu0 %v2378
      %2560 = vmatprep.subr.bf16.mxu0 0
      %2561 = vmatpush1.bf16.msra.mxu0 %v2379
      %2562 = vmatprep.mubr.bf16.mxu0 %v2093
      %2563 = vmatmul.mubr.bf16.gmra.mrb[0].mxu0 %v2092
      %v2564 = vpop.f32.mrb[0].mxu0
      %v2565 = vadd.f32 %v2476, %v2564
      %v2566 = vpop.f32.mrb[0].mxu0
      %v2567 = vpop.f32.mrb[0].mxu0
      %v2568 = vadd.f32 %v2479, %v2567
      %v2569 = vpop.f32.mrb[0].mxu0
      %2570 = vmatprep.mubr.bf16.mxu0 %v2098
      %2571 = vmatmul.mubr.bf16.gmra.mrb[0].mxu0 %v2097
      %v2572 = vpop.f32.mrb[0].mxu0
      %v2573 = vadd.f32 %v2484, %v2572
      %v2574 = vpop.f32.mrb[0].mxu0
      %v2575 = vpop.f32.mrb[0].mxu0
      %v2576 = vadd.f32 %v2487, %v2575
      %v2577 = vpop.f32.mrb[0].mxu0
      %2578 = vmatprep.mubr.bf16.mxu0 %v2103
      %2579 = vmatmul.mubr.bf16.gmra.mrb[0].mxu0 %v2102
      %v2580 = vpop.f32.mrb[0].mxu0
      %v2581 = vadd.f32 %v2492, %v2580
      %v2582 = vpop.f32.mrb[0].mxu0
      %v2583 = vpop.f32.mrb[0].mxu0
      %v2584 = vadd.f32 %v2495, %v2583
      %v2585 = vpop.f32.mrb[0].mxu0
      %2586 = vmatprep.mubr.bf16.mxu0 %v2108
      %2587 = vmatmul.mubr.bf16.gmra.mrb[0].mxu0 %v2107
      %v2588 = vpop.f32.mrb[0].mxu0
      %v2589 = vadd.f32 %v2500, %v2588
      %v2590 = vpop.f32.mrb[0].mxu0
      %v2591 = vpop.f32.mrb[0].mxu0
      %v2592 = vadd.f32 %v2503, %v2591
      %v2593 = vpop.f32.mrb[0].mxu0
      %2594 = vmatprep.mubr.bf16.mxu0 %v2113
      %2595 = vmatmul.mubr.bf16.gmra.mrb[0].mxu0 %v2112
      %v2596 = vpop.f32.mrb[0].mxu0
      %v2597 = vadd.f32 %v2508, %v2596
      %v2598 = vpop.f32.mrb[0].mxu0
      %v2599 = vpop.f32.mrb[0].mxu0
      %v2600 = vadd.f32 %v2511, %v2599
      %v2601 = vpop.f32.mrb[0].mxu0
      %2602 = vmatprep.mubr.bf16.mxu0 %v2118
      %2603 = vmatmul.mubr.bf16.gmra.mrb[0].mxu0 %v2117
      %v2604 = vpop.f32.mrb[0].mxu0
      %v2605 = vadd.f32 %v2516, %v2604
      %v2606 = vpop.f32.mrb[0].mxu0
      %v2607 = vpop.f32.mrb[0].mxu0
      %v2608 = vadd.f32 %v2519, %v2607
      %v2609 = vpop.f32.mrb[0].mxu0
      %2610 = vmatprep.mubr.bf16.mxu0 %v2123
      %2611 = vmatmul.mubr.bf16.gmra.mrb[0].mxu0 %v2122
      %v2612 = vpop.f32.mrb[0].mxu0
      %v2613 = vadd.f32 %v2524, %v2612
      %v2614 = vpop.f32.mrb[0].mxu0
      %v2615 = vpop.f32.mrb[0].mxu0
      %v2616 = vadd.f32 %v2527, %v2615
      %v2617 = vpop.f32.mrb[0].mxu0
      %2618 = vdwg.mxu0
      %2619 = vmatprep.subr.bf16.mxu0 0
      %2620 = vmatpush1.bf16.msra.mxu0 %v2380
      %2621 = vmatprep.subr.bf16.mxu0 0
      %2622 = vmatpush1.bf16.msra.mxu0 %v2381
      %2623 = vmatprep.subr.bf16.mxu0 0
      %2624 = vmatpush1.bf16.msra.mxu0 %v2382
      %2625 = vmatprep.subr.bf16.mxu0 0
      %2626 = vmatpush1.bf16.msra.mxu0 %v2383
      %2627 = vmatprep.subr.bf16.mxu0 0
      %2628 = vmatpush1.bf16.msra.mxu0 0
      %2629 = vmatprep.subr.bf16.mxu0 0
      %2630 = vmatpush1.bf16.msra.mxu0 0
      %2631 = vmatprep.subr.bf16.mxu0 0
      %2632 = vmatpush1.bf16.msra.mxu0 0
      %2633 = vmatprep.subr.bf16.mxu0 0
      %2634 = vmatpush1.bf16.msra.mxu0 0
      %2635 = vmatprep.subr.bf16.mxu0 0
      %2636 = vmatpush1.bf16.msra.mxu0 0
      %2637 = vmatprep.subr.bf16.mxu0 0
      %2638 = vmatpush1.bf16.msra.mxu0 0
      %2639 = vmatprep.subr.bf16.mxu0 0
      %2640 = vmatpush1.bf16.msra.mxu0 0
      %2641 = vmatprep.subr.bf16.mxu0 0
      %2642 = vmatpush1.bf16.msra.mxu0 0
      %2643 = vmatprep.subr.bf16.mxu0 0
      %2644 = vmatpush1.bf16.msra.mxu0 0
      %2645 = vmatprep.subr.bf16.mxu0 0
      %2646 = vmatpush1.bf16.msra.mxu0 0
      %2647 = vmatprep.subr.bf16.mxu0 0
      %2648 = vmatpush1.bf16.msra.mxu0 0
      %2649 = vmatprep.subr.bf16.mxu0 0
      %2650 = vmatpush1.bf16.msra.mxu0 0
      %2651 = vmatprep.mubr.bf16.mxu0 0
      %2652 = vmatmul.mubr.bf16.gmra.mrb[0].mxu0 %v2421
      %v2653 = vpop.f32.mrb[0].mxu0
      %v2654 = vadd.f32 %v2565, %v2653
      %v2655 = vpop.f32.mrb[0].mxu0
      %v2656 = vpop.f32.mrb[0].mxu0
      %v2657 = vadd.f32 %v2568, %v2656
      %v2658 = vpop.f32.mrb[0].mxu0
      %2659 = vmatprep.mubr.bf16.mxu0 0
      %2660 = vmatmul.mubr.bf16.gmra.mrb[0].mxu0 %v2424
      %v2661 = vpop.f32.mrb[0].mxu0
      %v2662 = vadd.f32 %v2573, %v2661
      %v2663 = vpop.f32.mrb[0].mxu0
      %v2664 = vpop.f32.mrb[0].mxu0
      %v2665 = vadd.f32 %v2576, %v2664
      %v2666 = vpop.f32.mrb[0].mxu0
      %2667 = vmatprep.mubr.bf16.mxu0 0
      %2668 = vmatmul.mubr.bf16.gmra.mrb[0].mxu0 %v2427
      %v2669 = vpop.f32.mrb[0].mxu0
      %v2670 = vadd.f32 %v2581, %v2669
      %v2671 = vpop.f32.mrb[0].mxu0
      %v2672 = vpop.f32.mrb[0].mxu0
      %v2673 = vadd.f32 %v2584, %v2672
      %v2674 = vpop.f32.mrb[0].mxu0
      %2675 = vmatprep.mubr.bf16.mxu0 0
      %2676 = vmatmul.mubr.bf16.gmra.mrb[0].mxu0 %v2430
      %v2677 = vpop.f32.mrb[0].mxu0
      %v2678 = vadd.f32 %v2589, %v2677
      %v2679 = vpop.f32.mrb[0].mxu0
      %v2680 = vpop.f32.mrb[0].mxu0
      %v2681 = vadd.f32 %v2592, %v2680
      %v2682 = vpop.f32.mrb[0].mxu0
      %2683 = vmatprep.mubr.bf16.mxu0 0
      %2684 = vmatmul.mubr.bf16.gmra.mrb[0].mxu0 %v2433
      %v2685 = vpop.f32.mrb[0].mxu0
      %v2686 = vadd.f32 %v2597, %v2685
      %v2687 = vpop.f32.mrb[0].mxu0
      %v2688 = vpop.f32.mrb[0].mxu0
      %v2689 = vadd.f32 %v2600, %v2688
      %v2690 = vpop.f32.mrb[0].mxu0
      %2691 = vmatprep.mubr.bf16.mxu0 0
      %2692 = vmatmul.mubr.bf16.gmra.mrb[0].mxu0 %v2436
      %v2693 = vpop.f32.mrb[0].mxu0
      %v2694 = vadd.f32 %v2605, %v2693
      %v2695 = vpop.f32.mrb[0].mxu0
      %v2696 = vpop.f32.mrb[0].mxu0
      %v2697 = vadd.f32 %v2608, %v2696
      %v2698 = vpop.f32.mrb[0].mxu0
      %2699 = vmatprep.mubr.bf16.mxu0 0
      %2700 = vmatmul.mubr.bf16.gmra.mrb[0].mxu0 %v2439
      %v2701 = vpop.f32.mrb[0].mxu0
      %v2702 = vadd.f32 %v2613, %v2701
      %v2703 = vpop.f32.mrb[0].mxu0
      %v2704 = vpop.f32.mrb[0].mxu0
      %v2705 = vadd.f32 %v2616, %v2704
      %v2706 = vpop.f32.mrb[0].mxu0
      %2707 = vdwg.mxu0
      %v2708 = vmax.f32 %v2654, 0.0
      %v2709 = vmax.f32 %v2657, 0.0
      %v2710 = vmax.f32 %v2662, 0.0
      %v2711 = vmax.f32 %v2665, 0.0
      %v2712 = vmax.f32 %v2670, 0.0
      %v2713 = vmax.f32 %v2673, 0.0
      %v2714 = vmax.f32 %v2678, 0.0
      %v2715 = vmax.f32 %v2681, 0.0
      %v2716 = vmax.f32 %v2686, 0.0
      %v2717 = vmax.f32 %v2689, 0.0
      %v2718 = vmax.f32 %v2694, 0.0
      %v2719 = vmax.f32 %v2697, 0.0
      %v2720 = vmax.f32 %v2702, 0.0
      %v2721 = vmax.f32 %v2705, 0.0
      %2722 = vst [vmem:[#allocation5] sm:$0xff] %v2708
      %2723 = vst [vmem:[#allocation5 + $0x8] sm:$0xff] %v2709
      %2724 = vst [vmem:[#allocation5 + $0x10] sm:$0xff] %v2710
      %2725 = vst [vmem:[#allocation5 + $0x18] sm:$0xff] %v2711
      %2726 = vst [vmem:[#allocation5 + $0x20] sm:$0xff] %v2712
      %2727 = vst [vmem:[#allocation5 + $0x28] sm:$0xff] %v2713
      %2728 = vst [vmem:[#allocation5 + $0x30] sm:$0xff] %v2714
      %2729 = vst [vmem:[#allocation5 + $0x38] sm:$0xff] %v2715
      %2730 = vst [vmem:[#allocation5 + $0x40] sm:$0xff] %v2716
      %2731 = vst [vmem:[#allocation5 + $0x48] sm:$0xff] %v2717
      %2732 = vst [vmem:[#allocation5 + $0x50] sm:$0xff] %v2718
      %2733 = vst [vmem:[#allocation5 + $0x58] sm:$0xff] %v2719
      %2734 = vst [vmem:[#allocation5 + $0x60] sm:$0xff] %v2720
      %2735 = vst [vmem:[#allocation5 + $0x68] sm:$0xff] %v2721
      %v2736 = vld [vmem:[#allocation5] ss:$2 sm:$0xff]
      %s2737 = scalar_lea.vmem [#allocation5], 16
      %v2738 = vld [vmem:[%s2737] ss:$2 sm:$0xff]
      %s2739 = scalar_lea.vmem [#allocation5], 32
      %v2740 = vld [vmem:[%s2739] ss:$2 sm:$0xff]
      %s2741 = scalar_lea.vmem [#allocation5], 48
      %v2742 = vld [vmem:[%s2741] ss:$2 sm:$0xff]
      %s2743 = scalar_lea.vmem [#allocation5], 64
      %v2744 = vld [vmem:[%s2743] ss:$2 sm:$0xff]
      %s2745 = scalar_lea.vmem [#allocation5], 80
      %v2746 = vld [vmem:[%s2745] ss:$2 sm:$0xff]
      %s2747 = scalar_lea.vmem [#allocation5], 1
      %v2748 = vld [vmem:[%s2747] ss:$2 sm:$0xff]
      %s2749 = scalar_lea.vmem [#allocation5], 17
      %v2750 = vld [vmem:[%s2749] ss:$2 sm:$0xff]
      %s2751 = scalar_lea.vmem [#allocation5], 33
      %v2752 = vld [vmem:[%s2751] ss:$2 sm:$0xff]
      %s2753 = scalar_lea.vmem [#allocation5], 49
      %v2754 = vld [vmem:[%s2753] ss:$2 sm:$0xff]
      %s2755 = scalar_lea.vmem [#allocation5], 65
      %v2756 = vld [vmem:[%s2755] ss:$2 sm:$0xff]
      %s2757 = scalar_lea.vmem [#allocation5], 81
      %v2758 = vld [vmem:[%s2757] ss:$2 sm:$0xff]
      %v2759 = vmax.f32 %v2736, %v2748
      %v2760 = vmax.f32 %v2738, %v2750
      %v2761 = vmax.f32 %v2740, %v2752
      %v2762 = vmax.f32 %v2742, %v2754
      %v2763 = vmax.f32 %v2744, %v2756
      %v2764 = vmax.f32 %v2746, %v2758
      %vm2771 = vcmask 1042432
      %v2772 = vrot.slane %v2759, 5
      %v2773 = vrot.slane %v2760, 5
      %v2774 = vsel %vm2771, %v2772, %v2773
      %v2775 = vrot.slane %v2761, 5
      %v2776 = vsel %vm2771, %v2773, %v2775
      %v2777 = vrot.slane %v2762, 5
      %v2778 = vsel %vm2771, %v2775, %v2777
      %v2779 = vrot.slane %v2763, 5
      %v2780 = vsel %vm2771, %v2777, %v2779
      %v2781 = vrot.slane %v2764, 5
      %v2782 = vsel %vm2771, %v2779, %v2781
      %v2788 = vmax.f32 %v2759, %v2774
      %v2789 = vmax.f32 %v2760, %v2776
      %v2790 = vmax.f32 %v2761, %v2778
      %v2791 = vmax.f32 %v2762, %v2780
      %v2792 = vmax.f32 %v2763, %v2782
      %v2793 = vpack.c.bf16 %v2788, %v2788
      %v2795 = vunpack.c.l.b16 %v2793
      %v2796 = vpack.c.b16 %v2795, %v2795
      %v2798 = vshll.u32 %v2796, 16
      %v2800 = vrot.slane %v2798, 5
      %v2801 = vshrl.u32 %v2796, 16
      %v2803 = vrot.slane %v2801, 4
      %v2804 = vor.u32 %v2803, %v2800
      %v2805 = vrot.slane %v2804, 4
      %vm2808 = vcmask 1043459
      %vm2809 = vmand %vm2808, %vm1032
      %v2810 = vld [vmem:[#allocation6] sm:$0x8]
      %v2811 = vsel %vm2809, %v2800, %v2810
      %2812 = vst [vmem:[#allocation6] sm:$0x8] %v2811
      %vm2813 = vcmask 1041408
      %vm2814 = vmand %vm2813, %vm984
      %v2815 = vld [vmem:[#allocation6 + $0x4] sm:$0x3]
      %v2816 = vsel %vm2814, %v2805, %v2815
      %2817 = vst [vmem:[#allocation6 + $0x4] sm:$0x3] %v2816
      %v2818 = vpack.c.bf16 %v2789, %v2789
      %v2820 = vunpack.c.l.b16 %v2818
      %v2821 = vpack.c.b16 %v2820, %v2820
      %v2823 = vshrl.u32 %v2821, 16
      %v2825 = vrot.slane %v2823, 6
      %v2826 = vshll.u32 %v2821, 16
      %v2828 = vrot.slane %v2826, 7
      %v2829 = vor.u32 %v2825, %v2828
      %v2830 = vrot.slane %v2825, 4
      %vm2833 = vcmask 1043458
      %vm2834 = vmand %vm2833, %vm1005
      %v2835 = vld [vmem:[#allocation6 + $0x4] sm:$0xc]
      %v2836 = vsel %vm2834, %v2829, %v2835
      %2837 = vst [vmem:[#allocation6 + $0x4] sm:$0xc] %v2836
      %vm2838 = vcmask 1040384
      %vm2839 = vmand %vm2838, %vm1063
      %v2840 = vld [vmem:[#allocation6 + $0x8] sm:$0x1]
      %v2841 = vsel %vm2839, %v2830, %v2840
      %2842 = vst [vmem:[#allocation6 + $0x8] sm:$0x1] %v2841
      %v2843 = vpack.c.bf16 %v2790, %v2790
      %v2845 = vunpack.c.l.b16 %v2843
      %v2846 = vpack.c.b16 %v2845, %v2845
      %v2848 = vshrl.u32 %v2846, 16
      %v2850 = vrot.slane %v2848, 4
      %v2851 = vshll.u32 %v2846, 16
      %v2853 = vrot.slane %v2851, 5
      %v2854 = vor.u32 %v2850, %v2853
      %v2855 = vrot.slane %v2854, 4
      %vm2857 = vcmask 1043457
      %vm2858 = vsmask.f32 3334
      %vm2859 = vmand %vm2857, %vm2858
      %v2860 = vld [vmem:[#allocation6 + $0x8] sm:$0xe]
      %v2861 = vsel %vm2859, %v2855, %v2860
      %2862 = vst [vmem:[#allocation6 + $0x8] sm:$0xe] %v2861
      %v2863 = vpack.c.bf16 %v2792, %v2791
      %v2865 = vunpack.c.l.b16 %v2863
      %v2866 = vunpack.c.h.b16 %v2863
      %v2867 = vpack.c.b16 %v2865, %v2865
      %v2868 = vpack.c.b16 %v2866, %v2866
      %vm2869 = vsmask.f32 5392
      %vm2870 = vmor %vm984, %vm2869
      %v2872 = vshrl.u32 %v2867, 16
      %v2874 = vrot.slane %v2872, 6
      %v2875 = vshll.u32 %v2867, 16
      %v2877 = vrot.slane %v2875, 7
      %v2878 = vor.u32 %v2874, %v2877
      %v2879 = vrot.slane %v2878, 4
      %v2881 = vshrl.u32 %v2868, 16
      %v2883 = vrot.slane %v2881, 6
      %v2884 = vshll.u32 %v2868, 16
      %v2886 = vrot.slane %v2884, 7
      %v2887 = vor.u32 %v2883, %v2886
      %v2888 = vsel %vm2870, %v2879, %v2887
      %vm2890 = vcmask 1042432
      %vm2891 = vsmask.f32 2306
      %vm2892 = vmand %vm2890, %vm2891
      %v2893 = vld [vmem:[#allocation6 + $0xc] sm:$0x7]
      %v2894 = vsel %vm2892, %v2888, %v2893
      %2895 = vst [vmem:[#allocation6 + $0xc] sm:$0x7] %v2894
      %v2896 = vld [vmem:[#allocation6] sm:$0xf]
      %v2897 = vld [vmem:[#allocation6 + $0x4] sm:$0xf]
      %v2898 = vld [vmem:[#allocation6 + $0x8] sm:$0xf]
      %v2899 = vld [vmem:[#allocation6 + $0xc] sm:$0xf]
      %v2900 = vld [vmem:[#allocation6 + $0x10] sm:$0xf]
      %2901 = vst [vmem:[#allocation7] sm:$0xf] %v2896
      %2902 = vst [vmem:[#allocation7 + $0x24] sm:$0xf] %v2897
      %2903 = vst [vmem:[#allocation7 + $0x48] sm:$0xf] %v2898
      %2904 = vst [vmem:[#allocation7 + $0x6c] sm:$0xf] %v2899
      %2905 = vst [vmem:[#allocation7 + $0x90] sm:$0xf] %v2900
      %v2906 = vld [vmem:[#allocation6] sm:$0xf]
      %v2907 = vld [vmem:[#allocation6 + $0x4] sm:$0xf]
      %v2908 = vld [vmem:[#allocation6 + $0x8] sm:$0xf]
      %v2909 = vld [vmem:[#allocation6 + $0xc] sm:$0xf]
      %v2910 = vld [vmem:[#allocation6 + $0x10] sm:$0xf]
      %v2911 = vld [vmem:[#allocation6 + $0x14] sm:$0x1]
      %vm2912 = vsmask.f32 7440
      %vm2913 = vmor %vm1038, %vm2912
      %v2915 = vshrl.u32 %v2906, 16
      %v2917 = vrot.slane %v2915, 4
      %v2918 = vshll.u32 %v2906, 16
      %v2920 = vrot.slane %v2918, 5
      %v2921 = vor.u32 %v2917, %v2920
      %v2922 = vrot.slane %v2921, 4
      %v2924 = vshll.u32 %v2907, 16
      %v2926 = vrot.slane %v2924, 5
      %v2927 = vsel %vm2913, %v2922, %v2926
      %v2928 = vshrl.u32 %v2907, 16
      %v2930 = vrot.slane %v2928, 4
      %v2931 = vor.u32 %v2930, %v2926
      %v2932 = vrot.slane %v2931, 4
      %v2934 = vshll.u32 %v2908, 16
      %v2936 = vrot.slane %v2934, 5
      %v2937 = vsel %vm2913, %v2932, %v2936
      %v2938 = vshrl.u32 %v2908, 16
      %v2940 = vrot.slane %v2938, 4
      %v2941 = vor.u32 %v2940, %v2936
      %v2942 = vrot.slane %v2941, 4
      %v2944 = vshll.u32 %v2909, 16
      %v2946 = vrot.slane %v2944, 5
      %v2947 = vsel %vm2913, %v2942, %v2946
      %v2948 = vshrl.u32 %v2909, 16
      %v2950 = vrot.slane %v2948, 4
      %v2951 = vor.u32 %v2950, %v2946
      %v2952 = vrot.slane %v2951, 4
      %v2954 = vshll.u32 %v2910, 16
      %v2956 = vrot.slane %v2954, 5
      %v2957 = vsel %vm2913, %v2952, %v2956
      %v2958 = vshrl.u32 %v2910, 16
      %v2960 = vrot.slane %v2958, 4
      %v2961 = vor.u32 %v2960, %v2956
      %v2962 = vrot.slane %v2961, 4
      %v2964 = vshll.u32 %v2911, 16
      %v2966 = vrot.slane %v2964, 5
      %v2967 = vsel %vm2913, %v2962, %v2966
      %2973 = vst [vmem:[#allocation7 + $0x4] sm:$0xf] %v2927
      %2974 = vst [vmem:[#allocation7 + $0x28] sm:$0xf] %v2937
      %2975 = vst [vmem:[#allocation7 + $0x4c] sm:$0xf] %v2947
      %2976 = vst [vmem:[#allocation7 + $0x70] sm:$0xf] %v2957
      %2977 = vst [vmem:[#allocation7 + $0x94] sm:$0xf] %v2967
      %v2978 = vld [vmem:[#allocation6] sm:$0xe]
      %v2979 = vld [vmem:[#allocation6 + $0x4] sm:$0xf]
      %v2980 = vld [vmem:[#allocation6 + $0x8] sm:$0xf]
      %v2981 = vld [vmem:[#allocation6 + $0xc] sm:$0xf]
      %v2982 = vld [vmem:[#allocation6 + $0x10] sm:$0xf]
      %v2983 = vld [vmem:[#allocation6 + $0x14] sm:$0x1]
      %vm2990 = vcmask 1046532
      %vm2991 = vmor %vm2890, %vm2990
      %v2992 = vrot.slane %v2978, 5
      %v2993 = vrot.slane %v2992, 4
      %v2994 = vrot.slane %v2979, 5
      %v2995 = vsel %vm2991, %v2993, %v2994
      %v2996 = vrot.slane %v2994, 4
      %v2997 = vrot.slane %v2980, 5
      %v2998 = vsel %vm2991, %v2996, %v2997
      %v2999 = vrot.slane %v2997, 4
      %v3000 = vrot.slane %v2981, 5
      %v3001 = vsel %vm2991, %v2999, %v3000
      %v3002 = vrot.slane %v3000, 4
      %v3003 = vrot.slane %v2982, 5
      %v3004 = vsel %vm2991, %v3002, %v3003
      %v3005 = vrot.slane %v3003, 4
      %v3006 = vrot.slane %v2983, 5
      %v3007 = vsel %vm2991, %v3005, %v3006
      %3013 = vst [vmem:[#allocation7 + $0x8] sm:$0xf] %v2995
      %3014 = vst [vmem:[#allocation7 + $0x2c] sm:$0xf] %v2998
      %3015 = vst [vmem:[#allocation7 + $0x50] sm:$0xf] %v3001
      %3016 = vst [vmem:[#allocation7 + $0x74] sm:$0xf] %v3004
      %3017 = vst [vmem:[#allocation7 + $0x98] sm:$0xf] %v3007
      %v3018 = vld [vmem:[#allocation6] sm:$0x8]
      %v3019 = vld [vmem:[#allocation6 + $0x4] sm:$0xf]
      %v3020 = vld [vmem:[#allocation6 + $0x8] sm:$0xf]
      %v3021 = vld [vmem:[#allocation6 + $0xc] sm:$0xf]
      %v3022 = vld [vmem:[#allocation6 + $0x10] sm:$0xf]
      %v3023 = vld [vmem:[#allocation6 + $0x14] sm:$0x7]
      %vm3030 = vcmask 1044484
      %vm3031 = vmor %vm2838, %vm3030
      %v3032 = vrot.slane %v3018, 7
      %v3033 = vrot.slane %v3032, 4
      %v3034 = vrot.slane %v3019, 7
      %v3035 = vsel %vm3031, %v3033, %v3034
      %v3036 = vrot.slane %v3034, 4
      %v3037 = vrot.slane %v3020, 7
      %v3038 = vsel %vm3031, %v3036, %v3037
      %v3039 = vrot.slane %v3037, 4
      %v3040 = vrot.slane %v3021, 7
      %v3041 = vsel %vm3031, %v3039, %v3040
      %v3042 = vrot.slane %v3040, 4
      %v3043 = vrot.slane %v3022, 7
      %v3044 = vsel %vm3031, %v3042, %v3043
      %v3045 = vrot.slane %v3043, 4
      %v3046 = vrot.slane %v3023, 7
      %v3047 = vsel %vm3031, %v3045, %v3046
      %3053 = vst [vmem:[#allocation7 + $0xc] sm:$0xf] %v3035
      %3054 = vst [vmem:[#allocation7 + $0x30] sm:$0xf] %v3038
      %3055 = vst [vmem:[#allocation7 + $0x54] sm:$0xf] %v3041
      %3056 = vst [vmem:[#allocation7 + $0x78] sm:$0xf] %v3044
      %3057 = vst [vmem:[#allocation7 + $0x9c] sm:$0xf] %v3047
      %v3058 = vld [vmem:[#allocation6] sm:$0x8]
      %v3059 = vld [vmem:[#allocation6 + $0x4] sm:$0xf]
      %v3060 = vld [vmem:[#allocation6 + $0x8] sm:$0xf]
      %v3061 = vld [vmem:[#allocation6 + $0xc] sm:$0xf]
      %v3062 = vld [vmem:[#allocation6 + $0x10] sm:$0xf]
      %v3063 = vld [vmem:[#allocation6 + $0x14] sm:$0xf]
      %vm3064 = vsmask.f32 4368
      %vm3065 = vmor %vm1063, %vm3064
      %v3067 = vshrl.u32 %v3058, 16
      %v3069 = vrot.slane %v3067, 7
      %v3070 = vrot.slane %v3069, 4
      %v3072 = vshrl.u32 %v3059, 16
      %v3074 = vrot.slane %v3072, 7
      %v3075 = vshll.u32 %v3059, 16
      %v3077 = vor.u32 %v3074, %v3075
      %v3078 = vsel %vm3065, %v3070, %v3077
      %v3079 = vrot.slane %v3074, 4
      %v3081 = vshrl.u32 %v3060, 16
      %v3083 = vrot.slane %v3081, 7
      %v3084 = vshll.u32 %v3060, 16
      %v3086 = vor.u32 %v3083, %v3084
      %v3087 = vsel %vm3065, %v3079, %v3086
      %v3088 = vrot.slane %v3083, 4
      %v3090 = vshrl.u32 %v3061, 16
      %v3092 = vrot.slane %v3090, 7
      %v3093 = vshll.u32 %v3061, 16
      %v3095 = vor.u32 %v3092, %v3093
      %v3096 = vsel %vm3065, %v3088, %v3095
      %v3097 = vrot.slane %v3092, 4
      %v3099 = vshrl.u32 %v3062, 16
      %v3101 = vrot.slane %v3099, 7
      %v3102 = vshll.u32 %v3062, 16
      %v3104 = vor.u32 %v3101, %v3102
      %v3105 = vsel %vm3065, %v3097, %v3104
      %v3106 = vrot.slane %v3101, 4
      %v3108 = vshrl.u32 %v3063, 16
      %v3110 = vrot.slane %v3108, 7
      %v3111 = vshll.u32 %v3063, 16
      %v3113 = vor.u32 %v3110, %v3111
      %v3114 = vsel %vm3065, %v3106, %v3113
      %3120 = vst [vmem:[#allocation7 + $0x10] sm:$0xf] %v3078
      %3121 = vst [vmem:[#allocation7 + $0x34] sm:$0xf] %v3087
      %3122 = vst [vmem:[#allocation7 + $0x58] sm:$0xf] %v3096
      %3123 = vst [vmem:[#allocation7 + $0x7c] sm:$0xf] %v3105
      %3124 = vst [vmem:[#allocation7 + $0xa0] sm:$0xf] %v3114
      %v3125 = vld [vmem:[#allocation6 + $0x4] sm:$0xf]
      %v3126 = vld [vmem:[#allocation6 + $0x8] sm:$0xf]
      %v3127 = vld [vmem:[#allocation6 + $0xc] sm:$0xf]
      %v3128 = vld [vmem:[#allocation6 + $0x10] sm:$0xf]
      %v3129 = vld [vmem:[#allocation6 + $0x14] sm:$0xf]
      %3130 = vst [vmem:[#allocation7 + $0x14] sm:$0xf] %v3125
      %3131 = vst [vmem:[#allocation7 + $0x38] sm:$0xf] %v3126
      %3132 = vst [vmem:[#allocation7 + $0x5c] sm:$0xf] %v3127
      %3133 = vst [vmem:[#allocation7 + $0x80] sm:$0xf] %v3128
      %3134 = vst [vmem:[#allocation7 + $0xa4] sm:$0xf] %v3129
      %v3135 = vld [vmem:[#allocation6 + $0x4] sm:$0xc]
      %v3136 = vld [vmem:[#allocation6 + $0x8] sm:$0xf]
      %v3137 = vld [vmem:[#allocation6 + $0xc] sm:$0xf]
      %v3138 = vld [vmem:[#allocation6 + $0x10] sm:$0xf]
      %v3139 = vld [vmem:[#allocation6 + $0x14] sm:$0xf]
      %v3140 = vld [vmem:[#allocation6 + $0x18] sm:$0x3]
      %vm3147 = vcmask 1045508
      %vm3148 = vmor %vm2813, %vm3147
      %v3149 = vrot.slane %v3135, 6
      %v3150 = vrot.slane %v3149, 4
      %v3151 = vrot.slane %v3136, 6
      %v3152 = vsel %vm3148, %v3150, %v3151
      %v3153 = vrot.slane %v3151, 4
      %v3154 = vrot.slane %v3137, 6
      %v3155 = vsel %vm3148, %v3153, %v3154
      %v3156 = vrot.slane %v3154, 4
      %v3157 = vrot.slane %v3138, 6
      %v3158 = vsel %vm3148, %v3156, %v3157
      %v3159 = vrot.slane %v3157, 4
      %v3160 = vrot.slane %v3139, 6
      %v3161 = vsel %vm3148, %v3159, %v3160
      %v3162 = vrot.slane %v3160, 4
      %v3163 = vrot.slane %v3140, 6
      %v3164 = vsel %vm3148, %v3162, %v3163
      %3170 = vst [vmem:[#allocation7 + $0x18] sm:$0xf] %v3152
      %3171 = vst [vmem:[#allocation7 + $0x3c] sm:$0xf] %v3155
      %3172 = vst [vmem:[#allocation7 + $0x60] sm:$0xf] %v3158
      %3173 = vst [vmem:[#allocation7 + $0x84] sm:$0xf] %v3161
      %3174 = vst [vmem:[#allocation7 + $0xa8] sm:$0xf] %v3164
      %v3175 = vld [vmem:[#allocation6 + $0x4] sm:$0xc]
      %v3176 = vld [vmem:[#allocation6 + $0x8] sm:$0xf]
      %v3177 = vld [vmem:[#allocation6 + $0xc] sm:$0xf]
      %v3178 = vld [vmem:[#allocation6 + $0x10] sm:$0xf]
      %v3179 = vld [vmem:[#allocation6 + $0x14] sm:$0xf]
      %v3180 = vld [vmem:[#allocation6 + $0x18] sm:$0x7]
      %v3182 = vshrl.u32 %v3175, 16
      %v3184 = vrot.slane %v3182, 6
      %v3185 = vshll.u32 %v3175, 16
      %v3187 = vrot.slane %v3185, 7
      %v3188 = vor.u32 %v3184, %v3187
      %v3189 = vrot.slane %v3188, 4
      %v3191 = vshrl.u32 %v3176, 16
      %v3193 = vrot.slane %v3191, 6
      %v3194 = vshll.u32 %v3176, 16
      %v3196 = vrot.slane %v3194, 7
      %v3197 = vor.u32 %v3193, %v3196
      %v3198 = vsel %vm2870, %v3189, %v3197
      %v3199 = vrot.slane %v3197, 4
      %v3201 = vshrl.u32 %v3177, 16
      %v3203 = vrot.slane %v3201, 6
      %v3204 = vshll.u32 %v3177, 16
      %v3206 = vrot.slane %v3204, 7
      %v3207 = vor.u32 %v3203, %v3206
      %v3208 = vsel %vm2870, %v3199, %v3207
      %v3209 = vrot.slane %v3207, 4
      %v3211 = vshrl.u32 %v3178, 16
      %v3213 = vrot.slane %v3211, 6
      %v3214 = vshll.u32 %v3178, 16
      %v3216 = vrot.slane %v3214, 7
      %v3217 = vor.u32 %v3213, %v3216
      %v3218 = vsel %vm2870, %v3209, %v3217
      %v3219 = vrot.slane %v3217, 4
      %v3221 = vshrl.u32 %v3179, 16
      %v3223 = vrot.slane %v3221, 6
      %v3224 = vshll.u32 %v3179, 16
      %v3226 = vrot.slane %v3224, 7
      %v3227 = vor.u32 %v3223, %v3226
      %v3228 = vsel %vm2870, %v3219, %v3227
      %v3229 = vrot.slane %v3227, 4
      %v3231 = vshrl.u32 %v3180, 16
      %v3233 = vrot.slane %v3231, 6
      %v3234 = vshll.u32 %v3180, 16
      %v3236 = vrot.slane %v3234, 7
      %v3237 = vor.u32 %v3233, %v3236
      %v3238 = vsel %vm2870, %v3229, %v3237
      %3244 = vst [vmem:[#allocation7 + $0x1c] sm:$0xf] %v3198
      %3245 = vst [vmem:[#allocation7 + $0x40] sm:$0xf] %v3208
      %3246 = vst [vmem:[#allocation7 + $0x64] sm:$0xf] %v3218
      %3247 = vst [vmem:[#allocation7 + $0x88] sm:$0xf] %v3228
      %3248 = vst [vmem:[#allocation7 + $0xac] sm:$0xf] %v3238
      %v3249 = vld [vmem:[#allocation6 + $0x4] sm:$0x8]
      %v3250 = vld [vmem:[#allocation6 + $0x8] sm:$0xf]
      %v3251 = vld [vmem:[#allocation6 + $0xc] sm:$0xf]
      %v3252 = vld [vmem:[#allocation6 + $0x10] sm:$0xf]
      %v3253 = vld [vmem:[#allocation6 + $0x14] sm:$0xf]
      %v3254 = vld [vmem:[#allocation6 + $0x18] sm:$0x7]
      %v3261 = vrot.slane %v3249, 7
      %v3262 = vrot.slane %v3261, 4
      %v3263 = vrot.slane %v3250, 7
      %v3264 = vsel %vm3031, %v3262, %v3263
      %v3265 = vrot.slane %v3263, 4
      %v3266 = vrot.slane %v3251, 7
      %v3267 = vsel %vm3031, %v3265, %v3266
      %v3268 = vrot.slane %v3266, 4
      %v3269 = vrot.slane %v3252, 7
      %v3270 = vsel %vm3031, %v3268, %v3269
      %v3271 = vrot.slane %v3269, 4
      %v3272 = vrot.slane %v3253, 7
      %v3273 = vsel %vm3031, %v3271, %v3272
      %v3274 = vrot.slane %v3272, 4
      %v3275 = vrot.slane %v3254, 7
      %v3276 = vsel %vm3031, %v3274, %v3275
      %3282 = vst [vmem:[#allocation7 + $0x20] sm:$0xf] %v3264
      %3283 = vst [vmem:[#allocation7 + $0x44] sm:$0xf] %v3267
      %3284 = vst [vmem:[#allocation7 + $0x68] sm:$0xf] %v3270
      %3285 = vst [vmem:[#allocation7 + $0x8c] sm:$0xf] %v3273
      %3286 = vst [vmem:[#allocation7 + $0xb0] sm:$0xf] %v3276
      %v3287 = vld [vmem:[#allocation7] sm:$0xff]
      %v3288 = vld [vmem:[#allocation7 + $0x8] sm:$0xff]
      %v3289 = vld [vmem:[#allocation7 + $0x10] sm:$0xff]
      %v3290 = vld [vmem:[#allocation7 + $0x18] sm:$0xff]
      %v3291 = vld [vmem:[#allocation7 + $0x20] sm:$0xf]
      %v3292 = vld [vmem:[#allocation7 + $0x24] sm:$0xff]
      %v3293 = vld [vmem:[#allocation7 + $0x2c] sm:$0xff]
      %v3294 = vld [vmem:[#allocation7 + $0x34] sm:$0xff]
      %v3295 = vld [vmem:[#allocation7 + $0x3c] sm:$0xff]
      %v3296 = vld [vmem:[#allocation7 + $0x44] sm:$0xf]
      %v3297 = vld [vmem:[#allocation7 + $0x48] sm:$0xff]
      %v3298 = vld [vmem:[#allocation7 + $0x50] sm:$0xff]
      %v3299 = vld [vmem:[#allocation7 + $0x58] sm:$0xff]
      %v3300 = vld [vmem:[#allocation7 + $0x60] sm:$0xff]
      %v3301 = vld [vmem:[#allocation7 + $0x68] sm:$0xf]
      %v3302 = vld [vmem:[#allocation7 + $0x6c] sm:$0xff]
      %v3303 = vld [vmem:[#allocation7 + $0x74] sm:$0xff]
      %v3304 = vld [vmem:[#allocation7 + $0x7c] sm:$0xff]
      %v3305 = vld [vmem:[#allocation7 + $0x84] sm:$0xff]
      %v3306 = vld [vmem:[#allocation7 + $0x8c] sm:$0xf]
      %v3307 = vld [vmem:[#allocation7 + $0x90] sm:$0xff]
      %v3308 = vld [vmem:[#allocation7 + $0x98] sm:$0xff]
      %v3309 = vld [vmem:[#allocation7 + $0xa0] sm:$0xff]
      %v3310 = vld [vmem:[#allocation7 + $0xa8] sm:$0xff]
      %v3311 = vld [vmem:[#allocation7 + $0xb0] sm:$0xf]
      %v3312 = vld [vmem:[%s5] sm:$0xff]
      %v3313 = vld [vmem:[%s5 + $0x8] sm:$0xff]
      %v3314 = vld [vmem:[%s5 + $0x10] sm:$0xff]
      %v3315 = vld [vmem:[%s5 + $0x18] sm:$0xff]
      %v3316 = vld [vmem:[%s5 + $0x20] sm:$0xff]
      %v3317 = vld [vmem:[%s5 + $0x28] sm:$0xff]
      %v3318 = vld [vmem:[%s5 + $0x30] sm:$0xff]
      %v3319 = vld [vmem:[%s5 + $0x38] sm:$0xff]
      %v3320 = vld [vmem:[%s5 + $0x40] sm:$0xff]
      %v3321 = vld [vmem:[%s5 + $0x48] sm:$0xff]
      %v3322 = vld [vmem:[%s5 + $0x50] sm:$0xff]
      %v3323 = vld [vmem:[%s5 + $0x58] sm:$0xff]
      %v3324 = vld [vmem:[%s5 + $0x60] sm:$0xff]
      %v3325 = vld [vmem:[%s5 + $0x68] sm:$0xff]
      %v3326 = vld [vmem:[%s5 + $0x70] sm:$0xff]
      %v3327 = vld [vmem:[%s5 + $0x78] sm:$0xff]
      %v3328 = vld [vmem:[%s5 + $0x80] sm:$0xff]
      %v3329 = vld [vmem:[%s5 + $0x88] sm:$0xff]
      %v3330 = vld [vmem:[%s5 + $0x90] sm:$0xff]
      %v3331 = vld [vmem:[%s5 + $0x98] sm:$0xff]
      %v3332 = vld [vmem:[%s5 + $0xa0] sm:$0xff]
      %v3333 = vld [vmem:[%s5 + $0xa8] sm:$0xff]
      %v3334 = vld [vmem:[%s5 + $0xb0] sm:$0xff]
      %v3335 = vld [vmem:[%s5 + $0xb8] sm:$0xff]
      %v3336 = vld [vmem:[%s5 + $0xc0] sm:$0xff]
      %v3337 = vld [vmem:[%s5 + $0xc8] sm:$0xff]
      %v3338 = vld [vmem:[%s5 + $0xd0] sm:$0xff]
      %v3339 = vld [vmem:[%s5 + $0xd8] sm:$0xff]
      %v3340 = vld [vmem:[%s5 + $0xe0] sm:$0xff]
      %v3341 = vld [vmem:[%s5 + $0xe8] sm:$0xff]
      %v3342 = vld [vmem:[%s5 + $0xf0] sm:$0xff]
      %v3343 = vld [vmem:[%s5 + $0xf8] sm:$0xff]
      %v3344 = vld [vmem:[%s5 + $0x100] sm:$0xff]
      %v3345 = vld [vmem:[%s5 + $0x108] sm:$0xff]
      %v3346 = vld [vmem:[%s5 + $0x110] sm:$0xff]
      %v3347 = vld [vmem:[%s5 + $0x118] sm:$0xff]
      %v3348 = vld [vmem:[%s5 + $0x120] sm:$0xff]
      %v3349 = vld [vmem:[%s5 + $0x128] sm:$0xff]
      %v3350 = vld [vmem:[%s5 + $0x130] sm:$0xff]
      %v3351 = vld [vmem:[%s5 + $0x138] sm:$0xff]
      %v3352 = vld [vmem:[%s5 + $0x140] sm:$0xff]
      %v3353 = vld [vmem:[%s5 + $0x148] sm:$0xff]
      %v3354 = vld [vmem:[%s5 + $0x150] sm:$0xff]
      %v3355 = vld [vmem:[%s5 + $0x158] sm:$0xff]
      %v3356 = vld [vmem:[%s5 + $0x160] sm:$0xff]
      %v3357 = vld [vmem:[%s5 + $0x168] sm:$0xff]
      %v3358 = vld [vmem:[%s5 + $0x170] sm:$0xff]
      %v3359 = vld [vmem:[%s5 + $0x178] sm:$0xff]
      %v3360 = vld [vmem:[%s5 + $0x180] sm:$0xff]
      %v3361 = vld [vmem:[%s5 + $0x188] sm:$0xff]
      %v3362 = vld [vmem:[%s5 + $0x190] sm:$0xff]
      %v3363 = vld [vmem:[%s5 + $0x198] sm:$0xff]
      %v3364 = vld [vmem:[%s5 + $0x1a0] sm:$0xff]
      %v3365 = vld [vmem:[%s5 + $0x1a8] sm:$0xff]
      %v3366 = vld [vmem:[%s5 + $0x1b0] sm:$0xff]
      %v3367 = vld [vmem:[%s5 + $0x1b8] sm:$0xff]
      %v3368 = vld [vmem:[%s5 + $0x1c0] sm:$0xff]
      %v3369 = vld [vmem:[%s5 + $0x1c8] sm:$0xff]
      %v3370 = vld [vmem:[%s5 + $0x1d0] sm:$0xff]
      %v3371 = vld [vmem:[%s5 + $0x1d8] sm:$0xff]
      %v3372 = vld [vmem:[%s5 + $0x1e0] sm:$0xff]
      %v3373 = vld [vmem:[%s5 + $0x1e8] sm:$0xff]
      %v3374 = vld [vmem:[%s5 + $0x1f0] sm:$0xff]
      %v3375 = vld [vmem:[%s5 + $0x1f8] sm:$0xff]
      %v3376 = vld [vmem:[%s5 + $0x200] sm:$0xff]
      %v3377 = vld [vmem:[%s5 + $0x208] sm:$0xff]
      %v3378 = vld [vmem:[%s5 + $0x210] sm:$0xff]
      %v3379 = vld [vmem:[%s5 + $0x218] sm:$0xff]
      %v3380 = vld [vmem:[%s5 + $0x220] sm:$0xff]
      %v3381 = vld [vmem:[%s5 + $0x228] sm:$0xff]
      %v3382 = vld [vmem:[%s5 + $0x230] sm:$0xff]
      %v3383 = vld [vmem:[%s5 + $0x238] sm:$0xff]
      %v3384 = vld [vmem:[%s5 + $0x240] sm:$0xff]
      %v3385 = vld [vmem:[%s5 + $0x248] sm:$0xff]
      %v3386 = vld [vmem:[%s5 + $0x250] sm:$0xff]
      %v3387 = vld [vmem:[%s5 + $0x258] sm:$0xff]
      %v3388 = vld [vmem:[%s5 + $0x260] sm:$0xff]
      %v3389 = vld [vmem:[%s5 + $0x268] sm:$0xff]
      %v3390 = vld [vmem:[%s5 + $0x270] sm:$0xff]
      %v3391 = vld [vmem:[%s5 + $0x278] sm:$0xff]
      %v3392 = vld [vmem:[%s5 + $0x280] sm:$0xff]
      %v3393 = vld [vmem:[%s5 + $0x288] sm:$0xff]
      %v3394 = vld [vmem:[%s5 + $0x290] sm:$0xff]
      %v3395 = vld [vmem:[%s5 + $0x298] sm:$0xff]
      %v3396 = vld [vmem:[%s5 + $0x2a0] sm:$0xff]
      %v3397 = vld [vmem:[%s5 + $0x2a8] sm:$0xff]
      %v3398 = vld [vmem:[%s5 + $0x2b0] sm:$0xff]
      %v3399 = vld [vmem:[%s5 + $0x2b8] sm:$0xff]
      %v3400 = vld [vmem:[%s5 + $0x2c0] sm:$0xff]
      %v3401 = vld [vmem:[%s5 + $0x2c8] sm:$0xff]
      %v3402 = vld [vmem:[%s5 + $0x2d0] sm:$0xff]
      %v3403 = vld [vmem:[%s5 + $0x2d8] sm:$0xff]
      %v3404 = vld [vmem:[%s5 + $0x2e0] sm:$0xff]
      %v3405 = vld [vmem:[%s5 + $0x2e8] sm:$0xff]
      %v3406 = vld [vmem:[%s5 + $0x2f0] sm:$0xff]
      %v3407 = vld [vmem:[%s5 + $0x2f8] sm:$0xff]
      %v3408 = vld [vmem:[%s5 + $0x300] sm:$0xff]
      %v3409 = vld [vmem:[%s5 + $0x308] sm:$0xff]
      %v3410 = vld [vmem:[%s5 + $0x310] sm:$0xff]
      %v3411 = vld [vmem:[%s5 + $0x318] sm:$0xff]
      %v3412 = vld [vmem:[%s5 + $0x320] sm:$0xff]
      %v3413 = vld [vmem:[%s5 + $0x328] sm:$0xff]
      %v3414 = vld [vmem:[%s5 + $0x330] sm:$0xff]
      %v3415 = vld [vmem:[%s5 + $0x338] sm:$0xff]
      %v3416 = vld [vmem:[%s5 + $0x340] sm:$0xff]
      %v3417 = vld [vmem:[%s5 + $0x348] sm:$0xff]
      %v3418 = vld [vmem:[%s5 + $0x350] sm:$0xff]
      %v3419 = vld [vmem:[%s5 + $0x358] sm:$0xff]
      %v3420 = vld [vmem:[%s5 + $0x360] sm:$0xff]
      %v3421 = vld [vmem:[%s5 + $0x368] sm:$0xff]
      %v3422 = vld [vmem:[%s5 + $0x370] sm:$0xff]
      %v3423 = vld [vmem:[%s5 + $0x378] sm:$0xff]
      %v3424 = vld [vmem:[%s5 + $0x380] sm:$0xff]
      %v3425 = vld [vmem:[%s5 + $0x388] sm:$0xff]
      %v3426 = vld [vmem:[%s5 + $0x390] sm:$0xff]
      %v3427 = vld [vmem:[%s5 + $0x398] sm:$0xff]
      %v3428 = vld [vmem:[%s5 + $0x3a0] sm:$0xff]
      %v3429 = vld [vmem:[%s5 + $0x3a8] sm:$0xff]
      %v3430 = vld [vmem:[%s5 + $0x3b0] sm:$0xff]
      %v3431 = vld [vmem:[%s5 + $0x3b8] sm:$0xff]
      %v3432 = vld [vmem:[%s5 + $0x3c0] sm:$0xff]
      %v3433 = vld [vmem:[%s5 + $0x3c8] sm:$0xff]
      %v3434 = vld [vmem:[%s5 + $0x3d0] sm:$0xff]
      %v3435 = vld [vmem:[%s5 + $0x3d8] sm:$0xff]
      %v3436 = vld [vmem:[%s5 + $0x3e0] sm:$0xff]
      %v3437 = vld [vmem:[%s5 + $0x3e8] sm:$0xff]
      %v3438 = vld [vmem:[%s5 + $0x3f0] sm:$0xff]
      %v3439 = vld [vmem:[%s5 + $0x3f8] sm:$0xff]
      %v3440 = vld [vmem:[%s5 + $0x400] sm:$0xff]
      %v3441 = vld [vmem:[%s5 + $0x408] sm:$0xff]
      %v3442 = vld [vmem:[%s5 + $0x410] sm:$0xff]
      %v3443 = vld [vmem:[%s5 + $0x418] sm:$0xff]
      %v3444 = vld [vmem:[%s5 + $0x420] sm:$0xff]
      %v3445 = vld [vmem:[%s5 + $0x428] sm:$0xff]
      %v3446 = vld [vmem:[%s5 + $0x430] sm:$0xff]
      %v3447 = vld [vmem:[%s5 + $0x438] sm:$0xff]
      %v3448 = vld [vmem:[%s5 + $0x440] sm:$0xff]
      %v3449 = vld [vmem:[%s5 + $0x448] sm:$0xff]
      %v3450 = vld [vmem:[%s5 + $0x450] sm:$0xff]
      %v3451 = vld [vmem:[%s5 + $0x458] sm:$0xff]
      %v3452 = vld [vmem:[%s5 + $0x460] sm:$0xff]
      %v3453 = vld [vmem:[%s5 + $0x468] sm:$0xff]
      %v3454 = vld [vmem:[%s5 + $0x470] sm:$0xff]
      %v3455 = vld [vmem:[%s5 + $0x478] sm:$0xff]
      %v3456 = vld [vmem:[%s6] sm:$0x3]
      %v3458 = vlaneseq
      %v3459 = vshrl.u32 %v3458, 7
      %v3460 = vsub.s32 0, %v3459
      %v3461 = vrot.slane %v3456, %v3460
      %v3462 = vlaneseq
      %v3463 = vshrl.u32 %v3462, 7
      %v3464 = vsub.s32 1, %v3463
      %v3465 = vrot.slane %v3456, %v3464
      %v3493 = vunpack.c.l.b16 %v3287
      %v3494 = vunpack.c.h.b16 %v3287
      %v3495 = vunpack.c.l.b16 %v3288
      %v3496 = vunpack.c.h.b16 %v3288
      %v3497 = vunpack.c.l.b16 %v3289
      %v3498 = vunpack.c.h.b16 %v3289
      %v3499 = vunpack.c.l.b16 %v3290
      %v3500 = vunpack.c.h.b16 %v3290
      %v3501 = vunpack.c.l.b16 %v3291
      %v3502 = vunpack.c.l.b16 %v3292
      %v3503 = vunpack.c.h.b16 %v3292
      %v3504 = vunpack.c.l.b16 %v3293
      %v3505 = vunpack.c.h.b16 %v3293
      %v3506 = vunpack.c.l.b16 %v3294
      %v3507 = vunpack.c.h.b16 %v3294
      %v3508 = vunpack.c.l.b16 %v3295
      %v3509 = vunpack.c.h.b16 %v3295
      %v3510 = vunpack.c.l.b16 %v3296
      %v3511 = vunpack.c.l.b16 %v3297
      %v3512 = vunpack.c.h.b16 %v3297
      %v3513 = vunpack.c.l.b16 %v3298
      %v3514 = vunpack.c.h.b16 %v3298
      %v3515 = vunpack.c.l.b16 %v3299
      %v3516 = vunpack.c.h.b16 %v3299
      %v3517 = vunpack.c.l.b16 %v3300
      %v3518 = vunpack.c.h.b16 %v3300
      %v3519 = vunpack.c.l.b16 %v3301
      %v3520 = vunpack.c.l.b16 %v3302
      %v3521 = vunpack.c.h.b16 %v3302
      %v3522 = vunpack.c.l.b16 %v3303
      %v3523 = vunpack.c.h.b16 %v3303
      %v3524 = vunpack.c.l.b16 %v3304
      %v3525 = vunpack.c.h.b16 %v3304
      %v3526 = vunpack.c.l.b16 %v3305
      %v3527 = vunpack.c.h.b16 %v3305
      %v3528 = vunpack.c.l.b16 %v3306
      %v3529 = vunpack.c.l.b16 %v3307
      %v3530 = vunpack.c.h.b16 %v3307
      %v3531 = vunpack.c.l.b16 %v3308
      %v3532 = vunpack.c.h.b16 %v3308
      %v3533 = vunpack.c.l.b16 %v3309
      %v3534 = vunpack.c.h.b16 %v3309
      %v3535 = vunpack.c.l.b16 %v3310
      %v3536 = vunpack.c.h.b16 %v3310
      %v3537 = vunpack.c.l.b16 %v3311
      %v3538 = vpack.c.b16 %v3502, %v3493
      %v3539 = vpack.c.b16 %v3503, %v3494
      %v3540 = vpack.c.b16 %v3504, %v3495
      %v3541 = vpack.c.b16 %v3505, %v3496
      %v3542 = vpack.c.b16 %v3506, %v3497
      %v3543 = vpack.c.b16 %v3507, %v3498
      %v3544 = vpack.c.b16 %v3508, %v3499
      %v3545 = vpack.c.b16 %v3509, %v3500
      %v3546 = vpack.c.b16 %v3510, %v3501
      %v3547 = vpack.c.b16 %v3520, %v3511
      %v3548 = vpack.c.b16 %v3521, %v3512
      %v3549 = vpack.c.b16 %v3522, %v3513
      %v3550 = vpack.c.b16 %v3523, %v3514
      %v3551 = vpack.c.b16 %v3524, %v3515
      %v3552 = vpack.c.b16 %v3525, %v3516
      %v3553 = vpack.c.b16 %v3526, %v3517
      %v3554 = vpack.c.b16 %v3527, %v3518
      %v3555 = vpack.c.b16 %v3528, %v3519
      %v3556 = vpack.c.b16 %v3529, %v3529
      %v3557 = vpack.c.b16 %v3530, %v3530
      %v3558 = vpack.c.b16 %v3531, %v3531
      %v3559 = vpack.c.b16 %v3532, %v3532
      %v3560 = vpack.c.b16 %v3533, %v3533
      %v3561 = vpack.c.b16 %v3534, %v3534
      %v3562 = vpack.c.b16 %v3535, %v3535
      %v3563 = vpack.c.b16 %v3536, %v3536
      %v3564 = vpack.c.b16 %v3537, %v3537
      %v3736 = vunpack.c.l.b16 %v3312
      %v3737 = vunpack.c.h.b16 %v3312
      %v3738 = vunpack.c.l.b16 %v3313
      %v3739 = vunpack.c.h.b16 %v3313
      %v3740 = vunpack.c.l.b16 %v3314
      %v3741 = vunpack.c.h.b16 %v3314
      %v3742 = vunpack.c.l.b16 %v3315
      %v3743 = vunpack.c.h.b16 %v3315
      %v3744 = vunpack.c.l.b16 %v3316
      %v3745 = vunpack.c.h.b16 %v3316
      %v3746 = vunpack.c.l.b16 %v3317
      %v3747 = vunpack.c.h.b16 %v3317
      %v3748 = vunpack.c.l.b16 %v3318
      %v3749 = vunpack.c.h.b16 %v3318
      %v3750 = vunpack.c.l.b16 %v3319
      %v3751 = vunpack.c.h.b16 %v3319
      %v3752 = vunpack.c.l.b16 %v3320
      %v3753 = vunpack.c.h.b16 %v3320
      %v3754 = vunpack.c.l.b16 %v3321
      %v3755 = vunpack.c.h.b16 %v3321
      %v3756 = vunpack.c.l.b16 %v3322
      %v3757 = vunpack.c.h.b16 %v3322
      %v3758 = vunpack.c.l.b16 %v3323
      %v3759 = vunpack.c.h.b16 %v3323
      %v3760 = vunpack.c.l.b16 %v3324
      %v3761 = vunpack.c.h.b16 %v3324
      %v3762 = vunpack.c.l.b16 %v3325
      %v3763 = vunpack.c.h.b16 %v3325
      %v3764 = vunpack.c.l.b16 %v3326
      %v3765 = vunpack.c.h.b16 %v3326
      %v3766 = vunpack.c.l.b16 %v3327
      %v3767 = vunpack.c.h.b16 %v3327
      %v3768 = vunpack.c.l.b16 %v3328
      %v3769 = vunpack.c.h.b16 %v3328
      %v3770 = vunpack.c.l.b16 %v3329
      %v3771 = vunpack.c.h.b16 %v3329
      %v3772 = vunpack.c.l.b16 %v3330
      %v3773 = vunpack.c.h.b16 %v3330
      %v3774 = vunpack.c.l.b16 %v3331
      %v3775 = vunpack.c.h.b16 %v3331
      %v3776 = vunpack.c.l.b16 %v3332
      %v3777 = vunpack.c.h.b16 %v3332
      %v3778 = vunpack.c.l.b16 %v3333
      %v3779 = vunpack.c.h.b16 %v3333
      %v3780 = vunpack.c.l.b16 %v3334
      %v3781 = vunpack.c.h.b16 %v3334
      %v3782 = vunpack.c.l.b16 %v3335
      %v3783 = vunpack.c.h.b16 %v3335
      %v3784 = vunpack.c.l.b16 %v3336
      %v3785 = vunpack.c.h.b16 %v3336
      %v3786 = vunpack.c.l.b16 %v3337
      %v3787 = vunpack.c.h.b16 %v3337
      %v3788 = vunpack.c.l.b16 %v3338
      %v3789 = vunpack.c.h.b16 %v3338
      %v3790 = vunpack.c.l.b16 %v3339
      %v3791 = vunpack.c.h.b16 %v3339
      %v3792 = vunpack.c.l.b16 %v3340
      %v3793 = vunpack.c.h.b16 %v3340
      %v3794 = vunpack.c.l.b16 %v3341
      %v3795 = vunpack.c.h.b16 %v3341
      %v3796 = vunpack.c.l.b16 %v3342
      %v3797 = vunpack.c.h.b16 %v3342
      %v3798 = vunpack.c.l.b16 %v3343
      %v3799 = vunpack.c.h.b16 %v3343
      %v3800 = vunpack.c.l.b16 %v3344
      %v3801 = vunpack.c.h.b16 %v3344
      %v3802 = vunpack.c.l.b16 %v3345
      %v3803 = vunpack.c.h.b16 %v3345
      %v3804 = vunpack.c.l.b16 %v3346
      %v3805 = vunpack.c.h.b16 %v3346
      %v3806 = vunpack.c.l.b16 %v3347
      %v3807 = vunpack.c.h.b16 %v3347
      %v3808 = vunpack.c.l.b16 %v3348
      %v3809 = vunpack.c.h.b16 %v3348
      %v3810 = vunpack.c.l.b16 %v3349
      %v3811 = vunpack.c.h.b16 %v3349
      %v3812 = vunpack.c.l.b16 %v3350
      %v3813 = vunpack.c.h.b16 %v3350
      %v3814 = vunpack.c.l.b16 %v3351
      %v3815 = vunpack.c.h.b16 %v3351
      %v3816 = vunpack.c.l.b16 %v3352
      %v3817 = vunpack.c.h.b16 %v3352
      %v3818 = vunpack.c.l.b16 %v3353
      %v3819 = vunpack.c.h.b16 %v3353
      %v3820 = vunpack.c.l.b16 %v3354
      %v3821 = vunpack.c.h.b16 %v3354
      %v3822 = vunpack.c.l.b16 %v3355
      %v3823 = vunpack.c.h.b16 %v3355
      %v3824 = vunpack.c.l.b16 %v3356
      %v3825 = vunpack.c.h.b16 %v3356
      %v3826 = vunpack.c.l.b16 %v3357
      %v3827 = vunpack.c.h.b16 %v3357
      %v3828 = vunpack.c.l.b16 %v3358
      %v3829 = vunpack.c.h.b16 %v3358
      %v3830 = vunpack.c.l.b16 %v3359
      %v3831 = vunpack.c.h.b16 %v3359
      %v3832 = vunpack.c.l.b16 %v3360
      %v3833 = vunpack.c.h.b16 %v3360
      %v3834 = vunpack.c.l.b16 %v3361
      %v3835 = vunpack.c.h.b16 %v3361
      %v3836 = vunpack.c.l.b16 %v3362
      %v3837 = vunpack.c.h.b16 %v3362
      %v3838 = vunpack.c.l.b16 %v3363
      %v3839 = vunpack.c.h.b16 %v3363
      %v3840 = vunpack.c.l.b16 %v3364
      %v3841 = vunpack.c.h.b16 %v3364
      %v3842 = vunpack.c.l.b16 %v3365
      %v3843 = vunpack.c.h.b16 %v3365
      %v3844 = vunpack.c.l.b16 %v3366
      %v3845 = vunpack.c.h.b16 %v3366
      %v3846 = vunpack.c.l.b16 %v3367
      %v3847 = vunpack.c.h.b16 %v3367
      %v3848 = vunpack.c.l.b16 %v3368
      %v3849 = vunpack.c.h.b16 %v3368
      %v3850 = vunpack.c.l.b16 %v3369
      %v3851 = vunpack.c.h.b16 %v3369
      %v3852 = vunpack.c.l.b16 %v3370
      %v3853 = vunpack.c.h.b16 %v3370
      %v3854 = vunpack.c.l.b16 %v3371
      %v3855 = vunpack.c.h.b16 %v3371
      %v3856 = vunpack.c.l.b16 %v3372
      %v3857 = vunpack.c.h.b16 %v3372
      %v3858 = vunpack.c.l.b16 %v3373
      %v3859 = vunpack.c.h.b16 %v3373
      %v3860 = vunpack.c.l.b16 %v3374
      %v3861 = vunpack.c.h.b16 %v3374
      %v3862 = vunpack.c.l.b16 %v3375
      %v3863 = vunpack.c.h.b16 %v3375
      %v3864 = vunpack.c.l.b16 %v3376
      %v3865 = vunpack.c.h.b16 %v3376
      %v3866 = vunpack.c.l.b16 %v3377
      %v3867 = vunpack.c.h.b16 %v3377
      %v3868 = vunpack.c.l.b16 %v3378
      %v3869 = vunpack.c.h.b16 %v3378
      %v3870 = vunpack.c.l.b16 %v3379
      %v3871 = vunpack.c.h.b16 %v3379
      %v3872 = vunpack.c.l.b16 %v3380
      %v3873 = vunpack.c.h.b16 %v3380
      %v3874 = vunpack.c.l.b16 %v3381
      %v3875 = vunpack.c.h.b16 %v3381
      %v3876 = vunpack.c.l.b16 %v3382
      %v3877 = vunpack.c.h.b16 %v3382
      %v3878 = vunpack.c.l.b16 %v3383
      %v3879 = vunpack.c.h.b16 %v3383
      %v3880 = vunpack.c.l.b16 %v3384
      %v3881 = vunpack.c.h.b16 %v3384
      %v3882 = vunpack.c.l.b16 %v3385
      %v3883 = vunpack.c.h.b16 %v3385
      %v3884 = vunpack.c.l.b16 %v3386
      %v3885 = vunpack.c.h.b16 %v3386
      %v3886 = vunpack.c.l.b16 %v3387
      %v3887 = vunpack.c.h.b16 %v3387
      %v3888 = vunpack.c.l.b16 %v3388
      %v3889 = vunpack.c.h.b16 %v3388
      %v3890 = vunpack.c.l.b16 %v3389
      %v3891 = vunpack.c.h.b16 %v3389
      %v3892 = vunpack.c.l.b16 %v3390
      %v3893 = vunpack.c.h.b16 %v3390
      %v3894 = vunpack.c.l.b16 %v3391
      %v3895 = vunpack.c.h.b16 %v3391
      %v3896 = vunpack.c.l.b16 %v3392
      %v3897 = vunpack.c.h.b16 %v3392
      %v3898 = vunpack.c.l.b16 %v3393
      %v3899 = vunpack.c.h.b16 %v3393
      %v3900 = vunpack.c.l.b16 %v3394
      %v3901 = vunpack.c.h.b16 %v3394
      %v3902 = vunpack.c.l.b16 %v3395
      %v3903 = vunpack.c.h.b16 %v3395
      %v3904 = vunpack.c.l.b16 %v3396
      %v3905 = vunpack.c.h.b16 %v3396
      %v3906 = vunpack.c.l.b16 %v3397
      %v3907 = vunpack.c.h.b16 %v3397
      %v3908 = vunpack.c.l.b16 %v3398
      %v3909 = vunpack.c.h.b16 %v3398
      %v3910 = vunpack.c.l.b16 %v3399
      %v3911 = vunpack.c.h.b16 %v3399
      %v3912 = vunpack.c.l.b16 %v3400
      %v3913 = vunpack.c.h.b16 %v3400
      %v3914 = vunpack.c.l.b16 %v3401
      %v3915 = vunpack.c.h.b16 %v3401
      %v3916 = vunpack.c.l.b16 %v3402
      %v3917 = vunpack.c.h.b16 %v3402
      %v3918 = vunpack.c.l.b16 %v3403
      %v3919 = vunpack.c.h.b16 %v3403
      %v3920 = vunpack.c.l.b16 %v3404
      %v3921 = vunpack.c.h.b16 %v3404
      %v3922 = vunpack.c.l.b16 %v3405
      %v3923 = vunpack.c.h.b16 %v3405
      %v3924 = vunpack.c.l.b16 %v3406
      %v3925 = vunpack.c.h.b16 %v3406
      %v3926 = vunpack.c.l.b16 %v3407
      %v3927 = vunpack.c.h.b16 %v3407
      %v3928 = vunpack.c.l.b16 %v3408
      %v3929 = vunpack.c.h.b16 %v3408
      %v3930 = vunpack.c.l.b16 %v3409
      %v3931 = vunpack.c.h.b16 %v3409
      %v3932 = vunpack.c.l.b16 %v3410
      %v3933 = vunpack.c.h.b16 %v3410
      %v3934 = vunpack.c.l.b16 %v3411
      %v3935 = vunpack.c.h.b16 %v3411
      %v3936 = vunpack.c.l.b16 %v3412
      %v3937 = vunpack.c.h.b16 %v3412
      %v3938 = vunpack.c.l.b16 %v3413
      %v3939 = vunpack.c.h.b16 %v3413
      %v3940 = vunpack.c.l.b16 %v3414
      %v3941 = vunpack.c.h.b16 %v3414
      %v3942 = vunpack.c.l.b16 %v3415
      %v3943 = vunpack.c.h.b16 %v3415
      %v3944 = vunpack.c.l.b16 %v3416
      %v3945 = vunpack.c.h.b16 %v3416
      %v3946 = vunpack.c.l.b16 %v3417
      %v3947 = vunpack.c.h.b16 %v3417
      %v3948 = vunpack.c.l.b16 %v3418
      %v3949 = vunpack.c.h.b16 %v3418
      %v3950 = vunpack.c.l.b16 %v3419
      %v3951 = vunpack.c.h.b16 %v3419
      %v3952 = vunpack.c.l.b16 %v3420
      %v3953 = vunpack.c.h.b16 %v3420
      %v3954 = vunpack.c.l.b16 %v3421
      %v3955 = vunpack.c.h.b16 %v3421
      %v3956 = vunpack.c.l.b16 %v3422
      %v3957 = vunpack.c.h.b16 %v3422
      %v3958 = vunpack.c.l.b16 %v3423
      %v3959 = vunpack.c.h.b16 %v3423
      %v3960 = vunpack.c.l.b16 %v3424
      %v3961 = vunpack.c.h.b16 %v3424
      %v3962 = vunpack.c.l.b16 %v3425
      %v3963 = vunpack.c.h.b16 %v3425
      %v3964 = vunpack.c.l.b16 %v3426
      %v3965 = vunpack.c.h.b16 %v3426
      %v3966 = vunpack.c.l.b16 %v3427
      %v3967 = vunpack.c.h.b16 %v3427
      %v3968 = vunpack.c.l.b16 %v3428
      %v3969 = vunpack.c.h.b16 %v3428
      %v3970 = vunpack.c.l.b16 %v3429
      %v3971 = vunpack.c.h.b16 %v3429
      %v3972 = vunpack.c.l.b16 %v3430
      %v3973 = vunpack.c.h.b16 %v3430
      %v3974 = vunpack.c.l.b16 %v3431
      %v3975 = vunpack.c.h.b16 %v3431
      %v3976 = vunpack.c.l.b16 %v3432
      %v3977 = vunpack.c.h.b16 %v3432
      %v3978 = vunpack.c.l.b16 %v3433
      %v3979 = vunpack.c.h.b16 %v3433
      %v3980 = vunpack.c.l.b16 %v3434
      %v3981 = vunpack.c.h.b16 %v3434
      %v3982 = vunpack.c.l.b16 %v3435
      %v3983 = vunpack.c.h.b16 %v3435
      %v3984 = vunpack.c.l.b16 %v3436
      %v3985 = vunpack.c.h.b16 %v3436
      %v3986 = vunpack.c.l.b16 %v3437
      %v3987 = vunpack.c.h.b16 %v3437
      %v3988 = vunpack.c.l.b16 %v3438
      %v3989 = vunpack.c.h.b16 %v3438
      %v3990 = vunpack.c.l.b16 %v3439
      %v3991 = vunpack.c.h.b16 %v3439
      %v3992 = vunpack.c.l.b16 %v3440
      %v3993 = vunpack.c.h.b16 %v3440
      %v3994 = vunpack.c.l.b16 %v3441
      %v3995 = vunpack.c.h.b16 %v3441
      %v3996 = vunpack.c.l.b16 %v3442
      %v3997 = vunpack.c.h.b16 %v3442
      %v3998 = vunpack.c.l.b16 %v3443
      %v3999 = vunpack.c.h.b16 %v3443
      %v4000 = vunpack.c.l.b16 %v3444
      %v4001 = vunpack.c.h.b16 %v3444
      %v4002 = vunpack.c.l.b16 %v3445
      %v4003 = vunpack.c.h.b16 %v3445
      %v4004 = vunpack.c.l.b16 %v3446
      %v4005 = vunpack.c.h.b16 %v3446
      %v4006 = vunpack.c.l.b16 %v3447
      %v4007 = vunpack.c.h.b16 %v3447
      %v4008 = vunpack.c.l.b16 %v3448
      %v4009 = vunpack.c.h.b16 %v3448
      %v4010 = vunpack.c.l.b16 %v3449
      %v4011 = vunpack.c.h.b16 %v3449
      %v4012 = vunpack.c.l.b16 %v3450
      %v4013 = vunpack.c.h.b16 %v3450
      %v4014 = vunpack.c.l.b16 %v3451
      %v4015 = vunpack.c.h.b16 %v3451
      %v4016 = vunpack.c.l.b16 %v3452
      %v4017 = vunpack.c.h.b16 %v3452
      %v4018 = vunpack.c.l.b16 %v3453
      %v4019 = vunpack.c.h.b16 %v3453
      %v4020 = vunpack.c.l.b16 %v3454
      %v4021 = vunpack.c.h.b16 %v3454
      %v4022 = vunpack.c.l.b16 %v3455
      %v4023 = vunpack.c.h.b16 %v3455
      %v4024 = vpack.c.b16 %v3738, %v3736
      %v4025 = vpack.c.b16 %v3739, %v3737
      %v4026 = vpack.c.b16 %v3742, %v3740
      %v4027 = vpack.c.b16 %v3743, %v3741
      %v4028 = vpack.c.b16 %v3746, %v3744
      %v4029 = vpack.c.b16 %v3747, %v3745
      %v4030 = vpack.c.b16 %v3750, %v3748
      %v4031 = vpack.c.b16 %v3751, %v3749
      %v4032 = vpack.c.b16 %v3754, %v3752
      %v4033 = vpack.c.b16 %v3755, %v3753
      %v4034 = vpack.c.b16 %v3758, %v3756
      %v4035 = vpack.c.b16 %v3759, %v3757
      %v4036 = vpack.c.b16 %v3762, %v3760
      %v4037 = vpack.c.b16 %v3763, %v3761
      %v4038 = vpack.c.b16 %v3766, %v3764
      %v4039 = vpack.c.b16 %v3767, %v3765
      %v4040 = vpack.c.b16 %v3770, %v3768
      %v4041 = vpack.c.b16 %v3771, %v3769
      %v4042 = vpack.c.b16 %v3774, %v3772
      %v4043 = vpack.c.b16 %v3775, %v3773
      %v4044 = vpack.c.b16 %v3778, %v3776
      %v4045 = vpack.c.b16 %v3779, %v3777
      %v4046 = vpack.c.b16 %v3782, %v3780
      %v4047 = vpack.c.b16 %v3783, %v3781
      %v4048 = vpack.c.b16 %v3786, %v3784
      %v4049 = vpack.c.b16 %v3787, %v3785
      %v4050 = vpack.c.b16 %v3790, %v3788
      %v4051 = vpack.c.b16 %v3791, %v3789
      %v4052 = vpack.c.b16 %v3794, %v3792
      %v4053 = vpack.c.b16 %v3795, %v3793
      %v4054 = vpack.c.b16 %v3798, %v3796
      %v4055 = vpack.c.b16 %v3799, %v3797
      %v4056 = vpack.c.b16 %v3802, %v3800
      %v4057 = vpack.c.b16 %v3803, %v3801
      %v4058 = vpack.c.b16 %v3806, %v3804
      %v4059 = vpack.c.b16 %v3807, %v3805
      %v4060 = vpack.c.b16 %v3810, %v3808
      %v4061 = vpack.c.b16 %v3811, %v3809
      %v4062 = vpack.c.b16 %v3814, %v3812
      %v4063 = vpack.c.b16 %v3815, %v3813
      %v4064 = vpack.c.b16 %v3818, %v3816
      %v4065 = vpack.c.b16 %v3819, %v3817
      %v4066 = vpack.c.b16 %v3822, %v3820
      %v4067 = vpack.c.b16 %v3823, %v3821
      %v4068 = vpack.c.b16 %v3826, %v3824
      %v4069 = vpack.c.b16 %v3827, %v3825
      %v4070 = vpack.c.b16 %v3830, %v3828
      %v4071 = vpack.c.b16 %v3831, %v3829
      %v4072 = vpack.c.b16 %v3834, %v3832
      %v4073 = vpack.c.b16 %v3835, %v3833
      %v4074 = vpack.c.b16 %v3838, %v3836
      %v4075 = vpack.c.b16 %v3839, %v3837
      %v4076 = vpack.c.b16 %v3842, %v3840
      %v4077 = vpack.c.b16 %v3843, %v3841
      %v4078 = vpack.c.b16 %v3846, %v3844
      %v4079 = vpack.c.b16 %v3847, %v3845
      %v4080 = vpack.c.b16 %v3850, %v3848
      %v4081 = vpack.c.b16 %v3851, %v3849
      %v4082 = vpack.c.b16 %v3854, %v3852
      %v4083 = vpack.c.b16 %v3855, %v3853
      %v4084 = vpack.c.b16 %v3858, %v3856
      %v4085 = vpack.c.b16 %v3859, %v3857
      %v4086 = vpack.c.b16 %v3862, %v3860
      %v4087 = vpack.c.b16 %v3863, %v3861
      %v4088 = vpack.c.b16 %v3866, %v3864
      %v4089 = vpack.c.b16 %v3867, %v3865
      %v4090 = vpack.c.b16 %v3870, %v3868
      %v4091 = vpack.c.b16 %v3871, %v3869
      %v4092 = vpack.c.b16 %v3874, %v3872
      %v4093 = vpack.c.b16 %v3875, %v3873
      %v4094 = vpack.c.b16 %v3878, %v3876
      %v4095 = vpack.c.b16 %v3879, %v3877
      %v4096 = vpack.c.b16 %v3882, %v3880
      %v4097 = vpack.c.b16 %v3883, %v3881
      %v4098 = vpack.c.b16 %v3886, %v3884
      %v4099 = vpack.c.b16 %v3887, %v3885
      %v4100 = vpack.c.b16 %v3890, %v3888
      %v4101 = vpack.c.b16 %v3891, %v3889
      %v4102 = vpack.c.b16 %v3894, %v3892
      %v4103 = vpack.c.b16 %v3895, %v3893
      %v4104 = vpack.c.b16 %v3898, %v3896
      %v4105 = vpack.c.b16 %v3899, %v3897
      %v4106 = vpack.c.b16 %v3902, %v3900
      %v4107 = vpack.c.b16 %v3903, %v3901
      %v4108 = vpack.c.b16 %v3906, %v3904
      %v4109 = vpack.c.b16 %v3907, %v3905
      %v4110 = vpack.c.b16 %v3910, %v3908
      %v4111 = vpack.c.b16 %v3911, %v3909
      %v4112 = vpack.c.b16 %v3914, %v3912
      %v4113 = vpack.c.b16 %v3915, %v3913
      %v4114 = vpack.c.b16 %v3918, %v3916
      %v4115 = vpack.c.b16 %v3919, %v3917
      %v4116 = vpack.c.b16 %v3922, %v3920
      %v4117 = vpack.c.b16 %v3923, %v3921
      %v4118 = vpack.c.b16 %v3926, %v3924
      %v4119 = vpack.c.b16 %v3927, %v3925
      %v4120 = vpack.c.b16 %v3930, %v3928
      %v4121 = vpack.c.b16 %v3931, %v3929
      %v4122 = vpack.c.b16 %v3934, %v3932
      %v4123 = vpack.c.b16 %v3935, %v3933
      %v4124 = vpack.c.b16 %v3938, %v3936
      %v4125 = vpack.c.b16 %v3939, %v3937
      %v4126 = vpack.c.b16 %v3942, %v3940
      %v4127 = vpack.c.b16 %v3943, %v3941
      %v4128 = vpack.c.b16 %v3946, %v3944
      %v4129 = vpack.c.b16 %v3947, %v3945
      %v4130 = vpack.c.b16 %v3950, %v3948
      %v4131 = vpack.c.b16 %v3951, %v3949
      %v4132 = vpack.c.b16 %v3954, %v3952
      %v4133 = vpack.c.b16 %v3955, %v3953
      %v4134 = vpack.c.b16 %v3958, %v3956
      %v4135 = vpack.c.b16 %v3959, %v3957
      %v4136 = vpack.c.b16 %v3962, %v3960
      %v4137 = vpack.c.b16 %v3963, %v3961
      %v4138 = vpack.c.b16 %v3966, %v3964
      %v4139 = vpack.c.b16 %v3967, %v3965
      %v4140 = vpack.c.b16 %v3970, %v3968
      %v4141 = vpack.c.b16 %v3971, %v3969
      %v4142 = vpack.c.b16 %v3974, %v3972
      %v4143 = vpack.c.b16 %v3975, %v3973
      %v4144 = vpack.c.b16 %v3978, %v3976
      %v4145 = vpack.c.b16 %v3979, %v3977
      %v4146 = vpack.c.b16 %v3982, %v3980
      %v4147 = vpack.c.b16 %v3983, %v3981
      %v4148 = vpack.c.b16 %v3986, %v3984
      %v4149 = vpack.c.b16 %v3987, %v3985
      %v4150 = vpack.c.b16 %v3990, %v3988
      %v4151 = vpack.c.b16 %v3991, %v3989
      %v4152 = vpack.c.b16 %v3994, %v3992
      %v4153 = vpack.c.b16 %v3995, %v3993
      %v4154 = vpack.c.b16 %v3998, %v3996
      %v4155 = vpack.c.b16 %v3999, %v3997
      %v4156 = vpack.c.b16 %v4002, %v4000
      %v4157 = vpack.c.b16 %v4003, %v4001
      %v4158 = vpack.c.b16 %v4006, %v4004
      %v4159 = vpack.c.b16 %v4007, %v4005
      %v4160 = vpack.c.b16 %v4010, %v4008
      %v4161 = vpack.c.b16 %v4011, %v4009
      %v4162 = vpack.c.b16 %v4014, %v4012
      %v4163 = vpack.c.b16 %v4015, %v4013
      %v4164 = vpack.c.b16 %v4018, %v4016
      %v4165 = vpack.c.b16 %v4019, %v4017
      %v4166 = vpack.c.b16 %v4022, %v4020
      %v4167 = vpack.c.b16 %v4023, %v4021
      %4312 = vmatprep.subr.bf16.mxu0 %v4025
      %4313 = vmatpush1.bf16.msra.mxu0 %v4024
      %4314 = vmatprep.subr.bf16.mxu0 %v4027
      %4315 = vmatpush1.bf16.msra.mxu0 %v4026
      %4316 = vmatprep.subr.bf16.mxu0 %v4029
      %4317 = vmatpush1.bf16.msra.mxu0 %v4028
      %4318 = vmatprep.subr.bf16.mxu0 %v4031
      %4319 = vmatpush1.bf16.msra.mxu0 %v4030
      %4320 = vmatprep.subr.bf16.mxu0 %v4033
      %4321 = vmatpush1.bf16.msra.mxu0 %v4032
      %4322 = vmatprep.subr.bf16.mxu0 %v4035
      %4323 = vmatpush1.bf16.msra.mxu0 %v4034
      %4324 = vmatprep.subr.bf16.mxu0 %v4037
      %4325 = vmatpush1.bf16.msra.mxu0 %v4036
      %4326 = vmatprep.subr.bf16.mxu0 %v4039
      %4327 = vmatpush1.bf16.msra.mxu0 %v4038
      %4328 = vmatprep.subr.bf16.mxu0 %v4041
      %4329 = vmatpush1.bf16.msra.mxu0 %v4040
      %4330 = vmatprep.subr.bf16.mxu0 %v4043
      %4331 = vmatpush1.bf16.msra.mxu0 %v4042
      %4332 = vmatprep.subr.bf16.mxu0 %v4045
      %4333 = vmatpush1.bf16.msra.mxu0 %v4044
      %4334 = vmatprep.subr.bf16.mxu0 %v4047
      %4335 = vmatpush1.bf16.msra.mxu0 %v4046
      %4336 = vmatprep.subr.bf16.mxu0 %v4049
      %4337 = vmatpush1.bf16.msra.mxu0 %v4048
      %4338 = vmatprep.subr.bf16.mxu0 %v4051
      %4339 = vmatpush1.bf16.msra.mxu0 %v4050
      %4340 = vmatprep.subr.bf16.mxu0 %v4053
      %4341 = vmatpush1.bf16.msra.mxu0 %v4052
      %4342 = vmatprep.subr.bf16.mxu0 %v4055
      %4343 = vmatpush1.bf16.msra.mxu0 %v4054
      %4344 = vmatprep.mubr.bf16.mxu0 %v3539
      %4345 = vmatmul.mubr.bf16.gmra.mrb[0].mxu0 %v3538
      %v4346 = vpop.f32.mrb[0].mxu0
      %v4347 = vadd.f32 %v3461, %v4346
      %v4348 = vpop.f32.mrb[0].mxu0
      %v4349 = vadd.f32 %v3465, %v4348
      %v4350 = vpop.f32.mrb[0].mxu0
      %v4351 = vadd.f32 %v3461, %v4350
      %v4352 = vpop.f32.mrb[0].mxu0
      %v4353 = vadd.f32 %v3465, %v4352
      %4354 = vmatprep.mubr.bf16.mxu0 %v3548
      %4355 = vmatmul.mubr.bf16.gmra.mrb[0].mxu0 %v3547
      %v4356 = vpop.f32.mrb[0].mxu0
      %v4357 = vadd.f32 %v3461, %v4356
      %v4358 = vpop.f32.mrb[0].mxu0
      %v4359 = vadd.f32 %v3465, %v4358
      %v4360 = vpop.f32.mrb[0].mxu0
      %v4361 = vpop.f32.mrb[0].mxu0
      %4362 = vmatprep.mubr.bf16.mxu0 %v3557
      %4363 = vmatmul.mubr.bf16.gmra.mrb[0].mxu0 %v3556
      %v4364 = vpop.f32.mrb[0].mxu0
      %v4365 = vpop.f32.mrb[0].mxu0
      %v4366 = vpop.f32.mrb[0].mxu0
      %v4367 = vpop.f32.mrb[0].mxu0
      %4368 = vdwg.mxu0
      %4369 = vmatprep.subr.bf16.mxu0 %v4057
      %4370 = vmatpush1.bf16.msra.mxu0 %v4056
      %4371 = vmatprep.subr.bf16.mxu0 %v4059
      %4372 = vmatpush1.bf16.msra.mxu0 %v4058
      %4373 = vmatprep.subr.bf16.mxu0 %v4061
      %4374 = vmatpush1.bf16.msra.mxu0 %v4060
      %4375 = vmatprep.subr.bf16.mxu0 %v4063
      %4376 = vmatpush1.bf16.msra.mxu0 %v4062
      %4377 = vmatprep.subr.bf16.mxu0 %v4065
      %4378 = vmatpush1.bf16.msra.mxu0 %v4064
      %4379 = vmatprep.subr.bf16.mxu0 %v4067
      %4380 = vmatpush1.bf16.msra.mxu0 %v4066
      %4381 = vmatprep.subr.bf16.mxu0 %v4069
      %4382 = vmatpush1.bf16.msra.mxu0 %v4068
      %4383 = vmatprep.subr.bf16.mxu0 %v4071
      %4384 = vmatpush1.bf16.msra.mxu0 %v4070
      %4385 = vmatprep.subr.bf16.mxu0 %v4073
      %4386 = vmatpush1.bf16.msra.mxu0 %v4072
      %4387 = vmatprep.subr.bf16.mxu0 %v4075
      %4388 = vmatpush1.bf16.msra.mxu0 %v4074
      %4389 = vmatprep.subr.bf16.mxu0 %v4077
      %4390 = vmatpush1.bf16.msra.mxu0 %v4076
      %4391 = vmatprep.subr.bf16.mxu0 %v4079
      %4392 = vmatpush1.bf16.msra.mxu0 %v4078
      %4393 = vmatprep.subr.bf16.mxu0 %v4081
      %4394 = vmatpush1.bf16.msra.mxu0 %v4080
      %4395 = vmatprep.subr.bf16.mxu0 %v4083
      %4396 = vmatpush1.bf16.msra.mxu0 %v4082
      %4397 = vmatprep.subr.bf16.mxu0 %v4085
      %4398 = vmatpush1.bf16.msra.mxu0 %v4084
      %4399 = vmatprep.subr.bf16.mxu0 %v4087
      %4400 = vmatpush1.bf16.msra.mxu0 %v4086
      %4401 = vmatprep.mubr.bf16.mxu0 %v3541
      %4402 = vmatmul.mubr.bf16.gmra.mrb[0].mxu0 %v3540
      %v4403 = vpop.f32.mrb[0].mxu0
      %v4404 = vadd.f32 %v4347, %v4403
      %v4405 = vpop.f32.mrb[0].mxu0
      %v4406 = vadd.f32 %v4349, %v4405
      %v4407 = vpop.f32.mrb[0].mxu0
      %v4408 = vadd.f32 %v4351, %v4407
      %v4409 = vpop.f32.mrb[0].mxu0
      %v4410 = vadd.f32 %v4353, %v4409
      %4411 = vmatprep.mubr.bf16.mxu0 %v3550
      %4412 = vmatmul.mubr.bf16.gmra.mrb[0].mxu0 %v3549
      %v4413 = vpop.f32.mrb[0].mxu0
      %v4414 = vadd.f32 %v4357, %v4413
      %v4415 = vpop.f32.mrb[0].mxu0
      %v4416 = vadd.f32 %v4359, %v4415
      %v4417 = vpop.f32.mrb[0].mxu0
      %v4418 = vpop.f32.mrb[0].mxu0
      %4419 = vmatprep.mubr.bf16.mxu0 %v3559
      %4420 = vmatmul.mubr.bf16.gmra.mrb[0].mxu0 %v3558
      %v4421 = vpop.f32.mrb[0].mxu0
      %v4422 = vpop.f32.mrb[0].mxu0
      %v4423 = vpop.f32.mrb[0].mxu0
      %v4424 = vpop.f32.mrb[0].mxu0
      %4425 = vdwg.mxu0
      %4426 = vmatprep.subr.bf16.mxu0 %v4089
      %4427 = vmatpush1.bf16.msra.mxu0 %v4088
      %4428 = vmatprep.subr.bf16.mxu0 %v4091
      %4429 = vmatpush1.bf16.msra.mxu0 %v4090
      %4430 = vmatprep.subr.bf16.mxu0 %v4093
      %4431 = vmatpush1.bf16.msra.mxu0 %v4092
      %4432 = vmatprep.subr.bf16.mxu0 %v4095
      %4433 = vmatpush1.bf16.msra.mxu0 %v4094
      %4434 = vmatprep.subr.bf16.mxu0 %v4097
      %4435 = vmatpush1.bf16.msra.mxu0 %v4096
      %4436 = vmatprep.subr.bf16.mxu0 %v4099
      %4437 = vmatpush1.bf16.msra.mxu0 %v4098
      %4438 = vmatprep.subr.bf16.mxu0 %v4101
      %4439 = vmatpush1.bf16.msra.mxu0 %v4100
      %4440 = vmatprep.subr.bf16.mxu0 %v4103
      %4441 = vmatpush1.bf16.msra.mxu0 %v4102
      %4442 = vmatprep.subr.bf16.mxu0 %v4105
      %4443 = vmatpush1.bf16.msra.mxu0 %v4104
      %4444 = vmatprep.subr.bf16.mxu0 %v4107
      %4445 = vmatpush1.bf16.msra.mxu0 %v4106
      %4446 = vmatprep.subr.bf16.mxu0 %v4109
      %4447 = vmatpush1.bf16.msra.mxu0 %v4108
      %4448 = vmatprep.subr.bf16.mxu0 %v4111
      %4449 = vmatpush1.bf16.msra.mxu0 %v4110
      %4450 = vmatprep.subr.bf16.mxu0 %v4113
      %4451 = vmatpush1.bf16.msra.mxu0 %v4112
      %4452 = vmatprep.subr.bf16.mxu0 %v4115
      %4453 = vmatpush1.bf16.msra.mxu0 %v4114
      %4454 = vmatprep.subr.bf16.mxu0 %v4117
      %4455 = vmatpush1.bf16.msra.mxu0 %v4116
      %4456 = vmatprep.subr.bf16.mxu0 %v4119
      %4457 = vmatpush1.bf16.msra.mxu0 %v4118
      %4458 = vmatprep.mubr.bf16.mxu0 %v3543
      %4459 = vmatmul.mubr.bf16.gmra.mrb[0].mxu0 %v3542
      %v4460 = vpop.f32.mrb[0].mxu0
      %v4461 = vadd.f32 %v4404, %v4460
      %v4462 = vpop.f32.mrb[0].mxu0
      %v4463 = vadd.f32 %v4406, %v4462
      %v4464 = vpop.f32.mrb[0].mxu0
      %v4465 = vadd.f32 %v4408, %v4464
      %v4466 = vpop.f32.mrb[0].mxu0
      %v4467 = vadd.f32 %v4410, %v4466
      %4468 = vmatprep.mubr.bf16.mxu0 %v3552
      %4469 = vmatmul.mubr.bf16.gmra.mrb[0].mxu0 %v3551
      %v4470 = vpop.f32.mrb[0].mxu0
      %v4471 = vadd.f32 %v4414, %v4470
      %v4472 = vpop.f32.mrb[0].mxu0
      %v4473 = vadd.f32 %v4416, %v4472
      %v4474 = vpop.f32.mrb[0].mxu0
      %v4475 = vpop.f32.mrb[0].mxu0
      %4476 = vmatprep.mubr.bf16.mxu0 %v3561
      %4477 = vmatmul.mubr.bf16.gmra.mrb[0].mxu0 %v3560
      %v4478 = vpop.f32.mrb[0].mxu0
      %v4479 = vpop.f32.mrb[0].mxu0
      %v4480 = vpop.f32.mrb[0].mxu0
      %v4481 = vpop.f32.mrb[0].mxu0
      %4482 = vdwg.mxu0
      %4483 = vmatprep.subr.bf16.mxu0 %v4121
      %4484 = vmatpush1.bf16.msra.mxu0 %v4120
      %4485 = vmatprep.subr.bf16.mxu0 %v4123
      %4486 = vmatpush1.bf16.msra.mxu0 %v4122
      %4487 = vmatprep.subr.bf16.mxu0 %v4125
      %4488 = vmatpush1.bf16.msra.mxu0 %v4124
      %4489 = vmatprep.subr.bf16.mxu0 %v4127
      %4490 = vmatpush1.bf16.msra.mxu0 %v4126
      %4491 = vmatprep.subr.bf16.mxu0 %v4129
      %4492 = vmatpush1.bf16.msra.mxu0 %v4128
      %4493 = vmatprep.subr.bf16.mxu0 %v4131
      %4494 = vmatpush1.bf16.msra.mxu0 %v4130
      %4495 = vmatprep.subr.bf16.mxu0 %v4133
      %4496 = vmatpush1.bf16.msra.mxu0 %v4132
      %4497 = vmatprep.subr.bf16.mxu0 %v4135
      %4498 = vmatpush1.bf16.msra.mxu0 %v4134
      %4499 = vmatprep.subr.bf16.mxu0 %v4137
      %4500 = vmatpush1.bf16.msra.mxu0 %v4136
      %4501 = vmatprep.subr.bf16.mxu0 %v4139
      %4502 = vmatpush1.bf16.msra.mxu0 %v4138
      %4503 = vmatprep.subr.bf16.mxu0 %v4141
      %4504 = vmatpush1.bf16.msra.mxu0 %v4140
      %4505 = vmatprep.subr.bf16.mxu0 %v4143
      %4506 = vmatpush1.bf16.msra.mxu0 %v4142
      %4507 = vmatprep.subr.bf16.mxu0 %v4145
      %4508 = vmatpush1.bf16.msra.mxu0 %v4144
      %4509 = vmatprep.subr.bf16.mxu0 %v4147
      %4510 = vmatpush1.bf16.msra.mxu0 %v4146
      %4511 = vmatprep.subr.bf16.mxu0 %v4149
      %4512 = vmatpush1.bf16.msra.mxu0 %v4148
      %4513 = vmatprep.subr.bf16.mxu0 %v4151
      %4514 = vmatpush1.bf16.msra.mxu0 %v4150
      %4515 = vmatprep.mubr.bf16.mxu0 %v3545
      %4516 = vmatmul.mubr.bf16.gmra.mrb[0].mxu0 %v3544
      %v4517 = vpop.f32.mrb[0].mxu0
      %v4518 = vadd.f32 %v4461, %v4517
      %v4519 = vpop.f32.mrb[0].mxu0
      %v4520 = vadd.f32 %v4463, %v4519
      %v4521 = vpop.f32.mrb[0].mxu0
      %v4522 = vadd.f32 %v4465, %v4521
      %v4523 = vpop.f32.mrb[0].mxu0
      %v4524 = vadd.f32 %v4467, %v4523
      %4525 = vmatprep.mubr.bf16.mxu0 %v3554
      %4526 = vmatmul.mubr.bf16.gmra.mrb[0].mxu0 %v3553
      %v4527 = vpop.f32.mrb[0].mxu0
      %v4528 = vadd.f32 %v4471, %v4527
      %v4529 = vpop.f32.mrb[0].mxu0
      %v4530 = vadd.f32 %v4473, %v4529
      %v4531 = vpop.f32.mrb[0].mxu0
      %v4532 = vpop.f32.mrb[0].mxu0
      %4533 = vmatprep.mubr.bf16.mxu0 %v3563
      %4534 = vmatmul.mubr.bf16.gmra.mrb[0].mxu0 %v3562
      %v4535 = vpop.f32.mrb[0].mxu0
      %v4536 = vpop.f32.mrb[0].mxu0
      %v4537 = vpop.f32.mrb[0].mxu0
      %v4538 = vpop.f32.mrb[0].mxu0
      %4539 = vdwg.mxu0
      %4540 = vmatprep.subr.bf16.mxu0 %v4153
      %4541 = vmatpush1.bf16.msra.mxu0 %v4152
      %4542 = vmatprep.subr.bf16.mxu0 %v4155
      %4543 = vmatpush1.bf16.msra.mxu0 %v4154
      %4544 = vmatprep.subr.bf16.mxu0 %v4157
      %4545 = vmatpush1.bf16.msra.mxu0 %v4156
      %4546 = vmatprep.subr.bf16.mxu0 %v4159
      %4547 = vmatpush1.bf16.msra.mxu0 %v4158
      %4548 = vmatprep.subr.bf16.mxu0 %v4161
      %4549 = vmatpush1.bf16.msra.mxu0 %v4160
      %4550 = vmatprep.subr.bf16.mxu0 %v4163
      %4551 = vmatpush1.bf16.msra.mxu0 %v4162
      %4552 = vmatprep.subr.bf16.mxu0 %v4165
      %4553 = vmatpush1.bf16.msra.mxu0 %v4164
      %4554 = vmatprep.subr.bf16.mxu0 %v4167
      %4555 = vmatpush1.bf16.msra.mxu0 %v4166
      %4556 = vmatprep.subr.bf16.mxu0 0
      %4557 = vmatpush1.bf16.msra.mxu0 0
      %4558 = vmatprep.subr.bf16.mxu0 0
      %4559 = vmatpush1.bf16.msra.mxu0 0
      %4560 = vmatprep.subr.bf16.mxu0 0
      %4561 = vmatpush1.bf16.msra.mxu0 0
      %4562 = vmatprep.subr.bf16.mxu0 0
      %4563 = vmatpush1.bf16.msra.mxu0 0
      %4564 = vmatprep.subr.bf16.mxu0 0
      %4565 = vmatpush1.bf16.msra.mxu0 0
      %4566 = vmatprep.subr.bf16.mxu0 0
      %4567 = vmatpush1.bf16.msra.mxu0 0
      %4568 = vmatprep.subr.bf16.mxu0 0
      %4569 = vmatpush1.bf16.msra.mxu0 0
      %4570 = vmatprep.subr.bf16.mxu0 0
      %4571 = vmatpush1.bf16.msra.mxu0 0
      %4572 = vmatprep.mubr.bf16.mxu0 0
      %4573 = vmatmul.mubr.bf16.gmra.mrb[0].mxu0 %v3546
      %v4574 = vpop.f32.mrb[0].mxu0
      %v4575 = vadd.f32 %v4518, %v4574
      %v4576 = vpop.f32.mrb[0].mxu0
      %v4577 = vadd.f32 %v4520, %v4576
      %v4578 = vpop.f32.mrb[0].mxu0
      %v4579 = vadd.f32 %v4522, %v4578
      %v4580 = vpop.f32.mrb[0].mxu0
      %v4581 = vadd.f32 %v4524, %v4580
      %4582 = vmatprep.mubr.bf16.mxu0 0
      %4583 = vmatmul.mubr.bf16.gmra.mrb[0].mxu0 %v3555
      %v4584 = vpop.f32.mrb[0].mxu0
      %v4585 = vadd.f32 %v4528, %v4584
      %v4586 = vpop.f32.mrb[0].mxu0
      %v4587 = vadd.f32 %v4530, %v4586
      %v4588 = vpop.f32.mrb[0].mxu0
      %v4589 = vpop.f32.mrb[0].mxu0
      %4590 = vmatprep.mubr.bf16.mxu0 0
      %4591 = vmatmul.mubr.bf16.gmra.mrb[0].mxu0 %v3564
      %v4592 = vpop.f32.mrb[0].mxu0
      %v4593 = vpop.f32.mrb[0].mxu0
      %v4594 = vpop.f32.mrb[0].mxu0
      %v4595 = vpop.f32.mrb[0].mxu0
      %4596 = vdwg.mxu0
      %v4597 = vmax.f32 %v4575, 0.0
      %v4598 = vmax.f32 %v4577, 0.0
      %v4599 = vmax.f32 %v4579, 0.0
      %v4600 = vmax.f32 %v4581, 0.0
      %v4601 = vmax.f32 %v4585, 0.0
      %v4602 = vmax.f32 %v4587, 0.0
      %v4605 = vrot.slane %v4597, 1
      %v4606 = vrot.slane %v4598, 1
      %v4609 = vmax.f32 %v4597, %v4605
      %v4610 = vmax.f32 %v4598, %v4606
      %v4613 = vrot.slane %v4609, 6
      %v4614 = vrot.slane %v4610, 6
      %v4617 = vmax.f32 %v4609, %v4613
      %v4618 = vmax.f32 %v4610, %v4614
      %v4621 = vrot.slane %v4599, 1
      %v4622 = vrot.slane %v4600, 1
      %v4625 = vmax.f32 %v4599, %v4621
      %v4626 = vmax.f32 %v4600, %v4622
      %v4629 = vrot.slane %v4625, 6
      %v4630 = vrot.slane %v4626, 6
      %v4633 = vmax.f32 %v4609, %v4629
      %v4634 = vmax.f32 %v4610, %v4630
      %v4637 = vrot.slane %v4633, 2
      %v4638 = vrot.slane %v4634, 2
      %v4643 = vrot.slane %v4601, 1
      %v4644 = vrot.slane %v4602, 1
      %v4647 = vmax.f32 %v4601, %v4643
      %v4648 = vmax.f32 %v4602, %v4644
      %v4651 = vrot.slane %v4647, 6
      %v4652 = vrot.slane %v4648, 6
      %v4655 = vmax.f32 %v4625, %v4651
      %v4656 = vmax.f32 %v4626, %v4652
      %v4659 = vrot.slane %v4655, 2
      %v4660 = vrot.slane %v4656, 2
      %v4661 = vrot.slane %v4655, 3
      %v4662 = vrot.slane %v4656, 3
      %v4663 = vrot.slane %v4659, 3
      %v4664 = vrot.slane %v4660, 3
      %vm4669 = vcmask 1040384
      %v4670 = vsel %vm4669, %v4617, %v4661
      %v4671 = vsel %vm4669, %v4618, %v4662
      %v4672 = vsel %vm4669, %v4637, %v4663
      %v4673 = vsel %vm4669, %v4638, %v4664
      %v4674 = vpack.c.bf16 %v4670, %v4670
      %v4675 = vpack.c.bf16 %v4671, %v4671
      %v4676 = vpack.c.bf16 %v4672, %v4672
      %v4677 = vpack.c.bf16 %v4673, %v4673
      %v4678 = vld [vmem:[%s7] sm:$0xff]
      %v4679 = vld [vmem:[%s7 + $0x8] sm:$0xff]
      %v4680 = vld [vmem:[%s7 + $0x10] sm:$0xff]
      %v4681 = vld [vmem:[%s7 + $0x18] sm:$0xff]
      %v4682 = vld [vmem:[%s7 + $0x20] sm:$0xff]
      %v4683 = vld [vmem:[%s7 + $0x28] sm:$0xff]
      %v4684 = vld [vmem:[%s7 + $0x30] sm:$0xff]
      %v4685 = vld [vmem:[%s7 + $0x38] sm:$0xff]
      %v4686 = vld [vmem:[%s7 + $0x40] sm:$0xff]
      %v4687 = vld [vmem:[%s7 + $0x48] sm:$0xff]
      %v4688 = vld [vmem:[%s7 + $0x50] sm:$0xff]
      %v4689 = vld [vmem:[%s7 + $0x58] sm:$0xff]
      %v4690 = vld [vmem:[%s7 + $0x60] sm:$0xff]
      %v4691 = vld [vmem:[%s7 + $0x68] sm:$0xff]
      %v4692 = vld [vmem:[%s7 + $0x70] sm:$0xff]
      %v4693 = vld [vmem:[%s7 + $0x78] sm:$0xff]
      %v4694 = vld [vmem:[%s7 + $0x80] sm:$0xff]
      %v4695 = vld [vmem:[%s7 + $0x88] sm:$0xff]
      %v4696 = vld [vmem:[%s7 + $0x90] sm:$0xff]
      %v4697 = vld [vmem:[%s7 + $0x98] sm:$0xff]
      %v4698 = vld [vmem:[%s7 + $0xa0] sm:$0xff]
      %v4699 = vld [vmem:[%s7 + $0xa8] sm:$0xff]
      %v4700 = vld [vmem:[%s7 + $0xb0] sm:$0xff]
      %v4701 = vld [vmem:[%s7 + $0xb8] sm:$0xff]
      %v4702 = vld [vmem:[%s7 + $0xc0] sm:$0xff]
      %v4703 = vld [vmem:[%s7 + $0xc8] sm:$0xff]
      %v4704 = vld [vmem:[%s7 + $0xd0] sm:$0xff]
      %v4705 = vld [vmem:[%s7 + $0xd8] sm:$0xff]
      %v4706 = vld [vmem:[%s7 + $0xe0] sm:$0xff]
      %v4707 = vld [vmem:[%s7 + $0xe8] sm:$0xff]
      %v4708 = vld [vmem:[%s7 + $0xf0] sm:$0xff]
      %v4709 = vld [vmem:[%s7 + $0xf8] sm:$0xff]
      %v4710 = vld [vmem:[%s7 + $0x100] sm:$0xff]
      %v4711 = vld [vmem:[%s7 + $0x108] sm:$0xff]
      %v4712 = vld [vmem:[%s7 + $0x110] sm:$0xff]
      %v4713 = vld [vmem:[%s7 + $0x118] sm:$0xff]
      %v4714 = vld [vmem:[%s7 + $0x120] sm:$0xff]
      %v4715 = vld [vmem:[%s7 + $0x128] sm:$0xff]
      %v4716 = vld [vmem:[%s7 + $0x130] sm:$0xff]
      %v4717 = vld [vmem:[%s7 + $0x138] sm:$0xff]
      %v4718 = vld [vmem:[%s7 + $0x140] sm:$0xff]
      %v4719 = vld [vmem:[%s7 + $0x148] sm:$0xff]
      %v4720 = vld [vmem:[%s7 + $0x150] sm:$0xff]
      %v4721 = vld [vmem:[%s7 + $0x158] sm:$0xff]
      %v4722 = vld [vmem:[%s7 + $0x160] sm:$0xff]
      %v4723 = vld [vmem:[%s7 + $0x168] sm:$0xff]
      %v4724 = vld [vmem:[%s7 + $0x170] sm:$0xff]
      %v4725 = vld [vmem:[%s7 + $0x178] sm:$0xff]
      %v4726 = vld [vmem:[%s7 + $0x180] sm:$0xff]
      %v4727 = vld [vmem:[%s7 + $0x188] sm:$0xff]
      %v4728 = vld [vmem:[%s7 + $0x190] sm:$0xff]
      %v4729 = vld [vmem:[%s7 + $0x198] sm:$0xff]
      %v4730 = vld [vmem:[%s7 + $0x1a0] sm:$0xff]
      %v4731 = vld [vmem:[%s7 + $0x1a8] sm:$0xff]
      %v4732 = vld [vmem:[%s7 + $0x1b0] sm:$0xff]
      %v4733 = vld [vmem:[%s7 + $0x1b8] sm:$0xff]
      %v4734 = vld [vmem:[%s7 + $0x1c0] sm:$0xff]
      %v4735 = vld [vmem:[%s7 + $0x1c8] sm:$0xff]
      %v4736 = vld [vmem:[%s7 + $0x1d0] sm:$0xff]
      %v4737 = vld [vmem:[%s7 + $0x1d8] sm:$0xff]
      %v4738 = vld [vmem:[%s7 + $0x1e0] sm:$0xff]
      %v4739 = vld [vmem:[%s7 + $0x1e8] sm:$0xff]
      %v4740 = vld [vmem:[%s7 + $0x1f0] sm:$0xff]
      %v4741 = vld [vmem:[%s7 + $0x1f8] sm:$0xff]
      %v4742 = vld [vmem:[%s7 + $0x200] sm:$0xff]
      %v4743 = vld [vmem:[%s7 + $0x208] sm:$0xff]
      %v4744 = vld [vmem:[%s7 + $0x210] sm:$0xff]
      %v4745 = vld [vmem:[%s7 + $0x218] sm:$0xff]
      %v4746 = vld [vmem:[%s7 + $0x220] sm:$0xff]
      %v4747 = vld [vmem:[%s7 + $0x228] sm:$0xff]
      %v4748 = vld [vmem:[%s7 + $0x230] sm:$0xff]
      %v4749 = vld [vmem:[%s7 + $0x238] sm:$0xff]
      %v4750 = vld [vmem:[%s7 + $0x240] sm:$0xff]
      %v4751 = vld [vmem:[%s7 + $0x248] sm:$0xff]
      %v4752 = vld [vmem:[%s7 + $0x250] sm:$0xff]
      %v4753 = vld [vmem:[%s7 + $0x258] sm:$0xff]
      %v4754 = vld [vmem:[%s7 + $0x260] sm:$0xff]
      %v4755 = vld [vmem:[%s7 + $0x268] sm:$0xff]
      %v4756 = vld [vmem:[%s7 + $0x270] sm:$0xff]
      %v4757 = vld [vmem:[%s7 + $0x278] sm:$0xff]
      %v4758 = vld [vmem:[%s7 + $0x280] sm:$0xff]
      %v4759 = vld [vmem:[%s7 + $0x288] sm:$0xff]
      %v4760 = vld [vmem:[%s7 + $0x290] sm:$0xff]
      %v4761 = vld [vmem:[%s7 + $0x298] sm:$0xff]
      %v4762 = vld [vmem:[%s7 + $0x2a0] sm:$0xff]
      %v4763 = vld [vmem:[%s7 + $0x2a8] sm:$0xff]
      %v4764 = vld [vmem:[%s7 + $0x2b0] sm:$0xff]
      %v4765 = vld [vmem:[%s7 + $0x2b8] sm:$0xff]
      %v4766 = vld [vmem:[%s7 + $0x2c0] sm:$0xff]
      %v4767 = vld [vmem:[%s7 + $0x2c8] sm:$0xff]
      %v4768 = vld [vmem:[%s7 + $0x2d0] sm:$0xff]
      %v4769 = vld [vmem:[%s7 + $0x2d8] sm:$0xff]
      %v4770 = vld [vmem:[%s7 + $0x2e0] sm:$0xff]
      %v4771 = vld [vmem:[%s7 + $0x2e8] sm:$0xff]
      %v4772 = vld [vmem:[%s7 + $0x2f0] sm:$0xff]
      %v4773 = vld [vmem:[%s7 + $0x2f8] sm:$0xff]
      %v4774 = vld [vmem:[%s7 + $0x300] sm:$0xff]
      %v4775 = vld [vmem:[%s7 + $0x308] sm:$0xff]
      %v4776 = vld [vmem:[%s7 + $0x310] sm:$0xff]
      %v4777 = vld [vmem:[%s7 + $0x318] sm:$0xff]
      %v4778 = vld [vmem:[%s7 + $0x320] sm:$0xff]
      %v4779 = vld [vmem:[%s7 + $0x328] sm:$0xff]
      %v4780 = vld [vmem:[%s7 + $0x330] sm:$0xff]
      %v4781 = vld [vmem:[%s7 + $0x338] sm:$0xff]
      %v4782 = vld [vmem:[%s7 + $0x340] sm:$0xff]
      %v4783 = vld [vmem:[%s7 + $0x348] sm:$0xff]
      %v4784 = vld [vmem:[%s7 + $0x350] sm:$0xff]
      %v4785 = vld [vmem:[%s7 + $0x358] sm:$0xff]
      %v4786 = vld [vmem:[%s7 + $0x360] sm:$0xff]
      %v4787 = vld [vmem:[%s7 + $0x368] sm:$0xff]
      %v4788 = vld [vmem:[%s7 + $0x370] sm:$0xff]
      %v4789 = vld [vmem:[%s7 + $0x378] sm:$0xff]
      %v4790 = vld [vmem:[%s7 + $0x380] sm:$0xff]
      %v4791 = vld [vmem:[%s7 + $0x388] sm:$0xff]
      %v4792 = vld [vmem:[%s7 + $0x390] sm:$0xff]
      %v4793 = vld [vmem:[%s7 + $0x398] sm:$0xff]
      %v4794 = vld [vmem:[%s7 + $0x3a0] sm:$0xff]
      %v4795 = vld [vmem:[%s7 + $0x3a8] sm:$0xff]
      %v4796 = vld [vmem:[%s7 + $0x3b0] sm:$0xff]
      %v4797 = vld [vmem:[%s7 + $0x3b8] sm:$0xff]
      %v4798 = vld [vmem:[%s7 + $0x3c0] sm:$0xff]
      %v4799 = vld [vmem:[%s7 + $0x3c8] sm:$0xff]
      %v4800 = vld [vmem:[%s7 + $0x3d0] sm:$0xff]
      %v4801 = vld [vmem:[%s7 + $0x3d8] sm:$0xff]
      %v4802 = vld [vmem:[%s7 + $0x3e0] sm:$0xff]
      %v4803 = vld [vmem:[%s7 + $0x3e8] sm:$0xff]
      %v4804 = vld [vmem:[%s7 + $0x3f0] sm:$0xff]
      %v4805 = vld [vmem:[%s7 + $0x3f8] sm:$0xff]
      %v4806 = vld [vmem:[%s7 + $0x400] sm:$0xff]
      %v4807 = vld [vmem:[%s7 + $0x408] sm:$0xff]
      %v4808 = vld [vmem:[%s7 + $0x410] sm:$0xff]
      %v4809 = vld [vmem:[%s7 + $0x418] sm:$0xff]
      %v4810 = vld [vmem:[%s7 + $0x420] sm:$0xff]
      %v4811 = vld [vmem:[%s7 + $0x428] sm:$0xff]
      %v4812 = vld [vmem:[%s7 + $0x430] sm:$0xff]
      %v4813 = vld [vmem:[%s7 + $0x438] sm:$0xff]
      %v4814 = vld [vmem:[%s7 + $0x440] sm:$0xff]
      %v4815 = vld [vmem:[%s7 + $0x448] sm:$0xff]
      %v4816 = vld [vmem:[%s7 + $0x450] sm:$0xff]
      %v4817 = vld [vmem:[%s7 + $0x458] sm:$0xff]
      %v4818 = vld [vmem:[%s7 + $0x460] sm:$0xff]
      %v4819 = vld [vmem:[%s7 + $0x468] sm:$0xff]
      %v4820 = vld [vmem:[%s7 + $0x470] sm:$0xff]
      %v4821 = vld [vmem:[%s7 + $0x478] sm:$0xff]
      %v4822 = vld [vmem:[%s7 + $0x480] sm:$0xff]
      %v4823 = vld [vmem:[%s7 + $0x488] sm:$0xff]
      %v4824 = vld [vmem:[%s7 + $0x490] sm:$0xff]
      %v4825 = vld [vmem:[%s7 + $0x498] sm:$0xff]
      %v4826 = vld [vmem:[%s7 + $0x4a0] sm:$0xff]
      %v4827 = vld [vmem:[%s7 + $0x4a8] sm:$0xff]
      %v4828 = vld [vmem:[%s7 + $0x4b0] sm:$0xff]
      %v4829 = vld [vmem:[%s7 + $0x4b8] sm:$0xff]
      %v4830 = vld [vmem:[%s7 + $0x4c0] sm:$0xff]
      %v4831 = vld [vmem:[%s7 + $0x4c8] sm:$0xff]
      %v4832 = vld [vmem:[%s7 + $0x4d0] sm:$0xff]
      %v4833 = vld [vmem:[%s7 + $0x4d8] sm:$0xff]
      %v4834 = vld [vmem:[%s7 + $0x4e0] sm:$0xff]
      %v4835 = vld [vmem:[%s7 + $0x4e8] sm:$0xff]
      %v4836 = vld [vmem:[%s7 + $0x4f0] sm:$0xff]
      %v4837 = vld [vmem:[%s7 + $0x4f8] sm:$0xff]
      %v4838 = vld [vmem:[%s7 + $0x500] sm:$0xff]
      %v4839 = vld [vmem:[%s7 + $0x508] sm:$0xff]
      %v4840 = vld [vmem:[%s7 + $0x510] sm:$0xff]
      %v4841 = vld [vmem:[%s7 + $0x518] sm:$0xff]
      %v4842 = vld [vmem:[%s7 + $0x520] sm:$0xff]
      %v4843 = vld [vmem:[%s7 + $0x528] sm:$0xff]
      %v4844 = vld [vmem:[%s7 + $0x530] sm:$0xff]
      %v4845 = vld [vmem:[%s7 + $0x538] sm:$0xff]
      %v4846 = vld [vmem:[%s7 + $0x540] sm:$0xff]
      %v4847 = vld [vmem:[%s7 + $0x548] sm:$0xff]
      %v4848 = vld [vmem:[%s7 + $0x550] sm:$0xff]
      %v4849 = vld [vmem:[%s7 + $0x558] sm:$0xff]
      %v4850 = vld [vmem:[%s7 + $0x560] sm:$0xff]
      %v4851 = vld [vmem:[%s7 + $0x568] sm:$0xff]
      %v4852 = vld [vmem:[%s7 + $0x570] sm:$0xff]
      %v4853 = vld [vmem:[%s7 + $0x578] sm:$0xff]
      %v4854 = vld [vmem:[%s7 + $0x580] sm:$0xff]
      %v4855 = vld [vmem:[%s7 + $0x588] sm:$0xff]
      %v4856 = vld [vmem:[%s7 + $0x590] sm:$0xff]
      %v4857 = vld [vmem:[%s7 + $0x598] sm:$0xff]
      %v4858 = vld [vmem:[%s7 + $0x5a0] sm:$0xff]
      %v4859 = vld [vmem:[%s7 + $0x5a8] sm:$0xff]
      %v4860 = vld [vmem:[%s7 + $0x5b0] sm:$0xff]
      %v4861 = vld [vmem:[%s7 + $0x5b8] sm:$0xff]
      %v4862 = vld [vmem:[%s7 + $0x5c0] sm:$0xff]
      %v4863 = vld [vmem:[%s7 + $0x5c8] sm:$0xff]
      %v4864 = vld [vmem:[%s7 + $0x5d0] sm:$0xff]
      %v4865 = vld [vmem:[%s7 + $0x5d8] sm:$0xff]
      %v4866 = vld [vmem:[%s7 + $0x5e0] sm:$0xff]
      %v4867 = vld [vmem:[%s7 + $0x5e8] sm:$0xff]
      %v4868 = vld [vmem:[%s7 + $0x5f0] sm:$0xff]
      %v4869 = vld [vmem:[%s7 + $0x5f8] sm:$0xff]
      %v4870 = vld [vmem:[%s7 + $0x600] sm:$0xff]
      %v4871 = vld [vmem:[%s7 + $0x608] sm:$0xff]
      %v4872 = vld [vmem:[%s7 + $0x610] sm:$0xff]
      %v4873 = vld [vmem:[%s7 + $0x618] sm:$0xff]
      %v4874 = vld [vmem:[%s7 + $0x620] sm:$0xff]
      %v4875 = vld [vmem:[%s7 + $0x628] sm:$0xff]
      %v4876 = vld [vmem:[%s7 + $0x630] sm:$0xff]
      %v4877 = vld [vmem:[%s7 + $0x638] sm:$0xff]
      %v4878 = vld [vmem:[%s7 + $0x640] sm:$0xff]
      %v4879 = vld [vmem:[%s7 + $0x648] sm:$0xff]
      %v4880 = vld [vmem:[%s7 + $0x650] sm:$0xff]
      %v4881 = vld [vmem:[%s7 + $0x658] sm:$0xff]
      %v4882 = vld [vmem:[%s7 + $0x660] sm:$0xff]
      %v4883 = vld [vmem:[%s7 + $0x668] sm:$0xff]
      %v4884 = vld [vmem:[%s7 + $0x670] sm:$0xff]
      %v4885 = vld [vmem:[%s7 + $0x678] sm:$0xff]
      %v4886 = vld [vmem:[%s7 + $0x680] sm:$0xff]
      %v4887 = vld [vmem:[%s7 + $0x688] sm:$0xff]
      %v4888 = vld [vmem:[%s7 + $0x690] sm:$0xff]
      %v4889 = vld [vmem:[%s7 + $0x698] sm:$0xff]
      %v4890 = vld [vmem:[%s7 + $0x6a0] sm:$0xff]
      %v4891 = vld [vmem:[%s7 + $0x6a8] sm:$0xff]
      %v4892 = vld [vmem:[%s7 + $0x6b0] sm:$0xff]
      %v4893 = vld [vmem:[%s7 + $0x6b8] sm:$0xff]
      %v4894 = vld [vmem:[%s7 + $0x6c0] sm:$0xff]
      %v4895 = vld [vmem:[%s7 + $0x6c8] sm:$0xff]
      %v4896 = vld [vmem:[%s7 + $0x6d0] sm:$0xff]
      %v4897 = vld [vmem:[%s7 + $0x6d8] sm:$0xff]
      %v4898 = vld [vmem:[%s7 + $0x6e0] sm:$0xff]
      %v4899 = vld [vmem:[%s7 + $0x6e8] sm:$0xff]
      %v4900 = vld [vmem:[%s7 + $0x6f0] sm:$0xff]
      %v4901 = vld [vmem:[%s7 + $0x6f8] sm:$0xff]
      %v4902 = vld [vmem:[%s7 + $0x700] sm:$0xff]
      %v4903 = vld [vmem:[%s7 + $0x708] sm:$0xff]
      %v4904 = vld [vmem:[%s7 + $0x710] sm:$0xff]
      %v4905 = vld [vmem:[%s7 + $0x718] sm:$0xff]
      %v4906 = vld [vmem:[%s7 + $0x720] sm:$0xff]
      %v4907 = vld [vmem:[%s7 + $0x728] sm:$0xff]
      %v4908 = vld [vmem:[%s7 + $0x730] sm:$0xff]
      %v4909 = vld [vmem:[%s7 + $0x738] sm:$0xff]
      %v4910 = vld [vmem:[%s7 + $0x740] sm:$0xff]
      %v4911 = vld [vmem:[%s7 + $0x748] sm:$0xff]
      %v4912 = vld [vmem:[%s7 + $0x750] sm:$0xff]
      %v4913 = vld [vmem:[%s7 + $0x758] sm:$0xff]
      %v4914 = vld [vmem:[%s7 + $0x760] sm:$0xff]
      %v4915 = vld [vmem:[%s7 + $0x768] sm:$0xff]
      %v4916 = vld [vmem:[%s7 + $0x770] sm:$0xff]
      %v4917 = vld [vmem:[%s7 + $0x778] sm:$0xff]
      %v4918 = vld [vmem:[%s7 + $0x780] sm:$0xff]
      %v4919 = vld [vmem:[%s7 + $0x788] sm:$0xff]
      %v4920 = vld [vmem:[%s7 + $0x790] sm:$0xff]
      %v4921 = vld [vmem:[%s7 + $0x798] sm:$0xff]
      %v4922 = vld [vmem:[%s7 + $0x7a0] sm:$0xff]
      %v4923 = vld [vmem:[%s7 + $0x7a8] sm:$0xff]
      %v4924 = vld [vmem:[%s7 + $0x7b0] sm:$0xff]
      %v4925 = vld [vmem:[%s7 + $0x7b8] sm:$0xff]
      %v4926 = vld [vmem:[%s7 + $0x7c0] sm:$0xff]
      %v4927 = vld [vmem:[%s7 + $0x7c8] sm:$0xff]
      %v4928 = vld [vmem:[%s7 + $0x7d0] sm:$0xff]
      %v4929 = vld [vmem:[%s7 + $0x7d8] sm:$0xff]
      %v4930 = vld [vmem:[%s7 + $0x7e0] sm:$0xff]
      %v4931 = vld [vmem:[%s7 + $0x7e8] sm:$0xff]
      %v4932 = vld [vmem:[%s7 + $0x7f0] sm:$0xff]
      %v4933 = vld [vmem:[%s7 + $0x7f8] sm:$0xff]
      %v4934 = vld [vmem:[%s8] sm:$0xff]
      %v4936 = vlaneseq
      %v4937 = vshrl.u32 %v4936, 7
      %v4938 = vsub.s32 0, %v4937
      %v4939 = vrot.slane %v4934, %v4938
      %v4940 = vlaneseq
      %v4941 = vshrl.u32 %v4940, 7
      %v4942 = vsub.s32 1, %v4941
      %v4943 = vrot.slane %v4934, %v4942
      %v4944 = vlaneseq
      %v4945 = vshrl.u32 %v4944, 7
      %v4946 = vsub.s32 2, %v4945
      %v4947 = vrot.slane %v4934, %v4946
      %v4948 = vlaneseq
      %v4949 = vshrl.u32 %v4948, 7
      %v4950 = vsub.s32 3, %v4949
      %v4951 = vrot.slane %v4934, %v4950
      %v4952 = vlaneseq
      %v4953 = vshrl.u32 %v4952, 7
      %v4954 = vsub.s32 4, %v4953
      %v4955 = vrot.slane %v4934, %v4954
      %v4956 = vlaneseq
      %v4957 = vshrl.u32 %v4956, 7
      %v4958 = vsub.s32 5, %v4957
      %v4959 = vrot.slane %v4934, %v4958
      %v4960 = vlaneseq
      %v4961 = vshrl.u32 %v4960, 7
      %v4962 = vsub.s32 6, %v4961
      %v4963 = vrot.slane %v4934, %v4962
      %v4964 = vlaneseq
      %v4965 = vshrl.u32 %v4964, 7
      %v4966 = vsub.s32 7, %v4965
      %v4967 = vrot.slane %v4934, %v4966
      %v5232 = vunpack.c.l.b16 %v4678
      %v5233 = vunpack.c.h.b16 %v4678
      %v5234 = vunpack.c.l.b16 %v4679
      %v5235 = vunpack.c.h.b16 %v4679
      %v5236 = vunpack.c.l.b16 %v4680
      %v5237 = vunpack.c.h.b16 %v4680
      %v5238 = vunpack.c.l.b16 %v4681
      %v5239 = vunpack.c.h.b16 %v4681
      %v5240 = vunpack.c.l.b16 %v4682
      %v5241 = vunpack.c.h.b16 %v4682
      %v5242 = vunpack.c.l.b16 %v4683
      %v5243 = vunpack.c.h.b16 %v4683
      %v5244 = vunpack.c.l.b16 %v4684
      %v5245 = vunpack.c.h.b16 %v4684
      %v5246 = vunpack.c.l.b16 %v4685
      %v5247 = vunpack.c.h.b16 %v4685
      %v5248 = vunpack.c.l.b16 %v4686
      %v5249 = vunpack.c.h.b16 %v4686
      %v5250 = vunpack.c.l.b16 %v4687
      %v5251 = vunpack.c.h.b16 %v4687
      %v5252 = vunpack.c.l.b16 %v4688
      %v5253 = vunpack.c.h.b16 %v4688
      %v5254 = vunpack.c.l.b16 %v4689
      %v5255 = vunpack.c.h.b16 %v4689
      %v5256 = vunpack.c.l.b16 %v4690
      %v5257 = vunpack.c.h.b16 %v4690
      %v5258 = vunpack.c.l.b16 %v4691
      %v5259 = vunpack.c.h.b16 %v4691
      %v5260 = vunpack.c.l.b16 %v4692
      %v5261 = vunpack.c.h.b16 %v4692
      %v5262 = vunpack.c.l.b16 %v4693
      %v5263 = vunpack.c.h.b16 %v4693
      %v5264 = vunpack.c.l.b16 %v4694
      %v5265 = vunpack.c.h.b16 %v4694
      %v5266 = vunpack.c.l.b16 %v4695
      %v5267 = vunpack.c.h.b16 %v4695
      %v5268 = vunpack.c.l.b16 %v4696
      %v5269 = vunpack.c.h.b16 %v4696
      %v5270 = vunpack.c.l.b16 %v4697
      %v5271 = vunpack.c.h.b16 %v4697
      %v5272 = vunpack.c.l.b16 %v4698
      %v5273 = vunpack.c.h.b16 %v4698
      %v5274 = vunpack.c.l.b16 %v4699
      %v5275 = vunpack.c.h.b16 %v4699
      %v5276 = vunpack.c.l.b16 %v4700
      %v5277 = vunpack.c.h.b16 %v4700
      %v5278 = vunpack.c.l.b16 %v4701
      %v5279 = vunpack.c.h.b16 %v4701
      %v5280 = vunpack.c.l.b16 %v4702
      %v5281 = vunpack.c.h.b16 %v4702
      %v5282 = vunpack.c.l.b16 %v4703
      %v5283 = vunpack.c.h.b16 %v4703
      %v5284 = vunpack.c.l.b16 %v4704
      %v5285 = vunpack.c.h.b16 %v4704
      %v5286 = vunpack.c.l.b16 %v4705
      %v5287 = vunpack.c.h.b16 %v4705
      %v5288 = vunpack.c.l.b16 %v4706
      %v5289 = vunpack.c.h.b16 %v4706
      %v5290 = vunpack.c.l.b16 %v4707
      %v5291 = vunpack.c.h.b16 %v4707
      %v5292 = vunpack.c.l.b16 %v4708
      %v5293 = vunpack.c.h.b16 %v4708
      %v5294 = vunpack.c.l.b16 %v4709
      %v5295 = vunpack.c.h.b16 %v4709
      %v5296 = vunpack.c.l.b16 %v4710
      %v5297 = vunpack.c.h.b16 %v4710
      %v5298 = vunpack.c.l.b16 %v4711
      %v5299 = vunpack.c.h.b16 %v4711
      %v5300 = vunpack.c.l.b16 %v4712
      %v5301 = vunpack.c.h.b16 %v4712
      %v5302 = vunpack.c.l.b16 %v4713
      %v5303 = vunpack.c.h.b16 %v4713
      %v5304 = vunpack.c.l.b16 %v4714
      %v5305 = vunpack.c.h.b16 %v4714
      %v5306 = vunpack.c.l.b16 %v4715
      %v5307 = vunpack.c.h.b16 %v4715
      %v5308 = vunpack.c.l.b16 %v4716
      %v5309 = vunpack.c.h.b16 %v4716
      %v5310 = vunpack.c.l.b16 %v4717
      %v5311 = vunpack.c.h.b16 %v4717
      %v5312 = vunpack.c.l.b16 %v4718
      %v5313 = vunpack.c.h.b16 %v4718
      %v5314 = vunpack.c.l.b16 %v4719
      %v5315 = vunpack.c.h.b16 %v4719
      %v5316 = vunpack.c.l.b16 %v4720
      %v5317 = vunpack.c.h.b16 %v4720
      %v5318 = vunpack.c.l.b16 %v4721
      %v5319 = vunpack.c.h.b16 %v4721
      %v5320 = vunpack.c.l.b16 %v4722
      %v5321 = vunpack.c.h.b16 %v4722
      %v5322 = vunpack.c.l.b16 %v4723
      %v5323 = vunpack.c.h.b16 %v4723
      %v5324 = vunpack.c.l.b16 %v4724
      %v5325 = vunpack.c.h.b16 %v4724
      %v5326 = vunpack.c.l.b16 %v4725
      %v5327 = vunpack.c.h.b16 %v4725
      %v5328 = vunpack.c.l.b16 %v4726
      %v5329 = vunpack.c.h.b16 %v4726
      %v5330 = vunpack.c.l.b16 %v4727
      %v5331 = vunpack.c.h.b16 %v4727
      %v5332 = vunpack.c.l.b16 %v4728
      %v5333 = vunpack.c.h.b16 %v4728
      %v5334 = vunpack.c.l.b16 %v4729
      %v5335 = vunpack.c.h.b16 %v4729
      %v5336 = vunpack.c.l.b16 %v4730
      %v5337 = vunpack.c.h.b16 %v4730
      %v5338 = vunpack.c.l.b16 %v4731
      %v5339 = vunpack.c.h.b16 %v4731
      %v5340 = vunpack.c.l.b16 %v4732
      %v5341 = vunpack.c.h.b16 %v4732
      %v5342 = vunpack.c.l.b16 %v4733
      %v5343 = vunpack.c.h.b16 %v4733
      %v5344 = vunpack.c.l.b16 %v4734
      %v5345 = vunpack.c.h.b16 %v4734
      %v5346 = vunpack.c.l.b16 %v4735
      %v5347 = vunpack.c.h.b16 %v4735
      %v5348 = vunpack.c.l.b16 %v4736
      %v5349 = vunpack.c.h.b16 %v4736
      %v5350 = vunpack.c.l.b16 %v4737
      %v5351 = vunpack.c.h.b16 %v4737
      %v5352 = vunpack.c.l.b16 %v4738
      %v5353 = vunpack.c.h.b16 %v4738
      %v5354 = vunpack.c.l.b16 %v4739
      %v5355 = vunpack.c.h.b16 %v4739
      %v5356 = vunpack.c.l.b16 %v4740
      %v5357 = vunpack.c.h.b16 %v4740
      %v5358 = vunpack.c.l.b16 %v4741
      %v5359 = vunpack.c.h.b16 %v4741
      %v5360 = vunpack.c.l.b16 %v4742
      %v5361 = vunpack.c.h.b16 %v4742
      %v5362 = vunpack.c.l.b16 %v4743
      %v5363 = vunpack.c.h.b16 %v4743
      %v5364 = vunpack.c.l.b16 %v4744
      %v5365 = vunpack.c.h.b16 %v4744
      %v5366 = vunpack.c.l.b16 %v4745
      %v5367 = vunpack.c.h.b16 %v4745
      %v5368 = vunpack.c.l.b16 %v4746
      %v5369 = vunpack.c.h.b16 %v4746
      %v5370 = vunpack.c.l.b16 %v4747
      %v5371 = vunpack.c.h.b16 %v4747
      %v5372 = vunpack.c.l.b16 %v4748
      %v5373 = vunpack.c.h.b16 %v4748
      %v5374 = vunpack.c.l.b16 %v4749
      %v5375 = vunpack.c.h.b16 %v4749
      %v5376 = vunpack.c.l.b16 %v4750
      %v5377 = vunpack.c.h.b16 %v4750
      %v5378 = vunpack.c.l.b16 %v4751
      %v5379 = vunpack.c.h.b16 %v4751
      %v5380 = vunpack.c.l.b16 %v4752
      %v5381 = vunpack.c.h.b16 %v4752
      %v5382 = vunpack.c.l.b16 %v4753
      %v5383 = vunpack.c.h.b16 %v4753
      %v5384 = vunpack.c.l.b16 %v4754
      %v5385 = vunpack.c.h.b16 %v4754
      %v5386 = vunpack.c.l.b16 %v4755
      %v5387 = vunpack.c.h.b16 %v4755
      %v5388 = vunpack.c.l.b16 %v4756
      %v5389 = vunpack.c.h.b16 %v4756
      %v5390 = vunpack.c.l.b16 %v4757
      %v5391 = vunpack.c.h.b16 %v4757
      %v5392 = vunpack.c.l.b16 %v4758
      %v5393 = vunpack.c.h.b16 %v4758
      %v5394 = vunpack.c.l.b16 %v4759
      %v5395 = vunpack.c.h.b16 %v4759
      %v5396 = vunpack.c.l.b16 %v4760
      %v5397 = vunpack.c.h.b16 %v4760
      %v5398 = vunpack.c.l.b16 %v4761
      %v5399 = vunpack.c.h.b16 %v4761
      %v5400 = vunpack.c.l.b16 %v4762
      %v5401 = vunpack.c.h.b16 %v4762
      %v5402 = vunpack.c.l.b16 %v4763
      %v5403 = vunpack.c.h.b16 %v4763
      %v5404 = vunpack.c.l.b16 %v4764
      %v5405 = vunpack.c.h.b16 %v4764
      %v5406 = vunpack.c.l.b16 %v4765
      %v5407 = vunpack.c.h.b16 %v4765
      %v5408 = vunpack.c.l.b16 %v4766
      %v5409 = vunpack.c.h.b16 %v4766
      %v5410 = vunpack.c.l.b16 %v4767
      %v5411 = vunpack.c.h.b16 %v4767
      %v5412 = vunpack.c.l.b16 %v4768
      %v5413 = vunpack.c.h.b16 %v4768
      %v5414 = vunpack.c.l.b16 %v4769
      %v5415 = vunpack.c.h.b16 %v4769
      %v5416 = vunpack.c.l.b16 %v4770
      %v5417 = vunpack.c.h.b16 %v4770
      %v5418 = vunpack.c.l.b16 %v4771
      %v5419 = vunpack.c.h.b16 %v4771
      %v5420 = vunpack.c.l.b16 %v4772
      %v5421 = vunpack.c.h.b16 %v4772
      %v5422 = vunpack.c.l.b16 %v4773
      %v5423 = vunpack.c.h.b16 %v4773
      %v5424 = vunpack.c.l.b16 %v4774
      %v5425 = vunpack.c.h.b16 %v4774
      %v5426 = vunpack.c.l.b16 %v4775
      %v5427 = vunpack.c.h.b16 %v4775
      %v5428 = vunpack.c.l.b16 %v4776
      %v5429 = vunpack.c.h.b16 %v4776
      %v5430 = vunpack.c.l.b16 %v4777
      %v5431 = vunpack.c.h.b16 %v4777
      %v5432 = vunpack.c.l.b16 %v4778
      %v5433 = vunpack.c.h.b16 %v4778
      %v5434 = vunpack.c.l.b16 %v4779
      %v5435 = vunpack.c.h.b16 %v4779
      %v5436 = vunpack.c.l.b16 %v4780
      %v5437 = vunpack.c.h.b16 %v4780
      %v5438 = vunpack.c.l.b16 %v4781
      %v5439 = vunpack.c.h.b16 %v4781
      %v5440 = vunpack.c.l.b16 %v4782
      %v5441 = vunpack.c.h.b16 %v4782
      %v5442 = vunpack.c.l.b16 %v4783
      %v5443 = vunpack.c.h.b16 %v4783
      %v5444 = vunpack.c.l.b16 %v4784
      %v5445 = vunpack.c.h.b16 %v4784
      %v5446 = vunpack.c.l.b16 %v4785
      %v5447 = vunpack.c.h.b16 %v4785
      %v5448 = vunpack.c.l.b16 %v4786
      %v5449 = vunpack.c.h.b16 %v4786
      %v5450 = vunpack.c.l.b16 %v4787
      %v5451 = vunpack.c.h.b16 %v4787
      %v5452 = vunpack.c.l.b16 %v4788
      %v5453 = vunpack.c.h.b16 %v4788
      %v5454 = vunpack.c.l.b16 %v4789
      %v5455 = vunpack.c.h.b16 %v4789
      %v5456 = vunpack.c.l.b16 %v4790
      %v5457 = vunpack.c.h.b16 %v4790
      %v5458 = vunpack.c.l.b16 %v4791
      %v5459 = vunpack.c.h.b16 %v4791
      %v5460 = vunpack.c.l.b16 %v4792
      %v5461 = vunpack.c.h.b16 %v4792
      %v5462 = vunpack.c.l.b16 %v4793
      %v5463 = vunpack.c.h.b16 %v4793
      %v5464 = vunpack.c.l.b16 %v4794
      %v5465 = vunpack.c.h.b16 %v4794
      %v5466 = vunpack.c.l.b16 %v4795
      %v5467 = vunpack.c.h.b16 %v4795
      %v5468 = vunpack.c.l.b16 %v4796
      %v5469 = vunpack.c.h.b16 %v4796
      %v5470 = vunpack.c.l.b16 %v4797
      %v5471 = vunpack.c.h.b16 %v4797
      %v5472 = vunpack.c.l.b16 %v4798
      %v5473 = vunpack.c.h.b16 %v4798
      %v5474 = vunpack.c.l.b16 %v4799
      %v5475 = vunpack.c.h.b16 %v4799
      %v5476 = vunpack.c.l.b16 %v4800
      %v5477 = vunpack.c.h.b16 %v4800
      %v5478 = vunpack.c.l.b16 %v4801
      %v5479 = vunpack.c.h.b16 %v4801
      %v5480 = vunpack.c.l.b16 %v4802
      %v5481 = vunpack.c.h.b16 %v4802
      %v5482 = vunpack.c.l.b16 %v4803
      %v5483 = vunpack.c.h.b16 %v4803
      %v5484 = vunpack.c.l.b16 %v4804
      %v5485 = vunpack.c.h.b16 %v4804
      %v5486 = vunpack.c.l.b16 %v4805
      %v5487 = vunpack.c.h.b16 %v4805
      %v5488 = vunpack.c.l.b16 %v4806
      %v5489 = vunpack.c.h.b16 %v4806
      %v5490 = vunpack.c.l.b16 %v4807
      %v5491 = vunpack.c.h.b16 %v4807
      %v5492 = vunpack.c.l.b16 %v4808
      %v5493 = vunpack.c.h.b16 %v4808
      %v5494 = vunpack.c.l.b16 %v4809
      %v5495 = vunpack.c.h.b16 %v4809
      %v5496 = vunpack.c.l.b16 %v4810
      %v5497 = vunpack.c.h.b16 %v4810
      %v5498 = vunpack.c.l.b16 %v4811
      %v5499 = vunpack.c.h.b16 %v4811
      %v5500 = vunpack.c.l.b16 %v4812
      %v5501 = vunpack.c.h.b16 %v4812
      %v5502 = vunpack.c.l.b16 %v4813
      %v5503 = vunpack.c.h.b16 %v4813
      %v5504 = vunpack.c.l.b16 %v4814
      %v5505 = vunpack.c.h.b16 %v4814
      %v5506 = vunpack.c.l.b16 %v4815
      %v5507 = vunpack.c.h.b16 %v4815
      %v5508 = vunpack.c.l.b16 %v4816
      %v5509 = vunpack.c.h.b16 %v4816
      %v5510 = vunpack.c.l.b16 %v4817
      %v5511 = vunpack.c.h.b16 %v4817
      %v5512 = vunpack.c.l.b16 %v4818
      %v5513 = vunpack.c.h.b16 %v4818
      %v5514 = vunpack.c.l.b16 %v4819
      %v5515 = vunpack.c.h.b16 %v4819
      %v5516 = vunpack.c.l.b16 %v4820
      %v5517 = vunpack.c.h.b16 %v4820
      %v5518 = vunpack.c.l.b16 %v4821
      %v5519 = vunpack.c.h.b16 %v4821
      %v5520 = vunpack.c.l.b16 %v4822
      %v5521 = vunpack.c.h.b16 %v4822
      %v5522 = vunpack.c.l.b16 %v4823
      %v5523 = vunpack.c.h.b16 %v4823
      %v5524 = vunpack.c.l.b16 %v4824
      %v5525 = vunpack.c.h.b16 %v4824
      %v5526 = vunpack.c.l.b16 %v4825
      %v5527 = vunpack.c.h.b16 %v4825
      %v5528 = vunpack.c.l.b16 %v4826
      %v5529 = vunpack.c.h.b16 %v4826
      %v5530 = vunpack.c.l.b16 %v4827
      %v5531 = vunpack.c.h.b16 %v4827
      %v5532 = vunpack.c.l.b16 %v4828
      %v5533 = vunpack.c.h.b16 %v4828
      %v5534 = vunpack.c.l.b16 %v4829
      %v5535 = vunpack.c.h.b16 %v4829
      %v5536 = vunpack.c.l.b16 %v4830
      %v5537 = vunpack.c.h.b16 %v4830
      %v5538 = vunpack.c.l.b16 %v4831
      %v5539 = vunpack.c.h.b16 %v4831
      %v5540 = vunpack.c.l.b16 %v4832
      %v5541 = vunpack.c.h.b16 %v4832
      %v5542 = vunpack.c.l.b16 %v4833
      %v5543 = vunpack.c.h.b16 %v4833
      %v5544 = vunpack.c.l.b16 %v4834
      %v5545 = vunpack.c.h.b16 %v4834
      %v5546 = vunpack.c.l.b16 %v4835
      %v5547 = vunpack.c.h.b16 %v4835
      %v5548 = vunpack.c.l.b16 %v4836
      %v5549 = vunpack.c.h.b16 %v4836
      %v5550 = vunpack.c.l.b16 %v4837
      %v5551 = vunpack.c.h.b16 %v4837
      %v5552 = vunpack.c.l.b16 %v4838
      %v5553 = vunpack.c.h.b16 %v4838
      %v5554 = vunpack.c.l.b16 %v4839
      %v5555 = vunpack.c.h.b16 %v4839
      %v5556 = vunpack.c.l.b16 %v4840
      %v5557 = vunpack.c.h.b16 %v4840
      %v5558 = vunpack.c.l.b16 %v4841
      %v5559 = vunpack.c.h.b16 %v4841
      %v5560 = vunpack.c.l.b16 %v4842
      %v5561 = vunpack.c.h.b16 %v4842
      %v5562 = vunpack.c.l.b16 %v4843
      %v5563 = vunpack.c.h.b16 %v4843
      %v5564 = vunpack.c.l.b16 %v4844
      %v5565 = vunpack.c.h.b16 %v4844
      %v5566 = vunpack.c.l.b16 %v4845
      %v5567 = vunpack.c.h.b16 %v4845
      %v5568 = vunpack.c.l.b16 %v4846
      %v5569 = vunpack.c.h.b16 %v4846
      %v5570 = vunpack.c.l.b16 %v4847
      %v5571 = vunpack.c.h.b16 %v4847
      %v5572 = vunpack.c.l.b16 %v4848
      %v5573 = vunpack.c.h.b16 %v4848
      %v5574 = vunpack.c.l.b16 %v4849
      %v5575 = vunpack.c.h.b16 %v4849
      %v5576 = vunpack.c.l.b16 %v4850
      %v5577 = vunpack.c.h.b16 %v4850
      %v5578 = vunpack.c.l.b16 %v4851
      %v5579 = vunpack.c.h.b16 %v4851
      %v5580 = vunpack.c.l.b16 %v4852
      %v5581 = vunpack.c.h.b16 %v4852
      %v5582 = vunpack.c.l.b16 %v4853
      %v5583 = vunpack.c.h.b16 %v4853
      %v5584 = vunpack.c.l.b16 %v4854
      %v5585 = vunpack.c.h.b16 %v4854
      %v5586 = vunpack.c.l.b16 %v4855
      %v5587 = vunpack.c.h.b16 %v4855
      %v5588 = vunpack.c.l.b16 %v4856
      %v5589 = vunpack.c.h.b16 %v4856
      %v5590 = vunpack.c.l.b16 %v4857
      %v5591 = vunpack.c.h.b16 %v4857
      %v5592 = vunpack.c.l.b16 %v4858
      %v5593 = vunpack.c.h.b16 %v4858
      %v5594 = vunpack.c.l.b16 %v4859
      %v5595 = vunpack.c.h.b16 %v4859
      %v5596 = vunpack.c.l.b16 %v4860
      %v5597 = vunpack.c.h.b16 %v4860
      %v5598 = vunpack.c.l.b16 %v4861
      %v5599 = vunpack.c.h.b16 %v4861
      %v5600 = vunpack.c.l.b16 %v4862
      %v5601 = vunpack.c.h.b16 %v4862
      %v5602 = vunpack.c.l.b16 %v4863
      %v5603 = vunpack.c.h.b16 %v4863
      %v5604 = vunpack.c.l.b16 %v4864
      %v5605 = vunpack.c.h.b16 %v4864
      %v5606 = vunpack.c.l.b16 %v4865
      %v5607 = vunpack.c.h.b16 %v4865
      %v5608 = vunpack.c.l.b16 %v4866
      %v5609 = vunpack.c.h.b16 %v4866
      %v5610 = vunpack.c.l.b16 %v4867
      %v5611 = vunpack.c.h.b16 %v4867
      %v5612 = vunpack.c.l.b16 %v4868
      %v5613 = vunpack.c.h.b16 %v4868
      %v5614 = vunpack.c.l.b16 %v4869
      %v5615 = vunpack.c.h.b16 %v4869
      %v5616 = vunpack.c.l.b16 %v4870
      %v5617 = vunpack.c.h.b16 %v4870
      %v5618 = vunpack.c.l.b16 %v4871
      %v5619 = vunpack.c.h.b16 %v4871
      %v5620 = vunpack.c.l.b16 %v4872
      %v5621 = vunpack.c.h.b16 %v4872
      %v5622 = vunpack.c.l.b16 %v4873
      %v5623 = vunpack.c.h.b16 %v4873
      %v5624 = vunpack.c.l.b16 %v4874
      %v5625 = vunpack.c.h.b16 %v4874
      %v5626 = vunpack.c.l.b16 %v4875
      %v5627 = vunpack.c.h.b16 %v4875
      %v5628 = vunpack.c.l.b16 %v4876
      %v5629 = vunpack.c.h.b16 %v4876
      %v5630 = vunpack.c.l.b16 %v4877
      %v5631 = vunpack.c.h.b16 %v4877
      %v5632 = vunpack.c.l.b16 %v4878
      %v5633 = vunpack.c.h.b16 %v4878
      %v5634 = vunpack.c.l.b16 %v4879
      %v5635 = vunpack.c.h.b16 %v4879
      %v5636 = vunpack.c.l.b16 %v4880
      %v5637 = vunpack.c.h.b16 %v4880
      %v5638 = vunpack.c.l.b16 %v4881
      %v5639 = vunpack.c.h.b16 %v4881
      %v5640 = vunpack.c.l.b16 %v4882
      %v5641 = vunpack.c.h.b16 %v4882
      %v5642 = vunpack.c.l.b16 %v4883
      %v5643 = vunpack.c.h.b16 %v4883
      %v5644 = vunpack.c.l.b16 %v4884
      %v5645 = vunpack.c.h.b16 %v4884
      %v5646 = vunpack.c.l.b16 %v4885
      %v5647 = vunpack.c.h.b16 %v4885
      %v5648 = vunpack.c.l.b16 %v4886
      %v5649 = vunpack.c.h.b16 %v4886
      %v5650 = vunpack.c.l.b16 %v4887
      %v5651 = vunpack.c.h.b16 %v4887
      %v5652 = vunpack.c.l.b16 %v4888
      %v5653 = vunpack.c.h.b16 %v4888
      %v5654 = vunpack.c.l.b16 %v4889
      %v5655 = vunpack.c.h.b16 %v4889
      %v5656 = vunpack.c.l.b16 %v4890
      %v5657 = vunpack.c.h.b16 %v4890
      %v5658 = vunpack.c.l.b16 %v4891
      %v5659 = vunpack.c.h.b16 %v4891
      %v5660 = vunpack.c.l.b16 %v4892
      %v5661 = vunpack.c.h.b16 %v4892
      %v5662 = vunpack.c.l.b16 %v4893
      %v5663 = vunpack.c.h.b16 %v4893
      %v5664 = vunpack.c.l.b16 %v4894
      %v5665 = vunpack.c.h.b16 %v4894
      %v5666 = vunpack.c.l.b16 %v4895
      %v5667 = vunpack.c.h.b16 %v4895
      %v5668 = vunpack.c.l.b16 %v4896
      %v5669 = vunpack.c.h.b16 %v4896
      %v5670 = vunpack.c.l.b16 %v4897
      %v5671 = vunpack.c.h.b16 %v4897
      %v5672 = vunpack.c.l.b16 %v4898
      %v5673 = vunpack.c.h.b16 %v4898
      %v5674 = vunpack.c.l.b16 %v4899
      %v5675 = vunpack.c.h.b16 %v4899
      %v5676 = vunpack.c.l.b16 %v4900
      %v5677 = vunpack.c.h.b16 %v4900
      %v5678 = vunpack.c.l.b16 %v4901
      %v5679 = vunpack.c.h.b16 %v4901
      %v5680 = vunpack.c.l.b16 %v4902
      %v5681 = vunpack.c.h.b16 %v4902
      %v5682 = vunpack.c.l.b16 %v4903
      %v5683 = vunpack.c.h.b16 %v4903
      %v5684 = vunpack.c.l.b16 %v4904
      %v5685 = vunpack.c.h.b16 %v4904
      %v5686 = vunpack.c.l.b16 %v4905
      %v5687 = vunpack.c.h.b16 %v4905
      %v5688 = vunpack.c.l.b16 %v4906
      %v5689 = vunpack.c.h.b16 %v4906
      %v5690 = vunpack.c.l.b16 %v4907
      %v5691 = vunpack.c.h.b16 %v4907
      %v5692 = vunpack.c.l.b16 %v4908
      %v5693 = vunpack.c.h.b16 %v4908
      %v5694 = vunpack.c.l.b16 %v4909
      %v5695 = vunpack.c.h.b16 %v4909
      %v5696 = vunpack.c.l.b16 %v4910
      %v5697 = vunpack.c.h.b16 %v4910
      %v5698 = vunpack.c.l.b16 %v4911
      %v5699 = vunpack.c.h.b16 %v4911
      %v5700 = vunpack.c.l.b16 %v4912
      %v5701 = vunpack.c.h.b16 %v4912
      %v5702 = vunpack.c.l.b16 %v4913
      %v5703 = vunpack.c.h.b16 %v4913
      %v5704 = vunpack.c.l.b16 %v4914
      %v5705 = vunpack.c.h.b16 %v4914
      %v5706 = vunpack.c.l.b16 %v4915
      %v5707 = vunpack.c.h.b16 %v4915
      %v5708 = vunpack.c.l.b16 %v4916
      %v5709 = vunpack.c.h.b16 %v4916
      %v5710 = vunpack.c.l.b16 %v4917
      %v5711 = vunpack.c.h.b16 %v4917
      %v5712 = vunpack.c.l.b16 %v4918
      %v5713 = vunpack.c.h.b16 %v4918
      %v5714 = vunpack.c.l.b16 %v4919
      %v5715 = vunpack.c.h.b16 %v4919
      %v5716 = vunpack.c.l.b16 %v4920
      %v5717 = vunpack.c.h.b16 %v4920
      %v5718 = vunpack.c.l.b16 %v4921
      %v5719 = vunpack.c.h.b16 %v4921
      %v5720 = vunpack.c.l.b16 %v4922
      %v5721 = vunpack.c.h.b16 %v4922
      %v5722 = vunpack.c.l.b16 %v4923
      %v5723 = vunpack.c.h.b16 %v4923
      %v5724 = vunpack.c.l.b16 %v4924
      %v5725 = vunpack.c.h.b16 %v4924
      %v5726 = vunpack.c.l.b16 %v4925
      %v5727 = vunpack.c.h.b16 %v4925
      %v5728 = vunpack.c.l.b16 %v4926
      %v5729 = vunpack.c.h.b16 %v4926
      %v5730 = vunpack.c.l.b16 %v4927
      %v5731 = vunpack.c.h.b16 %v4927
      %v5732 = vunpack.c.l.b16 %v4928
      %v5733 = vunpack.c.h.b16 %v4928
      %v5734 = vunpack.c.l.b16 %v4929
      %v5735 = vunpack.c.h.b16 %v4929
      %v5736 = vunpack.c.l.b16 %v4930
      %v5737 = vunpack.c.h.b16 %v4930
      %v5738 = vunpack.c.l.b16 %v4931
      %v5739 = vunpack.c.h.b16 %v4931
      %v5740 = vunpack.c.l.b16 %v4932
      %v5741 = vunpack.c.h.b16 %v4932
      %v5742 = vunpack.c.l.b16 %v4933
      %v5743 = vunpack.c.h.b16 %v4933
      %v5744 = vpack.c.b16 %v5240, %v5232
      %v5745 = vpack.c.b16 %v5241, %v5233
      %v5746 = vpack.c.b16 %v5242, %v5234
      %v5747 = vpack.c.b16 %v5243, %v5235
      %v5748 = vpack.c.b16 %v5244, %v5236
      %v5749 = vpack.c.b16 %v5245, %v5237
      %v5750 = vpack.c.b16 %v5246, %v5238
      %v5751 = vpack.c.b16 %v5247, %v5239
      %v5752 = vpack.c.b16 %v5256, %v5248
      %v5753 = vpack.c.b16 %v5257, %v5249
      %v5754 = vpack.c.b16 %v5258, %v5250
      %v5755 = vpack.c.b16 %v5259, %v5251
      %v5756 = vpack.c.b16 %v5260, %v5252
      %v5757 = vpack.c.b16 %v5261, %v5253
      %v5758 = vpack.c.b16 %v5262, %v5254
      %v5759 = vpack.c.b16 %v5263, %v5255
      %v5760 = vpack.c.b16 %v5272, %v5264
      %v5761 = vpack.c.b16 %v5273, %v5265
      %v5762 = vpack.c.b16 %v5274, %v5266
      %v5763 = vpack.c.b16 %v5275, %v5267
      %v5764 = vpack.c.b16 %v5276, %v5268
      %v5765 = vpack.c.b16 %v5277, %v5269
      %v5766 = vpack.c.b16 %v5278, %v5270
      %v5767 = vpack.c.b16 %v5279, %v5271
      %v5768 = vpack.c.b16 %v5288, %v5280
      %v5769 = vpack.c.b16 %v5289, %v5281
      %v5770 = vpack.c.b16 %v5290, %v5282
      %v5771 = vpack.c.b16 %v5291, %v5283
      %v5772 = vpack.c.b16 %v5292, %v5284
      %v5773 = vpack.c.b16 %v5293, %v5285
      %v5774 = vpack.c.b16 %v5294, %v5286
      %v5775 = vpack.c.b16 %v5295, %v5287
      %v5776 = vpack.c.b16 %v5304, %v5296
      %v5777 = vpack.c.b16 %v5305, %v5297
      %v5778 = vpack.c.b16 %v5306, %v5298
      %v5779 = vpack.c.b16 %v5307, %v5299
      %v5780 = vpack.c.b16 %v5308, %v5300
      %v5781 = vpack.c.b16 %v5309, %v5301
      %v5782 = vpack.c.b16 %v5310, %v5302
      %v5783 = vpack.c.b16 %v5311, %v5303
      %v5784 = vpack.c.b16 %v5320, %v5312
      %v5785 = vpack.c.b16 %v5321, %v5313
      %v5786 = vpack.c.b16 %v5322, %v5314
      %v5787 = vpack.c.b16 %v5323, %v5315
      %v5788 = vpack.c.b16 %v5324, %v5316
      %v5789 = vpack.c.b16 %v5325, %v5317
      %v5790 = vpack.c.b16 %v5326, %v5318
      %v5791 = vpack.c.b16 %v5327, %v5319
      %v5792 = vpack.c.b16 %v5336, %v5328
      %v5793 = vpack.c.b16 %v5337, %v5329
      %v5794 = vpack.c.b16 %v5338, %v5330
      %v5795 = vpack.c.b16 %v5339, %v5331
      %v5796 = vpack.c.b16 %v5340, %v5332
      %v5797 = vpack.c.b16 %v5341, %v5333
      %v5798 = vpack.c.b16 %v5342, %v5334
      %v5799 = vpack.c.b16 %v5343, %v5335
      %v5800 = vpack.c.b16 %v5352, %v5344
      %v5801 = vpack.c.b16 %v5353, %v5345
      %v5802 = vpack.c.b16 %v5354, %v5346
      %v5803 = vpack.c.b16 %v5355, %v5347
      %v5804 = vpack.c.b16 %v5356, %v5348
      %v5805 = vpack.c.b16 %v5357, %v5349
      %v5806 = vpack.c.b16 %v5358, %v5350
      %v5807 = vpack.c.b16 %v5359, %v5351
      %v5808 = vpack.c.b16 %v5368, %v5360
      %v5809 = vpack.c.b16 %v5369, %v5361
      %v5810 = vpack.c.b16 %v5370, %v5362
      %v5811 = vpack.c.b16 %v5371, %v5363
      %v5812 = vpack.c.b16 %v5372, %v5364
      %v5813 = vpack.c.b16 %v5373, %v5365
      %v5814 = vpack.c.b16 %v5374, %v5366
      %v5815 = vpack.c.b16 %v5375, %v5367
      %v5816 = vpack.c.b16 %v5384, %v5376
      %v5817 = vpack.c.b16 %v5385, %v5377
      %v5818 = vpack.c.b16 %v5386, %v5378
      %v5819 = vpack.c.b16 %v5387, %v5379
      %v5820 = vpack.c.b16 %v5388, %v5380
      %v5821 = vpack.c.b16 %v5389, %v5381
      %v5822 = vpack.c.b16 %v5390, %v5382
      %v5823 = vpack.c.b16 %v5391, %v5383
      %v5824 = vpack.c.b16 %v5400, %v5392
      %v5825 = vpack.c.b16 %v5401, %v5393
      %v5826 = vpack.c.b16 %v5402, %v5394
      %v5827 = vpack.c.b16 %v5403, %v5395
      %v5828 = vpack.c.b16 %v5404, %v5396
      %v5829 = vpack.c.b16 %v5405, %v5397
      %v5830 = vpack.c.b16 %v5406, %v5398
      %v5831 = vpack.c.b16 %v5407, %v5399
      %v5832 = vpack.c.b16 %v5416, %v5408
      %v5833 = vpack.c.b16 %v5417, %v5409
      %v5834 = vpack.c.b16 %v5418, %v5410
      %v5835 = vpack.c.b16 %v5419, %v5411
      %v5836 = vpack.c.b16 %v5420, %v5412
      %v5837 = vpack.c.b16 %v5421, %v5413
      %v5838 = vpack.c.b16 %v5422, %v5414
      %v5839 = vpack.c.b16 %v5423, %v5415
      %v5840 = vpack.c.b16 %v5432, %v5424
      %v5841 = vpack.c.b16 %v5433, %v5425
      %v5842 = vpack.c.b16 %v5434, %v5426
      %v5843 = vpack.c.b16 %v5435, %v5427
      %v5844 = vpack.c.b16 %v5436, %v5428
      %v5845 = vpack.c.b16 %v5437, %v5429
      %v5846 = vpack.c.b16 %v5438, %v5430
      %v5847 = vpack.c.b16 %v5439, %v5431
      %v5848 = vpack.c.b16 %v5448, %v5440
      %v5849 = vpack.c.b16 %v5449, %v5441
      %v5850 = vpack.c.b16 %v5450, %v5442
      %v5851 = vpack.c.b16 %v5451, %v5443
      %v5852 = vpack.c.b16 %v5452, %v5444
      %v5853 = vpack.c.b16 %v5453, %v5445
      %v5854 = vpack.c.b16 %v5454, %v5446
      %v5855 = vpack.c.b16 %v5455, %v5447
      %v5856 = vpack.c.b16 %v5464, %v5456
      %v5857 = vpack.c.b16 %v5465, %v5457
      %v5858 = vpack.c.b16 %v5466, %v5458
      %v5859 = vpack.c.b16 %v5467, %v5459
      %v5860 = vpack.c.b16 %v5468, %v5460
      %v5861 = vpack.c.b16 %v5469, %v5461
      %v5862 = vpack.c.b16 %v5470, %v5462
      %v5863 = vpack.c.b16 %v5471, %v5463
      %v5864 = vpack.c.b16 %v5480, %v5472
      %v5865 = vpack.c.b16 %v5481, %v5473
      %v5866 = vpack.c.b16 %v5482, %v5474
      %v5867 = vpack.c.b16 %v5483, %v5475
      %v5868 = vpack.c.b16 %v5484, %v5476
      %v5869 = vpack.c.b16 %v5485, %v5477
      %v5870 = vpack.c.b16 %v5486, %v5478
      %v5871 = vpack.c.b16 %v5487, %v5479
      %v5872 = vpack.c.b16 %v5496, %v5488
      %v5873 = vpack.c.b16 %v5497, %v5489
      %v5874 = vpack.c.b16 %v5498, %v5490
      %v5875 = vpack.c.b16 %v5499, %v5491
      %v5876 = vpack.c.b16 %v5500, %v5492
      %v5877 = vpack.c.b16 %v5501, %v5493
      %v5878 = vpack.c.b16 %v5502, %v5494
      %v5879 = vpack.c.b16 %v5503, %v5495
      %v5880 = vpack.c.b16 %v5512, %v5504
      %v5881 = vpack.c.b16 %v5513, %v5505
      %v5882 = vpack.c.b16 %v5514, %v5506
      %v5883 = vpack.c.b16 %v5515, %v5507
      %v5884 = vpack.c.b16 %v5516, %v5508
      %v5885 = vpack.c.b16 %v5517, %v5509
      %v5886 = vpack.c.b16 %v5518, %v5510
      %v5887 = vpack.c.b16 %v5519, %v5511
      %v5888 = vpack.c.b16 %v5528, %v5520
      %v5889 = vpack.c.b16 %v5529, %v5521
      %v5890 = vpack.c.b16 %v5530, %v5522
      %v5891 = vpack.c.b16 %v5531, %v5523
      %v5892 = vpack.c.b16 %v5532, %v5524
      %v5893 = vpack.c.b16 %v5533, %v5525
      %v5894 = vpack.c.b16 %v5534, %v5526
      %v5895 = vpack.c.b16 %v5535, %v5527
      %v5896 = vpack.c.b16 %v5544, %v5536
      %v5897 = vpack.c.b16 %v5545, %v5537
      %v5898 = vpack.c.b16 %v5546, %v5538
      %v5899 = vpack.c.b16 %v5547, %v5539
      %v5900 = vpack.c.b16 %v5548, %v5540
      %v5901 = vpack.c.b16 %v5549, %v5541
      %v5902 = vpack.c.b16 %v5550, %v5542
      %v5903 = vpack.c.b16 %v5551, %v5543
      %v5904 = vpack.c.b16 %v5560, %v5552
      %v5905 = vpack.c.b16 %v5561, %v5553
      %v5906 = vpack.c.b16 %v5562, %v5554
      %v5907 = vpack.c.b16 %v5563, %v5555
      %v5908 = vpack.c.b16 %v5564, %v5556
      %v5909 = vpack.c.b16 %v5565, %v5557
      %v5910 = vpack.c.b16 %v5566, %v5558
      %v5911 = vpack.c.b16 %v5567, %v5559
      %v5912 = vpack.c.b16 %v5576, %v5568
      %v5913 = vpack.c.b16 %v5577, %v5569
      %v5914 = vpack.c.b16 %v5578, %v5570
      %v5915 = vpack.c.b16 %v5579, %v5571
      %v5916 = vpack.c.b16 %v5580, %v5572
      %v5917 = vpack.c.b16 %v5581, %v5573
      %v5918 = vpack.c.b16 %v5582, %v5574
      %v5919 = vpack.c.b16 %v5583, %v5575
      %v5920 = vpack.c.b16 %v5592, %v5584
      %v5921 = vpack.c.b16 %v5593, %v5585
      %v5922 = vpack.c.b16 %v5594, %v5586
      %v5923 = vpack.c.b16 %v5595, %v5587
      %v5924 = vpack.c.b16 %v5596, %v5588
      %v5925 = vpack.c.b16 %v5597, %v5589
      %v5926 = vpack.c.b16 %v5598, %v5590
      %v5927 = vpack.c.b16 %v5599, %v5591
      %v5928 = vpack.c.b16 %v5608, %v5600
      %v5929 = vpack.c.b16 %v5609, %v5601
      %v5930 = vpack.c.b16 %v5610, %v5602
      %v5931 = vpack.c.b16 %v5611, %v5603
      %v5932 = vpack.c.b16 %v5612, %v5604
      %v5933 = vpack.c.b16 %v5613, %v5605
      %v5934 = vpack.c.b16 %v5614, %v5606
      %v5935 = vpack.c.b16 %v5615, %v5607
      %v5936 = vpack.c.b16 %v5624, %v5616
      %v5937 = vpack.c.b16 %v5625, %v5617
      %v5938 = vpack.c.b16 %v5626, %v5618
      %v5939 = vpack.c.b16 %v5627, %v5619
      %v5940 = vpack.c.b16 %v5628, %v5620
      %v5941 = vpack.c.b16 %v5629, %v5621
      %v5942 = vpack.c.b16 %v5630, %v5622
      %v5943 = vpack.c.b16 %v5631, %v5623
      %v5944 = vpack.c.b16 %v5640, %v5632
      %v5945 = vpack.c.b16 %v5641, %v5633
      %v5946 = vpack.c.b16 %v5642, %v5634
      %v5947 = vpack.c.b16 %v5643, %v5635
      %v5948 = vpack.c.b16 %v5644, %v5636
      %v5949 = vpack.c.b16 %v5645, %v5637
      %v5950 = vpack.c.b16 %v5646, %v5638
      %v5951 = vpack.c.b16 %v5647, %v5639
      %v5952 = vpack.c.b16 %v5656, %v5648
      %v5953 = vpack.c.b16 %v5657, %v5649
      %v5954 = vpack.c.b16 %v5658, %v5650
      %v5955 = vpack.c.b16 %v5659, %v5651
      %v5956 = vpack.c.b16 %v5660, %v5652
      %v5957 = vpack.c.b16 %v5661, %v5653
      %v5958 = vpack.c.b16 %v5662, %v5654
      %v5959 = vpack.c.b16 %v5663, %v5655
      %v5960 = vpack.c.b16 %v5672, %v5664
      %v5961 = vpack.c.b16 %v5673, %v5665
      %v5962 = vpack.c.b16 %v5674, %v5666
      %v5963 = vpack.c.b16 %v5675, %v5667
      %v5964 = vpack.c.b16 %v5676, %v5668
      %v5965 = vpack.c.b16 %v5677, %v5669
      %v5966 = vpack.c.b16 %v5678, %v5670
      %v5967 = vpack.c.b16 %v5679, %v5671
      %v5968 = vpack.c.b16 %v5688, %v5680
      %v5969 = vpack.c.b16 %v5689, %v5681
      %v5970 = vpack.c.b16 %v5690, %v5682
      %v5971 = vpack.c.b16 %v5691, %v5683
      %v5972 = vpack.c.b16 %v5692, %v5684
      %v5973 = vpack.c.b16 %v5693, %v5685
      %v5974 = vpack.c.b16 %v5694, %v5686
      %v5975 = vpack.c.b16 %v5695, %v5687
      %v5976 = vpack.c.b16 %v5704, %v5696
      %v5977 = vpack.c.b16 %v5705, %v5697
      %v5978 = vpack.c.b16 %v5706, %v5698
      %v5979 = vpack.c.b16 %v5707, %v5699
      %v5980 = vpack.c.b16 %v5708, %v5700
      %v5981 = vpack.c.b16 %v5709, %v5701
      %v5982 = vpack.c.b16 %v5710, %v5702
      %v5983 = vpack.c.b16 %v5711, %v5703
      %v5984 = vpack.c.b16 %v5720, %v5712
      %v5985 = vpack.c.b16 %v5721, %v5713
      %v5986 = vpack.c.b16 %v5722, %v5714
      %v5987 = vpack.c.b16 %v5723, %v5715
      %v5988 = vpack.c.b16 %v5724, %v5716
      %v5989 = vpack.c.b16 %v5725, %v5717
      %v5990 = vpack.c.b16 %v5726, %v5718
      %v5991 = vpack.c.b16 %v5727, %v5719
      %v5992 = vpack.c.b16 %v5736, %v5728
      %v5993 = vpack.c.b16 %v5737, %v5729
      %v5994 = vpack.c.b16 %v5738, %v5730
      %v5995 = vpack.c.b16 %v5739, %v5731
      %v5996 = vpack.c.b16 %v5740, %v5732
      %v5997 = vpack.c.b16 %v5741, %v5733
      %v5998 = vpack.c.b16 %v5742, %v5734
      %v5999 = vpack.c.b16 %v5743, %v5735
      %6256 = vmatprep.subr.bf16.mxu0 %v5745
      %6257 = vmatpush1.bf16.msra.mxu0 %v5744
      %6258 = vmatprep.subr.bf16.mxu0 %v5753
      %6259 = vmatpush1.bf16.msra.mxu0 %v5752
      %6260 = vmatprep.subr.bf16.mxu0 %v5761
      %6261 = vmatpush1.bf16.msra.mxu0 %v5760
      %6262 = vmatprep.subr.bf16.mxu0 %v5769
      %6263 = vmatpush1.bf16.msra.mxu0 %v5768
      %6264 = vmatprep.subr.bf16.mxu0 %v5777
      %6265 = vmatpush1.bf16.msra.mxu0 %v5776
      %6266 = vmatprep.subr.bf16.mxu0 %v5785
      %6267 = vmatpush1.bf16.msra.mxu0 %v5784
      %6268 = vmatprep.subr.bf16.mxu0 %v5793
      %6269 = vmatpush1.bf16.msra.mxu0 %v5792
      %6270 = vmatprep.subr.bf16.mxu0 %v5801
      %6271 = vmatpush1.bf16.msra.mxu0 %v5800
      %6272 = vmatprep.subr.bf16.mxu0 %v5809
      %6273 = vmatpush1.bf16.msra.mxu0 %v5808
      %6274 = vmatprep.subr.bf16.mxu0 %v5817
      %6275 = vmatpush1.bf16.msra.mxu0 %v5816
      %6276 = vmatprep.subr.bf16.mxu0 %v5825
      %6277 = vmatpush1.bf16.msra.mxu0 %v5824
      %6278 = vmatprep.subr.bf16.mxu0 %v5833
      %6279 = vmatpush1.bf16.msra.mxu0 %v5832
      %6280 = vmatprep.subr.bf16.mxu0 %v5841
      %6281 = vmatpush1.bf16.msra.mxu0 %v5840
      %6282 = vmatprep.subr.bf16.mxu0 %v5849
      %6283 = vmatpush1.bf16.msra.mxu0 %v5848
      %6284 = vmatprep.subr.bf16.mxu0 %v5857
      %6285 = vmatpush1.bf16.msra.mxu0 %v5856
      %6286 = vmatprep.subr.bf16.mxu0 %v5865
      %6287 = vmatpush1.bf16.msra.mxu0 %v5864
      %6288 = vmatprep.mubr.bf16.mxu0 %v4675
      %6289 = vmatmul.mubr.bf16.gmra.mrb[0].mxu0 %v4674
      %v6290 = vpop.f32.mrb[0].mxu0
      %v6291 = vadd.f32 %v4939, %v6290
      %v6292 = vpop.f32.mrb[0].mxu0
      %v6293 = vadd.f32 %v4943, %v6292
      %v6294 = vpop.f32.mrb[0].mxu0
      %v6295 = vpop.f32.mrb[0].mxu0
      %6296 = vdwg.mxu0
      %6297 = vmatprep.subr.bf16.mxu0 %v5873
      %6298 = vmatpush1.bf16.msra.mxu0 %v5872
      %6299 = vmatprep.subr.bf16.mxu0 %v5881
      %6300 = vmatpush1.bf16.msra.mxu0 %v5880
      %6301 = vmatprep.subr.bf16.mxu0 %v5889
      %6302 = vmatpush1.bf16.msra.mxu0 %v5888
      %6303 = vmatprep.subr.bf16.mxu0 %v5897
      %6304 = vmatpush1.bf16.msra.mxu0 %v5896
      %6305 = vmatprep.subr.bf16.mxu0 %v5905
      %6306 = vmatpush1.bf16.msra.mxu0 %v5904
      %6307 = vmatprep.subr.bf16.mxu0 %v5913
      %6308 = vmatpush1.bf16.msra.mxu0 %v5912
      %6309 = vmatprep.subr.bf16.mxu0 %v5921
      %6310 = vmatpush1.bf16.msra.mxu0 %v5920
      %6311 = vmatprep.subr.bf16.mxu0 %v5929
      %6312 = vmatpush1.bf16.msra.mxu0 %v5928
      %6313 = vmatprep.subr.bf16.mxu0 %v5937
      %6314 = vmatpush1.bf16.msra.mxu0 %v5936
      %6315 = vmatprep.subr.bf16.mxu0 %v5945
      %6316 = vmatpush1.bf16.msra.mxu0 %v5944
      %6317 = vmatprep.subr.bf16.mxu0 %v5953
      %6318 = vmatpush1.bf16.msra.mxu0 %v5952
      %6319 = vmatprep.subr.bf16.mxu0 %v5961
      %6320 = vmatpush1.bf16.msra.mxu0 %v5960
      %6321 = vmatprep.subr.bf16.mxu0 %v5969
      %6322 = vmatpush1.bf16.msra.mxu0 %v5968
      %6323 = vmatprep.subr.bf16.mxu0 %v5977
      %6324 = vmatpush1.bf16.msra.mxu0 %v5976
      %6325 = vmatprep.subr.bf16.mxu0 %v5985
      %6326 = vmatpush1.bf16.msra.mxu0 %v5984
      %6327 = vmatprep.subr.bf16.mxu0 %v5993
      %6328 = vmatpush1.bf16.msra.mxu0 %v5992
      %6329 = vmatprep.mubr.bf16.mxu0 %v4677
      %6330 = vmatmul.mubr.bf16.gmra.mrb[0].mxu0 %v4676
      %v6331 = vpop.f32.mrb[0].mxu0
      %v6332 = vadd.f32 %v6291, %v6331
      %v6333 = vpop.f32.mrb[0].mxu0
      %v6334 = vadd.f32 %v6293, %v6333
      %v6335 = vpop.f32.mrb[0].mxu0
      %v6336 = vpop.f32.mrb[0].mxu0
      %6337 = vdwg.mxu0
      %6338 = vmatprep.subr.bf16.mxu0 %v5747
      %6339 = vmatpush1.bf16.msra.mxu0 %v5746
      %6340 = vmatprep.subr.bf16.mxu0 %v5755
      %6341 = vmatpush1.bf16.msra.mxu0 %v5754
      %6342 = vmatprep.subr.bf16.mxu0 %v5763
      %6343 = vmatpush1.bf16.msra.mxu0 %v5762
      %6344 = vmatprep.subr.bf16.mxu0 %v5771
      %6345 = vmatpush1.bf16.msra.mxu0 %v5770
      %6346 = vmatprep.subr.bf16.mxu0 %v5779
      %6347 = vmatpush1.bf16.msra.mxu0 %v5778
      %6348 = vmatprep.subr.bf16.mxu0 %v5787
      %6349 = vmatpush1.bf16.msra.mxu0 %v5786
      %6350 = vmatprep.subr.bf16.mxu0 %v5795
      %6351 = vmatpush1.bf16.msra.mxu0 %v5794
      %6352 = vmatprep.subr.bf16.mxu0 %v5803
      %6353 = vmatpush1.bf16.msra.mxu0 %v5802
      %6354 = vmatprep.subr.bf16.mxu0 %v5811
      %6355 = vmatpush1.bf16.msra.mxu0 %v5810
      %6356 = vmatprep.subr.bf16.mxu0 %v5819
      %6357 = vmatpush1.bf16.msra.mxu0 %v5818
      %6358 = vmatprep.subr.bf16.mxu0 %v5827
      %6359 = vmatpush1.bf16.msra.mxu0 %v5826
      %6360 = vmatprep.subr.bf16.mxu0 %v5835
      %6361 = vmatpush1.bf16.msra.mxu0 %v5834
      %6362 = vmatprep.subr.bf16.mxu0 %v5843
      %6363 = vmatpush1.bf16.msra.mxu0 %v5842
      %6364 = vmatprep.subr.bf16.mxu0 %v5851
      %6365 = vmatpush1.bf16.msra.mxu0 %v5850
      %6366 = vmatprep.subr.bf16.mxu0 %v5859
      %6367 = vmatpush1.bf16.msra.mxu0 %v5858
      %6368 = vmatprep.subr.bf16.mxu0 %v5867
      %6369 = vmatpush1.bf16.msra.mxu0 %v5866
      %6370 = vmatprep.mubr.bf16.mxu0 %v4675
      %6371 = vmatmul.mubr.bf16.gmra.mrb[0].mxu0 %v4674
      %v6372 = vpop.f32.mrb[0].mxu0
      %v6373 = vadd.f32 %v4947, %v6372
      %v6374 = vpop.f32.mrb[0].mxu0
      %v6375 = vadd.f32 %v4951, %v6374
      %v6376 = vpop.f32.mrb[0].mxu0
      %v6377 = vpop.f32.mrb[0].mxu0
      %6378 = vdwg.mxu0
      %6379 = vmatprep.subr.bf16.mxu0 %v5875
      %6380 = vmatpush1.bf16.msra.mxu0 %v5874
      %6381 = vmatprep.subr.bf16.mxu0 %v5883
      %6382 = vmatpush1.bf16.msra.mxu0 %v5882
      %6383 = vmatprep.subr.bf16.mxu0 %v5891
      %6384 = vmatpush1.bf16.msra.mxu0 %v5890
      %6385 = vmatprep.subr.bf16.mxu0 %v5899
      %6386 = vmatpush1.bf16.msra.mxu0 %v5898
      %6387 = vmatprep.subr.bf16.mxu0 %v5907
      %6388 = vmatpush1.bf16.msra.mxu0 %v5906
      %6389 = vmatprep.subr.bf16.mxu0 %v5915
      %6390 = vmatpush1.bf16.msra.mxu0 %v5914
      %6391 = vmatprep.subr.bf16.mxu0 %v5923
      %6392 = vmatpush1.bf16.msra.mxu0 %v5922
      %6393 = vmatprep.subr.bf16.mxu0 %v5931
      %6394 = vmatpush1.bf16.msra.mxu0 %v5930
      %6395 = vmatprep.subr.bf16.mxu0 %v5939
      %6396 = vmatpush1.bf16.msra.mxu0 %v5938
      %6397 = vmatprep.subr.bf16.mxu0 %v5947
      %6398 = vmatpush1.bf16.msra.mxu0 %v5946
      %6399 = vmatprep.subr.bf16.mxu0 %v5955
      %6400 = vmatpush1.bf16.msra.mxu0 %v5954
      %6401 = vmatprep.subr.bf16.mxu0 %v5963
      %6402 = vmatpush1.bf16.msra.mxu0 %v5962
      %6403 = vmatprep.subr.bf16.mxu0 %v5971
      %6404 = vmatpush1.bf16.msra.mxu0 %v5970
      %6405 = vmatprep.subr.bf16.mxu0 %v5979
      %6406 = vmatpush1.bf16.msra.mxu0 %v5978
      %6407 = vmatprep.subr.bf16.mxu0 %v5987
      %6408 = vmatpush1.bf16.msra.mxu0 %v5986
      %6409 = vmatprep.subr.bf16.mxu0 %v5995
      %6410 = vmatpush1.bf16.msra.mxu0 %v5994
      %6411 = vmatprep.mubr.bf16.mxu0 %v4677
      %6412 = vmatmul.mubr.bf16.gmra.mrb[0].mxu0 %v4676
      %v6413 = vpop.f32.mrb[0].mxu0
      %v6414 = vadd.f32 %v6373, %v6413
      %v6415 = vpop.f32.mrb[0].mxu0
      %v6416 = vadd.f32 %v6375, %v6415
      %v6417 = vpop.f32.mrb[0].mxu0
      %v6418 = vpop.f32.mrb[0].mxu0
      %6419 = vdwg.mxu0
      %6420 = vmatprep.subr.bf16.mxu0 %v5749
      %6421 = vmatpush1.bf16.msra.mxu0 %v5748
      %6422 = vmatprep.subr.bf16.mxu0 %v5757
      %6423 = vmatpush1.bf16.msra.mxu0 %v5756
      %6424 = vmatprep.subr.bf16.mxu0 %v5765
      %6425 = vmatpush1.bf16.msra.mxu0 %v5764
      %6426 = vmatprep.subr.bf16.mxu0 %v5773
      %6427 = vmatpush1.bf16.msra.mxu0 %v5772
      %6428 = vmatprep.subr.bf16.mxu0 %v5781
      %6429 = vmatpush1.bf16.msra.mxu0 %v5780
      %6430 = vmatprep.subr.bf16.mxu0 %v5789
      %6431 = vmatpush1.bf16.msra.mxu0 %v5788
      %6432 = vmatprep.subr.bf16.mxu0 %v5797
      %6433 = vmatpush1.bf16.msra.mxu0 %v5796
      %6434 = vmatprep.subr.bf16.mxu0 %v5805
      %6435 = vmatpush1.bf16.msra.mxu0 %v5804
      %6436 = vmatprep.subr.bf16.mxu0 %v5813
      %6437 = vmatpush1.bf16.msra.mxu0 %v5812
      %6438 = vmatprep.subr.bf16.mxu0 %v5821
      %6439 = vmatpush1.bf16.msra.mxu0 %v5820
      %6440 = vmatprep.subr.bf16.mxu0 %v5829
      %6441 = vmatpush1.bf16.msra.mxu0 %v5828
      %6442 = vmatprep.subr.bf16.mxu0 %v5837
      %6443 = vmatpush1.bf16.msra.mxu0 %v5836
      %6444 = vmatprep.subr.bf16.mxu0 %v5845
      %6445 = vmatpush1.bf16.msra.mxu0 %v5844
      %6446 = vmatprep.subr.bf16.mxu0 %v5853
      %6447 = vmatpush1.bf16.msra.mxu0 %v5852
      %6448 = vmatprep.subr.bf16.mxu0 %v5861
      %6449 = vmatpush1.bf16.msra.mxu0 %v5860
      %6450 = vmatprep.subr.bf16.mxu0 %v5869
      %6451 = vmatpush1.bf16.msra.mxu0 %v5868
      %6452 = vmatprep.mubr.bf16.mxu0 %v4675
      %6453 = vmatmul.mubr.bf16.gmra.mrb[0].mxu0 %v4674
      %v6454 = vpop.f32.mrb[0].mxu0
      %v6455 = vadd.f32 %v4955, %v6454
      %v6456 = vpop.f32.mrb[0].mxu0
      %v6457 = vadd.f32 %v4959, %v6456
      %v6458 = vpop.f32.mrb[0].mxu0
      %v6459 = vpop.f32.mrb[0].mxu0
      %6460 = vdwg.mxu0
      %6461 = vmatprep.subr.bf16.mxu0 %v5877
      %6462 = vmatpush1.bf16.msra.mxu0 %v5876
      %6463 = vmatprep.subr.bf16.mxu0 %v5885
      %6464 = vmatpush1.bf16.msra.mxu0 %v5884
      %6465 = vmatprep.subr.bf16.mxu0 %v5893
      %6466 = vmatpush1.bf16.msra.mxu0 %v5892
      %6467 = vmatprep.subr.bf16.mxu0 %v5901
      %6468 = vmatpush1.bf16.msra.mxu0 %v5900
      %6469 = vmatprep.subr.bf16.mxu0 %v5909
      %6470 = vmatpush1.bf16.msra.mxu0 %v5908
      %6471 = vmatprep.subr.bf16.mxu0 %v5917
      %6472 = vmatpush1.bf16.msra.mxu0 %v5916
      %6473 = vmatprep.subr.bf16.mxu0 %v5925
      %6474 = vmatpush1.bf16.msra.mxu0 %v5924
      %6475 = vmatprep.subr.bf16.mxu0 %v5933
      %6476 = vmatpush1.bf16.msra.mxu0 %v5932
      %6477 = vmatprep.subr.bf16.mxu0 %v5941
      %6478 = vmatpush1.bf16.msra.mxu0 %v5940
      %6479 = vmatprep.subr.bf16.mxu0 %v5949
      %6480 = vmatpush1.bf16.msra.mxu0 %v5948
      %6481 = vmatprep.subr.bf16.mxu0 %v5957
      %6482 = vmatpush1.bf16.msra.mxu0 %v5956
      %6483 = vmatprep.subr.bf16.mxu0 %v5965
      %6484 = vmatpush1.bf16.msra.mxu0 %v5964
      %6485 = vmatprep.subr.bf16.mxu0 %v5973
      %6486 = vmatpush1.bf16.msra.mxu0 %v5972
      %6487 = vmatprep.subr.bf16.mxu0 %v5981
      %6488 = vmatpush1.bf16.msra.mxu0 %v5980
      %6489 = vmatprep.subr.bf16.mxu0 %v5989
      %6490 = vmatpush1.bf16.msra.mxu0 %v5988
      %6491 = vmatprep.subr.bf16.mxu0 %v5997
      %6492 = vmatpush1.bf16.msra.mxu0 %v5996
      %6493 = vmatprep.mubr.bf16.mxu0 %v4677
      %6494 = vmatmul.mubr.bf16.gmra.mrb[0].mxu0 %v4676
      %v6495 = vpop.f32.mrb[0].mxu0
      %v6496 = vadd.f32 %v6455, %v6495
      %v6497 = vpop.f32.mrb[0].mxu0
      %v6498 = vadd.f32 %v6457, %v6497
      %v6499 = vpop.f32.mrb[0].mxu0
      %v6500 = vpop.f32.mrb[0].mxu0
      %6501 = vdwg.mxu0
      %6502 = vmatprep.subr.bf16.mxu0 %v5751
      %6503 = vmatpush1.bf16.msra.mxu0 %v5750
      %6504 = vmatprep.subr.bf16.mxu0 %v5759
      %6505 = vmatpush1.bf16.msra.mxu0 %v5758
      %6506 = vmatprep.subr.bf16.mxu0 %v5767
      %6507 = vmatpush1.bf16.msra.mxu0 %v5766
      %6508 = vmatprep.subr.bf16.mxu0 %v5775
      %6509 = vmatpush1.bf16.msra.mxu0 %v5774
      %6510 = vmatprep.subr.bf16.mxu0 %v5783
      %6511 = vmatpush1.bf16.msra.mxu0 %v5782
      %6512 = vmatprep.subr.bf16.mxu0 %v5791
      %6513 = vmatpush1.bf16.msra.mxu0 %v5790
      %6514 = vmatprep.subr.bf16.mxu0 %v5799
      %6515 = vmatpush1.bf16.msra.mxu0 %v5798
      %6516 = vmatprep.subr.bf16.mxu0 %v5807
      %6517 = vmatpush1.bf16.msra.mxu0 %v5806
      %6518 = vmatprep.subr.bf16.mxu0 %v5815
      %6519 = vmatpush1.bf16.msra.mxu0 %v5814
      %6520 = vmatprep.subr.bf16.mxu0 %v5823
      %6521 = vmatpush1.bf16.msra.mxu0 %v5822
      %6522 = vmatprep.subr.bf16.mxu0 %v5831
      %6523 = vmatpush1.bf16.msra.mxu0 %v5830
      %6524 = vmatprep.subr.bf16.mxu0 %v5839
      %6525 = vmatpush1.bf16.msra.mxu0 %v5838
      %6526 = vmatprep.subr.bf16.mxu0 %v5847
      %6527 = vmatpush1.bf16.msra.mxu0 %v5846
      %6528 = vmatprep.subr.bf16.mxu0 %v5855
      %6529 = vmatpush1.bf16.msra.mxu0 %v5854
      %6530 = vmatprep.subr.bf16.mxu0 %v5863
      %6531 = vmatpush1.bf16.msra.mxu0 %v5862
      %6532 = vmatprep.subr.bf16.mxu0 %v5871
      %6533 = vmatpush1.bf16.msra.mxu0 %v5870
      %6534 = vmatprep.mubr.bf16.mxu0 %v4675
      %6535 = vmatmul.mubr.bf16.gmra.mrb[0].mxu0 %v4674
      %v6536 = vpop.f32.mrb[0].mxu0
      %v6537 = vadd.f32 %v4963, %v6536
      %v6538 = vpop.f32.mrb[0].mxu0
      %v6539 = vadd.f32 %v4967, %v6538
      %v6540 = vpop.f32.mrb[0].mxu0
      %v6541 = vpop.f32.mrb[0].mxu0
      %6542 = vdwg.mxu0
      %6543 = vmatprep.subr.bf16.mxu0 %v5879
      %6544 = vmatpush1.bf16.msra.mxu0 %v5878
      %6545 = vmatprep.subr.bf16.mxu0 %v5887
      %6546 = vmatpush1.bf16.msra.mxu0 %v5886
      %6547 = vmatprep.subr.bf16.mxu0 %v5895
      %6548 = vmatpush1.bf16.msra.mxu0 %v5894
      %6549 = vmatprep.subr.bf16.mxu0 %v5903
      %6550 = vmatpush1.bf16.msra.mxu0 %v5902
      %6551 = vmatprep.subr.bf16.mxu0 %v5911
      %6552 = vmatpush1.bf16.msra.mxu0 %v5910
      %6553 = vmatprep.subr.bf16.mxu0 %v5919
      %6554 = vmatpush1.bf16.msra.mxu0 %v5918
      %6555 = vmatprep.subr.bf16.mxu0 %v5927
      %6556 = vmatpush1.bf16.msra.mxu0 %v5926
      %6557 = vmatprep.subr.bf16.mxu0 %v5935
      %6558 = vmatpush1.bf16.msra.mxu0 %v5934
      %6559 = vmatprep.subr.bf16.mxu0 %v5943
      %6560 = vmatpush1.bf16.msra.mxu0 %v5942
      %6561 = vmatprep.subr.bf16.mxu0 %v5951
      %6562 = vmatpush1.bf16.msra.mxu0 %v5950
      %6563 = vmatprep.subr.bf16.mxu0 %v5959
      %6564 = vmatpush1.bf16.msra.mxu0 %v5958
      %6565 = vmatprep.subr.bf16.mxu0 %v5967
      %6566 = vmatpush1.bf16.msra.mxu0 %v5966
      %6567 = vmatprep.subr.bf16.mxu0 %v5975
      %6568 = vmatpush1.bf16.msra.mxu0 %v5974
      %6569 = vmatprep.subr.bf16.mxu0 %v5983
      %6570 = vmatpush1.bf16.msra.mxu0 %v5982
      %6571 = vmatprep.subr.bf16.mxu0 %v5991
      %6572 = vmatpush1.bf16.msra.mxu0 %v5990
      %6573 = vmatprep.subr.bf16.mxu0 %v5999
      %6574 = vmatpush1.bf16.msra.mxu0 %v5998
      %6575 = vmatprep.mubr.bf16.mxu0 %v4677
      %6576 = vmatmul.mubr.bf16.gmra.mrb[0].mxu0 %v4676
      %v6577 = vpop.f32.mrb[0].mxu0
      %v6578 = vadd.f32 %v6537, %v6577
      %v6579 = vpop.f32.mrb[0].mxu0
      %v6580 = vadd.f32 %v6539, %v6579
      %v6581 = vpop.f32.mrb[0].mxu0
      %v6582 = vpop.f32.mrb[0].mxu0
      %6583 = vdwg.mxu0
      %v6584 = vmax.f32 %v6332, 0.0
      %v6585 = vmax.f32 %v6334, 0.0
      %v6586 = vmax.f32 %v6414, 0.0
      %v6587 = vmax.f32 %v6416, 0.0
      %v6588 = vmax.f32 %v6496, 0.0
      %v6589 = vmax.f32 %v6498, 0.0
      %v6590 = vmax.f32 %v6578, 0.0
      %v6591 = vmax.f32 %v6580, 0.0
      %v6596 = vrot.slane %v6588, 6
      %v6597 = vrot.slane %v6589, 6
      %v6598 = vrot.slane %v6590, 6
      %v6599 = vrot.slane %v6591, 6
      %vm6604 = vcmask 1041408
      %v6605 = vsel %vm6604, %v6584, %v6596
      %v6606 = vsel %vm6604, %v6585, %v6597
      %v6607 = vsel %vm6604, %v6586, %v6598
      %v6608 = vsel %vm6604, %v6587, %v6599
      %v6609 = vpack.c.bf16 %v6605, %v6605
      %v6610 = vpack.c.bf16 %v6606, %v6606
      %v6611 = vpack.c.bf16 %v6607, %v6607
      %v6612 = vpack.c.bf16 %v6608, %v6608
      %v6613 = vld [vmem:[%s9] sm:$0xff]
      %v6614 = vld [vmem:[%s9 + $0x8] sm:$0xff]
      %v6615 = vld [vmem:[%s9 + $0x10] sm:$0xff]
      %v6616 = vld [vmem:[%s9 + $0x18] sm:$0xff]
      %v6617 = vld [vmem:[%s9 + $0x20] sm:$0xff]
      %v6618 = vld [vmem:[%s9 + $0x28] sm:$0xff]
      %v6619 = vld [vmem:[%s9 + $0x30] sm:$0xff]
      %v6620 = vld [vmem:[%s9 + $0x38] sm:$0xff]
      %v6621 = vld [vmem:[%s9 + $0x40] sm:$0xff]
      %v6622 = vld [vmem:[%s9 + $0x48] sm:$0xff]
      %v6623 = vld [vmem:[%s9 + $0x50] sm:$0xff]
      %v6624 = vld [vmem:[%s9 + $0x58] sm:$0xff]
      %v6625 = vld [vmem:[%s9 + $0x60] sm:$0xff]
      %v6626 = vld [vmem:[%s9 + $0x68] sm:$0xff]
      %v6627 = vld [vmem:[%s9 + $0x70] sm:$0xff]
      %v6628 = vld [vmem:[%s9 + $0x78] sm:$0xff]
      %v6629 = vld [vmem:[%s9 + $0x80] sm:$0xff]
      %v6630 = vld [vmem:[%s9 + $0x88] sm:$0xff]
      %v6631 = vld [vmem:[%s9 + $0x90] sm:$0xff]
      %v6632 = vld [vmem:[%s9 + $0x98] sm:$0xff]
      %v6633 = vld [vmem:[%s9 + $0xa0] sm:$0xff]
      %v6634 = vld [vmem:[%s9 + $0xa8] sm:$0xff]
      %v6635 = vld [vmem:[%s9 + $0xb0] sm:$0xff]
      %v6636 = vld [vmem:[%s9 + $0xb8] sm:$0xff]
      %v6637 = vld [vmem:[%s9 + $0xc0] sm:$0xff]
      %v6638 = vld [vmem:[%s9 + $0xc8] sm:$0xff]
      %v6639 = vld [vmem:[%s9 + $0xd0] sm:$0xff]
      %v6640 = vld [vmem:[%s9 + $0xd8] sm:$0xff]
      %v6641 = vld [vmem:[%s9 + $0xe0] sm:$0xff]
      %v6642 = vld [vmem:[%s9 + $0xe8] sm:$0xff]
      %v6643 = vld [vmem:[%s9 + $0xf0] sm:$0xff]
      %v6644 = vld [vmem:[%s9 + $0xf8] sm:$0xff]
      %v6645 = vld [vmem:[%s9 + $0x100] sm:$0xff]
      %v6646 = vld [vmem:[%s9 + $0x108] sm:$0xff]
      %v6647 = vld [vmem:[%s9 + $0x110] sm:$0xff]
      %v6648 = vld [vmem:[%s9 + $0x118] sm:$0xff]
      %v6649 = vld [vmem:[%s9 + $0x120] sm:$0xff]
      %v6650 = vld [vmem:[%s9 + $0x128] sm:$0xff]
      %v6651 = vld [vmem:[%s9 + $0x130] sm:$0xff]
      %v6652 = vld [vmem:[%s9 + $0x138] sm:$0xff]
      %v6653 = vld [vmem:[%s9 + $0x140] sm:$0xff]
      %v6654 = vld [vmem:[%s9 + $0x148] sm:$0xff]
      %v6655 = vld [vmem:[%s9 + $0x150] sm:$0xff]
      %v6656 = vld [vmem:[%s9 + $0x158] sm:$0xff]
      %v6657 = vld [vmem:[%s9 + $0x160] sm:$0xff]
      %v6658 = vld [vmem:[%s9 + $0x168] sm:$0xff]
      %v6659 = vld [vmem:[%s9 + $0x170] sm:$0xff]
      %v6660 = vld [vmem:[%s9 + $0x178] sm:$0xff]
      %v6661 = vld [vmem:[%s9 + $0x180] sm:$0xff]
      %v6662 = vld [vmem:[%s9 + $0x188] sm:$0xff]
      %v6663 = vld [vmem:[%s9 + $0x190] sm:$0xff]
      %v6664 = vld [vmem:[%s9 + $0x198] sm:$0xff]
      %v6665 = vld [vmem:[%s9 + $0x1a0] sm:$0xff]
      %v6666 = vld [vmem:[%s9 + $0x1a8] sm:$0xff]
      %v6667 = vld [vmem:[%s9 + $0x1b0] sm:$0xff]
      %v6668 = vld [vmem:[%s9 + $0x1b8] sm:$0xff]
      %v6669 = vld [vmem:[%s9 + $0x1c0] sm:$0xff]
      %v6670 = vld [vmem:[%s9 + $0x1c8] sm:$0xff]
      %v6671 = vld [vmem:[%s9 + $0x1d0] sm:$0xff]
      %v6672 = vld [vmem:[%s9 + $0x1d8] sm:$0xff]
      %v6673 = vld [vmem:[%s9 + $0x1e0] sm:$0xff]
      %v6674 = vld [vmem:[%s9 + $0x1e8] sm:$0xff]
      %v6675 = vld [vmem:[%s9 + $0x1f0] sm:$0xff]
      %v6676 = vld [vmem:[%s9 + $0x1f8] sm:$0xff]
      %v6677 = vld [vmem:[%s9 + $0x200] sm:$0xff]
      %v6678 = vld [vmem:[%s9 + $0x208] sm:$0xff]
      %v6679 = vld [vmem:[%s9 + $0x210] sm:$0xff]
      %v6680 = vld [vmem:[%s9 + $0x218] sm:$0xff]
      %v6681 = vld [vmem:[%s9 + $0x220] sm:$0xff]
      %v6682 = vld [vmem:[%s9 + $0x228] sm:$0xff]
      %v6683 = vld [vmem:[%s9 + $0x230] sm:$0xff]
      %v6684 = vld [vmem:[%s9 + $0x238] sm:$0xff]
      %v6685 = vld [vmem:[%s9 + $0x240] sm:$0xff]
      %v6686 = vld [vmem:[%s9 + $0x248] sm:$0xff]
      %v6687 = vld [vmem:[%s9 + $0x250] sm:$0xff]
      %v6688 = vld [vmem:[%s9 + $0x258] sm:$0xff]
      %v6689 = vld [vmem:[%s9 + $0x260] sm:$0xff]
      %v6690 = vld [vmem:[%s9 + $0x268] sm:$0xff]
      %v6691 = vld [vmem:[%s9 + $0x270] sm:$0xff]
      %v6692 = vld [vmem:[%s9 + $0x278] sm:$0xff]
      %v6693 = vld [vmem:[%s9 + $0x280] sm:$0xff]
      %v6694 = vld [vmem:[%s9 + $0x288] sm:$0xff]
      %v6695 = vld [vmem:[%s9 + $0x290] sm:$0xff]
      %v6696 = vld [vmem:[%s9 + $0x298] sm:$0xff]
      %v6697 = vld [vmem:[%s9 + $0x2a0] sm:$0xff]
      %v6698 = vld [vmem:[%s9 + $0x2a8] sm:$0xff]
      %v6699 = vld [vmem:[%s9 + $0x2b0] sm:$0xff]
      %v6700 = vld [vmem:[%s9 + $0x2b8] sm:$0xff]
      %v6701 = vld [vmem:[%s9 + $0x2c0] sm:$0xff]
      %v6702 = vld [vmem:[%s9 + $0x2c8] sm:$0xff]
      %v6703 = vld [vmem:[%s9 + $0x2d0] sm:$0xff]
      %v6704 = vld [vmem:[%s9 + $0x2d8] sm:$0xff]
      %v6705 = vld [vmem:[%s9 + $0x2e0] sm:$0xff]
      %v6706 = vld [vmem:[%s9 + $0x2e8] sm:$0xff]
      %v6707 = vld [vmem:[%s9 + $0x2f0] sm:$0xff]
      %v6708 = vld [vmem:[%s9 + $0x2f8] sm:$0xff]
      %v6709 = vld [vmem:[%s9 + $0x300] sm:$0xff]
      %v6710 = vld [vmem:[%s9 + $0x308] sm:$0xff]
      %v6711 = vld [vmem:[%s9 + $0x310] sm:$0xff]
      %v6712 = vld [vmem:[%s9 + $0x318] sm:$0xff]
      %v6713 = vld [vmem:[%s9 + $0x320] sm:$0xff]
      %v6714 = vld [vmem:[%s9 + $0x328] sm:$0xff]
      %v6715 = vld [vmem:[%s9 + $0x330] sm:$0xff]
      %v6716 = vld [vmem:[%s9 + $0x338] sm:$0xff]
      %v6717 = vld [vmem:[%s9 + $0x340] sm:$0xff]
      %v6718 = vld [vmem:[%s9 + $0x348] sm:$0xff]
      %v6719 = vld [vmem:[%s9 + $0x350] sm:$0xff]
      %v6720 = vld [vmem:[%s9 + $0x358] sm:$0xff]
      %v6721 = vld [vmem:[%s9 + $0x360] sm:$0xff]
      %v6722 = vld [vmem:[%s9 + $0x368] sm:$0xff]
      %v6723 = vld [vmem:[%s9 + $0x370] sm:$0xff]
      %v6724 = vld [vmem:[%s9 + $0x378] sm:$0xff]
      %v6725 = vld [vmem:[%s9 + $0x380] sm:$0xff]
      %v6726 = vld [vmem:[%s9 + $0x388] sm:$0xff]
      %v6727 = vld [vmem:[%s9 + $0x390] sm:$0xff]
      %v6728 = vld [vmem:[%s9 + $0x398] sm:$0xff]
      %v6729 = vld [vmem:[%s9 + $0x3a0] sm:$0xff]
      %v6730 = vld [vmem:[%s9 + $0x3a8] sm:$0xff]
      %v6731 = vld [vmem:[%s9 + $0x3b0] sm:$0xff]
      %v6732 = vld [vmem:[%s9 + $0x3b8] sm:$0xff]
      %v6733 = vld [vmem:[%s9 + $0x3c0] sm:$0xff]
      %v6734 = vld [vmem:[%s9 + $0x3c8] sm:$0xff]
      %v6735 = vld [vmem:[%s9 + $0x3d0] sm:$0xff]
      %v6736 = vld [vmem:[%s9 + $0x3d8] sm:$0xff]
      %v6737 = vld [vmem:[%s9 + $0x3e0] sm:$0xff]
      %v6738 = vld [vmem:[%s9 + $0x3e8] sm:$0xff]
      %v6739 = vld [vmem:[%s9 + $0x3f0] sm:$0xff]
      %v6740 = vld [vmem:[%s9 + $0x3f8] sm:$0xff]
      %v6741 = vld [vmem:[%s9 + $0x400] sm:$0xff]
      %v6742 = vld [vmem:[%s9 + $0x408] sm:$0xff]
      %v6743 = vld [vmem:[%s9 + $0x410] sm:$0xff]
      %v6744 = vld [vmem:[%s9 + $0x418] sm:$0xff]
      %v6745 = vld [vmem:[%s9 + $0x420] sm:$0xff]
      %v6746 = vld [vmem:[%s9 + $0x428] sm:$0xff]
      %v6747 = vld [vmem:[%s9 + $0x430] sm:$0xff]
      %v6748 = vld [vmem:[%s9 + $0x438] sm:$0xff]
      %v6749 = vld [vmem:[%s9 + $0x440] sm:$0xff]
      %v6750 = vld [vmem:[%s9 + $0x448] sm:$0xff]
      %v6751 = vld [vmem:[%s9 + $0x450] sm:$0xff]
      %v6752 = vld [vmem:[%s9 + $0x458] sm:$0xff]
      %v6753 = vld [vmem:[%s9 + $0x460] sm:$0xff]
      %v6754 = vld [vmem:[%s9 + $0x468] sm:$0xff]
      %v6755 = vld [vmem:[%s9 + $0x470] sm:$0xff]
      %v6756 = vld [vmem:[%s9 + $0x478] sm:$0xff]
      %v6757 = vld [vmem:[%s9 + $0x480] sm:$0xff]
      %v6758 = vld [vmem:[%s9 + $0x488] sm:$0xff]
      %v6759 = vld [vmem:[%s9 + $0x490] sm:$0xff]
      %v6760 = vld [vmem:[%s9 + $0x498] sm:$0xff]
      %v6761 = vld [vmem:[%s9 + $0x4a0] sm:$0xff]
      %v6762 = vld [vmem:[%s9 + $0x4a8] sm:$0xff]
      %v6763 = vld [vmem:[%s9 + $0x4b0] sm:$0xff]
      %v6764 = vld [vmem:[%s9 + $0x4b8] sm:$0xff]
      %v6765 = vld [vmem:[%s9 + $0x4c0] sm:$0xff]
      %v6766 = vld [vmem:[%s9 + $0x4c8] sm:$0xff]
      %v6767 = vld [vmem:[%s9 + $0x4d0] sm:$0xff]
      %v6768 = vld [vmem:[%s9 + $0x4d8] sm:$0xff]
      %v6769 = vld [vmem:[%s9 + $0x4e0] sm:$0xff]
      %v6770 = vld [vmem:[%s9 + $0x4e8] sm:$0xff]
      %v6771 = vld [vmem:[%s9 + $0x4f0] sm:$0xff]
      %v6772 = vld [vmem:[%s9 + $0x4f8] sm:$0xff]
      %v6773 = vld [vmem:[%s9 + $0x500] sm:$0xff]
      %v6774 = vld [vmem:[%s9 + $0x508] sm:$0xff]
      %v6775 = vld [vmem:[%s9 + $0x510] sm:$0xff]
      %v6776 = vld [vmem:[%s9 + $0x518] sm:$0xff]
      %v6777 = vld [vmem:[%s9 + $0x520] sm:$0xff]
      %v6778 = vld [vmem:[%s9 + $0x528] sm:$0xff]
      %v6779 = vld [vmem:[%s9 + $0x530] sm:$0xff]
      %v6780 = vld [vmem:[%s9 + $0x538] sm:$0xff]
      %v6781 = vld [vmem:[%s9 + $0x540] sm:$0xff]
      %v6782 = vld [vmem:[%s9 + $0x548] sm:$0xff]
      %v6783 = vld [vmem:[%s9 + $0x550] sm:$0xff]
      %v6784 = vld [vmem:[%s9 + $0x558] sm:$0xff]
      %v6785 = vld [vmem:[%s9 + $0x560] sm:$0xff]
      %v6786 = vld [vmem:[%s9 + $0x568] sm:$0xff]
      %v6787 = vld [vmem:[%s9 + $0x570] sm:$0xff]
      %v6788 = vld [vmem:[%s9 + $0x578] sm:$0xff]
      %v6789 = vld [vmem:[%s9 + $0x580] sm:$0xff]
      %v6790 = vld [vmem:[%s9 + $0x588] sm:$0xff]
      %v6791 = vld [vmem:[%s9 + $0x590] sm:$0xff]
      %v6792 = vld [vmem:[%s9 + $0x598] sm:$0xff]
      %v6793 = vld [vmem:[%s9 + $0x5a0] sm:$0xff]
      %v6794 = vld [vmem:[%s9 + $0x5a8] sm:$0xff]
      %v6795 = vld [vmem:[%s9 + $0x5b0] sm:$0xff]
      %v6796 = vld [vmem:[%s9 + $0x5b8] sm:$0xff]
      %v6797 = vld [vmem:[%s9 + $0x5c0] sm:$0xff]
      %v6798 = vld [vmem:[%s9 + $0x5c8] sm:$0xff]
      %v6799 = vld [vmem:[%s9 + $0x5d0] sm:$0xff]
      %v6800 = vld [vmem:[%s9 + $0x5d8] sm:$0xff]
      %v6801 = vld [vmem:[%s9 + $0x5e0] sm:$0xff]
      %v6802 = vld [vmem:[%s9 + $0x5e8] sm:$0xff]
      %v6803 = vld [vmem:[%s9 + $0x5f0] sm:$0xff]
      %v6804 = vld [vmem:[%s9 + $0x5f8] sm:$0xff]
      %v6805 = vld [vmem:[%s9 + $0x600] sm:$0xff]
      %v6806 = vld [vmem:[%s9 + $0x608] sm:$0xff]
      %v6807 = vld [vmem:[%s9 + $0x610] sm:$0xff]
      %v6808 = vld [vmem:[%s9 + $0x618] sm:$0xff]
      %v6809 = vld [vmem:[%s9 + $0x620] sm:$0xff]
      %v6810 = vld [vmem:[%s9 + $0x628] sm:$0xff]
      %v6811 = vld [vmem:[%s9 + $0x630] sm:$0xff]
      %v6812 = vld [vmem:[%s9 + $0x638] sm:$0xff]
      %v6813 = vld [vmem:[%s9 + $0x640] sm:$0xff]
      %v6814 = vld [vmem:[%s9 + $0x648] sm:$0xff]
      %v6815 = vld [vmem:[%s9 + $0x650] sm:$0xff]
      %v6816 = vld [vmem:[%s9 + $0x658] sm:$0xff]
      %v6817 = vld [vmem:[%s9 + $0x660] sm:$0xff]
      %v6818 = vld [vmem:[%s9 + $0x668] sm:$0xff]
      %v6819 = vld [vmem:[%s9 + $0x670] sm:$0xff]
      %v6820 = vld [vmem:[%s9 + $0x678] sm:$0xff]
      %v6821 = vld [vmem:[%s9 + $0x680] sm:$0xff]
      %v6822 = vld [vmem:[%s9 + $0x688] sm:$0xff]
      %v6823 = vld [vmem:[%s9 + $0x690] sm:$0xff]
      %v6824 = vld [vmem:[%s9 + $0x698] sm:$0xff]
      %v6825 = vld [vmem:[%s9 + $0x6a0] sm:$0xff]
      %v6826 = vld [vmem:[%s9 + $0x6a8] sm:$0xff]
      %v6827 = vld [vmem:[%s9 + $0x6b0] sm:$0xff]
      %v6828 = vld [vmem:[%s9 + $0x6b8] sm:$0xff]
      %v6829 = vld [vmem:[%s9 + $0x6c0] sm:$0xff]
      %v6830 = vld [vmem:[%s9 + $0x6c8] sm:$0xff]
      %v6831 = vld [vmem:[%s9 + $0x6d0] sm:$0xff]
      %v6832 = vld [vmem:[%s9 + $0x6d8] sm:$0xff]
      %v6833 = vld [vmem:[%s9 + $0x6e0] sm:$0xff]
      %v6834 = vld [vmem:[%s9 + $0x6e8] sm:$0xff]
      %v6835 = vld [vmem:[%s9 + $0x6f0] sm:$0xff]
      %v6836 = vld [vmem:[%s9 + $0x6f8] sm:$0xff]
      %v6837 = vld [vmem:[%s9 + $0x700] sm:$0xff]
      %v6838 = vld [vmem:[%s9 + $0x708] sm:$0xff]
      %v6839 = vld [vmem:[%s9 + $0x710] sm:$0xff]
      %v6840 = vld [vmem:[%s9 + $0x718] sm:$0xff]
      %v6841 = vld [vmem:[%s9 + $0x720] sm:$0xff]
      %v6842 = vld [vmem:[%s9 + $0x728] sm:$0xff]
      %v6843 = vld [vmem:[%s9 + $0x730] sm:$0xff]
      %v6844 = vld [vmem:[%s9 + $0x738] sm:$0xff]
      %v6845 = vld [vmem:[%s9 + $0x740] sm:$0xff]
      %v6846 = vld [vmem:[%s9 + $0x748] sm:$0xff]
      %v6847 = vld [vmem:[%s9 + $0x750] sm:$0xff]
      %v6848 = vld [vmem:[%s9 + $0x758] sm:$0xff]
      %v6849 = vld [vmem:[%s9 + $0x760] sm:$0xff]
      %v6850 = vld [vmem:[%s9 + $0x768] sm:$0xff]
      %v6851 = vld [vmem:[%s9 + $0x770] sm:$0xff]
      %v6852 = vld [vmem:[%s9 + $0x778] sm:$0xff]
      %v6853 = vld [vmem:[%s9 + $0x780] sm:$0xff]
      %v6854 = vld [vmem:[%s9 + $0x788] sm:$0xff]
      %v6855 = vld [vmem:[%s9 + $0x790] sm:$0xff]
      %v6856 = vld [vmem:[%s9 + $0x798] sm:$0xff]
      %v6857 = vld [vmem:[%s9 + $0x7a0] sm:$0xff]
      %v6858 = vld [vmem:[%s9 + $0x7a8] sm:$0xff]
      %v6859 = vld [vmem:[%s9 + $0x7b0] sm:$0xff]
      %v6860 = vld [vmem:[%s9 + $0x7b8] sm:$0xff]
      %v6861 = vld [vmem:[%s9 + $0x7c0] sm:$0xff]
      %v6862 = vld [vmem:[%s9 + $0x7c8] sm:$0xff]
      %v6863 = vld [vmem:[%s9 + $0x7d0] sm:$0xff]
      %v6864 = vld [vmem:[%s9 + $0x7d8] sm:$0xff]
      %v6865 = vld [vmem:[%s9 + $0x7e0] sm:$0xff]
      %v6866 = vld [vmem:[%s9 + $0x7e8] sm:$0xff]
      %v6867 = vld [vmem:[%s9 + $0x7f0] sm:$0xff]
      %v6868 = vld [vmem:[%s9 + $0x7f8] sm:$0xff]
      %v6869 = vld [vmem:[%s10] sm:$0xff]
      %v6871 = vlaneseq
      %v6872 = vshrl.u32 %v6871, 7
      %v6873 = vsub.s32 0, %v6872
      %v6874 = vrot.slane %v6869, %v6873
      %v6875 = vlaneseq
      %v6876 = vshrl.u32 %v6875, 7
      %v6877 = vsub.s32 1, %v6876
      %v6878 = vrot.slane %v6869, %v6877
      %v6879 = vlaneseq
      %v6880 = vshrl.u32 %v6879, 7
      %v6881 = vsub.s32 2, %v6880
      %v6882 = vrot.slane %v6869, %v6881
      %v6883 = vlaneseq
      %v6884 = vshrl.u32 %v6883, 7
      %v6885 = vsub.s32 3, %v6884
      %v6886 = vrot.slane %v6869, %v6885
      %v6887 = vlaneseq
      %v6888 = vshrl.u32 %v6887, 7
      %v6889 = vsub.s32 4, %v6888
      %v6890 = vrot.slane %v6869, %v6889
      %v6891 = vlaneseq
      %v6892 = vshrl.u32 %v6891, 7
      %v6893 = vsub.s32 5, %v6892
      %v6894 = vrot.slane %v6869, %v6893
      %v6895 = vlaneseq
      %v6896 = vshrl.u32 %v6895, 7
      %v6897 = vsub.s32 6, %v6896
      %v6898 = vrot.slane %v6869, %v6897
      %v6899 = vlaneseq
      %v6900 = vshrl.u32 %v6899, 7
      %v6901 = vsub.s32 7, %v6900
      %v6902 = vrot.slane %v6869, %v6901
      %v7167 = vunpack.c.l.b16 %v6613
      %v7168 = vunpack.c.h.b16 %v6613
      %v7169 = vunpack.c.l.b16 %v6614
      %v7170 = vunpack.c.h.b16 %v6614
      %v7171 = vunpack.c.l.b16 %v6615
      %v7172 = vunpack.c.h.b16 %v6615
      %v7173 = vunpack.c.l.b16 %v6616
      %v7174 = vunpack.c.h.b16 %v6616
      %v7175 = vunpack.c.l.b16 %v6617
      %v7176 = vunpack.c.h.b16 %v6617
      %v7177 = vunpack.c.l.b16 %v6618
      %v7178 = vunpack.c.h.b16 %v6618
      %v7179 = vunpack.c.l.b16 %v6619
      %v7180 = vunpack.c.h.b16 %v6619
      %v7181 = vunpack.c.l.b16 %v6620
      %v7182 = vunpack.c.h.b16 %v6620
      %v7183 = vunpack.c.l.b16 %v6621
      %v7184 = vunpack.c.h.b16 %v6621
      %v7185 = vunpack.c.l.b16 %v6622
      %v7186 = vunpack.c.h.b16 %v6622
      %v7187 = vunpack.c.l.b16 %v6623
      %v7188 = vunpack.c.h.b16 %v6623
      %v7189 = vunpack.c.l.b16 %v6624
      %v7190 = vunpack.c.h.b16 %v6624
      %v7191 = vunpack.c.l.b16 %v6625
      %v7192 = vunpack.c.h.b16 %v6625
      %v7193 = vunpack.c.l.b16 %v6626
      %v7194 = vunpack.c.h.b16 %v6626
      %v7195 = vunpack.c.l.b16 %v6627
      %v7196 = vunpack.c.h.b16 %v6627
      %v7197 = vunpack.c.l.b16 %v6628
      %v7198 = vunpack.c.h.b16 %v6628
      %v7199 = vunpack.c.l.b16 %v6629
      %v7200 = vunpack.c.h.b16 %v6629
      %v7201 = vunpack.c.l.b16 %v6630
      %v7202 = vunpack.c.h.b16 %v6630
      %v7203 = vunpack.c.l.b16 %v6631
      %v7204 = vunpack.c.h.b16 %v6631
      %v7205 = vunpack.c.l.b16 %v6632
      %v7206 = vunpack.c.h.b16 %v6632
      %v7207 = vunpack.c.l.b16 %v6633
      %v7208 = vunpack.c.h.b16 %v6633
      %v7209 = vunpack.c.l.b16 %v6634
      %v7210 = vunpack.c.h.b16 %v6634
      %v7211 = vunpack.c.l.b16 %v6635
      %v7212 = vunpack.c.h.b16 %v6635
      %v7213 = vunpack.c.l.b16 %v6636
      %v7214 = vunpack.c.h.b16 %v6636
      %v7215 = vunpack.c.l.b16 %v6637
      %v7216 = vunpack.c.h.b16 %v6637
      %v7217 = vunpack.c.l.b16 %v6638
      %v7218 = vunpack.c.h.b16 %v6638
      %v7219 = vunpack.c.l.b16 %v6639
      %v7220 = vunpack.c.h.b16 %v6639
      %v7221 = vunpack.c.l.b16 %v6640
      %v7222 = vunpack.c.h.b16 %v6640
      %v7223 = vunpack.c.l.b16 %v6641
      %v7224 = vunpack.c.h.b16 %v6641
      %v7225 = vunpack.c.l.b16 %v6642
      %v7226 = vunpack.c.h.b16 %v6642
      %v7227 = vunpack.c.l.b16 %v6643
      %v7228 = vunpack.c.h.b16 %v6643
      %v7229 = vunpack.c.l.b16 %v6644
      %v7230 = vunpack.c.h.b16 %v6644
      %v7231 = vunpack.c.l.b16 %v6645
      %v7232 = vunpack.c.h.b16 %v6645
      %v7233 = vunpack.c.l.b16 %v6646
      %v7234 = vunpack.c.h.b16 %v6646
      %v7235 = vunpack.c.l.b16 %v6647
      %v7236 = vunpack.c.h.b16 %v6647
      %v7237 = vunpack.c.l.b16 %v6648
      %v7238 = vunpack.c.h.b16 %v6648
      %v7239 = vunpack.c.l.b16 %v6649
      %v7240 = vunpack.c.h.b16 %v6649
      %v7241 = vunpack.c.l.b16 %v6650
      %v7242 = vunpack.c.h.b16 %v6650
      %v7243 = vunpack.c.l.b16 %v6651
      %v7244 = vunpack.c.h.b16 %v6651
      %v7245 = vunpack.c.l.b16 %v6652
      %v7246 = vunpack.c.h.b16 %v6652
      %v7247 = vunpack.c.l.b16 %v6653
      %v7248 = vunpack.c.h.b16 %v6653
      %v7249 = vunpack.c.l.b16 %v6654
      %v7250 = vunpack.c.h.b16 %v6654
      %v7251 = vunpack.c.l.b16 %v6655
      %v7252 = vunpack.c.h.b16 %v6655
      %v7253 = vunpack.c.l.b16 %v6656
      %v7254 = vunpack.c.h.b16 %v6656
      %v7255 = vunpack.c.l.b16 %v6657
      %v7256 = vunpack.c.h.b16 %v6657
      %v7257 = vunpack.c.l.b16 %v6658
      %v7258 = vunpack.c.h.b16 %v6658
      %v7259 = vunpack.c.l.b16 %v6659
      %v7260 = vunpack.c.h.b16 %v6659
      %v7261 = vunpack.c.l.b16 %v6660
      %v7262 = vunpack.c.h.b16 %v6660
      %v7263 = vunpack.c.l.b16 %v6661
      %v7264 = vunpack.c.h.b16 %v6661
      %v7265 = vunpack.c.l.b16 %v6662
      %v7266 = vunpack.c.h.b16 %v6662
      %v7267 = vunpack.c.l.b16 %v6663
      %v7268 = vunpack.c.h.b16 %v6663
      %v7269 = vunpack.c.l.b16 %v6664
      %v7270 = vunpack.c.h.b16 %v6664
      %v7271 = vunpack.c.l.b16 %v6665
      %v7272 = vunpack.c.h.b16 %v6665
      %v7273 = vunpack.c.l.b16 %v6666
      %v7274 = vunpack.c.h.b16 %v6666
      %v7275 = vunpack.c.l.b16 %v6667
      %v7276 = vunpack.c.h.b16 %v6667
      %v7277 = vunpack.c.l.b16 %v6668
      %v7278 = vunpack.c.h.b16 %v6668
      %v7279 = vunpack.c.l.b16 %v6669
      %v7280 = vunpack.c.h.b16 %v6669
      %v7281 = vunpack.c.l.b16 %v6670
      %v7282 = vunpack.c.h.b16 %v6670
      %v7283 = vunpack.c.l.b16 %v6671
      %v7284 = vunpack.c.h.b16 %v6671
      %v7285 = vunpack.c.l.b16 %v6672
      %v7286 = vunpack.c.h.b16 %v6672
      %v7287 = vunpack.c.l.b16 %v6673
      %v7288 = vunpack.c.h.b16 %v6673
      %v7289 = vunpack.c.l.b16 %v6674
      %v7290 = vunpack.c.h.b16 %v6674
      %v7291 = vunpack.c.l.b16 %v6675
      %v7292 = vunpack.c.h.b16 %v6675
      %v7293 = vunpack.c.l.b16 %v6676
      %v7294 = vunpack.c.h.b16 %v6676
      %v7295 = vunpack.c.l.b16 %v6677
      %v7296 = vunpack.c.h.b16 %v6677
      %v7297 = vunpack.c.l.b16 %v6678
      %v7298 = vunpack.c.h.b16 %v6678
      %v7299 = vunpack.c.l.b16 %v6679
      %v7300 = vunpack.c.h.b16 %v6679
      %v7301 = vunpack.c.l.b16 %v6680
      %v7302 = vunpack.c.h.b16 %v6680
      %v7303 = vunpack.c.l.b16 %v6681
      %v7304 = vunpack.c.h.b16 %v6681
      %v7305 = vunpack.c.l.b16 %v6682
      %v7306 = vunpack.c.h.b16 %v6682
      %v7307 = vunpack.c.l.b16 %v6683
      %v7308 = vunpack.c.h.b16 %v6683
      %v7309 = vunpack.c.l.b16 %v6684
      %v7310 = vunpack.c.h.b16 %v6684
      %v7311 = vunpack.c.l.b16 %v6685
      %v7312 = vunpack.c.h.b16 %v6685
      %v7313 = vunpack.c.l.b16 %v6686
      %v7314 = vunpack.c.h.b16 %v6686
      %v7315 = vunpack.c.l.b16 %v6687
      %v7316 = vunpack.c.h.b16 %v6687
      %v7317 = vunpack.c.l.b16 %v6688
      %v7318 = vunpack.c.h.b16 %v6688
      %v7319 = vunpack.c.l.b16 %v6689
      %v7320 = vunpack.c.h.b16 %v6689
      %v7321 = vunpack.c.l.b16 %v6690
      %v7322 = vunpack.c.h.b16 %v6690
      %v7323 = vunpack.c.l.b16 %v6691
      %v7324 = vunpack.c.h.b16 %v6691
      %v7325 = vunpack.c.l.b16 %v6692
      %v7326 = vunpack.c.h.b16 %v6692
      %v7327 = vunpack.c.l.b16 %v6693
      %v7328 = vunpack.c.h.b16 %v6693
      %v7329 = vunpack.c.l.b16 %v6694
      %v7330 = vunpack.c.h.b16 %v6694
      %v7331 = vunpack.c.l.b16 %v6695
      %v7332 = vunpack.c.h.b16 %v6695
      %v7333 = vunpack.c.l.b16 %v6696
      %v7334 = vunpack.c.h.b16 %v6696
      %v7335 = vunpack.c.l.b16 %v6697
      %v7336 = vunpack.c.h.b16 %v6697
      %v7337 = vunpack.c.l.b16 %v6698
      %v7338 = vunpack.c.h.b16 %v6698
      %v7339 = vunpack.c.l.b16 %v6699
      %v7340 = vunpack.c.h.b16 %v6699
      %v7341 = vunpack.c.l.b16 %v6700
      %v7342 = vunpack.c.h.b16 %v6700
      %v7343 = vunpack.c.l.b16 %v6701
      %v7344 = vunpack.c.h.b16 %v6701
      %v7345 = vunpack.c.l.b16 %v6702
      %v7346 = vunpack.c.h.b16 %v6702
      %v7347 = vunpack.c.l.b16 %v6703
      %v7348 = vunpack.c.h.b16 %v6703
      %v7349 = vunpack.c.l.b16 %v6704
      %v7350 = vunpack.c.h.b16 %v6704
      %v7351 = vunpack.c.l.b16 %v6705
      %v7352 = vunpack.c.h.b16 %v6705
      %v7353 = vunpack.c.l.b16 %v6706
      %v7354 = vunpack.c.h.b16 %v6706
      %v7355 = vunpack.c.l.b16 %v6707
      %v7356 = vunpack.c.h.b16 %v6707
      %v7357 = vunpack.c.l.b16 %v6708
      %v7358 = vunpack.c.h.b16 %v6708
      %v7359 = vunpack.c.l.b16 %v6709
      %v7360 = vunpack.c.h.b16 %v6709
      %v7361 = vunpack.c.l.b16 %v6710
      %v7362 = vunpack.c.h.b16 %v6710
      %v7363 = vunpack.c.l.b16 %v6711
      %v7364 = vunpack.c.h.b16 %v6711
      %v7365 = vunpack.c.l.b16 %v6712
      %v7366 = vunpack.c.h.b16 %v6712
      %v7367 = vunpack.c.l.b16 %v6713
      %v7368 = vunpack.c.h.b16 %v6713
      %v7369 = vunpack.c.l.b16 %v6714
      %v7370 = vunpack.c.h.b16 %v6714
      %v7371 = vunpack.c.l.b16 %v6715
      %v7372 = vunpack.c.h.b16 %v6715
      %v7373 = vunpack.c.l.b16 %v6716
      %v7374 = vunpack.c.h.b16 %v6716
      %v7375 = vunpack.c.l.b16 %v6717
      %v7376 = vunpack.c.h.b16 %v6717
      %v7377 = vunpack.c.l.b16 %v6718
      %v7378 = vunpack.c.h.b16 %v6718
      %v7379 = vunpack.c.l.b16 %v6719
      %v7380 = vunpack.c.h.b16 %v6719
      %v7381 = vunpack.c.l.b16 %v6720
      %v7382 = vunpack.c.h.b16 %v6720
      %v7383 = vunpack.c.l.b16 %v6721
      %v7384 = vunpack.c.h.b16 %v6721
      %v7385 = vunpack.c.l.b16 %v6722
      %v7386 = vunpack.c.h.b16 %v6722
      %v7387 = vunpack.c.l.b16 %v6723
      %v7388 = vunpack.c.h.b16 %v6723
      %v7389 = vunpack.c.l.b16 %v6724
      %v7390 = vunpack.c.h.b16 %v6724
      %v7391 = vunpack.c.l.b16 %v6725
      %v7392 = vunpack.c.h.b16 %v6725
      %v7393 = vunpack.c.l.b16 %v6726
      %v7394 = vunpack.c.h.b16 %v6726
      %v7395 = vunpack.c.l.b16 %v6727
      %v7396 = vunpack.c.h.b16 %v6727
      %v7397 = vunpack.c.l.b16 %v6728
      %v7398 = vunpack.c.h.b16 %v6728
      %v7399 = vunpack.c.l.b16 %v6729
      %v7400 = vunpack.c.h.b16 %v6729
      %v7401 = vunpack.c.l.b16 %v6730
      %v7402 = vunpack.c.h.b16 %v6730
      %v7403 = vunpack.c.l.b16 %v6731
      %v7404 = vunpack.c.h.b16 %v6731
      %v7405 = vunpack.c.l.b16 %v6732
      %v7406 = vunpack.c.h.b16 %v6732
      %v7407 = vunpack.c.l.b16 %v6733
      %v7408 = vunpack.c.h.b16 %v6733
      %v7409 = vunpack.c.l.b16 %v6734
      %v7410 = vunpack.c.h.b16 %v6734
      %v7411 = vunpack.c.l.b16 %v6735
      %v7412 = vunpack.c.h.b16 %v6735
      %v7413 = vunpack.c.l.b16 %v6736
      %v7414 = vunpack.c.h.b16 %v6736
      %v7415 = vunpack.c.l.b16 %v6737
      %v7416 = vunpack.c.h.b16 %v6737
      %v7417 = vunpack.c.l.b16 %v6738
      %v7418 = vunpack.c.h.b16 %v6738
      %v7419 = vunpack.c.l.b16 %v6739
      %v7420 = vunpack.c.h.b16 %v6739
      %v7421 = vunpack.c.l.b16 %v6740
      %v7422 = vunpack.c.h.b16 %v6740
      %v7423 = vunpack.c.l.b16 %v6741
      %v7424 = vunpack.c.h.b16 %v6741
      %v7425 = vunpack.c.l.b16 %v6742
      %v7426 = vunpack.c.h.b16 %v6742
      %v7427 = vunpack.c.l.b16 %v6743
      %v7428 = vunpack.c.h.b16 %v6743
      %v7429 = vunpack.c.l.b16 %v6744
      %v7430 = vunpack.c.h.b16 %v6744
      %v7431 = vunpack.c.l.b16 %v6745
      %v7432 = vunpack.c.h.b16 %v6745
      %v7433 = vunpack.c.l.b16 %v6746
      %v7434 = vunpack.c.h.b16 %v6746
      %v7435 = vunpack.c.l.b16 %v6747
      %v7436 = vunpack.c.h.b16 %v6747
      %v7437 = vunpack.c.l.b16 %v6748
      %v7438 = vunpack.c.h.b16 %v6748
      %v7439 = vunpack.c.l.b16 %v6749
      %v7440 = vunpack.c.h.b16 %v6749
      %v7441 = vunpack.c.l.b16 %v6750
      %v7442 = vunpack.c.h.b16 %v6750
      %v7443 = vunpack.c.l.b16 %v6751
      %v7444 = vunpack.c.h.b16 %v6751
      %v7445 = vunpack.c.l.b16 %v6752
      %v7446 = vunpack.c.h.b16 %v6752
      %v7447 = vunpack.c.l.b16 %v6753
      %v7448 = vunpack.c.h.b16 %v6753
      %v7449 = vunpack.c.l.b16 %v6754
      %v7450 = vunpack.c.h.b16 %v6754
      %v7451 = vunpack.c.l.b16 %v6755
      %v7452 = vunpack.c.h.b16 %v6755
      %v7453 = vunpack.c.l.b16 %v6756
      %v7454 = vunpack.c.h.b16 %v6756
      %v7455 = vunpack.c.l.b16 %v6757
      %v7456 = vunpack.c.h.b16 %v6757
      %v7457 = vunpack.c.l.b16 %v6758
      %v7458 = vunpack.c.h.b16 %v6758
      %v7459 = vunpack.c.l.b16 %v6759
      %v7460 = vunpack.c.h.b16 %v6759
      %v7461 = vunpack.c.l.b16 %v6760
      %v7462 = vunpack.c.h.b16 %v6760
      %v7463 = vunpack.c.l.b16 %v6761
      %v7464 = vunpack.c.h.b16 %v6761
      %v7465 = vunpack.c.l.b16 %v6762
      %v7466 = vunpack.c.h.b16 %v6762
      %v7467 = vunpack.c.l.b16 %v6763
      %v7468 = vunpack.c.h.b16 %v6763
      %v7469 = vunpack.c.l.b16 %v6764
      %v7470 = vunpack.c.h.b16 %v6764
      %v7471 = vunpack.c.l.b16 %v6765
      %v7472 = vunpack.c.h.b16 %v6765
      %v7473 = vunpack.c.l.b16 %v6766
      %v7474 = vunpack.c.h.b16 %v6766
      %v7475 = vunpack.c.l.b16 %v6767
      %v7476 = vunpack.c.h.b16 %v6767
      %v7477 = vunpack.c.l.b16 %v6768
      %v7478 = vunpack.c.h.b16 %v6768
      %v7479 = vunpack.c.l.b16 %v6769
      %v7480 = vunpack.c.h.b16 %v6769
      %v7481 = vunpack.c.l.b16 %v6770
      %v7482 = vunpack.c.h.b16 %v6770
      %v7483 = vunpack.c.l.b16 %v6771
      %v7484 = vunpack.c.h.b16 %v6771
      %v7485 = vunpack.c.l.b16 %v6772
      %v7486 = vunpack.c.h.b16 %v6772
      %v7487 = vunpack.c.l.b16 %v6773
      %v7488 = vunpack.c.h.b16 %v6773
      %v7489 = vunpack.c.l.b16 %v6774
      %v7490 = vunpack.c.h.b16 %v6774
      %v7491 = vunpack.c.l.b16 %v6775
      %v7492 = vunpack.c.h.b16 %v6775
      %v7493 = vunpack.c.l.b16 %v6776
      %v7494 = vunpack.c.h.b16 %v6776
      %v7495 = vunpack.c.l.b16 %v6777
      %v7496 = vunpack.c.h.b16 %v6777
      %v7497 = vunpack.c.l.b16 %v6778
      %v7498 = vunpack.c.h.b16 %v6778
      %v7499 = vunpack.c.l.b16 %v6779
      %v7500 = vunpack.c.h.b16 %v6779
      %v7501 = vunpack.c.l.b16 %v6780
      %v7502 = vunpack.c.h.b16 %v6780
      %v7503 = vunpack.c.l.b16 %v6781
      %v7504 = vunpack.c.h.b16 %v6781
      %v7505 = vunpack.c.l.b16 %v6782
      %v7506 = vunpack.c.h.b16 %v6782
      %v7507 = vunpack.c.l.b16 %v6783
      %v7508 = vunpack.c.h.b16 %v6783
      %v7509 = vunpack.c.l.b16 %v6784
      %v7510 = vunpack.c.h.b16 %v6784
      %v7511 = vunpack.c.l.b16 %v6785
      %v7512 = vunpack.c.h.b16 %v6785
      %v7513 = vunpack.c.l.b16 %v6786
      %v7514 = vunpack.c.h.b16 %v6786
      %v7515 = vunpack.c.l.b16 %v6787
      %v7516 = vunpack.c.h.b16 %v6787
      %v7517 = vunpack.c.l.b16 %v6788
      %v7518 = vunpack.c.h.b16 %v6788
      %v7519 = vunpack.c.l.b16 %v6789
      %v7520 = vunpack.c.h.b16 %v6789
      %v7521 = vunpack.c.l.b16 %v6790
      %v7522 = vunpack.c.h.b16 %v6790
      %v7523 = vunpack.c.l.b16 %v6791
      %v7524 = vunpack.c.h.b16 %v6791
      %v7525 = vunpack.c.l.b16 %v6792
      %v7526 = vunpack.c.h.b16 %v6792
      %v7527 = vunpack.c.l.b16 %v6793
      %v7528 = vunpack.c.h.b16 %v6793
      %v7529 = vunpack.c.l.b16 %v6794
      %v7530 = vunpack.c.h.b16 %v6794
      %v7531 = vunpack.c.l.b16 %v6795
      %v7532 = vunpack.c.h.b16 %v6795
      %v7533 = vunpack.c.l.b16 %v6796
      %v7534 = vunpack.c.h.b16 %v6796
      %v7535 = vunpack.c.l.b16 %v6797
      %v7536 = vunpack.c.h.b16 %v6797
      %v7537 = vunpack.c.l.b16 %v6798
      %v7538 = vunpack.c.h.b16 %v6798
      %v7539 = vunpack.c.l.b16 %v6799
      %v7540 = vunpack.c.h.b16 %v6799
      %v7541 = vunpack.c.l.b16 %v6800
      %v7542 = vunpack.c.h.b16 %v6800
      %v7543 = vunpack.c.l.b16 %v6801
      %v7544 = vunpack.c.h.b16 %v6801
      %v7545 = vunpack.c.l.b16 %v6802
      %v7546 = vunpack.c.h.b16 %v6802
      %v7547 = vunpack.c.l.b16 %v6803
      %v7548 = vunpack.c.h.b16 %v6803
      %v7549 = vunpack.c.l.b16 %v6804
      %v7550 = vunpack.c.h.b16 %v6804
      %v7551 = vunpack.c.l.b16 %v6805
      %v7552 = vunpack.c.h.b16 %v6805
      %v7553 = vunpack.c.l.b16 %v6806
      %v7554 = vunpack.c.h.b16 %v6806
      %v7555 = vunpack.c.l.b16 %v6807
      %v7556 = vunpack.c.h.b16 %v6807
      %v7557 = vunpack.c.l.b16 %v6808
      %v7558 = vunpack.c.h.b16 %v6808
      %v7559 = vunpack.c.l.b16 %v6809
      %v7560 = vunpack.c.h.b16 %v6809
      %v7561 = vunpack.c.l.b16 %v6810
      %v7562 = vunpack.c.h.b16 %v6810
      %v7563 = vunpack.c.l.b16 %v6811
      %v7564 = vunpack.c.h.b16 %v6811
      %v7565 = vunpack.c.l.b16 %v6812
      %v7566 = vunpack.c.h.b16 %v6812
      %v7567 = vunpack.c.l.b16 %v6813
      %v7568 = vunpack.c.h.b16 %v6813
      %v7569 = vunpack.c.l.b16 %v6814
      %v7570 = vunpack.c.h.b16 %v6814
      %v7571 = vunpack.c.l.b16 %v6815
      %v7572 = vunpack.c.h.b16 %v6815
      %v7573 = vunpack.c.l.b16 %v6816
      %v7574 = vunpack.c.h.b16 %v6816
      %v7575 = vunpack.c.l.b16 %v6817
      %v7576 = vunpack.c.h.b16 %v6817
      %v7577 = vunpack.c.l.b16 %v6818
      %v7578 = vunpack.c.h.b16 %v6818
      %v7579 = vunpack.c.l.b16 %v6819
      %v7580 = vunpack.c.h.b16 %v6819
      %v7581 = vunpack.c.l.b16 %v6820
      %v7582 = vunpack.c.h.b16 %v6820
      %v7583 = vunpack.c.l.b16 %v6821
      %v7584 = vunpack.c.h.b16 %v6821
      %v7585 = vunpack.c.l.b16 %v6822
      %v7586 = vunpack.c.h.b16 %v6822
      %v7587 = vunpack.c.l.b16 %v6823
      %v7588 = vunpack.c.h.b16 %v6823
      %v7589 = vunpack.c.l.b16 %v6824
      %v7590 = vunpack.c.h.b16 %v6824
      %v7591 = vunpack.c.l.b16 %v6825
      %v7592 = vunpack.c.h.b16 %v6825
      %v7593 = vunpack.c.l.b16 %v6826
      %v7594 = vunpack.c.h.b16 %v6826
      %v7595 = vunpack.c.l.b16 %v6827
      %v7596 = vunpack.c.h.b16 %v6827
      %v7597 = vunpack.c.l.b16 %v6828
      %v7598 = vunpack.c.h.b16 %v6828
      %v7599 = vunpack.c.l.b16 %v6829
      %v7600 = vunpack.c.h.b16 %v6829
      %v7601 = vunpack.c.l.b16 %v6830
      %v7602 = vunpack.c.h.b16 %v6830
      %v7603 = vunpack.c.l.b16 %v6831
      %v7604 = vunpack.c.h.b16 %v6831
      %v7605 = vunpack.c.l.b16 %v6832
      %v7606 = vunpack.c.h.b16 %v6832
      %v7607 = vunpack.c.l.b16 %v6833
      %v7608 = vunpack.c.h.b16 %v6833
      %v7609 = vunpack.c.l.b16 %v6834
      %v7610 = vunpack.c.h.b16 %v6834
      %v7611 = vunpack.c.l.b16 %v6835
      %v7612 = vunpack.c.h.b16 %v6835
      %v7613 = vunpack.c.l.b16 %v6836
      %v7614 = vunpack.c.h.b16 %v6836
      %v7615 = vunpack.c.l.b16 %v6837
      %v7616 = vunpack.c.h.b16 %v6837
      %v7617 = vunpack.c.l.b16 %v6838
      %v7618 = vunpack.c.h.b16 %v6838
      %v7619 = vunpack.c.l.b16 %v6839
      %v7620 = vunpack.c.h.b16 %v6839
      %v7621 = vunpack.c.l.b16 %v6840
      %v7622 = vunpack.c.h.b16 %v6840
      %v7623 = vunpack.c.l.b16 %v6841
      %v7624 = vunpack.c.h.b16 %v6841
      %v7625 = vunpack.c.l.b16 %v6842
      %v7626 = vunpack.c.h.b16 %v6842
      %v7627 = vunpack.c.l.b16 %v6843
      %v7628 = vunpack.c.h.b16 %v6843
      %v7629 = vunpack.c.l.b16 %v6844
      %v7630 = vunpack.c.h.b16 %v6844
      %v7631 = vunpack.c.l.b16 %v6845
      %v7632 = vunpack.c.h.b16 %v6845
      %v7633 = vunpack.c.l.b16 %v6846
      %v7634 = vunpack.c.h.b16 %v6846
      %v7635 = vunpack.c.l.b16 %v6847
      %v7636 = vunpack.c.h.b16 %v6847
      %v7637 = vunpack.c.l.b16 %v6848
      %v7638 = vunpack.c.h.b16 %v6848
      %v7639 = vunpack.c.l.b16 %v6849
      %v7640 = vunpack.c.h.b16 %v6849
      %v7641 = vunpack.c.l.b16 %v6850
      %v7642 = vunpack.c.h.b16 %v6850
      %v7643 = vunpack.c.l.b16 %v6851
      %v7644 = vunpack.c.h.b16 %v6851
      %v7645 = vunpack.c.l.b16 %v6852
      %v7646 = vunpack.c.h.b16 %v6852
      %v7647 = vunpack.c.l.b16 %v6853
      %v7648 = vunpack.c.h.b16 %v6853
      %v7649 = vunpack.c.l.b16 %v6854
      %v7650 = vunpack.c.h.b16 %v6854
      %v7651 = vunpack.c.l.b16 %v6855
      %v7652 = vunpack.c.h.b16 %v6855
      %v7653 = vunpack.c.l.b16 %v6856
      %v7654 = vunpack.c.h.b16 %v6856
      %v7655 = vunpack.c.l.b16 %v6857
      %v7656 = vunpack.c.h.b16 %v6857
      %v7657 = vunpack.c.l.b16 %v6858
      %v7658 = vunpack.c.h.b16 %v6858
      %v7659 = vunpack.c.l.b16 %v6859
      %v7660 = vunpack.c.h.b16 %v6859
      %v7661 = vunpack.c.l.b16 %v6860
      %v7662 = vunpack.c.h.b16 %v6860
      %v7663 = vunpack.c.l.b16 %v6861
      %v7664 = vunpack.c.h.b16 %v6861
      %v7665 = vunpack.c.l.b16 %v6862
      %v7666 = vunpack.c.h.b16 %v6862
      %v7667 = vunpack.c.l.b16 %v6863
      %v7668 = vunpack.c.h.b16 %v6863
      %v7669 = vunpack.c.l.b16 %v6864
      %v7670 = vunpack.c.h.b16 %v6864
      %v7671 = vunpack.c.l.b16 %v6865
      %v7672 = vunpack.c.h.b16 %v6865
      %v7673 = vunpack.c.l.b16 %v6866
      %v7674 = vunpack.c.h.b16 %v6866
      %v7675 = vunpack.c.l.b16 %v6867
      %v7676 = vunpack.c.h.b16 %v6867
      %v7677 = vunpack.c.l.b16 %v6868
      %v7678 = vunpack.c.h.b16 %v6868
      %v7679 = vpack.c.b16 %v7175, %v7167
      %v7680 = vpack.c.b16 %v7176, %v7168
      %v7681 = vpack.c.b16 %v7177, %v7169
      %v7682 = vpack.c.b16 %v7178, %v7170
      %v7683 = vpack.c.b16 %v7179, %v7171
      %v7684 = vpack.c.b16 %v7180, %v7172
      %v7685 = vpack.c.b16 %v7181, %v7173
      %v7686 = vpack.c.b16 %v7182, %v7174
      %v7687 = vpack.c.b16 %v7191, %v7183
      %v7688 = vpack.c.b16 %v7192, %v7184
      %v7689 = vpack.c.b16 %v7193, %v7185
      %v7690 = vpack.c.b16 %v7194, %v7186
      %v7691 = vpack.c.b16 %v7195, %v7187
      %v7692 = vpack.c.b16 %v7196, %v7188
      %v7693 = vpack.c.b16 %v7197, %v7189
      %v7694 = vpack.c.b16 %v7198, %v7190
      %v7695 = vpack.c.b16 %v7207, %v7199
      %v7696 = vpack.c.b16 %v7208, %v7200
      %v7697 = vpack.c.b16 %v7209, %v7201
      %v7698 = vpack.c.b16 %v7210, %v7202
      %v7699 = vpack.c.b16 %v7211, %v7203
      %v7700 = vpack.c.b16 %v7212, %v7204
      %v7701 = vpack.c.b16 %v7213, %v7205
      %v7702 = vpack.c.b16 %v7214, %v7206
      %v7703 = vpack.c.b16 %v7223, %v7215
      %v7704 = vpack.c.b16 %v7224, %v7216
      %v7705 = vpack.c.b16 %v7225, %v7217
      %v7706 = vpack.c.b16 %v7226, %v7218
      %v7707 = vpack.c.b16 %v7227, %v7219
      %v7708 = vpack.c.b16 %v7228, %v7220
      %v7709 = vpack.c.b16 %v7229, %v7221
      %v7710 = vpack.c.b16 %v7230, %v7222
      %v7711 = vpack.c.b16 %v7239, %v7231
      %v7712 = vpack.c.b16 %v7240, %v7232
      %v7713 = vpack.c.b16 %v7241, %v7233
      %v7714 = vpack.c.b16 %v7242, %v7234
      %v7715 = vpack.c.b16 %v7243, %v7235
      %v7716 = vpack.c.b16 %v7244, %v7236
      %v7717 = vpack.c.b16 %v7245, %v7237
      %v7718 = vpack.c.b16 %v7246, %v7238
      %v7719 = vpack.c.b16 %v7255, %v7247
      %v7720 = vpack.c.b16 %v7256, %v7248
      %v7721 = vpack.c.b16 %v7257, %v7249
      %v7722 = vpack.c.b16 %v7258, %v7250
      %v7723 = vpack.c.b16 %v7259, %v7251
      %v7724 = vpack.c.b16 %v7260, %v7252
      %v7725 = vpack.c.b16 %v7261, %v7253
      %v7726 = vpack.c.b16 %v7262, %v7254
      %v7727 = vpack.c.b16 %v7271, %v7263
      %v7728 = vpack.c.b16 %v7272, %v7264
      %v7729 = vpack.c.b16 %v7273, %v7265
      %v7730 = vpack.c.b16 %v7274, %v7266
      %v7731 = vpack.c.b16 %v7275, %v7267
      %v7732 = vpack.c.b16 %v7276, %v7268
      %v7733 = vpack.c.b16 %v7277, %v7269
      %v7734 = vpack.c.b16 %v7278, %v7270
      %v7735 = vpack.c.b16 %v7287, %v7279
      %v7736 = vpack.c.b16 %v7288, %v7280
      %v7737 = vpack.c.b16 %v7289, %v7281
      %v7738 = vpack.c.b16 %v7290, %v7282
      %v7739 = vpack.c.b16 %v7291, %v7283
      %v7740 = vpack.c.b16 %v7292, %v7284
      %v7741 = vpack.c.b16 %v7293, %v7285
      %v7742 = vpack.c.b16 %v7294, %v7286
      %v7743 = vpack.c.b16 %v7303, %v7295
      %v7744 = vpack.c.b16 %v7304, %v7296
      %v7745 = vpack.c.b16 %v7305, %v7297
      %v7746 = vpack.c.b16 %v7306, %v7298
      %v7747 = vpack.c.b16 %v7307, %v7299
      %v7748 = vpack.c.b16 %v7308, %v7300
      %v7749 = vpack.c.b16 %v7309, %v7301
      %v7750 = vpack.c.b16 %v7310, %v7302
      %v7751 = vpack.c.b16 %v7319, %v7311
      %v7752 = vpack.c.b16 %v7320, %v7312
      %v7753 = vpack.c.b16 %v7321, %v7313
      %v7754 = vpack.c.b16 %v7322, %v7314
      %v7755 = vpack.c.b16 %v7323, %v7315
      %v7756 = vpack.c.b16 %v7324, %v7316
      %v7757 = vpack.c.b16 %v7325, %v7317
      %v7758 = vpack.c.b16 %v7326, %v7318
      %v7759 = vpack.c.b16 %v7335, %v7327
      %v7760 = vpack.c.b16 %v7336, %v7328
      %v7761 = vpack.c.b16 %v7337, %v7329
      %v7762 = vpack.c.b16 %v7338, %v7330
      %v7763 = vpack.c.b16 %v7339, %v7331
      %v7764 = vpack.c.b16 %v7340, %v7332
      %v7765 = vpack.c.b16 %v7341, %v7333
      %v7766 = vpack.c.b16 %v7342, %v7334
      %v7767 = vpack.c.b16 %v7351, %v7343
      %v7768 = vpack.c.b16 %v7352, %v7344
      %v7769 = vpack.c.b16 %v7353, %v7345
      %v7770 = vpack.c.b16 %v7354, %v7346
      %v7771 = vpack.c.b16 %v7355, %v7347
      %v7772 = vpack.c.b16 %v7356, %v7348
      %v7773 = vpack.c.b16 %v7357, %v7349
      %v7774 = vpack.c.b16 %v7358, %v7350
      %v7775 = vpack.c.b16 %v7367, %v7359
      %v7776 = vpack.c.b16 %v7368, %v7360
      %v7777 = vpack.c.b16 %v7369, %v7361
      %v7778 = vpack.c.b16 %v7370, %v7362
      %v7779 = vpack.c.b16 %v7371, %v7363
      %v7780 = vpack.c.b16 %v7372, %v7364
      %v7781 = vpack.c.b16 %v7373, %v7365
      %v7782 = vpack.c.b16 %v7374, %v7366
      %v7783 = vpack.c.b16 %v7383, %v7375
      %v7784 = vpack.c.b16 %v7384, %v7376
      %v7785 = vpack.c.b16 %v7385, %v7377
      %v7786 = vpack.c.b16 %v7386, %v7378
      %v7787 = vpack.c.b16 %v7387, %v7379
      %v7788 = vpack.c.b16 %v7388, %v7380
      %v7789 = vpack.c.b16 %v7389, %v7381
      %v7790 = vpack.c.b16 %v7390, %v7382
      %v7791 = vpack.c.b16 %v7399, %v7391
      %v7792 = vpack.c.b16 %v7400, %v7392
      %v7793 = vpack.c.b16 %v7401, %v7393
      %v7794 = vpack.c.b16 %v7402, %v7394
      %v7795 = vpack.c.b16 %v7403, %v7395
      %v7796 = vpack.c.b16 %v7404, %v7396
      %v7797 = vpack.c.b16 %v7405, %v7397
      %v7798 = vpack.c.b16 %v7406, %v7398
      %v7799 = vpack.c.b16 %v7415, %v7407
      %v7800 = vpack.c.b16 %v7416, %v7408
      %v7801 = vpack.c.b16 %v7417, %v7409
      %v7802 = vpack.c.b16 %v7418, %v7410
      %v7803 = vpack.c.b16 %v7419, %v7411
      %v7804 = vpack.c.b16 %v7420, %v7412
      %v7805 = vpack.c.b16 %v7421, %v7413
      %v7806 = vpack.c.b16 %v7422, %v7414
      %v7807 = vpack.c.b16 %v7431, %v7423
      %v7808 = vpack.c.b16 %v7432, %v7424
      %v7809 = vpack.c.b16 %v7433, %v7425
      %v7810 = vpack.c.b16 %v7434, %v7426
      %v7811 = vpack.c.b16 %v7435, %v7427
      %v7812 = vpack.c.b16 %v7436, %v7428
      %v7813 = vpack.c.b16 %v7437, %v7429
      %v7814 = vpack.c.b16 %v7438, %v7430
      %v7815 = vpack.c.b16 %v7447, %v7439
      %v7816 = vpack.c.b16 %v7448, %v7440
      %v7817 = vpack.c.b16 %v7449, %v7441
      %v7818 = vpack.c.b16 %v7450, %v7442
      %v7819 = vpack.c.b16 %v7451, %v7443
      %v7820 = vpack.c.b16 %v7452, %v7444
      %v7821 = vpack.c.b16 %v7453, %v7445
      %v7822 = vpack.c.b16 %v7454, %v7446
      %v7823 = vpack.c.b16 %v7463, %v7455
      %v7824 = vpack.c.b16 %v7464, %v7456
      %v7825 = vpack.c.b16 %v7465, %v7457
      %v7826 = vpack.c.b16 %v7466, %v7458
      %v7827 = vpack.c.b16 %v7467, %v7459
      %v7828 = vpack.c.b16 %v7468, %v7460
      %v7829 = vpack.c.b16 %v7469, %v7461
      %v7830 = vpack.c.b16 %v7470, %v7462
      %v7831 = vpack.c.b16 %v7479, %v7471
      %v7832 = vpack.c.b16 %v7480, %v7472
      %v7833 = vpack.c.b16 %v7481, %v7473
      %v7834 = vpack.c.b16 %v7482, %v7474
      %v7835 = vpack.c.b16 %v7483, %v7475
      %v7836 = vpack.c.b16 %v7484, %v7476
      %v7837 = vpack.c.b16 %v7485, %v7477
      %v7838 = vpack.c.b16 %v7486, %v7478
      %v7839 = vpack.c.b16 %v7495, %v7487
      %v7840 = vpack.c.b16 %v7496, %v7488
      %v7841 = vpack.c.b16 %v7497, %v7489
      %v7842 = vpack.c.b16 %v7498, %v7490
      %v7843 = vpack.c.b16 %v7499, %v7491
      %v7844 = vpack.c.b16 %v7500, %v7492
      %v7845 = vpack.c.b16 %v7501, %v7493
      %v7846 = vpack.c.b16 %v7502, %v7494
      %v7847 = vpack.c.b16 %v7511, %v7503
      %v7848 = vpack.c.b16 %v7512, %v7504
      %v7849 = vpack.c.b16 %v7513, %v7505
      %v7850 = vpack.c.b16 %v7514, %v7506
      %v7851 = vpack.c.b16 %v7515, %v7507
      %v7852 = vpack.c.b16 %v7516, %v7508
      %v7853 = vpack.c.b16 %v7517, %v7509
      %v7854 = vpack.c.b16 %v7518, %v7510
      %v7855 = vpack.c.b16 %v7527, %v7519
      %v7856 = vpack.c.b16 %v7528, %v7520
      %v7857 = vpack.c.b16 %v7529, %v7521
      %v7858 = vpack.c.b16 %v7530, %v7522
      %v7859 = vpack.c.b16 %v7531, %v7523
      %v7860 = vpack.c.b16 %v7532, %v7524
      %v7861 = vpack.c.b16 %v7533, %v7525
      %v7862 = vpack.c.b16 %v7534, %v7526
      %v7863 = vpack.c.b16 %v7543, %v7535
      %v7864 = vpack.c.b16 %v7544, %v7536
      %v7865 = vpack.c.b16 %v7545, %v7537
      %v7866 = vpack.c.b16 %v7546, %v7538
      %v7867 = vpack.c.b16 %v7547, %v7539
      %v7868 = vpack.c.b16 %v7548, %v7540
      %v7869 = vpack.c.b16 %v7549, %v7541
      %v7870 = vpack.c.b16 %v7550, %v7542
      %v7871 = vpack.c.b16 %v7559, %v7551
      %v7872 = vpack.c.b16 %v7560, %v7552
      %v7873 = vpack.c.b16 %v7561, %v7553
      %v7874 = vpack.c.b16 %v7562, %v7554
      %v7875 = vpack.c.b16 %v7563, %v7555
      %v7876 = vpack.c.b16 %v7564, %v7556
      %v7877 = vpack.c.b16 %v7565, %v7557
      %v7878 = vpack.c.b16 %v7566, %v7558
      %v7879 = vpack.c.b16 %v7575, %v7567
      %v7880 = vpack.c.b16 %v7576, %v7568
      %v7881 = vpack.c.b16 %v7577, %v7569
      %v7882 = vpack.c.b16 %v7578, %v7570
      %v7883 = vpack.c.b16 %v7579, %v7571
      %v7884 = vpack.c.b16 %v7580, %v7572
      %v7885 = vpack.c.b16 %v7581, %v7573
      %v7886 = vpack.c.b16 %v7582, %v7574
      %v7887 = vpack.c.b16 %v7591, %v7583
      %v7888 = vpack.c.b16 %v7592, %v7584
      %v7889 = vpack.c.b16 %v7593, %v7585
      %v7890 = vpack.c.b16 %v7594, %v7586
      %v7891 = vpack.c.b16 %v7595, %v7587
      %v7892 = vpack.c.b16 %v7596, %v7588
      %v7893 = vpack.c.b16 %v7597, %v7589
      %v7894 = vpack.c.b16 %v7598, %v7590
      %v7895 = vpack.c.b16 %v7607, %v7599
      %v7896 = vpack.c.b16 %v7608, %v7600
      %v7897 = vpack.c.b16 %v7609, %v7601
      %v7898 = vpack.c.b16 %v7610, %v7602
      %v7899 = vpack.c.b16 %v7611, %v7603
      %v7900 = vpack.c.b16 %v7612, %v7604
      %v7901 = vpack.c.b16 %v7613, %v7605
      %v7902 = vpack.c.b16 %v7614, %v7606
      %v7903 = vpack.c.b16 %v7623, %v7615
      %v7904 = vpack.c.b16 %v7624, %v7616
      %v7905 = vpack.c.b16 %v7625, %v7617
      %v7906 = vpack.c.b16 %v7626, %v7618
      %v7907 = vpack.c.b16 %v7627, %v7619
      %v7908 = vpack.c.b16 %v7628, %v7620
      %v7909 = vpack.c.b16 %v7629, %v7621
      %v7910 = vpack.c.b16 %v7630, %v7622
      %v7911 = vpack.c.b16 %v7639, %v7631
      %v7912 = vpack.c.b16 %v7640, %v7632
      %v7913 = vpack.c.b16 %v7641, %v7633
      %v7914 = vpack.c.b16 %v7642, %v7634
      %v7915 = vpack.c.b16 %v7643, %v7635
      %v7916 = vpack.c.b16 %v7644, %v7636
      %v7917 = vpack.c.b16 %v7645, %v7637
      %v7918 = vpack.c.b16 %v7646, %v7638
      %v7919 = vpack.c.b16 %v7655, %v7647
      %v7920 = vpack.c.b16 %v7656, %v7648
      %v7921 = vpack.c.b16 %v7657, %v7649
      %v7922 = vpack.c.b16 %v7658, %v7650
      %v7923 = vpack.c.b16 %v7659, %v7651
      %v7924 = vpack.c.b16 %v7660, %v7652
      %v7925 = vpack.c.b16 %v7661, %v7653
      %v7926 = vpack.c.b16 %v7662, %v7654
      %v7927 = vpack.c.b16 %v7671, %v7663
      %v7928 = vpack.c.b16 %v7672, %v7664
      %v7929 = vpack.c.b16 %v7673, %v7665
      %v7930 = vpack.c.b16 %v7674, %v7666
      %v7931 = vpack.c.b16 %v7675, %v7667
      %v7932 = vpack.c.b16 %v7676, %v7668
      %v7933 = vpack.c.b16 %v7677, %v7669
      %v7934 = vpack.c.b16 %v7678, %v7670
      %8191 = vmatprep.subr.bf16.mxu0 %v7680
      %8192 = vmatpush1.bf16.msra.mxu0 %v7679
      %8193 = vmatprep.subr.bf16.mxu0 %v7688
      %8194 = vmatpush1.bf16.msra.mxu0 %v7687
      %8195 = vmatprep.subr.bf16.mxu0 %v7696
      %8196 = vmatpush1.bf16.msra.mxu0 %v7695
      %8197 = vmatprep.subr.bf16.mxu0 %v7704
      %8198 = vmatpush1.bf16.msra.mxu0 %v7703
      %8199 = vmatprep.subr.bf16.mxu0 %v7712
      %8200 = vmatpush1.bf16.msra.mxu0 %v7711
      %8201 = vmatprep.subr.bf16.mxu0 %v7720
      %8202 = vmatpush1.bf16.msra.mxu0 %v7719
      %8203 = vmatprep.subr.bf16.mxu0 %v7728
      %8204 = vmatpush1.bf16.msra.mxu0 %v7727
      %8205 = vmatprep.subr.bf16.mxu0 %v7736
      %8206 = vmatpush1.bf16.msra.mxu0 %v7735
      %8207 = vmatprep.subr.bf16.mxu0 %v7744
      %8208 = vmatpush1.bf16.msra.mxu0 %v7743
      %8209 = vmatprep.subr.bf16.mxu0 %v7752
      %8210 = vmatpush1.bf16.msra.mxu0 %v7751
      %8211 = vmatprep.subr.bf16.mxu0 %v7760
      %8212 = vmatpush1.bf16.msra.mxu0 %v7759
      %8213 = vmatprep.subr.bf16.mxu0 %v7768
      %8214 = vmatpush1.bf16.msra.mxu0 %v7767
      %8215 = vmatprep.subr.bf16.mxu0 %v7776
      %8216 = vmatpush1.bf16.msra.mxu0 %v7775
      %8217 = vmatprep.subr.bf16.mxu0 %v7784
      %8218 = vmatpush1.bf16.msra.mxu0 %v7783
      %8219 = vmatprep.subr.bf16.mxu0 %v7792
      %8220 = vmatpush1.bf16.msra.mxu0 %v7791
      %8221 = vmatprep.subr.bf16.mxu0 %v7800
      %8222 = vmatpush1.bf16.msra.mxu0 %v7799
      %8223 = vmatprep.mubr.bf16.mxu0 %v6610
      %8224 = vmatmul.mubr.bf16.gmra.mrb[0].mxu0 %v6609
      %v8225 = vpop.f32.mrb[0].mxu0
      %v8226 = vadd.f32 %v6874, %v8225
      %v8227 = vpop.f32.mrb[0].mxu0
      %v8228 = vadd.f32 %v6878, %v8227
      %v8229 = vpop.f32.mrb[0].mxu0
      %v8230 = vpop.f32.mrb[0].mxu0
      %8231 = vdwg.mxu0
      %8232 = vmatprep.subr.bf16.mxu0 %v7808
      %8233 = vmatpush1.bf16.msra.mxu0 %v7807
      %8234 = vmatprep.subr.bf16.mxu0 %v7816
      %8235 = vmatpush1.bf16.msra.mxu0 %v7815
      %8236 = vmatprep.subr.bf16.mxu0 %v7824
      %8237 = vmatpush1.bf16.msra.mxu0 %v7823
      %8238 = vmatprep.subr.bf16.mxu0 %v7832
      %8239 = vmatpush1.bf16.msra.mxu0 %v7831
      %8240 = vmatprep.subr.bf16.mxu0 %v7840
      %8241 = vmatpush1.bf16.msra.mxu0 %v7839
      %8242 = vmatprep.subr.bf16.mxu0 %v7848
      %8243 = vmatpush1.bf16.msra.mxu0 %v7847
      %8244 = vmatprep.subr.bf16.mxu0 %v7856
      %8245 = vmatpush1.bf16.msra.mxu0 %v7855
      %8246 = vmatprep.subr.bf16.mxu0 %v7864
      %8247 = vmatpush1.bf16.msra.mxu0 %v7863
      %8248 = vmatprep.subr.bf16.mxu0 %v7872
      %8249 = vmatpush1.bf16.msra.mxu0 %v7871
      %8250 = vmatprep.subr.bf16.mxu0 %v7880
      %8251 = vmatpush1.bf16.msra.mxu0 %v7879
      %8252 = vmatprep.subr.bf16.mxu0 %v7888
      %8253 = vmatpush1.bf16.msra.mxu0 %v7887
      %8254 = vmatprep.subr.bf16.mxu0 %v7896
      %8255 = vmatpush1.bf16.msra.mxu0 %v7895
      %8256 = vmatprep.subr.bf16.mxu0 %v7904
      %8257 = vmatpush1.bf16.msra.mxu0 %v7903
      %8258 = vmatprep.subr.bf16.mxu0 %v7912
      %8259 = vmatpush1.bf16.msra.mxu0 %v7911
      %8260 = vmatprep.subr.bf16.mxu0 %v7920
      %8261 = vmatpush1.bf16.msra.mxu0 %v7919
      %8262 = vmatprep.subr.bf16.mxu0 %v7928
      %8263 = vmatpush1.bf16.msra.mxu0 %v7927
      %8264 = vmatprep.mubr.bf16.mxu0 %v6612
      %8265 = vmatmul.mubr.bf16.gmra.mrb[0].mxu0 %v6611
      %v8266 = vpop.f32.mrb[0].mxu0
      %v8267 = vadd.f32 %v8226, %v8266
      %v8268 = vpop.f32.mrb[0].mxu0
      %v8269 = vadd.f32 %v8228, %v8268
      %v8270 = vpop.f32.mrb[0].mxu0
      %v8271 = vpop.f32.mrb[0].mxu0
      %8272 = vdwg.mxu0
      %8273 = vmatprep.subr.bf16.mxu0 %v7682
      %8274 = vmatpush1.bf16.msra.mxu0 %v7681
      %8275 = vmatprep.subr.bf16.mxu0 %v7690
      %8276 = vmatpush1.bf16.msra.mxu0 %v7689
      %8277 = vmatprep.subr.bf16.mxu0 %v7698
      %8278 = vmatpush1.bf16.msra.mxu0 %v7697
      %8279 = vmatprep.subr.bf16.mxu0 %v7706
      %8280 = vmatpush1.bf16.msra.mxu0 %v7705
      %8281 = vmatprep.subr.bf16.mxu0 %v7714
      %8282 = vmatpush1.bf16.msra.mxu0 %v7713
      %8283 = vmatprep.subr.bf16.mxu0 %v7722
      %8284 = vmatpush1.bf16.msra.mxu0 %v7721
      %8285 = vmatprep.subr.bf16.mxu0 %v7730
      %8286 = vmatpush1.bf16.msra.mxu0 %v7729
      %8287 = vmatprep.subr.bf16.mxu0 %v7738
      %8288 = vmatpush1.bf16.msra.mxu0 %v7737
      %8289 = vmatprep.subr.bf16.mxu0 %v7746
      %8290 = vmatpush1.bf16.msra.mxu0 %v7745
      %8291 = vmatprep.subr.bf16.mxu0 %v7754
      %8292 = vmatpush1.bf16.msra.mxu0 %v7753
      %8293 = vmatprep.subr.bf16.mxu0 %v7762
      %8294 = vmatpush1.bf16.msra.mxu0 %v7761
      %8295 = vmatprep.subr.bf16.mxu0 %v7770
      %8296 = vmatpush1.bf16.msra.mxu0 %v7769
      %8297 = vmatprep.subr.bf16.mxu0 %v7778
      %8298 = vmatpush1.bf16.msra.mxu0 %v7777
      %8299 = vmatprep.subr.bf16.mxu0 %v7786
      %8300 = vmatpush1.bf16.msra.mxu0 %v7785
      %8301 = vmatprep.subr.bf16.mxu0 %v7794
      %8302 = vmatpush1.bf16.msra.mxu0 %v7793
      %8303 = vmatprep.subr.bf16.mxu0 %v7802
      %8304 = vmatpush1.bf16.msra.mxu0 %v7801
      %8305 = vmatprep.mubr.bf16.mxu0 %v6610
      %8306 = vmatmul.mubr.bf16.gmra.mrb[0].mxu0 %v6609
      %v8307 = vpop.f32.mrb[0].mxu0
      %v8308 = vadd.f32 %v6882, %v8307
      %v8309 = vpop.f32.mrb[0].mxu0
      %v8310 = vadd.f32 %v6886, %v8309
      %v8311 = vpop.f32.mrb[0].mxu0
      %v8312 = vpop.f32.mrb[0].mxu0
      %8313 = vdwg.mxu0
      %8314 = vmatprep.subr.bf16.mxu0 %v7810
      %8315 = vmatpush1.bf16.msra.mxu0 %v7809
      %8316 = vmatprep.subr.bf16.mxu0 %v7818
      %8317 = vmatpush1.bf16.msra.mxu0 %v7817
      %8318 = vmatprep.subr.bf16.mxu0 %v7826
      %8319 = vmatpush1.bf16.msra.mxu0 %v7825
      %8320 = vmatprep.subr.bf16.mxu0 %v7834
      %8321 = vmatpush1.bf16.msra.mxu0 %v7833
      %8322 = vmatprep.subr.bf16.mxu0 %v7842
      %8323 = vmatpush1.bf16.msra.mxu0 %v7841
      %8324 = vmatprep.subr.bf16.mxu0 %v7850
      %8325 = vmatpush1.bf16.msra.mxu0 %v7849
      %8326 = vmatprep.subr.bf16.mxu0 %v7858
      %8327 = vmatpush1.bf16.msra.mxu0 %v7857
      %8328 = vmatprep.subr.bf16.mxu0 %v7866
      %8329 = vmatpush1.bf16.msra.mxu0 %v7865
      %8330 = vmatprep.subr.bf16.mxu0 %v7874
      %8331 = vmatpush1.bf16.msra.mxu0 %v7873
      %8332 = vmatprep.subr.bf16.mxu0 %v7882
      %8333 = vmatpush1.bf16.msra.mxu0 %v7881
      %8334 = vmatprep.subr.bf16.mxu0 %v7890
      %8335 = vmatpush1.bf16.msra.mxu0 %v7889
      %8336 = vmatprep.subr.bf16.mxu0 %v7898
      %8337 = vmatpush1.bf16.msra.mxu0 %v7897
      %8338 = vmatprep.subr.bf16.mxu0 %v7906
      %8339 = vmatpush1.bf16.msra.mxu0 %v7905
      %8340 = vmatprep.subr.bf16.mxu0 %v7914
      %8341 = vmatpush1.bf16.msra.mxu0 %v7913
      %8342 = vmatprep.subr.bf16.mxu0 %v7922
      %8343 = vmatpush1.bf16.msra.mxu0 %v7921
      %8344 = vmatprep.subr.bf16.mxu0 %v7930
      %8345 = vmatpush1.bf16.msra.mxu0 %v7929
      %8346 = vmatprep.mubr.bf16.mxu0 %v6612
      %8347 = vmatmul.mubr.bf16.gmra.mrb[0].mxu0 %v6611
      %v8348 = vpop.f32.mrb[0].mxu0
      %v8349 = vadd.f32 %v8308, %v8348
      %v8350 = vpop.f32.mrb[0].mxu0
      %v8351 = vadd.f32 %v8310, %v8350
      %v8352 = vpop.f32.mrb[0].mxu0
      %v8353 = vpop.f32.mrb[0].mxu0
      %8354 = vdwg.mxu0
      %8355 = vmatprep.subr.bf16.mxu0 %v7684
      %8356 = vmatpush1.bf16.msra.mxu0 %v7683
      %8357 = vmatprep.subr.bf16.mxu0 %v7692
      %8358 = vmatpush1.bf16.msra.mxu0 %v7691
      %8359 = vmatprep.subr.bf16.mxu0 %v7700
      %8360 = vmatpush1.bf16.msra.mxu0 %v7699
      %8361 = vmatprep.subr.bf16.mxu0 %v7708
      %8362 = vmatpush1.bf16.msra.mxu0 %v7707
      %8363 = vmatprep.subr.bf16.mxu0 %v7716
      %8364 = vmatpush1.bf16.msra.mxu0 %v7715
      %8365 = vmatprep.subr.bf16.mxu0 %v7724
      %8366 = vmatpush1.bf16.msra.mxu0 %v7723
      %8367 = vmatprep.subr.bf16.mxu0 %v7732
      %8368 = vmatpush1.bf16.msra.mxu0 %v7731
      %8369 = vmatprep.subr.bf16.mxu0 %v7740
      %8370 = vmatpush1.bf16.msra.mxu0 %v7739
      %8371 = vmatprep.subr.bf16.mxu0 %v7748
      %8372 = vmatpush1.bf16.msra.mxu0 %v7747
      %8373 = vmatprep.subr.bf16.mxu0 %v7756
      %8374 = vmatpush1.bf16.msra.mxu0 %v7755
      %8375 = vmatprep.subr.bf16.mxu0 %v7764
      %8376 = vmatpush1.bf16.msra.mxu0 %v7763
      %8377 = vmatprep.subr.bf16.mxu0 %v7772
      %8378 = vmatpush1.bf16.msra.mxu0 %v7771
      %8379 = vmatprep.subr.bf16.mxu0 %v7780
      %8380 = vmatpush1.bf16.msra.mxu0 %v7779
      %8381 = vmatprep.subr.bf16.mxu0 %v7788
      %8382 = vmatpush1.bf16.msra.mxu0 %v7787
      %8383 = vmatprep.subr.bf16.mxu0 %v7796
      %8384 = vmatpush1.bf16.msra.mxu0 %v7795
      %8385 = vmatprep.subr.bf16.mxu0 %v7804
      %8386 = vmatpush1.bf16.msra.mxu0 %v7803
      %8387 = vmatprep.mubr.bf16.mxu0 %v6610
      %8388 = vmatmul.mubr.bf16.gmra.mrb[0].mxu0 %v6609
      %v8389 = vpop.f32.mrb[0].mxu0
      %v8390 = vadd.f32 %v6890, %v8389
      %v8391 = vpop.f32.mrb[0].mxu0
      %v8392 = vadd.f32 %v6894, %v8391
      %v8393 = vpop.f32.mrb[0].mxu0
      %v8394 = vpop.f32.mrb[0].mxu0
      %8395 = vdwg.mxu0
      %8396 = vmatprep.subr.bf16.mxu0 %v7812
      %8397 = vmatpush1.bf16.msra.mxu0 %v7811
      %8398 = vmatprep.subr.bf16.mxu0 %v7820
      %8399 = vmatpush1.bf16.msra.mxu0 %v7819
      %8400 = vmatprep.subr.bf16.mxu0 %v7828
      %8401 = vmatpush1.bf16.msra.mxu0 %v7827
      %8402 = vmatprep.subr.bf16.mxu0 %v7836
      %8403 = vmatpush1.bf16.msra.mxu0 %v7835
      %8404 = vmatprep.subr.bf16.mxu0 %v7844
      %8405 = vmatpush1.bf16.msra.mxu0 %v7843
      %8406 = vmatprep.subr.bf16.mxu0 %v7852
      %8407 = vmatpush1.bf16.msra.mxu0 %v7851
      %8408 = vmatprep.subr.bf16.mxu0 %v7860
      %8409 = vmatpush1.bf16.msra.mxu0 %v7859
      %8410 = vmatprep.subr.bf16.mxu0 %v7868
      %8411 = vmatpush1.bf16.msra.mxu0 %v7867
      %8412 = vmatprep.subr.bf16.mxu0 %v7876
      %8413 = vmatpush1.bf16.msra.mxu0 %v7875
      %8414 = vmatprep.subr.bf16.mxu0 %v7884
      %8415 = vmatpush1.bf16.msra.mxu0 %v7883
      %8416 = vmatprep.subr.bf16.mxu0 %v7892
      %8417 = vmatpush1.bf16.msra.mxu0 %v7891
      %8418 = vmatprep.subr.bf16.mxu0 %v7900
      %8419 = vmatpush1.bf16.msra.mxu0 %v7899
      %8420 = vmatprep.subr.bf16.mxu0 %v7908
      %8421 = vmatpush1.bf16.msra.mxu0 %v7907
      %8422 = vmatprep.subr.bf16.mxu0 %v7916
      %8423 = vmatpush1.bf16.msra.mxu0 %v7915
      %8424 = vmatprep.subr.bf16.mxu0 %v7924
      %8425 = vmatpush1.bf16.msra.mxu0 %v7923
      %8426 = vmatprep.subr.bf16.mxu0 %v7932
      %8427 = vmatpush1.bf16.msra.mxu0 %v7931
      %8428 = vmatprep.mubr.bf16.mxu0 %v6612
      %8429 = vmatmul.mubr.bf16.gmra.mrb[0].mxu0 %v6611
      %v8430 = vpop.f32.mrb[0].mxu0
      %v8431 = vadd.f32 %v8390, %v8430
      %v8432 = vpop.f32.mrb[0].mxu0
      %v8433 = vadd.f32 %v8392, %v8432
      %v8434 = vpop.f32.mrb[0].mxu0
      %v8435 = vpop.f32.mrb[0].mxu0
      %8436 = vdwg.mxu0
      %8437 = vmatprep.subr.bf16.mxu0 %v7686
      %8438 = vmatpush1.bf16.msra.mxu0 %v7685
      %8439 = vmatprep.subr.bf16.mxu0 %v7694
      %8440 = vmatpush1.bf16.msra.mxu0 %v7693
      %8441 = vmatprep.subr.bf16.mxu0 %v7702
      %8442 = vmatpush1.bf16.msra.mxu0 %v7701
      %8443 = vmatprep.subr.bf16.mxu0 %v7710
      %8444 = vmatpush1.bf16.msra.mxu0 %v7709
      %8445 = vmatprep.subr.bf16.mxu0 %v7718
      %8446 = vmatpush1.bf16.msra.mxu0 %v7717
      %8447 = vmatprep.subr.bf16.mxu0 %v7726
      %8448 = vmatpush1.bf16.msra.mxu0 %v7725
      %8449 = vmatprep.subr.bf16.mxu0 %v7734
      %8450 = vmatpush1.bf16.msra.mxu0 %v7733
      %8451 = vmatprep.subr.bf16.mxu0 %v7742
      %8452 = vmatpush1.bf16.msra.mxu0 %v7741
      %8453 = vmatprep.subr.bf16.mxu0 %v7750
      %8454 = vmatpush1.bf16.msra.mxu0 %v7749
      %8455 = vmatprep.subr.bf16.mxu0 %v7758
      %8456 = vmatpush1.bf16.msra.mxu0 %v7757
      %8457 = vmatprep.subr.bf16.mxu0 %v7766
      %8458 = vmatpush1.bf16.msra.mxu0 %v7765
      %8459 = vmatprep.subr.bf16.mxu0 %v7774
      %8460 = vmatpush1.bf16.msra.mxu0 %v7773
      %8461 = vmatprep.subr.bf16.mxu0 %v7782
      %8462 = vmatpush1.bf16.msra.mxu0 %v7781
      %8463 = vmatprep.subr.bf16.mxu0 %v7790
      %8464 = vmatpush1.bf16.msra.mxu0 %v7789
      %8465 = vmatprep.subr.bf16.mxu0 %v7798
      %8466 = vmatpush1.bf16.msra.mxu0 %v7797
      %8467 = vmatprep.subr.bf16.mxu0 %v7806
      %8468 = vmatpush1.bf16.msra.mxu0 %v7805
      %8469 = vmatprep.mubr.bf16.mxu0 %v6610
      %8470 = vmatmul.mubr.bf16.gmra.mrb[0].mxu0 %v6609
      %v8471 = vpop.f32.mrb[0].mxu0
      %v8472 = vadd.f32 %v6898, %v8471
      %v8473 = vpop.f32.mrb[0].mxu0
      %v8474 = vadd.f32 %v6902, %v8473
      %v8475 = vpop.f32.mrb[0].mxu0
      %v8476 = vpop.f32.mrb[0].mxu0
      %8477 = vdwg.mxu0
      %8478 = vmatprep.subr.bf16.mxu0 %v7814
      %8479 = vmatpush1.bf16.msra.mxu0 %v7813
      %8480 = vmatprep.subr.bf16.mxu0 %v7822
      %8481 = vmatpush1.bf16.msra.mxu0 %v7821
      %8482 = vmatprep.subr.bf16.mxu0 %v7830
      %8483 = vmatpush1.bf16.msra.mxu0 %v7829
      %8484 = vmatprep.subr.bf16.mxu0 %v7838
      %8485 = vmatpush1.bf16.msra.mxu0 %v7837
      %8486 = vmatprep.subr.bf16.mxu0 %v7846
      %8487 = vmatpush1.bf16.msra.mxu0 %v7845
      %8488 = vmatprep.subr.bf16.mxu0 %v7854
      %8489 = vmatpush1.bf16.msra.mxu0 %v7853
      %8490 = vmatprep.subr.bf16.mxu0 %v7862
      %8491 = vmatpush1.bf16.msra.mxu0 %v7861
      %8492 = vmatprep.subr.bf16.mxu0 %v7870
      %8493 = vmatpush1.bf16.msra.mxu0 %v7869
      %8494 = vmatprep.subr.bf16.mxu0 %v7878
      %8495 = vmatpush1.bf16.msra.mxu0 %v7877
      %8496 = vmatprep.subr.bf16.mxu0 %v7886
      %8497 = vmatpush1.bf16.msra.mxu0 %v7885
      %8498 = vmatprep.subr.bf16.mxu0 %v7894
      %8499 = vmatpush1.bf16.msra.mxu0 %v7893
      %8500 = vmatprep.subr.bf16.mxu0 %v7902
      %8501 = vmatpush1.bf16.msra.mxu0 %v7901
      %8502 = vmatprep.subr.bf16.mxu0 %v7910
      %8503 = vmatpush1.bf16.msra.mxu0 %v7909
      %8504 = vmatprep.subr.bf16.mxu0 %v7918
      %8505 = vmatpush1.bf16.msra.mxu0 %v7917
      %8506 = vmatprep.subr.bf16.mxu0 %v7926
      %8507 = vmatpush1.bf16.msra.mxu0 %v7925
      %8508 = vmatprep.subr.bf16.mxu0 %v7934
      %8509 = vmatpush1.bf16.msra.mxu0 %v7933
      %8510 = vmatprep.mubr.bf16.mxu0 %v6612
      %8511 = vmatmul.mubr.bf16.gmra.mrb[0].mxu0 %v6611
      %v8512 = vpop.f32.mrb[0].mxu0
      %v8513 = vadd.f32 %v8472, %v8512
      %v8514 = vpop.f32.mrb[0].mxu0
      %v8515 = vadd.f32 %v8474, %v8514
      %v8516 = vpop.f32.mrb[0].mxu0
      %v8517 = vpop.f32.mrb[0].mxu0
      %8518 = vdwg.mxu0
      %v8519 = vmax.f32 %v8267, 0.0
      %v8520 = vmax.f32 %v8269, 0.0
      %v8521 = vmax.f32 %v8349, 0.0
      %v8522 = vmax.f32 %v8351, 0.0
      %v8523 = vmax.f32 %v8431, 0.0
      %v8524 = vmax.f32 %v8433, 0.0
      %v8525 = vmax.f32 %v8513, 0.0
      %v8526 = vmax.f32 %v8515, 0.0
      %v8531 = vrot.slane %v8523, 4
      %v8532 = vrot.slane %v8524, 4
      %v8533 = vrot.slane %v8525, 4
      %v8534 = vrot.slane %v8526, 4
      %vm8539 = vcmask 1043456
      %v8540 = vsel %vm8539, %v8519, %v8531
      %v8541 = vsel %vm8539, %v8520, %v8532
      %v8542 = vsel %vm8539, %v8521, %v8533
      %v8543 = vsel %vm8539, %v8522, %v8534
      %v8544 = vpack.c.bf16 %v8540, %v8540
      %v8545 = vpack.c.bf16 %v8541, %v8541
      %v8546 = vpack.c.bf16 %v8542, %v8542
      %v8547 = vpack.c.bf16 %v8543, %v8543
      %v8548 = vld [vmem:[%s11] sm:$0xf]
      %v8549 = vld [vmem:[%s11 + $0x4] sm:$0xf]
      %v8550 = vld [vmem:[%s11 + $0x8] sm:$0xf]
      %v8551 = vld [vmem:[%s11 + $0xc] sm:$0xf]
      %v8552 = vld [vmem:[%s11 + $0x10] sm:$0xf]
      %v8553 = vld [vmem:[%s11 + $0x14] sm:$0xf]
      %v8554 = vld [vmem:[%s11 + $0x18] sm:$0xf]
      %v8555 = vld [vmem:[%s11 + $0x1c] sm:$0xf]
      %v8556 = vld [vmem:[%s11 + $0x20] sm:$0xf]
      %v8557 = vld [vmem:[%s11 + $0x24] sm:$0xf]
      %v8558 = vld [vmem:[%s11 + $0x28] sm:$0xf]
      %v8559 = vld [vmem:[%s11 + $0x2c] sm:$0xf]
      %v8560 = vld [vmem:[%s11 + $0x30] sm:$0xf]
      %v8561 = vld [vmem:[%s11 + $0x34] sm:$0xf]
      %v8562 = vld [vmem:[%s11 + $0x38] sm:$0xf]
      %v8563 = vld [vmem:[%s11 + $0x3c] sm:$0xf]
      %v8564 = vld [vmem:[%s11 + $0x40] sm:$0xf]
      %v8565 = vld [vmem:[%s11 + $0x44] sm:$0xf]
      %v8566 = vld [vmem:[%s11 + $0x48] sm:$0xf]
      %v8567 = vld [vmem:[%s11 + $0x4c] sm:$0xf]
      %v8568 = vld [vmem:[%s11 + $0x50] sm:$0xf]
      %v8569 = vld [vmem:[%s11 + $0x54] sm:$0xf]
      %v8570 = vld [vmem:[%s11 + $0x58] sm:$0xf]
      %v8571 = vld [vmem:[%s11 + $0x5c] sm:$0xf]
      %v8572 = vld [vmem:[%s11 + $0x60] sm:$0xf]
      %v8573 = vld [vmem:[%s11 + $0x64] sm:$0xf]
      %v8574 = vld [vmem:[%s11 + $0x68] sm:$0xf]
      %v8575 = vld [vmem:[%s11 + $0x6c] sm:$0xf]
      %v8576 = vld [vmem:[%s11 + $0x70] sm:$0xf]
      %v8577 = vld [vmem:[%s11 + $0x74] sm:$0xf]
      %v8578 = vld [vmem:[%s11 + $0x78] sm:$0xf]
      %v8579 = vld [vmem:[%s11 + $0x7c] sm:$0xf]
      %v8580 = vld [vmem:[%s11 + $0x80] sm:$0xf]
      %v8581 = vld [vmem:[%s11 + $0x84] sm:$0xf]
      %v8582 = vld [vmem:[%s11 + $0x88] sm:$0xf]
      %v8583 = vld [vmem:[%s11 + $0x8c] sm:$0xf]
      %v8584 = vld [vmem:[%s11 + $0x90] sm:$0xf]
      %v8585 = vld [vmem:[%s11 + $0x94] sm:$0xf]
      %v8586 = vld [vmem:[%s11 + $0x98] sm:$0xf]
      %v8587 = vld [vmem:[%s11 + $0x9c] sm:$0xf]
      %v8588 = vld [vmem:[%s11 + $0xa0] sm:$0xf]
      %v8589 = vld [vmem:[%s11 + $0xa4] sm:$0xf]
      %v8590 = vld [vmem:[%s11 + $0xa8] sm:$0xf]
      %v8591 = vld [vmem:[%s11 + $0xac] sm:$0xf]
      %v8592 = vld [vmem:[%s11 + $0xb0] sm:$0xf]
      %v8593 = vld [vmem:[%s11 + $0xb4] sm:$0xf]
      %v8594 = vld [vmem:[%s11 + $0xb8] sm:$0xf]
      %v8595 = vld [vmem:[%s11 + $0xbc] sm:$0xf]
      %v8596 = vld [vmem:[%s11 + $0xc0] sm:$0xf]
      %v8597 = vld [vmem:[%s11 + $0xc4] sm:$0xf]
      %v8598 = vld [vmem:[%s11 + $0xc8] sm:$0xf]
      %v8599 = vld [vmem:[%s11 + $0xcc] sm:$0xf]
      %v8600 = vld [vmem:[%s11 + $0xd0] sm:$0xf]
      %v8601 = vld [vmem:[%s11 + $0xd4] sm:$0xf]
      %v8602 = vld [vmem:[%s11 + $0xd8] sm:$0xf]
      %v8603 = vld [vmem:[%s11 + $0xdc] sm:$0xf]
      %v8604 = vld [vmem:[%s11 + $0xe0] sm:$0xf]
      %v8605 = vld [vmem:[%s11 + $0xe4] sm:$0xf]
      %v8606 = vld [vmem:[%s11 + $0xe8] sm:$0xf]
      %v8607 = vld [vmem:[%s11 + $0xec] sm:$0xf]
      %v8608 = vld [vmem:[%s11 + $0xf0] sm:$0xf]
      %v8609 = vld [vmem:[%s11 + $0xf4] sm:$0xf]
      %v8610 = vld [vmem:[%s11 + $0xf8] sm:$0xf]
      %v8611 = vld [vmem:[%s11 + $0xfc] sm:$0xf]
      %v8612 = vld [vmem:[%s12] sm:$0x1]
      %v8614 = vlaneseq
      %v8615 = vshrl.u32 %v8614, 7
      %v8616 = vsub.s32 0, %v8615
      %v8617 = vrot.slane %v8612, %v8616
      %v8683 = vunpack.c.l.b16 %v8548
      %v8684 = vunpack.c.l.b16 %v8549
      %v8685 = vunpack.c.l.b16 %v8550
      %v8686 = vunpack.c.l.b16 %v8551
      %v8687 = vunpack.c.l.b16 %v8552
      %v8688 = vunpack.c.l.b16 %v8553
      %v8689 = vunpack.c.l.b16 %v8554
      %v8690 = vunpack.c.l.b16 %v8555
      %v8691 = vunpack.c.l.b16 %v8556
      %v8692 = vunpack.c.l.b16 %v8557
      %v8693 = vunpack.c.l.b16 %v8558
      %v8694 = vunpack.c.l.b16 %v8559
      %v8695 = vunpack.c.l.b16 %v8560
      %v8696 = vunpack.c.l.b16 %v8561
      %v8697 = vunpack.c.l.b16 %v8562
      %v8698 = vunpack.c.l.b16 %v8563
      %v8699 = vunpack.c.l.b16 %v8564
      %v8700 = vunpack.c.l.b16 %v8565
      %v8701 = vunpack.c.l.b16 %v8566
      %v8702 = vunpack.c.l.b16 %v8567
      %v8703 = vunpack.c.l.b16 %v8568
      %v8704 = vunpack.c.l.b16 %v8569
      %v8705 = vunpack.c.l.b16 %v8570
      %v8706 = vunpack.c.l.b16 %v8571
      %v8707 = vunpack.c.l.b16 %v8572
      %v8708 = vunpack.c.l.b16 %v8573
      %v8709 = vunpack.c.l.b16 %v8574
      %v8710 = vunpack.c.l.b16 %v8575
      %v8711 = vunpack.c.l.b16 %v8576
      %v8712 = vunpack.c.l.b16 %v8577
      %v8713 = vunpack.c.l.b16 %v8578
      %v8714 = vunpack.c.l.b16 %v8579
      %v8715 = vunpack.c.l.b16 %v8580
      %v8716 = vunpack.c.l.b16 %v8581
      %v8717 = vunpack.c.l.b16 %v8582
      %v8718 = vunpack.c.l.b16 %v8583
      %v8719 = vunpack.c.l.b16 %v8584
      %v8720 = vunpack.c.l.b16 %v8585
      %v8721 = vunpack.c.l.b16 %v8586
      %v8722 = vunpack.c.l.b16 %v8587
      %v8723 = vunpack.c.l.b16 %v8588
      %v8724 = vunpack.c.l.b16 %v8589
      %v8725 = vunpack.c.l.b16 %v8590
      %v8726 = vunpack.c.l.b16 %v8591
      %v8727 = vunpack.c.l.b16 %v8592
      %v8728 = vunpack.c.l.b16 %v8593
      %v8729 = vunpack.c.l.b16 %v8594
      %v8730 = vunpack.c.l.b16 %v8595
      %v8731 = vunpack.c.l.b16 %v8596
      %v8732 = vunpack.c.l.b16 %v8597
      %v8733 = vunpack.c.l.b16 %v8598
      %v8734 = vunpack.c.l.b16 %v8599
      %v8735 = vunpack.c.l.b16 %v8600
      %v8736 = vunpack.c.l.b16 %v8601
      %v8737 = vunpack.c.l.b16 %v8602
      %v8738 = vunpack.c.l.b16 %v8603
      %v8739 = vunpack.c.l.b16 %v8604
      %v8740 = vunpack.c.l.b16 %v8605
      %v8741 = vunpack.c.l.b16 %v8606
      %v8742 = vunpack.c.l.b16 %v8607
      %v8743 = vunpack.c.l.b16 %v8608
      %v8744 = vunpack.c.l.b16 %v8609
      %v8745 = vunpack.c.l.b16 %v8610
      %v8746 = vunpack.c.l.b16 %v8611
      %v8747 = vpack.c.b16 %v8684, %v8683
      %v8748 = vpack.c.b16 %v8686, %v8685
      %v8749 = vpack.c.b16 %v8688, %v8687
      %v8750 = vpack.c.b16 %v8690, %v8689
      %v8751 = vpack.c.b16 %v8692, %v8691
      %v8752 = vpack.c.b16 %v8694, %v8693
      %v8753 = vpack.c.b16 %v8696, %v8695
      %v8754 = vpack.c.b16 %v8698, %v8697
      %v8755 = vpack.c.b16 %v8700, %v8699
      %v8756 = vpack.c.b16 %v8702, %v8701
      %v8757 = vpack.c.b16 %v8704, %v8703
      %v8758 = vpack.c.b16 %v8706, %v8705
      %v8759 = vpack.c.b16 %v8708, %v8707
      %v8760 = vpack.c.b16 %v8710, %v8709
      %v8761 = vpack.c.b16 %v8712, %v8711
      %v8762 = vpack.c.b16 %v8714, %v8713
      %v8763 = vpack.c.b16 %v8716, %v8715
      %v8764 = vpack.c.b16 %v8718, %v8717
      %v8765 = vpack.c.b16 %v8720, %v8719
      %v8766 = vpack.c.b16 %v8722, %v8721
      %v8767 = vpack.c.b16 %v8724, %v8723
      %v8768 = vpack.c.b16 %v8726, %v8725
      %v8769 = vpack.c.b16 %v8728, %v8727
      %v8770 = vpack.c.b16 %v8730, %v8729
      %v8771 = vpack.c.b16 %v8732, %v8731
      %v8772 = vpack.c.b16 %v8734, %v8733
      %v8773 = vpack.c.b16 %v8736, %v8735
      %v8774 = vpack.c.b16 %v8738, %v8737
      %v8775 = vpack.c.b16 %v8740, %v8739
      %v8776 = vpack.c.b16 %v8742, %v8741
      %v8777 = vpack.c.b16 %v8744, %v8743
      %v8778 = vpack.c.b16 %v8746, %v8745
      %8811 = vmatprep.subr.bf16.mxu0 0
      %8812 = vmatpush1.bf16.msra.mxu0 %v8747
      %8813 = vmatprep.subr.bf16.mxu0 0
      %8814 = vmatpush1.bf16.msra.mxu0 %v8748
      %8815 = vmatprep.subr.bf16.mxu0 0
      %8816 = vmatpush1.bf16.msra.mxu0 %v8749
      %8817 = vmatprep.subr.bf16.mxu0 0
      %8818 = vmatpush1.bf16.msra.mxu0 %v8750
      %8819 = vmatprep.subr.bf16.mxu0 0
      %8820 = vmatpush1.bf16.msra.mxu0 %v8751
      %8821 = vmatprep.subr.bf16.mxu0 0
      %8822 = vmatpush1.bf16.msra.mxu0 %v8752
      %8823 = vmatprep.subr.bf16.mxu0 0
      %8824 = vmatpush1.bf16.msra.mxu0 %v8753
      %8825 = vmatprep.subr.bf16.mxu0 0
      %8826 = vmatpush1.bf16.msra.mxu0 %v8754
      %8827 = vmatprep.subr.bf16.mxu0 0
      %8828 = vmatpush1.bf16.msra.mxu0 %v8755
      %8829 = vmatprep.subr.bf16.mxu0 0
      %8830 = vmatpush1.bf16.msra.mxu0 %v8756
      %8831 = vmatprep.subr.bf16.mxu0 0
      %8832 = vmatpush1.bf16.msra.mxu0 %v8757
      %8833 = vmatprep.subr.bf16.mxu0 0
      %8834 = vmatpush1.bf16.msra.mxu0 %v8758
      %8835 = vmatprep.subr.bf16.mxu0 0
      %8836 = vmatpush1.bf16.msra.mxu0 %v8759
      %8837 = vmatprep.subr.bf16.mxu0 0
      %8838 = vmatpush1.bf16.msra.mxu0 %v8760
      %8839 = vmatprep.subr.bf16.mxu0 0
      %8840 = vmatpush1.bf16.msra.mxu0 %v8761
      %8841 = vmatprep.subr.bf16.mxu0 0
      %8842 = vmatpush1.bf16.msra.mxu0 %v8762
      %8843 = vmatprep.mubr.bf16.mxu0 %v8545
      %8844 = vmatmul.mubr.bf16.gmra.mrb[0].mxu0 %v8544
      %v8845 = vpop.f32.mrb[0].mxu0
      %v8846 = vadd.f32 %v8617, %v8845
      %v8847 = vpop.f32.mrb[0].mxu0
      %v8848 = vpop.f32.mrb[0].mxu0
      %v8849 = vpop.f32.mrb[0].mxu0
      %8850 = vdwg.mxu0
      %8851 = vmatprep.subr.bf16.mxu0 0
      %8852 = vmatpush1.bf16.msra.mxu0 %v8763
      %8853 = vmatprep.subr.bf16.mxu0 0
      %8854 = vmatpush1.bf16.msra.mxu0 %v8764
      %8855 = vmatprep.subr.bf16.mxu0 0
      %8856 = vmatpush1.bf16.msra.mxu0 %v8765
      %8857 = vmatprep.subr.bf16.mxu0 0
      %8858 = vmatpush1.bf16.msra.mxu0 %v8766
      %8859 = vmatprep.subr.bf16.mxu0 0
      %8860 = vmatpush1.bf16.msra.mxu0 %v8767
      %8861 = vmatprep.subr.bf16.mxu0 0
      %8862 = vmatpush1.bf16.msra.mxu0 %v8768
      %8863 = vmatprep.subr.bf16.mxu0 0
      %8864 = vmatpush1.bf16.msra.mxu0 %v8769
      %8865 = vmatprep.subr.bf16.mxu0 0
      %8866 = vmatpush1.bf16.msra.mxu0 %v8770
      %8867 = vmatprep.subr.bf16.mxu0 0
      %8868 = vmatpush1.bf16.msra.mxu0 %v8771
      %8869 = vmatprep.subr.bf16.mxu0 0
      %8870 = vmatpush1.bf16.msra.mxu0 %v8772
      %8871 = vmatprep.subr.bf16.mxu0 0
      %8872 = vmatpush1.bf16.msra.mxu0 %v8773
      %8873 = vmatprep.subr.bf16.mxu0 0
      %8874 = vmatpush1.bf16.msra.mxu0 %v8774
      %8875 = vmatprep.subr.bf16.mxu0 0
      %8876 = vmatpush1.bf16.msra.mxu0 %v8775
      %8877 = vmatprep.subr.bf16.mxu0 0
      %8878 = vmatpush1.bf16.msra.mxu0 %v8776
      %8879 = vmatprep.subr.bf16.mxu0 0
      %8880 = vmatpush1.bf16.msra.mxu0 %v8777
      %8881 = vmatprep.subr.bf16.mxu0 0
      %8882 = vmatpush1.bf16.msra.mxu0 %v8778
      %8883 = vmatprep.mubr.bf16.mxu0 %v8547
      %8884 = vmatmul.mubr.bf16.gmra.mrb[0].mxu0 %v8546
      %v8885 = vpop.f32.mrb[0].mxu0
      %v8886 = vadd.f32 %v8846, %v8885
      %v8887 = vpop.f32.mrb[0].mxu0
      %v8888 = vpop.f32.mrb[0].mxu0
      %v8889 = vpop.f32.mrb[0].mxu0
      %8890 = vdwg.mxu0
      %v8891 = vmul.f32 %v8886, 0.5
      %v8892 = vtanh.pop %v8891
      %v8893 = vadd.f32 %v8892, 1.0
      %v8894 = vmul.f32 %v8893, 0.5
      %8895 = vst.msk [vmem:[%s438] sm:$0xff] %vm600, %v8894
      %p8896 = scmp.lt.s32.totalorder %s24, 1
      %s8897 = scalar_select %p8896, %s24, 1
      %s8898 = smul.addr %s8897, 8
      %s8899 = scalar_lea.vmem %s13, %s8898
      // Predicated region
      $region73: #{autoencoder_forward.1} parent=71 // pred_check
        %p8900 = pneg %p320
      $region74: #{autoencoder_forward.1} parent=71 // pred_check_branch
        %8902 = sbr.rel (%p8900) target = $region76
      $region75: #{autoencoder_forward.1} parent=71 // pred_region
        _
      $region76: #{autoencoder_forward.1} parent=71 // pred_fallthru
        _
    $region72: #{autoencoder_forward.1} parent=5 // pred_fallthru
      _
    %p8903 = scmp.le.s32.totalorder 2, %s19
    // Predicated region
    $region77: #{autoencoder_forward.1} parent=5 // pred_check
      %p8904 = pneg %p8903
    $region78: #{autoencoder_forward.1} parent=5 // pred_check_branch
      %8906 = sbr.rel (%p8904) target = $region80
    $region79: #{autoencoder_forward.1} parent=5 // pred_region
      %s8907 = ssub.s32 %s19, 2
      // Predicated region
      $region81: #{autoencoder_forward.1} parent=79 // pred_check
        %p8908 = pneg %p326
      $region82: #{autoencoder_forward.1} parent=79 // pred_check_branch
        %8910 = sbr.rel (%p8908) target = $region84
      $region83: #{autoencoder_forward.1} parent=79 // pred_region
        %p8911 = scmp.lt.s32.totalorder %s25, 1
        %s8912 = scalar_select %p8911, %s25, 1
        %s8913 = smul.addr %s8912, 8
        %s8914 = scalar_lea.vmem %s13, %s8913
      $region84: #{autoencoder_forward.1} parent=79 // pred_fallthru
        _
    $region80: #{autoencoder_forward.1} parent=5 // pred_fallthru
      _
  $region6: #{autoencoder_forward.1} parent=0 // loop_footer
    %s23 = sadd.s32 1, %s19
  $region7: #{autoencoder_forward.1} parent=0 // loop_footer_branch
    %18 = sbr.rel target = $region3
  $region8: #{autoencoder_forward.1} parent=0 // loop_exit
    _

</llo_original>
